<compile_context>
chip_gen: v7x
topology: tpu7x:2x2x1
jax: 0.10.0
libtpu: 0.0.40
codegen_flags: <defaults>
</compile_context>

<pallas_src>
import math

import jax
import jax.numpy as jnp
import numpy as np
from jax import lax
from jax.experimental import pallas as pl
from jax.experimental.pallas import tpu as pltpu

NUM_GROUPS = 32
GN_EPS = 1e-5


def _round_up(x, m):
    return (x + m - 1) // m * m


# ------------------------------- fused Pallas kernel ------------------------------ #

def _make_branch_kernel(H, W, Wp, base, layer_cins, cseg):
    """Builds the fused [conv3x3+GN(32)+ReLU]*L + conv3x3(head, bias) kernel body.

    The feature map lives in a flat zero-padded VMEM scratch: padded position
    (py, px) -> flat row base + py*Wp + px, so tap (dy, dx) of the 3x3 conv is the
    row window starting at base + dy*Wp + dx.  Rows whose column index is >= W are
    "wrap"/pad garbage; they are excluded from the GroupNorm statistics via `mask`,
    zeroed before being written back, and cropped from the head output.
    """
    Nrows = H * Wp
    L = len(layer_cins)
    n_in = 3 + 3 * L + 2  # x, mask, gmat, (w, gamma, beta) * L, head_w, head_b

    def kernel(*refs):
        x_ref, mask_ref, gmat_ref = refs[0], refs[1], refs[2]
        layer_refs = refs[3:3 + 3 * L]
        hw_ref, hb_ref = refs[3 + 3 * L], refs[4 + 3 * L]
        out_ref = refs[n_in]
        pad_ref = refs[n_in + 1]   # (Npad, Cmax) f32  : flat zero-padded features
        col_ref = refs[n_in + 2]   # (Nrows, 9*Cmax) bf16 : im2col buffer

        # All border / tail / extra-pad rows must read zero for every layer.
        pad_ref[...] = jnp.zeros_like(pad_ref)

        # In-kernel zero padding of the branch input (no jnp.pad pass in HBM):
        # interior row (1+y, 1..W) of the padded map <- x[y, :, :].  All starts are
        # sublane-aligned because base + Wp + 1 == 0 (mod 8) and Wp % 8 == 0.
        cin0 = layer_cins[0]
        for y in range(H):
            r = base + (1 + y) * Wp + 1
            pad_ref[r:r + W, :cin0] = x_ref[y]

        mask = mask_ref[...]                       # (Nrows, 1) f32, 1 iff col < W
        inv_hw = 1.0 / float(H * W)

        def conv_from_scratch(cin, w_ref):
            # im2col: 9 shifted row windows -> one K = 9*cin MXU matmul (f32 acc).
            for k in range(9):
                dy, dx = divmod(k, 3)
                off = base + dy * Wp + dx
                src = pad_ref[off:off + Nrows, :cin]
                col_ref[:, k * cin:(k + 1) * cin] = src.astype(jnp.bfloat16)
            return jnp.dot(col_ref[:, :9 * cin], w_ref[...],
                           preferred_element_type=jnp.float32)      # (Nrows, Cout)

        for l in range(L):
            w_ref, g_ref, b_ref = layer_refs[3 * l:3 * l + 3]
            acc = conv_from_scratch(layer_cins[l], w_ref)

            # GroupNorm(32): per-channel moments over the valid pixels, then group
            # averaging via one stacked (2, C) x (C, C) block-diagonal matmul.
            acc_m = acc * mask
            mean_c = jnp.sum(acc_m, axis=0, keepdims=True) * inv_hw
            msq_c = jnp.sum(acc_m * acc_m, axis=0, keepdims=True) * inv_hw
            gstats = jnp.dot(jnp.concatenate([mean_c, msq_c], axis=0),
                             gmat_ref[...], preferred_element_type=jnp.float32)
            gmean = gstats[0:1, :]
            gvar = jnp.maximum(gstats[1:2, :] - gmean * gmean, 0.0)

            y = (acc - gmean) * lax.rsqrt(gvar + GN_EPS)
            y = y * g_ref[...] + b_ref[...]
            y = jnp.maximum(y, 0.0) * mask         # ReLU; zero wrap/pad columns
            # Write back for the next layer: shifting by Wp+1 lands pixel (y, x) at
            # padded (1+y, 1+x); the masked wrap columns land exactly on the zero
            # borders, so the halo stays zero.  Aligned store (base+Wp+1 % 8 == 0).
            pad_ref[base + Wp + 1: base + Wp + 1 + Nrows, :cseg] = y

        # Head conv (bias, no norm).  Output channels are zero-padded to a multiple
        # of 128 lanes so the HBM store is lane-dense; wrapper slices the pad off.
        acc = conv_from_scratch(cseg, hw_ref) + hb_ref[...]          # (Nrows, Chp)
        chp = acc.shape[1]
        out_ref[...] = acc.reshape(H, Wp, chp)[:, :W, :].astype(out_ref.dtype)

    return kernel


# ---------------------------------- JAX wrapper ------------------------------------ #

def _branch_pallas(x_nhwc, params):
    B, H, W, Cin = x_nhwc.shape
    layers = params["cate_convs"]
    L = len(layers)
    cseg = layers[0][0].shape[0]
    ch = params["solo_cate_w"].shape[0]
    assert cseg % NUM_GROUPS == 0, "GroupNorm(32) needs seg_feat_channels % 32 == 0"

    layer_cins = [layers[l][0].shape[1] for l in range(L)]
    assert layer_cins[0] == Cin and all(c == cseg for c in layer_cins[1:])

    # Flat padded-feature geometry (aligned stores: base + Wp + 1 == 0 mod 8).
    Wp = _round_up(W + 2, 8)
    base = (-(Wp + 1)) % 8
    Nrows = H * Wp
    Cmax = max([cseg] + layer_cins)
    Npad = _round_up(base + (H + 2) * Wp + 8, 8)
    chp = _round_up(ch, 128)                      # lane-dense head output width

    # Validity mask: 1 where the flat column index is a real output column.
    mask = ((jnp.arange(Nrows) % Wp) < W).astype(jnp.float32).reshape(Nrows, 1)

    # Block-diagonal group-averaging matrix for GroupNorm(32).
    cg = cseg // NUM_GROUPS
    gid = jnp.arange(cseg) // cg
    gmat = (gid[:, None] == gid[None, :]).astype(jnp.float32) / float(cg)

    def _tap_weights(w_oihw):
        # PyTorch (Cout, Cin, 3, 3) -> im2col weight (9*Cin, Cout), bf16 MXU inputs.
        cout, cin = w_oihw.shape[0], w_oihw.shape[1]
        return (jnp.transpose(w_oihw, (2, 3, 1, 0))
                .reshape(9 * cin, cout).astype(jnp.bfloat16))

    def _const_spec(shape):
        return pl.BlockSpec(shape, lambda b, _s=len(shape): (0,) * _s)

    args = [x_nhwc, mask, gmat]
    in_specs = [
        pl.BlockSpec((None, H, W, Cin), lambda b: (b, 0, 0, 0)),
        _const_spec((Nrows, 1)),
        _const_spec((cseg, cseg)),
    ]
    for (w, gamma, beta) in layers:
        cout, cin = w.shape[0], w.shape[1]
        args += [_tap_weights(w),
                 gamma.astype(jnp.float32).reshape(1, cout),
                 beta.astype(jnp.float32).reshape(1, cout)]
        in_specs += [_const_spec((9 * cin, cout)),
                     _const_spec((1, cout)),
                     _const_spec((1, cout))]

    hw = _tap_weights(params["solo_cate_w"])                 # (9*cseg, ch) bf16
    hw = jnp.pad(hw, ((0, 0), (0, chp - ch)))                # lane-pad to chp
    hb = jnp.pad(params["solo_cate_b"].astype(jnp.float32), (0, chp - ch)).reshape(1, chp)
    args += [hw, hb]
    in_specs += [_const_spec((9 * cseg, chp)), _const_spec((1, chp))]

    scratch_shapes = [pltpu.VMEM((Npad, Cmax), jnp.float32),
                      pltpu.VMEM((Nrows, 9 * Cmax), jnp.bfloat16)]

    # Explicit VMEM budget (scratch + blocks + headroom), capped below v7x's 64 MiB.
    arg_bytes = sum(int(np.prod(a.shape)) * a.dtype.itemsize for a in args)
    scratch_bytes = Npad * Cmax * 4 + Nrows * 9 * Cmax * 2
    out_bytes = H * W * chp * 4
    vmem_limit = int(min(max(4 * (arg_bytes + scratch_bytes + out_bytes),
                             32 * 1024 * 1024), 60 * 1024 * 1024))

    kernel = _make_branch_kernel(H, W, Wp, base, layer_cins, cseg)
    out_padded = pl.pallas_call(
        kernel,
        out_shape=jax.ShapeDtypeStruct((B, H, W, chp), jnp.float32),
        grid=(B,),
        in_specs=in_specs,
        out_specs=pl.BlockSpec((None, H, W, chp), lambda b: (b, 0, 0, 0)),
        scratch_shapes=scratch_shapes,
        compiler_params=pltpu.CompilerParams(
            dimension_semantics=("parallel",),
            vmem_limit_bytes=vmem_limit),
    )(*args)
    return out_padded[..., :ch]                              # drop the lane padding


def category_branch_forward(x_nchw, params, grid_size=None, eval=False):
    """Mirrors CategoryBranch.forward; input / output are NCHW like PyTorch."""
    if grid_size is not None:
        if isinstance(grid_size, int):
            grid_size = (grid_size, grid_size)
        B, C = x_nchw.shape[:2]
        # F.interpolate(mode='bilinear', align_corners=False) == half-pixel bilinear.
        x_nchw = jax.image.resize(x_nchw, (B, C) + tuple(grid_size),
                                  method="bilinear", antialias=False)
    feat = jnp.transpose(x_nchw, (0, 2, 3, 1))               # NCHW -> NHWC
    out_nhwc = _branch_pallas(feat, params)
    out_nchw = jnp.transpose(out_nhwc, (0, 3, 1, 2))
    if eval:
        # TODO(synk): points_nms(sigmoid(pred), kernel=2).permute(0,2,3,1) eval
        # post-processing is not implemented in Pallas.
        raise NotImplementedError("eval=True path (points_nms) not implemented")
    return out_nchw


# ------------------------------ deterministic params ------------------------------ #

def init_params(key, in_channels, seg_feat_channels, stacked_convs, cate_out_channels):
    params = {"cate_convs": []}
    for i in range(stacked_convs):
        chn = in_channels if i == 0 else seg_feat_channels
        key, k1, k2, k3 = jax.random.split(key, 4)
        w = 0.01 * jax.random.normal(k1, (seg_feat_channels, chn, 3, 3), jnp.float32)
        gamma = 1.0 + 0.1 * jax.random.normal(k2, (seg_feat_channels,), jnp.float32)
        beta = 0.1 * jax.random.normal(k3, (seg_feat_channels,), jnp.float32)
        params["cate_convs"].append((w, gamma, beta))
    key, k1 = jax.random.split(key)
    params["solo_cate_w"] = 0.01 * jax.random.normal(
        k1, (cate_out_channels, seg_feat_channels, 3, 3), jnp.float32)
    bias_cate = -math.log((1.0 - 0.01) / 0.01)               # bias_init_with_prob(0.01)
    params["solo_cate_b"] = jnp.full((cate_out_channels,), bias_cate, jnp.float32)
    return params


# --------------------------------- pure-JAX reference ------------------------------ #

def _reference_forward(x_nchw, params, matmul_dtype=jnp.float32):
    """lax.conv reference.  matmul_dtype=bfloat16 mirrors the kernel's bf16 MXU
    inputs (f32 accumulation; GroupNorm / ReLU stay f32)."""
    x = jnp.transpose(x_nchw, (0, 2, 3, 1))

    def conv3x3(x, w_oihw):
        whwio = jnp.transpose(w_oihw, (2, 3, 1, 0)).astype(matmul_dtype)
        return lax.conv_general_dilated(
            x.astype(matmul_dtype), whwio, (1, 1), ((1, 1), (1, 1)),
            dimension_numbers=("NHWC", "HWIO", "NHWC"),
            preferred_element_type=jnp.float32)

    for (w, gamma, beta) in params["cate_convs"]:
        y = conv3x3(x, w)
        B, H, W, C = y.shape
        yg = y.reshape(B, H, W, NUM_GROUPS, C // NUM_GROUPS)
        mean = yg.mean(axis=(1, 2, 4), keepdims=True)
        var = ((yg - mean) ** 2).mean(axis=(1, 2, 4), keepdims=True)
        yg = (yg - mean) / jnp.sqrt(var + GN_EPS)
        y = yg.reshape(B, H, W, C) * gamma + beta
        x = jnp.maximum(y, 0.0)
    y = conv3x3(x, params["solo_cate_w"]) + params["solo_cate_b"]
    return jnp.transpose(y, (0, 3, 1, 2))


# --------------------------------------- main -------------------------------------- #

if __name__ == "__main__":
    B, Cin, H, W = 2, 32, 16, 16
    seg_feat_channels, stacked_convs, cate_out_channels = 32, 2, 8

    key = jax.random.PRNGKey(0)
    key, kx = jax.random.split(key)
    x = jax.random.normal(kx, (B, Cin, H, W), jnp.float32)   # NCHW, like PyTorch

    params = init_params(key, Cin, seg_feat_channels, stacked_convs, cate_out_channels)

    out = jax.block_until_ready(category_branch_forward(x, params))
    assert out.shape == (B, cate_out_channels, H, W), out.shape

    # Tight check against a bf16-MXU-matched reference.
    ref_bf16 = jax.block_until_ready(_reference_forward(x, params, jnp.bfloat16))
    np.testing.assert_allclose(np.asarray(out), np.asarray(ref_bf16), rtol=5e-3, atol=5e-3)

    # Loose check against the full-f32 reference (bf16 MXU rounding tolerance).
    ref_f32 = jax.block_until_ready(_reference_forward(x, params, jnp.float32))
    np.testing.assert_allclose(np.asarray(out), np.asarray(ref_f32), rtol=3e-2, atol=3e-2)

    print("KERNEL_OK")
</pallas_src>

<mosaic_0001>
module attributes {stable_mosaic.version = 11 : i64} {
  func.func @kernel(%arg0: i32, %arg1: memref<1x16x16x32xf32, #tpu.memory_space<vmem>>, %arg2: memref<384x1xf32, #tpu.memory_space<vmem>>, %arg3: memref<32x32xf32, #tpu.memory_space<vmem>>, %arg4: memref<288x32xbf16, #tpu.memory_space<vmem>>, %arg5: memref<1x32xf32, #tpu.memory_space<vmem>>, %arg6: memref<1x32xf32, #tpu.memory_space<vmem>>, %arg7: memref<288x32xbf16, #tpu.memory_space<vmem>>, %arg8: memref<1x32xf32, #tpu.memory_space<vmem>>, %arg9: memref<1x32xf32, #tpu.memory_space<vmem>>, %arg10: memref<288x128xbf16, #tpu.memory_space<vmem>>, %arg11: memref<1x128xf32, #tpu.memory_space<vmem>>, %arg12: memref<1x16x16x128xf32, #tpu.memory_space<vmem>>, %arg13: memref<448x32xf32, #tpu.memory_space<vmem>>, %arg14: memref<384x288xbf16, #tpu.memory_space<vmem>>) attributes {dimension_semantics = [#tpu.dimension_semantics<parallel>], iteration_bounds = array<i64: 2>, scalar_prefetch = 0 : i64, scratch_operands = 2 : i64, tpu.core_type = #tpu.core_type<tc>, window_params = [{transform_indices = @transform_0, window_bounds = array<i64: 1, 16, 16, 32>}, {pipeline_mode = #tpu.pipeline_mode<synchronous>, transform_indices = @transform_1, window_bounds = array<i64: 384, 1>}, {pipeline_mode = #tpu.pipeline_mode<synchronous>, transform_indices = @transform_2, window_bounds = array<i64: 32, 32>}, {pipeline_mode = #tpu.pipeline_mode<synchronous>, transform_indices = @transform_3, window_bounds = array<i64: 288, 32>}, {pipeline_mode = #tpu.pipeline_mode<synchronous>, transform_indices = @transform_4, window_bounds = array<i64: 1, 32>}, {pipeline_mode = #tpu.pipeline_mode<synchronous>, transform_indices = @transform_5, window_bounds = array<i64: 1, 32>}, {pipeline_mode = #tpu.pipeline_mode<synchronous>, transform_indices = @transform_6, window_bounds = array<i64: 288, 32>}, {pipeline_mode = #tpu.pipeline_mode<synchronous>, transform_indices = @transform_7, window_bounds = array<i64: 1, 32>}, {pipeline_mode = #tpu.pipeline_mode<synchronous>, transform_indices = @transform_8, window_bounds = array<i64: 1, 32>}, {pipeline_mode = #tpu.pipeline_mode<synchronous>, transform_indices = @transform_9, window_bounds = array<i64: 288, 128>}, {pipeline_mode = #tpu.pipeline_mode<synchronous>, transform_indices = @transform_10, window_bounds = array<i64: 1, 128>}, {transform_indices = @transform_11, window_bounds = array<i64: 1, 16, 16, 128>}]} {
    %cst = arith.constant 0.000000e+00 : f32
    %0 = vector.broadcast %cst : f32 to vector<448x32xf32>
    %c0 = arith.constant 0 : index
    %c0_0 = arith.constant 0 : index
    %1 = vector.load %arg13[%c0, %c0_0] : memref<448x32xf32, #tpu.memory_space<vmem>>, vector<448x32xf32>
    tpu.vector_store %arg13[%c0, %c0_0], %0 {strides = array<i32>} : memref<448x32xf32, #tpu.memory_space<vmem>>, vector<448x32xf32>,
    %c0_1 = arith.constant 0 : index
    %c0_2 = arith.constant 0 : index
    %c0_3 = arith.constant 0 : index
    %c0_4 = arith.constant 0 : index
    %2 = vector.load %arg1[%c0_1, %c0_2, %c0_3, %c0_4] : memref<1x16x16x32xf32, #tpu.memory_space<vmem>>, vector<1x1x16x32xf32>
    %3 = vector.shape_cast %2 : vector<1x1x16x32xf32> to vector<16x32xf32>
    %c32 = arith.constant 32 : index
    %c0_5 = arith.constant 0 : index
    %4 = vector.load %arg13[%c32, %c0_5] : memref<448x32xf32, #tpu.memory_space<vmem>>, vector<16x32xf32>
    tpu.vector_store %arg13[%c32, %c0_5], %3 {strides = array<i32>} : memref<448x32xf32, #tpu.memory_space<vmem>>, vector<16x32xf32>,
    %c0_6 = arith.constant 0 : index
    %c1 = arith.constant 1 : index
    %c0_7 = arith.constant 0 : index
    %c0_8 = arith.constant 0 : index
    %5 = vector.load %arg1[%c0_6, %c1, %c0_7, %c0_8] : memref<1x16x16x32xf32, #tpu.memory_space<vmem>>, vector<1x1x16x32xf32>
    %6 = vector.shape_cast %5 : vector<1x1x16x32xf32> to vector<16x32xf32>
    %c56 = arith.constant 56 : index
    %c0_9 = arith.constant 0 : index
    %7 = vector.load %arg13[%c56, %c0_9] : memref<448x32xf32, #tpu.memory_space<vmem>>, vector<16x32xf32>
    tpu.vector_store %arg13[%c56, %c0_9], %6 {strides = array<i32>} : memref<448x32xf32, #tpu.memory_space<vmem>>, vector<16x32xf32>,
    %c0_10 = arith.constant 0 : index
    %c2 = arith.constant 2 : index
    %c0_11 = arith.constant 0 : index
    %c0_12 = arith.constant 0 : index
    %8 = vector.load %arg1[%c0_10, %c2, %c0_11, %c0_12] : memref<1x16x16x32xf32, #tpu.memory_space<vmem>>, vector<1x1x16x32xf32>
    %9 = vector.shape_cast %8 : vector<1x1x16x32xf32> to vector<16x32xf32>
    %c80 = arith.constant 80 : index
    %c0_13 = arith.constant 0 : index
    %10 = vector.load %arg13[%c80, %c0_13] : memref<448x32xf32, #tpu.memory_space<vmem>>, vector<16x32xf32>
    tpu.vector_store %arg13[%c80, %c0_13], %9 {strides = array<i32>} : memref<448x32xf32, #tpu.memory_space<vmem>>, vector<16x32xf32>,
    %c0_14 = arith.constant 0 : index
    %c3 = arith.constant 3 : index
    %c0_15 = arith.constant 0 : index
    %c0_16 = arith.constant 0 : index
    %11 = vector.load %arg1[%c0_14, %c3, %c0_15, %c0_16] : memref<1x16x16x32xf32, #tpu.memory_space<vmem>>, vector<1x1x16x32xf32>
    %12 = vector.shape_cast %11 : vector<1x1x16x32xf32> to vector<16x32xf32>
    %c104 = arith.constant 104 : index
    %c0_17 = arith.constant 0 : index
    %13 = vector.load %arg13[%c104, %c0_17] : memref<448x32xf32, #tpu.memory_space<vmem>>, vector<16x32xf32>
    tpu.vector_store %arg13[%c104, %c0_17], %12 {strides = array<i32>} : memref<448x32xf32, #tpu.memory_space<vmem>>, vector<16x32xf32>,
    %c0_18 = arith.constant 0 : index
    %c4 = arith.constant 4 : index
    %c0_19 = arith.constant 0 : index
    %c0_20 = arith.constant 0 : index
    %14 = vector.load %arg1[%c0_18, %c4, %c0_19, %c0_20] : memref<1x16x16x32xf32, #tpu.memory_space<vmem>>, vector<1x1x16x32xf32>
    %15 = vector.shape_cast %14 : vector<1x1x16x32xf32> to vector<16x32xf32>
    %c128 = arith.constant 128 : index
    %c0_21 = arith.constant 0 : index
    %16 = vector.load %arg13[%c128, %c0_21] : memref<448x32xf32, #tpu.memory_space<vmem>>, vector<16x32xf32>
    tpu.vector_store %arg13[%c128, %c0_21], %15 {strides = array<i32>} : memref<448x32xf32, #tpu.memory_space<vmem>>, vector<16x32xf32>,
    %c0_22 = arith.constant 0 : index
    %c5 = arith.constant 5 : index
    %c0_23 = arith.constant 0 : index
    %c0_24 = arith.constant 0 : index
    %17 = vector.load %arg1[%c0_22, %c5, %c0_23, %c0_24] : memref<1x16x16x32xf32, #tpu.memory_space<vmem>>, vector<1x1x16x32xf32>
    %18 = vector.shape_cast %17 : vector<1x1x16x32xf32> to vector<16x32xf32>
    %c152 = arith.constant 152 : index
    %c0_25 = arith.constant 0 : index
    %19 = vector.load %arg13[%c152, %c0_25] : memref<448x32xf32, #tpu.memory_space<vmem>>, vector<16x32xf32>
    tpu.vector_store %arg13[%c152, %c0_25], %18 {strides = array<i32>} : memref<448x32xf32, #tpu.memory_space<vmem>>, vector<16x32xf32>,
    %c0_26 = arith.constant 0 : index
    %c6 = arith.constant 6 : index
    %c0_27 = arith.constant 0 : index
    %c0_28 = arith.constant 0 : index
    %20 = vector.load %arg1[%c0_26, %c6, %c0_27, %c0_28] : memref<1x16x16x32xf32, #tpu.memory_space<vmem>>, vector<1x1x16x32xf32>
    %21 = vector.shape_cast %20 : vector<1x1x16x32xf32> to vector<16x32xf32>
    %c176 = arith.constant 176 : index
    %c0_29 = arith.constant 0 : index
    %22 = vector.load %arg13[%c176, %c0_29] : memref<448x32xf32, #tpu.memory_space<vmem>>, vector<16x32xf32>
    tpu.vector_store %arg13[%c176, %c0_29], %21 {strides = array<i32>} : memref<448x32xf32, #tpu.memory_space<vmem>>, vector<16x32xf32>,
    %c0_30 = arith.constant 0 : index
    %c7 = arith.constant 7 : index
    %c0_31 = arith.constant 0 : index
    %c0_32 = arith.constant 0 : index
    %23 = vector.load %arg1[%c0_30, %c7, %c0_31, %c0_32] : memref<1x16x16x32xf32, #tpu.memory_space<vmem>>, vector<1x1x16x32xf32>
    %24 = vector.shape_cast %23 : vector<1x1x16x32xf32> to vector<16x32xf32>
    %c200 = arith.constant 200 : index
    %c0_33 = arith.constant 0 : index
    %25 = vector.load %arg13[%c200, %c0_33] : memref<448x32xf32, #tpu.memory_space<vmem>>, vector<16x32xf32>
    tpu.vector_store %arg13[%c200, %c0_33], %24 {strides = array<i32>} : memref<448x32xf32, #tpu.memory_space<vmem>>, vector<16x32xf32>,
    %c0_34 = arith.constant 0 : index
    %c8 = arith.constant 8 : index
    %c0_35 = arith.constant 0 : index
    %c0_36 = arith.constant 0 : index
    %26 = vector.load %arg1[%c0_34, %c8, %c0_35, %c0_36] : memref<1x16x16x32xf32, #tpu.memory_space<vmem>>, vector<1x1x16x32xf32>
    %27 = vector.shape_cast %26 : vector<1x1x16x32xf32> to vector<16x32xf32>
    %c224 = arith.constant 224 : index
    %c0_37 = arith.constant 0 : index
    %28 = vector.load %arg13[%c224, %c0_37] : memref<448x32xf32, #tpu.memory_space<vmem>>, vector<16x32xf32>
    tpu.vector_store %arg13[%c224, %c0_37], %27 {strides = array<i32>} : memref<448x32xf32, #tpu.memory_space<vmem>>, vector<16x32xf32>,
    %c0_38 = arith.constant 0 : index
    %c9 = arith.constant 9 : index
    %c0_39 = arith.constant 0 : index
    %c0_40 = arith.constant 0 : index
    %29 = vector.load %arg1[%c0_38, %c9, %c0_39, %c0_40] : memref<1x16x16x32xf32, #tpu.memory_space<vmem>>, vector<1x1x16x32xf32>
    %30 = vector.shape_cast %29 : vector<1x1x16x32xf32> to vector<16x32xf32>
    %c248 = arith.constant 248 : index
    %c0_41 = arith.constant 0 : index
    %31 = vector.load %arg13[%c248, %c0_41] : memref<448x32xf32, #tpu.memory_space<vmem>>, vector<16x32xf32>
    tpu.vector_store %arg13[%c248, %c0_41], %30 {strides = array<i32>} : memref<448x32xf32, #tpu.memory_space<vmem>>, vector<16x32xf32>,
    %c0_42 = arith.constant 0 : index
    %c10 = arith.constant 10 : index
    %c0_43 = arith.constant 0 : index
    %c0_44 = arith.constant 0 : index
    %32 = vector.load %arg1[%c0_42, %c10, %c0_43, %c0_44] : memref<1x16x16x32xf32, #tpu.memory_space<vmem>>, vector<1x1x16x32xf32>
    %33 = vector.shape_cast %32 : vector<1x1x16x32xf32> to vector<16x32xf32>
    %c272 = arith.constant 272 : index
    %c0_45 = arith.constant 0 : index
    %34 = vector.load %arg13[%c272, %c0_45] : memref<448x32xf32, #tpu.memory_space<vmem>>, vector<16x32xf32>
    tpu.vector_store %arg13[%c272, %c0_45], %33 {strides = array<i32>} : memref<448x32xf32, #tpu.memory_space<vmem>>, vector<16x32xf32>,
    %c0_46 = arith.constant 0 : index
    %c11 = arith.constant 11 : index
    %c0_47 = arith.constant 0 : index
    %c0_48 = arith.constant 0 : index
    %35 = vector.load %arg1[%c0_46, %c11, %c0_47, %c0_48] : memref<1x16x16x32xf32, #tpu.memory_space<vmem>>, vector<1x1x16x32xf32>
    %36 = vector.shape_cast %35 : vector<1x1x16x32xf32> to vector<16x32xf32>
    %c296 = arith.constant 296 : index
    %c0_49 = arith.constant 0 : index
    %37 = vector.load %arg13[%c296, %c0_49] : memref<448x32xf32, #tpu.memory_space<vmem>>, vector<16x32xf32>
    tpu.vector_store %arg13[%c296, %c0_49], %36 {strides = array<i32>} : memref<448x32xf32, #tpu.memory_space<vmem>>, vector<16x32xf32>,
    %c0_50 = arith.constant 0 : index
    %c12 = arith.constant 12 : index
    %c0_51 = arith.constant 0 : index
    %c0_52 = arith.constant 0 : index
    %38 = vector.load %arg1[%c0_50, %c12, %c0_51, %c0_52] : memref<1x16x16x32xf32, #tpu.memory_space<vmem>>, vector<1x1x16x32xf32>
    %39 = vector.shape_cast %38 : vector<1x1x16x32xf32> to vector<16x32xf32>
    %c320 = arith.constant 320 : index
    %c0_53 = arith.constant 0 : index
    %40 = vector.load %arg13[%c320, %c0_53] : memref<448x32xf32, #tpu.memory_space<vmem>>, vector<16x32xf32>
    tpu.vector_store %arg13[%c320, %c0_53], %39 {strides = array<i32>} : memref<448x32xf32, #tpu.memory_space<vmem>>, vector<16x32xf32>,
    %c0_54 = arith.constant 0 : index
    %c13 = arith.constant 13 : index
    %c0_55 = arith.constant 0 : index
    %c0_56 = arith.constant 0 : index
    %41 = vector.load %arg1[%c0_54, %c13, %c0_55, %c0_56] : memref<1x16x16x32xf32, #tpu.memory_space<vmem>>, vector<1x1x16x32xf32>
    %42 = vector.shape_cast %41 : vector<1x1x16x32xf32> to vector<16x32xf32>
    %c344 = arith.constant 344 : index
    %c0_57 = arith.constant 0 : index
    %43 = vector.load %arg13[%c344, %c0_57] : memref<448x32xf32, #tpu.memory_space<vmem>>, vector<16x32xf32>
    tpu.vector_store %arg13[%c344, %c0_57], %42 {strides = array<i32>} : memref<448x32xf32, #tpu.memory_space<vmem>>, vector<16x32xf32>,
    %c0_58 = arith.constant 0 : index
    %c14 = arith.constant 14 : index
    %c0_59 = arith.constant 0 : index
    %c0_60 = arith.constant 0 : index
    %44 = vector.load %arg1[%c0_58, %c14, %c0_59, %c0_60] : memref<1x16x16x32xf32, #tpu.memory_space<vmem>>, vector<1x1x16x32xf32>
    %45 = vector.shape_cast %44 : vector<1x1x16x32xf32> to vector<16x32xf32>
    %c368 = arith.constant 368 : index
    %c0_61 = arith.constant 0 : index
    %46 = vector.load %arg13[%c368, %c0_61] : memref<448x32xf32, #tpu.memory_space<vmem>>, vector<16x32xf32>
    tpu.vector_store %arg13[%c368, %c0_61], %45 {strides = array<i32>} : memref<448x32xf32, #tpu.memory_space<vmem>>, vector<16x32xf32>,
    %c0_62 = arith.constant 0 : index
    %c15 = arith.constant 15 : index
    %c0_63 = arith.constant 0 : index
    %c0_64 = arith.constant 0 : index
    %47 = vector.load %arg1[%c0_62, %c15, %c0_63, %c0_64] : memref<1x16x16x32xf32, #tpu.memory_space<vmem>>, vector<1x1x16x32xf32>
    %48 = vector.shape_cast %47 : vector<1x1x16x32xf32> to vector<16x32xf32>
    %c392 = arith.constant 392 : index
    %c0_65 = arith.constant 0 : index
    %49 = vector.load %arg13[%c392, %c0_65] : memref<448x32xf32, #tpu.memory_space<vmem>>, vector<16x32xf32>
    tpu.vector_store %arg13[%c392, %c0_65], %48 {strides = array<i32>} : memref<448x32xf32, #tpu.memory_space<vmem>>, vector<16x32xf32>,
    %c0_66 = arith.constant 0 : index
    %c0_67 = arith.constant 0 : index
    %50 = vector.load %arg2[%c0_66, %c0_67] : memref<384x1xf32, #tpu.memory_space<vmem>>, vector<384x1xf32>
    %c7_68 = arith.constant 7 : index
    %c0_69 = arith.constant 0 : index
    %51 = vector.load %arg13[%c7_68, %c0_69] : memref<448x32xf32, #tpu.memory_space<vmem>>, vector<384x32xf32>
    %52 = arith.truncf %51 : vector<384x32xf32> to vector<384x32xbf16>
    %c0_70 = arith.constant 0 : index
    %c0_71 = arith.constant 0 : index
    %53 = vector.load %arg14[%c0_70, %c0_71] : memref<384x288xbf16, #tpu.memory_space<vmem>>, vector<384x32xbf16>
    tpu.vector_store %arg14[%c0_70, %c0_71], %52 {strides = array<i32>} : memref<384x288xbf16, #tpu.memory_space<vmem>>, vector<384x32xbf16>,
    %c8_72 = arith.constant 8 : index
    %c0_73 = arith.constant 0 : index
    %54 = vector.load %arg13[%c8_72, %c0_73] : memref<448x32xf32, #tpu.memory_space<vmem>>, vector<384x32xf32>
    %55 = arith.truncf %54 : vector<384x32xf32> to vector<384x32xbf16>
    %c0_74 = arith.constant 0 : index
    %c32_75 = arith.constant 32 : index
    %56 = vector.load %arg14[%c0_74, %c32_75] : memref<384x288xbf16, #tpu.memory_space<vmem>>, vector<384x32xbf16>
    tpu.vector_store %arg14[%c0_74, %c32_75], %55 {strides = array<i32>} : memref<384x288xbf16, #tpu.memory_space<vmem>>, vector<384x32xbf16>,
    %c9_76 = arith.constant 9 : index
    %c0_77 = arith.constant 0 : index
    %57 = vector.load %arg13[%c9_76, %c0_77] : memref<448x32xf32, #tpu.memory_space<vmem>>, vector<384x32xf32>
    %58 = arith.truncf %57 : vector<384x32xf32> to vector<384x32xbf16>
    %c0_78 = arith.constant 0 : index
    %c64 = arith.constant 64 : index
    %59 = vector.load %arg14[%c0_78, %c64] : memref<384x288xbf16, #tpu.memory_space<vmem>>, vector<384x32xbf16>
    tpu.vector_store %arg14[%c0_78, %c64], %58 {strides = array<i32>} : memref<384x288xbf16, #tpu.memory_space<vmem>>, vector<384x32xbf16>,
    %c31 = arith.constant 31 : index
    %c0_79 = arith.constant 0 : index
    %60 = vector.load %arg13[%c31, %c0_79] : memref<448x32xf32, #tpu.memory_space<vmem>>, vector<384x32xf32>
    %61 = arith.truncf %60 : vector<384x32xf32> to vector<384x32xbf16>
    %c0_80 = arith.constant 0 : index
    %c96 = arith.constant 96 : index
    %62 = vector.load %arg14[%c0_80, %c96] : memref<384x288xbf16, #tpu.memory_space<vmem>>, vector<384x32xbf16>
    tpu.vector_store %arg14[%c0_80, %c96], %61 {strides = array<i32>} : memref<384x288xbf16, #tpu.memory_space<vmem>>, vector<384x32xbf16>,
    %c32_81 = arith.constant 32 : index
    %c0_82 = arith.constant 0 : index
    %63 = vector.load %arg13[%c32_81, %c0_82] : memref<448x32xf32, #tpu.memory_space<vmem>>, vector<384x32xf32>
    %64 = arith.truncf %63 : vector<384x32xf32> to vector<384x32xbf16>
    %c0_83 = arith.constant 0 : index
    %c128_84 = arith.constant 128 : index
    %65 = vector.load %arg14[%c0_83, %c128_84] : memref<384x288xbf16, #tpu.memory_space<vmem>>, vector<384x32xbf16>
    tpu.vector_store %arg14[%c0_83, %c128_84], %64 {strides = array<i32>} : memref<384x288xbf16, #tpu.memory_space<vmem>>, vector<384x32xbf16>,
    %c33 = arith.constant 33 : index
    %c0_85 = arith.constant 0 : index
    %66 = vector.load %arg13[%c33, %c0_85] : memref<448x32xf32, #tpu.memory_space<vmem>>, vector<384x32xf32>
    %67 = arith.truncf %66 : vector<384x32xf32> to vector<384x32xbf16>
    %c0_86 = arith.constant 0 : index
    %c160 = arith.constant 160 : index
    %68 = vector.load %arg14[%c0_86, %c160] : memref<384x288xbf16, #tpu.memory_space<vmem>>, vector<384x32xbf16>
    tpu.vector_store %arg14[%c0_86, %c160], %67 {strides = array<i32>} : memref<384x288xbf16, #tpu.memory_space<vmem>>, vector<384x32xbf16>,
    %c55 = arith.constant 55 : index
    %c0_87 = arith.constant 0 : index
    %69 = vector.load %arg13[%c55, %c0_87] : memref<448x32xf32, #tpu.memory_space<vmem>>, vector<384x32xf32>
    %70 = arith.truncf %69 : vector<384x32xf32> to vector<384x32xbf16>
    %c0_88 = arith.constant 0 : index
    %c192 = arith.constant 192 : index
    %71 = vector.load %arg14[%c0_88, %c192] : memref<384x288xbf16, #tpu.memory_space<vmem>>, vector<384x32xbf16>
    tpu.vector_store %arg14[%c0_88, %c192], %70 {strides = array<i32>} : memref<384x288xbf16, #tpu.memory_space<vmem>>, vector<384x32xbf16>,
    %c56_89 = arith.constant 56 : index
    %c0_90 = arith.constant 0 : index
    %72 = vector.load %arg13[%c56_89, %c0_90] : memref<448x32xf32, #tpu.memory_space<vmem>>, vector<384x32xf32>
    %73 = arith.truncf %72 : vector<384x32xf32> to vector<384x32xbf16>
    %c0_91 = arith.constant 0 : index
    %c224_92 = arith.constant 224 : index
    %74 = vector.load %arg14[%c0_91, %c224_92] : memref<384x288xbf16, #tpu.memory_space<vmem>>, vector<384x32xbf16>
    tpu.vector_store %arg14[%c0_91, %c224_92], %73 {strides = array<i32>} : memref<384x288xbf16, #tpu.memory_space<vmem>>, vector<384x32xbf16>,
    %c57 = arith.constant 57 : index
    %c0_93 = arith.constant 0 : index
    %75 = vector.load %arg13[%c57, %c0_93] : memref<448x32xf32, #tpu.memory_space<vmem>>, vector<384x32xf32>
    %76 = arith.truncf %75 : vector<384x32xf32> to vector<384x32xbf16>
    %c0_94 = arith.constant 0 : index
    %c256 = arith.constant 256 : index
    %77 = vector.load %arg14[%c0_94, %c256] : memref<384x288xbf16, #tpu.memory_space<vmem>>, vector<384x32xbf16>
    tpu.vector_store %arg14[%c0_94, %c256], %76 {strides = array<i32>} : memref<384x288xbf16, #tpu.memory_space<vmem>>, vector<384x32xbf16>,
    %c0_95 = arith.constant 0 : index
    %c0_96 = arith.constant 0 : index
    %78 = vector.load %arg14[%c0_95, %c0_96] : memref<384x288xbf16, #tpu.memory_space<vmem>>, vector<384x288xbf16>
    %c0_97 = arith.constant 0 : index
    %c0_98 = arith.constant 0 : index
    %79 = vector.load %arg4[%c0_97, %c0_98] : memref<288x32xbf16, #tpu.memory_space<vmem>>, vector<288x32xbf16>
    %cst_99 = arith.constant dense<0.000000e+00> : vector<384x32xf32>
    %80 = tpu.matmul %78, %79, %cst_99 {dimension_numbers = #tpu.dot_dimension_numbers<[1], [0], [0], [1], [0, 0, 1, 1], [], []>} : vector<384x288xbf16>, vector<288x32xbf16>, vector<384x32xf32> -> vector<384x32xf32>
    %81 = vector.broadcast %50 : vector<384x1xf32> to vector<384x32xf32>
    %82 = arith.mulf %80, %81 : vector<384x32xf32>
    %cst_100 = arith.constant dense<0.000000e+00> : vector<32xf32>
    %83 = vector.multi_reduction <add>, %82, %cst_100 [0] : vector<384x32xf32> to vector<32xf32>
    %84 = vector.shape_cast %83 : vector<32xf32> to vector<1x32xf32>
    %cst_101 = arith.constant 3.906250e-03 : f32
    %85 = vector.broadcast %cst_101 : f32 to vector<1x32xf32>
    %86 = arith.mulf %84, %85 : vector<1x32xf32>
    %87 = arith.mulf %82, %82 : vector<384x32xf32>
    %cst_102 = arith.constant dense<0.000000e+00> : vector<32xf32>
    %88 = vector.multi_reduction <add>, %87, %cst_102 [0] : vector<384x32xf32> to vector<32xf32>
    %89 = vector.shape_cast %88 : vector<32xf32> to vector<1x32xf32>
    %cst_103 = arith.constant 3.906250e-03 : f32
    %90 = vector.broadcast %cst_103 : f32 to vector<1x32xf32>
    %91 = arith.mulf %89, %90 : vector<1x32xf32>
    %92 = tpu.concatenate %86, %91 in 0 : vector<1x32xf32>, vector<1x32xf32> -> vector<2x32xf32>
    %c0_104 = arith.constant 0 : index
    %c0_105 = arith.constant 0 : index
    %93 = vector.load %arg3[%c0_104, %c0_105] : memref<32x32xf32, #tpu.memory_space<vmem>>, vector<32x32xf32>
    %cst_106 = arith.constant dense<0.000000e+00> : vector<2x32xf32>
    %94 = tpu.matmul %92, %93, %cst_106 {dimension_numbers = #tpu.dot_dimension_numbers<[1], [0], [0], [1], [0, 0, 1, 1], [], []>} : vector<2x32xf32>, vector<32x32xf32>, vector<2x32xf32> -> vector<2x32xf32>
    %95 = vector.extract_strided_slice %94 {offsets = [0, 0], sizes = [1, 32], strides = [1, 1]} : vector<2x32xf32> to vector<1x32xf32>
    %96 = vector.extract_strided_slice %94 {offsets = [1, 0], sizes = [1, 32], strides = [1, 1]} : vector<2x32xf32> to vector<1x32xf32>
    %97 = arith.mulf %95, %95 : vector<1x32xf32>
    %98 = arith.subf %96, %97 : vector<1x32xf32>
    %cst_107 = arith.constant 0.000000e+00 : f32
    %99 = vector.broadcast %cst_107 : f32 to vector<1x32xf32>
    %100 = arith.maximumf %98, %99 : vector<1x32xf32>
    %101 = vector.broadcast %95 : vector<1x32xf32> to vector<384x32xf32>
    %102 = arith.subf %80, %101 : vector<384x32xf32>
    %cst_108 = arith.constant 9.99999974E-6 : f32
    %103 = vector.broadcast %cst_108 : f32 to vector<1x32xf32>
    %104 = arith.addf %100, %103 : vector<1x32xf32>
    %105 = math.rsqrt %104 : vector<1x32xf32>
    %106 = vector.broadcast %105 : vector<1x32xf32> to vector<384x32xf32>
    %107 = arith.mulf %102, %106 : vector<384x32xf32>
    %c0_109 = arith.constant 0 : index
    %c0_110 = arith.constant 0 : index
    %108 = vector.load %arg5[%c0_109, %c0_110] : memref<1x32xf32, #tpu.memory_space<vmem>>, vector<1x32xf32>
    %109 = vector.broadcast %108 : vector<1x32xf32> to vector<384x32xf32>
    %110 = arith.mulf %107, %109 : vector<384x32xf32>
    %c0_111 = arith.constant 0 : index
    %c0_112 = arith.constant 0 : index
    %111 = vector.load %arg6[%c0_111, %c0_112] : memref<1x32xf32, #tpu.memory_space<vmem>>, vector<1x32xf32>
    %112 = vector.broadcast %111 : vector<1x32xf32> to vector<384x32xf32>
    %113 = arith.addf %110, %112 : vector<384x32xf32>
    %cst_113 = arith.constant 0.000000e+00 : f32
    %114 = vector.broadcast %cst_113 : f32 to vector<384x32xf32>
    %115 = arith.maximumf %113, %114 : vector<384x32xf32>
    %116 = vector.broadcast %50 : vector<384x1xf32> to vector<384x32xf32>
    %117 = arith.mulf %115, %116 : vector<384x32xf32>
    %c32_114 = arith.constant 32 : index
    %c0_115 = arith.constant 0 : index
    %118 = vector.load %arg13[%c32_114, %c0_115] : memref<448x32xf32, #tpu.memory_space<vmem>>, vector<384x32xf32>
    tpu.vector_store %arg13[%c32_114, %c0_115], %117 {strides = array<i32>} : memref<448x32xf32, #tpu.memory_space<vmem>>, vector<384x32xf32>,
    %c7_116 = arith.constant 7 : index
    %c0_117 = arith.constant 0 : index
    %119 = vector.load %arg13[%c7_116, %c0_117] : memref<448x32xf32, #tpu.memory_space<vmem>>, vector<384x32xf32>
    %120 = arith.truncf %119 : vector<384x32xf32> to vector<384x32xbf16>
    %c0_118 = arith.constant 0 : index
    %c0_119 = arith.constant 0 : index
    %121 = vector.load %arg14[%c0_118, %c0_119] : memref<384x288xbf16, #tpu.memory_space<vmem>>, vector<384x32xbf16>
    tpu.vector_store %arg14[%c0_118, %c0_119], %120 {strides = array<i32>} : memref<384x288xbf16, #tpu.memory_space<vmem>>, vector<384x32xbf16>,
    %c8_120 = arith.constant 8 : index
    %c0_121 = arith.constant 0 : index
    %122 = vector.load %arg13[%c8_120, %c0_121] : memref<448x32xf32, #tpu.memory_space<vmem>>, vector<384x32xf32>
    %123 = arith.truncf %122 : vector<384x32xf32> to vector<384x32xbf16>
    %c0_122 = arith.constant 0 : index
    %c32_123 = arith.constant 32 : index
    %124 = vector.load %arg14[%c0_122, %c32_123] : memref<384x288xbf16, #tpu.memory_space<vmem>>, vector<384x32xbf16>
    tpu.vector_store %arg14[%c0_122, %c32_123], %123 {strides = array<i32>} : memref<384x288xbf16, #tpu.memory_space<vmem>>, vector<384x32xbf16>,
    %c9_124 = arith.constant 9 : index
    %c0_125 = arith.constant 0 : index
    %125 = vector.load %arg13[%c9_124, %c0_125] : memref<448x32xf32, #tpu.memory_space<vmem>>, vector<384x32xf32>
    %126 = arith.truncf %125 : vector<384x32xf32> to vector<384x32xbf16>
    %c0_126 = arith.constant 0 : index
    %c64_127 = arith.constant 64 : index
    %127 = vector.load %arg14[%c0_126, %c64_127] : memref<384x288xbf16, #tpu.memory_space<vmem>>, vector<384x32xbf16>
    tpu.vector_store %arg14[%c0_126, %c64_127], %126 {strides = array<i32>} : memref<384x288xbf16, #tpu.memory_space<vmem>>, vector<384x32xbf16>,
    %c31_128 = arith.constant 31 : index
    %c0_129 = arith.constant 0 : index
    %128 = vector.load %arg13[%c31_128, %c0_129] : memref<448x32xf32, #tpu.memory_space<vmem>>, vector<384x32xf32>
    %129 = arith.truncf %128 : vector<384x32xf32> to vector<384x32xbf16>
    %c0_130 = arith.constant 0 : index
    %c96_131 = arith.constant 96 : index
    %130 = vector.load %arg14[%c0_130, %c96_131] : memref<384x288xbf16, #tpu.memory_space<vmem>>, vector<384x32xbf16>
    tpu.vector_store %arg14[%c0_130, %c96_131], %129 {strides = array<i32>} : memref<384x288xbf16, #tpu.memory_space<vmem>>, vector<384x32xbf16>,
    %c32_132 = arith.constant 32 : index
    %c0_133 = arith.constant 0 : index
    %131 = vector.load %arg13[%c32_132, %c0_133] : memref<448x32xf32, #tpu.memory_space<vmem>>, vector<384x32xf32>
    %132 = arith.truncf %131 : vector<384x32xf32> to vector<384x32xbf16>
    %c0_134 = arith.constant 0 : index
    %c128_135 = arith.constant 128 : index
    %133 = vector.load %arg14[%c0_134, %c128_135] : memref<384x288xbf16, #tpu.memory_space<vmem>>, vector<384x32xbf16>
    tpu.vector_store %arg14[%c0_134, %c128_135], %132 {strides = array<i32>} : memref<384x288xbf16, #tpu.memory_space<vmem>>, vector<384x32xbf16>,
    %c33_136 = arith.constant 33 : index
    %c0_137 = arith.constant 0 : index
    %134 = vector.load %arg13[%c33_136, %c0_137] : memref<448x32xf32, #tpu.memory_space<vmem>>, vector<384x32xf32>
    %135 = arith.truncf %134 : vector<384x32xf32> to vector<384x32xbf16>
    %c0_138 = arith.constant 0 : index
    %c160_139 = arith.constant 160 : index
    %136 = vector.load %arg14[%c0_138, %c160_139] : memref<384x288xbf16, #tpu.memory_space<vmem>>, vector<384x32xbf16>
    tpu.vector_store %arg14[%c0_138, %c160_139], %135 {strides = array<i32>} : memref<384x288xbf16, #tpu.memory_space<vmem>>, vector<384x32xbf16>,
    %c55_140 = arith.constant 55 : index
    %c0_141 = arith.constant 0 : index
    %137 = vector.load %arg13[%c55_140, %c0_141] : memref<448x32xf32, #tpu.memory_space<vmem>>, vector<384x32xf32>
    %138 = arith.truncf %137 : vector<384x32xf32> to vector<384x32xbf16>
    %c0_142 = arith.constant 0 : index
    %c192_143 = arith.constant 192 : index
    %139 = vector.load %arg14[%c0_142, %c192_143] : memref<384x288xbf16, #tpu.memory_space<vmem>>, vector<384x32xbf16>
    tpu.vector_store %arg14[%c0_142, %c192_143], %138 {strides = array<i32>} : memref<384x288xbf16, #tpu.memory_space<vmem>>, vector<384x32xbf16>,
    %c56_144 = arith.constant 56 : index
    %c0_145 = arith.constant 0 : index
    %140 = vector.load %arg13[%c56_144, %c0_145] : memref<448x32xf32, #tpu.memory_space<vmem>>, vector<384x32xf32>
    %141 = arith.truncf %140 : vector<384x32xf32> to vector<384x32xbf16>
    %c0_146 = arith.constant 0 : index
    %c224_147 = arith.constant 224 : index
    %142 = vector.load %arg14[%c0_146, %c224_147] : memref<384x288xbf16, #tpu.memory_space<vmem>>, vector<384x32xbf16>
    tpu.vector_store %arg14[%c0_146, %c224_147], %141 {strides = array<i32>} : memref<384x288xbf16, #tpu.memory_space<vmem>>, vector<384x32xbf16>,
    %c57_148 = arith.constant 57 : index
    %c0_149 = arith.constant 0 : index
    %143 = vector.load %arg13[%c57_148, %c0_149] : memref<448x32xf32, #tpu.memory_space<vmem>>, vector<384x32xf32>
    %144 = arith.truncf %143 : vector<384x32xf32> to vector<384x32xbf16>
    %c0_150 = arith.constant 0 : index
    %c256_151 = arith.constant 256 : index
    %145 = vector.load %arg14[%c0_150, %c256_151] : memref<384x288xbf16, #tpu.memory_space<vmem>>, vector<384x32xbf16>
    tpu.vector_store %arg14[%c0_150, %c256_151], %144 {strides = array<i32>} : memref<384x288xbf16, #tpu.memory_space<vmem>>, vector<384x32xbf16>,
    %c0_152 = arith.constant 0 : index
    %c0_153 = arith.constant 0 : index
    %146 = vector.load %arg14[%c0_152, %c0_153] : memref<384x288xbf16, #tpu.memory_space<vmem>>, vector<384x288xbf16>
    %c0_154 = arith.constant 0 : index
    %c0_155 = arith.constant 0 : index
    %147 = vector.load %arg7[%c0_154, %c0_155] : memref<288x32xbf16, #tpu.memory_space<vmem>>, vector<288x32xbf16>
    %cst_156 = arith.constant dense<0.000000e+00> : vector<384x32xf32>
    %148 = tpu.matmul %146, %147, %cst_156 {dimension_numbers = #tpu.dot_dimension_numbers<[1], [0], [0], [1], [0, 0, 1, 1], [], []>} : vector<384x288xbf16>, vector<288x32xbf16>, vector<384x32xf32> -> vector<384x32xf32>
    %149 = vector.broadcast %50 : vector<384x1xf32> to vector<384x32xf32>
    %150 = arith.mulf %148, %149 : vector<384x32xf32>
    %cst_157 = arith.constant dense<0.000000e+00> : vector<32xf32>
    %151 = vector.multi_reduction <add>, %150, %cst_157 [0] : vector<384x32xf32> to vector<32xf32>
    %152 = vector.shape_cast %151 : vector<32xf32> to vector<1x32xf32>
    %cst_158 = arith.constant 3.906250e-03 : f32
    %153 = vector.broadcast %cst_158 : f32 to vector<1x32xf32>
    %154 = arith.mulf %152, %153 : vector<1x32xf32>
    %155 = arith.mulf %150, %150 : vector<384x32xf32>
    %cst_159 = arith.constant dense<0.000000e+00> : vector<32xf32>
    %156 = vector.multi_reduction <add>, %155, %cst_159 [0] : vector<384x32xf32> to vector<32xf32>
    %157 = vector.shape_cast %156 : vector<32xf32> to vector<1x32xf32>
    %cst_160 = arith.constant 3.906250e-03 : f32
    %158 = vector.broadcast %cst_160 : f32 to vector<1x32xf32>
    %159 = arith.mulf %157, %158 : vector<1x32xf32>
    %160 = tpu.concatenate %154, %159 in 0 : vector<1x32xf32>, vector<1x32xf32> -> vector<2x32xf32>
    %c0_161 = arith.constant 0 : index
    %c0_162 = arith.constant 0 : index
    %161 = vector.load %arg3[%c0_161, %c0_162] : memref<32x32xf32, #tpu.memory_space<vmem>>, vector<32x32xf32>
    %cst_163 = arith.constant dense<0.000000e+00> : vector<2x32xf32>
    %162 = tpu.matmul %160, %161, %cst_163 {dimension_numbers = #tpu.dot_dimension_numbers<[1], [0], [0], [1], [0, 0, 1, 1], [], []>} : vector<2x32xf32>, vector<32x32xf32>, vector<2x32xf32> -> vector<2x32xf32>
    %163 = vector.extract_strided_slice %162 {offsets = [0, 0], sizes = [1, 32], strides = [1, 1]} : vector<2x32xf32> to vector<1x32xf32>
    %164 = vector.extract_strided_slice %162 {offsets = [1, 0], sizes = [1, 32], strides = [1, 1]} : vector<2x32xf32> to vector<1x32xf32>
    %165 = arith.mulf %163, %163 : vector<1x32xf32>
    %166 = arith.subf %164, %165 : vector<1x32xf32>
    %cst_164 = arith.constant 0.000000e+00 : f32
    %167 = vector.broadcast %cst_164 : f32 to vector<1x32xf32>
    %168 = arith.maximumf %166, %167 : vector<1x32xf32>
    %169 = vector.broadcast %163 : vector<1x32xf32> to vector<384x32xf32>
    %170 = arith.subf %148, %169 : vector<384x32xf32>
    %cst_165 = arith.constant 9.99999974E-6 : f32
    %171 = vector.broadcast %cst_165 : f32 to vector<1x32xf32>
    %172 = arith.addf %168, %171 : vector<1x32xf32>
    %173 = math.rsqrt %172 : vector<1x32xf32>
    %174 = vector.broadcast %173 : vector<1x32xf32> to vector<384x32xf32>
    %175 = arith.mulf %170, %174 : vector<384x32xf32>
    %c0_166 = arith.constant 0 : index
    %c0_167 = arith.constant 0 : index
    %176 = vector.load %arg8[%c0_166, %c0_167] : memref<1x32xf32, #tpu.memory_space<vmem>>, vector<1x32xf32>
    %177 = vector.broadcast %176 : vector<1x32xf32> to vector<384x32xf32>
    %178 = arith.mulf %175, %177 : vector<384x32xf32>
    %c0_168 = arith.constant 0 : index
    %c0_169 = arith.constant 0 : index
    %179 = vector.load %arg9[%c0_168, %c0_169] : memref<1x32xf32, #tpu.memory_space<vmem>>, vector<1x32xf32>
    %180 = vector.broadcast %179 : vector<1x32xf32> to vector<384x32xf32>
    %181 = arith.addf %178, %180 : vector<384x32xf32>
    %cst_170 = arith.constant 0.000000e+00 : f32
    %182 = vector.broadcast %cst_170 : f32 to vector<384x32xf32>
    %183 = arith.maximumf %181, %182 : vector<384x32xf32>
    %184 = vector.broadcast %50 : vector<384x1xf32> to vector<384x32xf32>
    %185 = arith.mulf %183, %184 : vector<384x32xf32>
    %c32_171 = arith.constant 32 : index
    %c0_172 = arith.constant 0 : index
    %186 = vector.load %arg13[%c32_171, %c0_172] : memref<448x32xf32, #tpu.memory_space<vmem>>, vector<384x32xf32>
    tpu.vector_store %arg13[%c32_171, %c0_172], %185 {strides = array<i32>} : memref<448x32xf32, #tpu.memory_space<vmem>>, vector<384x32xf32>,
    %c7_173 = arith.constant 7 : index
    %c0_174 = arith.constant 0 : index
    %187 = vector.load %arg13[%c7_173, %c0_174] : memref<448x32xf32, #tpu.memory_space<vmem>>, vector<384x32xf32>
    %188 = arith.truncf %187 : vector<384x32xf32> to vector<384x32xbf16>
    %c0_175 = arith.constant 0 : index
    %c0_176 = arith.constant 0 : index
    %189 = vector.load %arg14[%c0_175, %c0_176] : memref<384x288xbf16, #tpu.memory_space<vmem>>, vector<384x32xbf16>
    tpu.vector_store %arg14[%c0_175, %c0_176], %188 {strides = array<i32>} : memref<384x288xbf16, #tpu.memory_space<vmem>>, vector<384x32xbf16>,
    %c8_177 = arith.constant 8 : index
    %c0_178 = arith.constant 0 : index
    %190 = vector.load %arg13[%c8_177, %c0_178] : memref<448x32xf32, #tpu.memory_space<vmem>>, vector<384x32xf32>
    %191 = arith.truncf %190 : vector<384x32xf32> to vector<384x32xbf16>
    %c0_179 = arith.constant 0 : index
    %c32_180 = arith.constant 32 : index
    %192 = vector.load %arg14[%c0_179, %c32_180] : memref<384x288xbf16, #tpu.memory_space<vmem>>, vector<384x32xbf16>
    tpu.vector_store %arg14[%c0_179, %c32_180], %191 {strides = array<i32>} : memref<384x288xbf16, #tpu.memory_space<vmem>>, vector<384x32xbf16>,
    %c9_181 = arith.constant 9 : index
    %c0_182 = arith.constant 0 : index
    %193 = vector.load %arg13[%c9_181, %c0_182] : memref<448x32xf32, #tpu.memory_space<vmem>>, vector<384x32xf32>
    %194 = arith.truncf %193 : vector<384x32xf32> to vector<384x32xbf16>
    %c0_183 = arith.constant 0 : index
    %c64_184 = arith.constant 64 : index
    %195 = vector.load %arg14[%c0_183, %c64_184] : memref<384x288xbf16, #tpu.memory_space<vmem>>, vector<384x32xbf16>
    tpu.vector_store %arg14[%c0_183, %c64_184], %194 {strides = array<i32>} : memref<384x288xbf16, #tpu.memory_space<vmem>>, vector<384x32xbf16>,
    %c31_185 = arith.constant 31 : index
    %c0_186 = arith.constant 0 : index
    %196 = vector.load %arg13[%c31_185, %c0_186] : memref<448x32xf32, #tpu.memory_space<vmem>>, vector<384x32xf32>
    %197 = arith.truncf %196 : vector<384x32xf32> to vector<384x32xbf16>
    %c0_187 = arith.constant 0 : index
    %c96_188 = arith.constant 96 : index
    %198 = vector.load %arg14[%c0_187, %c96_188] : memref<384x288xbf16, #tpu.memory_space<vmem>>, vector<384x32xbf16>
    tpu.vector_store %arg14[%c0_187, %c96_188], %197 {strides = array<i32>} : memref<384x288xbf16, #tpu.memory_space<vmem>>, vector<384x32xbf16>,
    %c32_189 = arith.constant 32 : index
    %c0_190 = arith.constant 0 : index
    %199 = vector.load %arg13[%c32_189, %c0_190] : memref<448x32xf32, #tpu.memory_space<vmem>>, vector<384x32xf32>
    %200 = arith.truncf %199 : vector<384x32xf32> to vector<384x32xbf16>
    %c0_191 = arith.constant 0 : index
    %c128_192 = arith.constant 128 : index
    %201 = vector.load %arg14[%c0_191, %c128_192] : memref<384x288xbf16, #tpu.memory_space<vmem>>, vector<384x32xbf16>
    tpu.vector_store %arg14[%c0_191, %c128_192], %200 {strides = array<i32>} : memref<384x288xbf16, #tpu.memory_space<vmem>>, vector<384x32xbf16>,
    %c33_193 = arith.constant 33 : index
    %c0_194 = arith.constant 0 : index
    %202 = vector.load %arg13[%c33_193, %c0_194] : memref<448x32xf32, #tpu.memory_space<vmem>>, vector<384x32xf32>
    %203 = arith.truncf %202 : vector<384x32xf32> to vector<384x32xbf16>
    %c0_195 = arith.constant 0 : index
    %c160_196 = arith.constant 160 : index
    %204 = vector.load %arg14[%c0_195, %c160_196] : memref<384x288xbf16, #tpu.memory_space<vmem>>, vector<384x32xbf16>
    tpu.vector_store %arg14[%c0_195, %c160_196], %203 {strides = array<i32>} : memref<384x288xbf16, #tpu.memory_space<vmem>>, vector<384x32xbf16>,
    %c55_197 = arith.constant 55 : index
    %c0_198 = arith.constant 0 : index
    %205 = vector.load %arg13[%c55_197, %c0_198] : memref<448x32xf32, #tpu.memory_space<vmem>>, vector<384x32xf32>
    %206 = arith.truncf %205 : vector<384x32xf32> to vector<384x32xbf16>
    %c0_199 = arith.constant 0 : index
    %c192_200 = arith.constant 192 : index
    %207 = vector.load %arg14[%c0_199, %c192_200] : memref<384x288xbf16, #tpu.memory_space<vmem>>, vector<384x32xbf16>
    tpu.vector_store %arg14[%c0_199, %c192_200], %206 {strides = array<i32>} : memref<384x288xbf16, #tpu.memory_space<vmem>>, vector<384x32xbf16>,
    %c56_201 = arith.constant 56 : index
    %c0_202 = arith.constant 0 : index
    %208 = vector.load %arg13[%c56_201, %c0_202] : memref<448x32xf32, #tpu.memory_space<vmem>>, vector<384x32xf32>
    %209 = arith.truncf %208 : vector<384x32xf32> to vector<384x32xbf16>
    %c0_203 = arith.constant 0 : index
    %c224_204 = arith.constant 224 : index
    %210 = vector.load %arg14[%c0_203, %c224_204] : memref<384x288xbf16, #tpu.memory_space<vmem>>, vector<384x32xbf16>
    tpu.vector_store %arg14[%c0_203, %c224_204], %209 {strides = array<i32>} : memref<384x288xbf16, #tpu.memory_space<vmem>>, vector<384x32xbf16>,
    %c57_205 = arith.constant 57 : index
    %c0_206 = arith.constant 0 : index
    %211 = vector.load %arg13[%c57_205, %c0_206] : memref<448x32xf32, #tpu.memory_space<vmem>>, vector<384x32xf32>
    %212 = arith.truncf %211 : vector<384x32xf32> to vector<384x32xbf16>
    %c0_207 = arith.constant 0 : index
    %c256_208 = arith.constant 256 : index
    %213 = vector.load %arg14[%c0_207, %c256_208] : memref<384x288xbf16, #tpu.memory_space<vmem>>, vector<384x32xbf16>
    tpu.vector_store %arg14[%c0_207, %c256_208], %212 {strides = array<i32>} : memref<384x288xbf16, #tpu.memory_space<vmem>>, vector<384x32xbf16>,
    %c0_209 = arith.constant 0 : index
    %c0_210 = arith.constant 0 : index
    %214 = vector.load %arg14[%c0_209, %c0_210] : memref<384x288xbf16, #tpu.memory_space<vmem>>, vector<384x288xbf16>
    %c0_211 = arith.constant 0 : index
    %c0_212 = arith.constant 0 : index
    %215 = vector.load %arg10[%c0_211, %c0_212] : memref<288x128xbf16, #tpu.memory_space<vmem>>, vector<288x128xbf16>
    %cst_213 = arith.constant dense<0.000000e+00> : vector<384x128xf32>
    %216 = tpu.matmul %214, %215, %cst_213 {dimension_numbers = #tpu.dot_dimension_numbers<[1], [0], [0], [1], [0, 0, 1, 1], [], []>} : vector<384x288xbf16>, vector<288x128xbf16>, vector<384x128xf32> -> vector<384x128xf32>
    %c0_214 = arith.constant 0 : index
    %c0_215 = arith.constant 0 : index
    %217 = vector.load %arg11[%c0_214, %c0_215] : memref<1x128xf32, #tpu.memory_space<vmem>>, vector<1x128xf32>
    %218 = vector.broadcast %217 : vector<1x128xf32> to vector<384x128xf32>
    %219 = arith.addf %216, %218 : vector<384x128xf32>
    %220 = vector.shape_cast %219 : vector<384x128xf32> to vector<16x24x128xf32>
    %221 = vector.extract_strided_slice %220 {offsets = [0, 0, 0], sizes = [16, 16, 128], strides = [1, 1, 1]} : vector<16x24x128xf32> to vector<16x16x128xf32>
    %c0_216 = arith.constant 0 : index
    %c0_217 = arith.constant 0 : index
    %c0_218 = arith.constant 0 : index
    %c0_219 = arith.constant 0 : index
    %222 = vector.load %arg12[%c0_216, %c0_217, %c0_218, %c0_219] : memref<1x16x16x128xf32, #tpu.memory_space<vmem>>, vector<1x16x16x128xf32>
    %223 = vector.shape_cast %222 : vector<1x16x16x128xf32> to vector<16x16x128xf32>
    %224 = vector.shape_cast %221 : vector<16x16x128xf32> to vector<1x16x16x128xf32>
    tpu.vector_store %arg12[%c0_216, %c0_217, %c0_218, %c0_219], %224 {strides = array<i32>} : memref<1x16x16x128xf32, #tpu.memory_space<vmem>>, vector<1x16x16x128xf32>,
    return
  }
  func.func @transform_0(%arg0: i32) -> (i32, i32, i32, i32) {
    %c0_i32 = arith.constant 0 : i32
    %c0_i32_0 = arith.constant 0 : i32
    %c0_i32_1 = arith.constant 0 : i32
    %c0_i32_2 = arith.constant 0 : i32
    return %arg0, %c0_i32, %c0_i32_0, %c0_i32_1 : i32, i32, i32, i32
  }
  func.func @transform_1(%arg0: i32) -> (i32, i32) {
    %c0_i32 = arith.constant 0 : i32
    %c0_i32_0 = arith.constant 0 : i32
    %c0_i32_1 = arith.constant 0 : i32
    return %c0_i32, %c0_i32_0 : i32, i32
  }
  func.func @transform_2(%arg0: i32) -> (i32, i32) {
    %c0_i32 = arith.constant 0 : i32
    %c0_i32_0 = arith.constant 0 : i32
    %c0_i32_1 = arith.constant 0 : i32
    return %c0_i32, %c0_i32_0 : i32, i32
  }
  func.func @transform_3(%arg0: i32) -> (i32, i32) {
    %c0_i32 = arith.constant 0 : i32
    %c0_i32_0 = arith.constant 0 : i32
    %c0_i32_1 = arith.constant 0 : i32
    return %c0_i32, %c0_i32_0 : i32, i32
  }
  func.func @transform_4(%arg0: i32) -> (i32, i32) {
    %c0_i32 = arith.constant 0 : i32
    %c0_i32_0 = arith.constant 0 : i32
    %c0_i32_1 = arith.constant 0 : i32
    return %c0_i32, %c0_i32_0 : i32, i32
  }
  func.func @transform_5(%arg0: i32) -> (i32, i32) {
    %c0_i32 = arith.constant 0 : i32
    %c0_i32_0 = arith.constant 0 : i32
    %c0_i32_1 = arith.constant 0 : i32
    return %c0_i32, %c0_i32_0 : i32, i32
  }
  func.func @transform_6(%arg0: i32) -> (i32, i32) {
    %c0_i32 = arith.constant 0 : i32
    %c0_i32_0 = arith.constant 0 : i32
    %c0_i32_1 = arith.constant 0 : i32
    return %c0_i32, %c0_i32_0 : i32, i32
  }
  func.func @transform_7(%arg0: i32) -> (i32, i32) {
    %c0_i32 = arith.constant 0 : i32
    %c0_i32_0 = arith.constant 0 : i32
    %c0_i32_1 = arith.constant 0 : i32
    return %c0_i32, %c0_i32_0 : i32, i32
  }
  func.func @transform_8(%arg0: i32) -> (i32, i32) {
    %c0_i32 = arith.constant 0 : i32
    %c0_i32_0 = arith.constant 0 : i32
    %c0_i32_1 = arith.constant 0 : i32
    return %c0_i32, %c0_i32_0 : i32, i32
  }
  func.func @transform_9(%arg0: i32) -> (i32, i32) {
    %c0_i32 = arith.constant 0 : i32
    %c0_i32_0 = arith.constant 0 : i32
    %c0_i32_1 = arith.constant 0 : i32
    return %c0_i32, %c0_i32_0 : i32, i32
  }
  func.func @transform_10(%arg0: i32) -> (i32, i32) {
    %c0_i32 = arith.constant 0 : i32
    %c0_i32_0 = arith.constant 0 : i32
    %c0_i32_1 = arith.constant 0 : i32
    return %c0_i32, %c0_i32_0 : i32, i32
  }
  func.func @transform_11(%arg0: i32) -> (i32, i32, i32, i32) {
    %c0_i32 = arith.constant 0 : i32
    %c0_i32_0 = arith.constant 0 : i32
    %c0_i32_1 = arith.constant 0 : i32
    %c0_i32_2 = arith.constant 0 : i32
    return %arg0, %c0_i32, %c0_i32_0, %c0_i32_1 : i32, i32, i32, i32
  }
}

</mosaic_0001>

<llo_original>
// kernel: tpu_custom_call.1
$region0: #{tpu_custom_call.1}
  #allocation0 [shape = 'u32[]', space=smem, size = 0x4, offset = 0x4, fixed_abs, tag = 'smem constant byte address 0x4 - core index']
  #allocation1 [shape = 'u32[144,128]{1,0:T(1,128)}', space=vmem, size = 0x12000, scoped, tag = 'internal scratch']
  #allocation2 [shape = 'f32[448,32]{1,0:T(8,128)}', space=vmem, size = 0x38000, scoped, tag = 'scratch operand']
  #allocation3 [shape = 'bf16[384,288]{1,0:T(16,128)(2,1)}', space=vmem, size = 0x48000, scoped, tag = 'scratch operand']
  %s0 = inlined_call_operand.vmem [shape: f32[2,16,16,32], index: 0, kind: input, shape index: {}]
  %s1 = inlined_call_operand.vmem [shape: f32[384,1], index: 1, kind: input, shape index: {}]
  %s2 = inlined_call_operand.vmem [shape: f32[32,32], index: 2, kind: input, shape index: {}]
  %s3 = inlined_call_operand.vmem [shape: bf16[288,32], index: 3, kind: input, shape index: {}]
  %s4 = inlined_call_operand.vmem [shape: f32[1,32], index: 4, kind: input, shape index: {}]
  %s5 = inlined_call_operand.vmem [shape: f32[1,32], index: 5, kind: input, shape index: {}]
  %s6 = inlined_call_operand.vmem [shape: bf16[288,32], index: 6, kind: input, shape index: {}]
  %s7 = inlined_call_operand.vmem [shape: f32[1,32], index: 7, kind: input, shape index: {}]
  %s8 = inlined_call_operand.vmem [shape: f32[1,32], index: 8, kind: input, shape index: {}]
  %s9 = inlined_call_operand.vmem [shape: bf16[288,128], index: 9, kind: input, shape index: {}]
  %s10 = inlined_call_operand.vmem [shape: f32[1,128], index: 10, kind: input, shape index: {}]
  %s11 = inlined_call_operand.hbm [shape: f32[2,16,16,128], index: 11, kind: output, shape index: {}]
  %s12 = sld [smem:[#allocation0]]
  $region77: #{tpu_custom_call.1} parent=0
    _
  %s14 = ssub.s32 1, %s12
  %s15 = scalar_select 0, %s14, %s12
  $region1: #{tpu_custom_call.1} parent=0
    #allocation4 [shape = 'u8[262144]{0}', space=vmem, size = 0x40000, scoped, tag = 'output window, operand 0']
    #allocation5 [shape = 's32[2]{0}', space=sflag, size = 0x8, scoped, tag = 'scoped memory for tpu_custom_call.1']
    %16 = vsyncpa [#allocation5], 0
    %s17 = scalar_lea.sflag [#allocation5], 1
    %18 = vsyncpa %s17, 0
    loop: start=0, step=1, limit=4
    $region2: #{tpu_custom_call.1} parent=1 // loop_pre_header
      _
    $region3: #{tpu_custom_call.1} parent=1 // loop_header
      %s20 = sphi 0, %s24
      %p21 = scmp.ge.s32.totalorder %s20, 4
      %s30 = sphi 0, %s32
      %s33 = sphi 0, %s30
      %s34 = sphi 0, %s33
      %s50 = sphi 0, %s34
      %s54 = sphi 0, %s54
      %s56 = sphi 0, %s54
      %s57 = sphi 0, %s56
      %s71 = sphi 0, %s57
      %s75 = sphi 0, %s75
      %s77 = sphi 0, %s75
      %s78 = sphi 0, %s77
      %s92 = sphi 0, %s78
      %s96 = sphi 0, %s96
      %s98 = sphi 0, %s96
      %s99 = sphi 0, %s98
      %s113 = sphi 0, %s99
      %s117 = sphi 0, %s117
      %s119 = sphi 0, %s117
      %s120 = sphi 0, %s119
      %s134 = sphi 0, %s120
      %s138 = sphi 0, %s138
      %s140 = sphi 0, %s138
      %s141 = sphi 0, %s140
      %s155 = sphi 0, %s141
      %s159 = sphi 0, %s159
      %s161 = sphi 0, %s159
      %s162 = sphi 0, %s161
      %s176 = sphi 0, %s162
      %s180 = sphi 0, %s180
      %s182 = sphi 0, %s180
      %s183 = sphi 0, %s182
      %s197 = sphi 0, %s183
      %s201 = sphi 0, %s201
      %s203 = sphi 0, %s201
      %s204 = sphi 0, %s203
      %s218 = sphi 0, %s204
      %s222 = sphi 0, %s222
      %s224 = sphi 0, %s222
      %s225 = sphi 0, %s224
      %s239 = sphi 0, %s225
      %s243 = sphi 0, %s243
      %s245 = sphi 0, %s243
      %s246 = sphi 0, %s245
      %s260 = sphi 0, %s246
      %s266 = sphi 0, %s268
      %s269 = sphi 0, %s266
      %s270 = sphi 0, %s269
      %s286 = sphi 0, %s270
    $region4: #{tpu_custom_call.1} parent=1 // loop_header_branch
      %23 = sbr.rel (%p21) target = $region8
    $region5: #{tpu_custom_call.1} parent=1 // loop_body
      %s25 = ssub.s32 %s20, 1
      %s26 = ssub.s32 %s20, 2
      %s27 = sadd.s32 %s20, 1
      %s28 = ssub.s32 %s20, %s27
      %p29 = scmp.eq.s32.totalorder %s28, 0
      %s31 = sadd.s32 %s30, 1
      %s32 = scalar_select %p29, %s30, %s31
      %p35 = pneg %p29
      %p36 = scmp.eq.s32.totalorder %s20, 1
      %p37 = por %p35, %p36
      %p38 = scmp.ne.s32.totalorder %s30, %s33
      %p39 = scmp.eq.s32.totalorder %s20, 0
      %p40 = por %p38, %p39
      %p41 = scmp.ne.s32.totalorder %s30, %s33
      %p42 = scmp.eq.s32.totalorder %s25, 1
      %p43 = por %p41, %p42
      %p44 = scmp.ne.s32.totalorder %s33, %s34
      %p45 = scmp.eq.s32.totalorder %s25, 0
      %p46 = por %p44, %p45
      %p47 = scmp.ne.s32.totalorder %s33, %s34
      %p48 = scmp.eq.s32.totalorder %s26, 1
      %p49 = por %p47, %p48
      %p51 = scmp.ne.s32.totalorder %s34, %s50
      %p52 = scmp.eq.s32.totalorder %s26, 0
      %p53 = por %p51, %p52
      %s55 = sadd.s32 %s54, 1
      %p58 = scmp.eq.s32.totalorder %s20, 1
      %p59 = scmp.ne.s32.totalorder %s54, %s56
      %p60 = scmp.eq.s32.totalorder %s20, 0
      %p61 = por %p59, %p60
      %p62 = scmp.ne.s32.totalorder %s54, %s56
      %p63 = scmp.eq.s32.totalorder %s25, 1
      %p64 = por %p62, %p63
      %p65 = scmp.ne.s32.totalorder %s56, %s57
      %p66 = scmp.eq.s32.totalorder %s25, 0
      %p67 = por %p65, %p66
      %p68 = scmp.ne.s32.totalorder %s56, %s57
      %p69 = scmp.eq.s32.totalorder %s26, 1
      %p70 = por %p68, %p69
      %p72 = scmp.ne.s32.totalorder %s57, %s71
      %p73 = scmp.eq.s32.totalorder %s26, 0
      %p74 = por %p72, %p73
      %s76 = sadd.s32 %s75, 1
      %p79 = scmp.eq.s32.totalorder %s20, 1
      %p80 = scmp.ne.s32.totalorder %s75, %s77
      %p81 = scmp.eq.s32.totalorder %s20, 0
      %p82 = por %p80, %p81
      %p83 = scmp.ne.s32.totalorder %s75, %s77
      %p84 = scmp.eq.s32.totalorder %s25, 1
      %p85 = por %p83, %p84
      %p86 = scmp.ne.s32.totalorder %s77, %s78
      %p87 = scmp.eq.s32.totalorder %s25, 0
      %p88 = por %p86, %p87
      %p89 = scmp.ne.s32.totalorder %s77, %s78
      %p90 = scmp.eq.s32.totalorder %s26, 1
      %p91 = por %p89, %p90
      %p93 = scmp.ne.s32.totalorder %s78, %s92
      %p94 = scmp.eq.s32.totalorder %s26, 0
      %p95 = por %p93, %p94
      %s97 = sadd.s32 %s96, 1
      %p100 = scmp.eq.s32.totalorder %s20, 1
      %p101 = scmp.ne.s32.totalorder %s96, %s98
      %p102 = scmp.eq.s32.totalorder %s20, 0
      %p103 = por %p101, %p102
      %p104 = scmp.ne.s32.totalorder %s96, %s98
      %p105 = scmp.eq.s32.totalorder %s25, 1
      %p106 = por %p104, %p105
      %p107 = scmp.ne.s32.totalorder %s98, %s99
      %p108 = scmp.eq.s32.totalorder %s25, 0
      %p109 = por %p107, %p108
      %p110 = scmp.ne.s32.totalorder %s98, %s99
      %p111 = scmp.eq.s32.totalorder %s26, 1
      %p112 = por %p110, %p111
      %p114 = scmp.ne.s32.totalorder %s99, %s113
      %p115 = scmp.eq.s32.totalorder %s26, 0
      %p116 = por %p114, %p115
      %s118 = sadd.s32 %s117, 1
      %p121 = scmp.eq.s32.totalorder %s20, 1
      %p122 = scmp.ne.s32.totalorder %s117, %s119
      %p123 = scmp.eq.s32.totalorder %s20, 0
      %p124 = por %p122, %p123
      %p125 = scmp.ne.s32.totalorder %s117, %s119
      %p126 = scmp.eq.s32.totalorder %s25, 1
      %p127 = por %p125, %p126
      %p128 = scmp.ne.s32.totalorder %s119, %s120
      %p129 = scmp.eq.s32.totalorder %s25, 0
      %p130 = por %p128, %p129
      %p131 = scmp.ne.s32.totalorder %s119, %s120
      %p132 = scmp.eq.s32.totalorder %s26, 1
      %p133 = por %p131, %p132
      %p135 = scmp.ne.s32.totalorder %s120, %s134
      %p136 = scmp.eq.s32.totalorder %s26, 0
      %p137 = por %p135, %p136
      %s139 = sadd.s32 %s138, 1
      %p142 = scmp.eq.s32.totalorder %s20, 1
      %p143 = scmp.ne.s32.totalorder %s138, %s140
      %p144 = scmp.eq.s32.totalorder %s20, 0
      %p145 = por %p143, %p144
      %p146 = scmp.ne.s32.totalorder %s138, %s140
      %p147 = scmp.eq.s32.totalorder %s25, 1
      %p148 = por %p146, %p147
      %p149 = scmp.ne.s32.totalorder %s140, %s141
      %p150 = scmp.eq.s32.totalorder %s25, 0
      %p151 = por %p149, %p150
      %p152 = scmp.ne.s32.totalorder %s140, %s141
      %p153 = scmp.eq.s32.totalorder %s26, 1
      %p154 = por %p152, %p153
      %p156 = scmp.ne.s32.totalorder %s141, %s155
      %p157 = scmp.eq.s32.totalorder %s26, 0
      %p158 = por %p156, %p157
      %s160 = sadd.s32 %s159, 1
      %p163 = scmp.eq.s32.totalorder %s20, 1
      %p164 = scmp.ne.s32.totalorder %s159, %s161
      %p165 = scmp.eq.s32.totalorder %s20, 0
      %p166 = por %p164, %p165
      %p167 = scmp.ne.s32.totalorder %s159, %s161
      %p168 = scmp.eq.s32.totalorder %s25, 1
      %p169 = por %p167, %p168
      %p170 = scmp.ne.s32.totalorder %s161, %s162
      %p171 = scmp.eq.s32.totalorder %s25, 0
      %p172 = por %p170, %p171
      %p173 = scmp.ne.s32.totalorder %s161, %s162
      %p174 = scmp.eq.s32.totalorder %s26, 1
      %p175 = por %p173, %p174
      %p177 = scmp.ne.s32.totalorder %s162, %s176
      %p178 = scmp.eq.s32.totalorder %s26, 0
      %p179 = por %p177, %p178
      %s181 = sadd.s32 %s180, 1
      %p184 = scmp.eq.s32.totalorder %s20, 1
      %p185 = scmp.ne.s32.totalorder %s180, %s182
      %p186 = scmp.eq.s32.totalorder %s20, 0
      %p187 = por %p185, %p186
      %p188 = scmp.ne.s32.totalorder %s180, %s182
      %p189 = scmp.eq.s32.totalorder %s25, 1
      %p190 = por %p188, %p189
      %p191 = scmp.ne.s32.totalorder %s182, %s183
      %p192 = scmp.eq.s32.totalorder %s25, 0
      %p193 = por %p191, %p192
      %p194 = scmp.ne.s32.totalorder %s182, %s183
      %p195 = scmp.eq.s32.totalorder %s26, 1
      %p196 = por %p194, %p195
      %p198 = scmp.ne.s32.totalorder %s183, %s197
      %p199 = scmp.eq.s32.totalorder %s26, 0
      %p200 = por %p198, %p199
      %s202 = sadd.s32 %s201, 1
      %p205 = scmp.eq.s32.totalorder %s20, 1
      %p206 = scmp.ne.s32.totalorder %s201, %s203
      %p207 = scmp.eq.s32.totalorder %s20, 0
      %p208 = por %p206, %p207
      %p209 = scmp.ne.s32.totalorder %s201, %s203
      %p210 = scmp.eq.s32.totalorder %s25, 1
      %p211 = por %p209, %p210
      %p212 = scmp.ne.s32.totalorder %s203, %s204
      %p213 = scmp.eq.s32.totalorder %s25, 0
      %p214 = por %p212, %p213
      %p215 = scmp.ne.s32.totalorder %s203, %s204
      %p216 = scmp.eq.s32.totalorder %s26, 1
      %p217 = por %p215, %p216
      %p219 = scmp.ne.s32.totalorder %s204, %s218
      %p220 = scmp.eq.s32.totalorder %s26, 0
      %p221 = por %p219, %p220
      %s223 = sadd.s32 %s222, 1
      %p226 = scmp.eq.s32.totalorder %s20, 1
      %p227 = scmp.ne.s32.totalorder %s222, %s224
      %p228 = scmp.eq.s32.totalorder %s20, 0
      %p229 = por %p227, %p228
      %p230 = scmp.ne.s32.totalorder %s222, %s224
      %p231 = scmp.eq.s32.totalorder %s25, 1
      %p232 = por %p230, %p231
      %p233 = scmp.ne.s32.totalorder %s224, %s225
      %p234 = scmp.eq.s32.totalorder %s25, 0
      %p235 = por %p233, %p234
      %p236 = scmp.ne.s32.totalorder %s224, %s225
      %p237 = scmp.eq.s32.totalorder %s26, 1
      %p238 = por %p236, %p237
      %p240 = scmp.ne.s32.totalorder %s225, %s239
      %p241 = scmp.eq.s32.totalorder %s26, 0
      %p242 = por %p240, %p241
      %s244 = sadd.s32 %s243, 1
      %p247 = scmp.eq.s32.totalorder %s20, 1
      %p248 = scmp.ne.s32.totalorder %s243, %s245
      %p249 = scmp.eq.s32.totalorder %s20, 0
      %p250 = por %p248, %p249
      %p251 = scmp.ne.s32.totalorder %s243, %s245
      %p252 = scmp.eq.s32.totalorder %s25, 1
      %p253 = por %p251, %p252
      %p254 = scmp.ne.s32.totalorder %s245, %s246
      %p255 = scmp.eq.s32.totalorder %s25, 0
      %p256 = por %p254, %p255
      %p257 = scmp.ne.s32.totalorder %s245, %s246
      %p258 = scmp.eq.s32.totalorder %s26, 1
      %p259 = por %p257, %p258
      %p261 = scmp.ne.s32.totalorder %s246, %s260
      %p262 = scmp.eq.s32.totalorder %s26, 0
      %p263 = por %p261, %p262
      %s264 = ssub.s32 %s20, %s27
      %p265 = scmp.eq.s32.totalorder %s264, 0
      %s267 = sadd.s32 %s266, 1
      %s268 = scalar_select %p265, %s266, %s267
      %p271 = pneg %p265
      %p272 = scmp.eq.s32.totalorder %s20, 1
      %p273 = por %p271, %p272
      %p274 = scmp.ne.s32.totalorder %s266, %s269
      %p275 = scmp.eq.s32.totalorder %s20, 0
      %p276 = por %p274, %p275
      %p277 = scmp.ne.s32.totalorder %s266, %s269
      %p278 = scmp.eq.s32.totalorder %s25, 1
      %p279 = por %p277, %p278
      %p280 = scmp.ne.s32.totalorder %s269, %s270
      %p281 = scmp.eq.s32.totalorder %s25, 0
      %p282 = por %p280, %p281
      %p283 = scmp.ne.s32.totalorder %s269, %s270
      %p284 = scmp.eq.s32.totalorder %s26, 1
      %p285 = por %p283, %p284
      %p287 = scmp.ne.s32.totalorder %s270, %s286
      %p288 = scmp.eq.s32.totalorder %s26, 0
      %p289 = por %p287, %p288
      %p290 = scmp.le.s32.totalorder 1, %s20
      %p291 = scmp.lt.s32.totalorder %s20, 3
      %p292 = pnand %p290, %p291
      %p293 = pneg %p292
      // Predicated region
      $region9: #{tpu_custom_call.1} parent=5 // pred_check
        _
      $region10: #{tpu_custom_call.1} parent=5 // pred_check_branch
        %295 = sbr.rel (%p292) target = $region12
      $region11: #{tpu_custom_call.1} parent=5 // pred_region
        %s296 = ssub.s32 %s20, 1
        // Predicated region
        $region13: #{tpu_custom_call.1} parent=11 // pred_check
          %p297 = pneg %p67
        $region14: #{tpu_custom_call.1} parent=11 // pred_check_branch
          %299 = sbr.rel (%p297) target = $region16
        $region15: #{tpu_custom_call.1} parent=11 // pred_region
          _
        $region16: #{tpu_custom_call.1} parent=11 // pred_fallthru
          _
        // Predicated region
        $region17: #{tpu_custom_call.1} parent=11 // pred_check
          %p300 = pneg %p88
        $region18: #{tpu_custom_call.1} parent=11 // pred_check_branch
          %302 = sbr.rel (%p300) target = $region20
        $region19: #{tpu_custom_call.1} parent=11 // pred_region
          _
        $region20: #{tpu_custom_call.1} parent=11 // pred_fallthru
          _
        // Predicated region
        $region21: #{tpu_custom_call.1} parent=11 // pred_check
          %p303 = pneg %p109
        $region22: #{tpu_custom_call.1} parent=11 // pred_check_branch
          %305 = sbr.rel (%p303) target = $region24
        $region23: #{tpu_custom_call.1} parent=11 // pred_region
          _
        $region24: #{tpu_custom_call.1} parent=11 // pred_fallthru
          _
        // Predicated region
        $region25: #{tpu_custom_call.1} parent=11 // pred_check
          %p306 = pneg %p130
        $region26: #{tpu_custom_call.1} parent=11 // pred_check_branch
          %308 = sbr.rel (%p306) target = $region28
        $region27: #{tpu_custom_call.1} parent=11 // pred_region
          _
        $region28: #{tpu_custom_call.1} parent=11 // pred_fallthru
          _
        // Predicated region
        $region29: #{tpu_custom_call.1} parent=11 // pred_check
          %p309 = pneg %p151
        $region30: #{tpu_custom_call.1} parent=11 // pred_check_branch
          %311 = sbr.rel (%p309) target = $region32
        $region31: #{tpu_custom_call.1} parent=11 // pred_region
          _
        $region32: #{tpu_custom_call.1} parent=11 // pred_fallthru
          _
        // Predicated region
        $region33: #{tpu_custom_call.1} parent=11 // pred_check
          %p312 = pneg %p172
        $region34: #{tpu_custom_call.1} parent=11 // pred_check_branch
          %314 = sbr.rel (%p312) target = $region36
        $region35: #{tpu_custom_call.1} parent=11 // pred_region
          _
        $region36: #{tpu_custom_call.1} parent=11 // pred_fallthru
          _
        // Predicated region
        $region37: #{tpu_custom_call.1} parent=11 // pred_check
          %p315 = pneg %p193
        $region38: #{tpu_custom_call.1} parent=11 // pred_check_branch
          %317 = sbr.rel (%p315) target = $region40
        $region39: #{tpu_custom_call.1} parent=11 // pred_region
          _
        $region40: #{tpu_custom_call.1} parent=11 // pred_fallthru
          _
        // Predicated region
        $region41: #{tpu_custom_call.1} parent=11 // pred_check
          %p318 = pneg %p214
        $region42: #{tpu_custom_call.1} parent=11 // pred_check_branch
          %320 = sbr.rel (%p318) target = $region44
        $region43: #{tpu_custom_call.1} parent=11 // pred_region
          _
        $region44: #{tpu_custom_call.1} parent=11 // pred_fallthru
          _
        // Predicated region
        $region45: #{tpu_custom_call.1} parent=11 // pred_check
          %p321 = pneg %p235
        $region46: #{tpu_custom_call.1} parent=11 // pred_check_branch
          %323 = sbr.rel (%p321) target = $region48
        $region47: #{tpu_custom_call.1} parent=11 // pred_region
          _
        $region48: #{tpu_custom_call.1} parent=11 // pred_fallthru
          _
        // Predicated region
        $region49: #{tpu_custom_call.1} parent=11 // pred_check
          %p324 = pneg %p256
        $region50: #{tpu_custom_call.1} parent=11 // pred_check_branch
          %326 = sbr.rel (%p324) target = $region52
        $region51: #{tpu_custom_call.1} parent=11 // pred_region
          _
        $region52: #{tpu_custom_call.1} parent=11 // pred_fallthru
          _
      $region12: #{tpu_custom_call.1} parent=5 // pred_fallthru
        _
      %p327 = scmp.lt.s32.totalorder %s20, 2
      // Predicated region
      $region53: #{tpu_custom_call.1} parent=5 // pred_check
        %p328 = pneg %p327
      $region54: #{tpu_custom_call.1} parent=5 // pred_check_branch
        %330 = sbr.rel (%p328) target = $region56
      $region55: #{tpu_custom_call.1} parent=5 // pred_region
        // Predicated region
        $region57: #{tpu_custom_call.1} parent=55 // pred_check
          %p331 = pneg %p40
        $region58: #{tpu_custom_call.1} parent=55 // pred_check_branch
          %333 = sbr.rel (%p331) target = $region60
        $region59: #{tpu_custom_call.1} parent=55 // pred_region
          %p334 = scmp.lt.s32.totalorder %s20, 1
          %s335 = scalar_select %p334, %s20, 1
          %s336 = smul.addr %s335, 32
          %s337 = smul.addr %s336, 8
          %s338 = scalar_lea.vmem %s0, %s337
        $region60: #{tpu_custom_call.1} parent=55 // pred_fallthru
          _
      $region56: #{tpu_custom_call.1} parent=5 // pred_fallthru
        _
      %p339 = scmp.le.s32.totalorder 1, %s20
      %p340 = scmp.lt.s32.totalorder %s20, 3
      %p341 = pnand %p339, %p340
      %p342 = pneg %p341
      // Predicated region
      $region61: #{tpu_custom_call.1} parent=5 // pred_check
        _
      $region62: #{tpu_custom_call.1} parent=5 // pred_check_branch
        %344 = sbr.rel (%p341) target = $region64
      $region63: #{tpu_custom_call.1} parent=5 // pred_region
        %s345 = ssub.s32 %s20, 1
        %p346 = scmp.lt.s32.totalorder %s25, 1
        %s347 = scalar_select %p346, %s25, 1
        %s348 = smul.addr %s347, 32
        %s349 = smul.addr %s348, 8
        %s350 = scalar_lea.vmem %s0, %s349
        %p351 = pneg %p46
        %p352 = pneg %p43
        %p353 = pneg %p67
        %p354 = pneg %p64
        %p355 = pneg %p88
        %p356 = pneg %p85
        %p357 = pneg %p109
        %p358 = pneg %p106
        %p359 = pneg %p130
        %p360 = pneg %p127
        %p361 = pneg %p151
        %p362 = pneg %p148
        %p363 = pneg %p172
        %p364 = pneg %p169
        %p365 = pneg %p193
        %p366 = pneg %p190
        %p367 = pneg %p214
        %p368 = pneg %p211
        %p369 = pneg %p235
        %p370 = pneg %p232
        %p371 = pneg %p256
        %p372 = pneg %p253
        %p373 = pneg %p282
        %p374 = pneg %p279
        %s375 = sand.u32 %s269, 1
        %s376 = scalar_lea.sflag [#allocation5], %s375
        %s377 = sand.u32 %s269, 1
        %s378 = smul.addr %s377, 256
        %s379 = scalar_lea.vmem [#allocation4], %s378
        %p380 = scmp.lt.s32.totalorder %s25, 1
        %s381 = scalar_select %p380, %s25, 1
        %s382 = smul.addr %s381, 32
        %s383 = smul.addr %s382, 8
        %s384 = scalar_lea.vmem %s0, %s383
        %vm386 = vcmask 261120
        %387 = vst.msk [vmem:[#allocation2] sm:$0xff] %vm386, 0.0
        %388 = vst.msk [vmem:[#allocation2 + $0x8] sm:$0xff] %vm386, 0.0
        %389 = vst.msk [vmem:[#allocation2 + $0x10] sm:$0xff] %vm386, 0.0
        %390 = vst.msk [vmem:[#allocation2 + $0x18] sm:$0xff] %vm386, 0.0
        %391 = vst.msk [vmem:[#allocation2 + $0x20] sm:$0xff] %vm386, 0.0
        %392 = vst.msk [vmem:[#allocation2 + $0x28] sm:$0xff] %vm386, 0.0
        %393 = vst.msk [vmem:[#allocation2 + $0x30] sm:$0xff] %vm386, 0.0
        %394 = vst.msk [vmem:[#allocation2 + $0x38] sm:$0xff] %vm386, 0.0
        %395 = vst.msk [vmem:[#allocation2 + $0x40] sm:$0xff] %vm386, 0.0
        %396 = vst.msk [vmem:[#allocation2 + $0x48] sm:$0xff] %vm386, 0.0
        %397 = vst.msk [vmem:[#allocation2 + $0x50] sm:$0xff] %vm386, 0.0
        %398 = vst.msk [vmem:[#allocation2 + $0x58] sm:$0xff] %vm386, 0.0
        %399 = vst.msk [vmem:[#allocation2 + $0x60] sm:$0xff] %vm386, 0.0
        %400 = vst.msk [vmem:[#allocation2 + $0x68] sm:$0xff] %vm386, 0.0
        %401 = vst.msk [vmem:[#allocation2 + $0x70] sm:$0xff] %vm386, 0.0
        %402 = vst.msk [vmem:[#allocation2 + $0x78] sm:$0xff] %vm386, 0.0
        %403 = vst.msk [vmem:[#allocation2 + $0x80] sm:$0xff] %vm386, 0.0
        %404 = vst.msk [vmem:[#allocation2 + $0x88] sm:$0xff] %vm386, 0.0
        %405 = vst.msk [vmem:[#allocation2 + $0x90] sm:$0xff] %vm386, 0.0
        %406 = vst.msk [vmem:[#allocation2 + $0x98] sm:$0xff] %vm386, 0.0
        %407 = vst.msk [vmem:[#allocation2 + $0xa0] sm:$0xff] %vm386, 0.0
        %408 = vst.msk [vmem:[#allocation2 + $0xa8] sm:$0xff] %vm386, 0.0
        %409 = vst.msk [vmem:[#allocation2 + $0xb0] sm:$0xff] %vm386, 0.0
        %410 = vst.msk [vmem:[#allocation2 + $0xb8] sm:$0xff] %vm386, 0.0
        %411 = vst.msk [vmem:[#allocation2 + $0xc0] sm:$0xff] %vm386, 0.0
        %412 = vst.msk [vmem:[#allocation2 + $0xc8] sm:$0xff] %vm386, 0.0
        %413 = vst.msk [vmem:[#allocation2 + $0xd0] sm:$0xff] %vm386, 0.0
        %414 = vst.msk [vmem:[#allocation2 + $0xd8] sm:$0xff] %vm386, 0.0
        %415 = vst.msk [vmem:[#allocation2 + $0xe0] sm:$0xff] %vm386, 0.0
        %416 = vst.msk [vmem:[#allocation2 + $0xe8] sm:$0xff] %vm386, 0.0
        %417 = vst.msk [vmem:[#allocation2 + $0xf0] sm:$0xff] %vm386, 0.0
        %418 = vst.msk [vmem:[#allocation2 + $0xf8] sm:$0xff] %vm386, 0.0
        %419 = vst.msk [vmem:[#allocation2 + $0x100] sm:$0xff] %vm386, 0.0
        %420 = vst.msk [vmem:[#allocation2 + $0x108] sm:$0xff] %vm386, 0.0
        %421 = vst.msk [vmem:[#allocation2 + $0x110] sm:$0xff] %vm386, 0.0
        %422 = vst.msk [vmem:[#allocation2 + $0x118] sm:$0xff] %vm386, 0.0
        %423 = vst.msk [vmem:[#allocation2 + $0x120] sm:$0xff] %vm386, 0.0
        %424 = vst.msk [vmem:[#allocation2 + $0x128] sm:$0xff] %vm386, 0.0
        %425 = vst.msk [vmem:[#allocation2 + $0x130] sm:$0xff] %vm386, 0.0
        %426 = vst.msk [vmem:[#allocation2 + $0x138] sm:$0xff] %vm386, 0.0
        %427 = vst.msk [vmem:[#allocation2 + $0x140] sm:$0xff] %vm386, 0.0
        %428 = vst.msk [vmem:[#allocation2 + $0x148] sm:$0xff] %vm386, 0.0
        %429 = vst.msk [vmem:[#allocation2 + $0x150] sm:$0xff] %vm386, 0.0
        %430 = vst.msk [vmem:[#allocation2 + $0x158] sm:$0xff] %vm386, 0.0
        %431 = vst.msk [vmem:[#allocation2 + $0x160] sm:$0xff] %vm386, 0.0
        %432 = vst.msk [vmem:[#allocation2 + $0x168] sm:$0xff] %vm386, 0.0
        %433 = vst.msk [vmem:[#allocation2 + $0x170] sm:$0xff] %vm386, 0.0
        %434 = vst.msk [vmem:[#allocation2 + $0x178] sm:$0xff] %vm386, 0.0
        %435 = vst.msk [vmem:[#allocation2 + $0x180] sm:$0xff] %vm386, 0.0
        %436 = vst.msk [vmem:[#allocation2 + $0x188] sm:$0xff] %vm386, 0.0
        %437 = vst.msk [vmem:[#allocation2 + $0x190] sm:$0xff] %vm386, 0.0
        %438 = vst.msk [vmem:[#allocation2 + $0x198] sm:$0xff] %vm386, 0.0
        %439 = vst.msk [vmem:[#allocation2 + $0x1a0] sm:$0xff] %vm386, 0.0
        %440 = vst.msk [vmem:[#allocation2 + $0x1a8] sm:$0xff] %vm386, 0.0
        %441 = vst.msk [vmem:[#allocation2 + $0x1b0] sm:$0xff] %vm386, 0.0
        %442 = vst.msk [vmem:[#allocation2 + $0x1b8] sm:$0xff] %vm386, 0.0
        %v443 = vld [vmem:[%s384] sm:$0xff]
        %v444 = vld [vmem:[%s384 + $0x8] sm:$0xff]
        %445 = vst.msk [vmem:[#allocation2 + $0x20] sm:$0xff] %vm386, %v443
        %446 = vst.msk [vmem:[#allocation2 + $0x28] sm:$0xff] %vm386, %v444
        %s447 = scalar_lea.vmem %s384, 16
        %v448 = vld [vmem:[%s447] sm:$0xff]
        %v449 = vld [vmem:[%s447 + $0x8] sm:$0xff]
        %450 = vst.msk [vmem:[#allocation2 + $0x38] sm:$0xff] %vm386, %v448
        %451 = vst.msk [vmem:[#allocation2 + $0x40] sm:$0xff] %vm386, %v449
        %s452 = scalar_lea.vmem %s384, 32
        %v453 = vld [vmem:[%s452] sm:$0xff]
        %v454 = vld [vmem:[%s452 + $0x8] sm:$0xff]
        %455 = vst.msk [vmem:[#allocation2 + $0x50] sm:$0xff] %vm386, %v453
        %456 = vst.msk [vmem:[#allocation2 + $0x58] sm:$0xff] %vm386, %v454
        %s457 = scalar_lea.vmem %s384, 48
        %v458 = vld [vmem:[%s457] sm:$0xff]
        %v459 = vld [vmem:[%s457 + $0x8] sm:$0xff]
        %460 = vst.msk [vmem:[#allocation2 + $0x68] sm:$0xff] %vm386, %v458
        %461 = vst.msk [vmem:[#allocation2 + $0x70] sm:$0xff] %vm386, %v459
        %s462 = scalar_lea.vmem %s384, 64
        %v463 = vld [vmem:[%s462] sm:$0xff]
        %v464 = vld [vmem:[%s462 + $0x8] sm:$0xff]
        %465 = vst.msk [vmem:[#allocation2 + $0x80] sm:$0xff] %vm386, %v463
        %466 = vst.msk [vmem:[#allocation2 + $0x88] sm:$0xff] %vm386, %v464
        %s467 = scalar_lea.vmem %s384, 80
        %v468 = vld [vmem:[%s467] sm:$0xff]
        %v469 = vld [vmem:[%s467 + $0x8] sm:$0xff]
        %470 = vst.msk [vmem:[#allocation2 + $0x98] sm:$0xff] %vm386, %v468
        %471 = vst.msk [vmem:[#allocation2 + $0xa0] sm:$0xff] %vm386, %v469
        %s472 = scalar_lea.vmem %s384, 96
        %v473 = vld [vmem:[%s472] sm:$0xff]
        %v474 = vld [vmem:[%s472 + $0x8] sm:$0xff]
        %475 = vst.msk [vmem:[#allocation2 + $0xb0] sm:$0xff] %vm386, %v473
        %476 = vst.msk [vmem:[#allocation2 + $0xb8] sm:$0xff] %vm386, %v474
        %s477 = scalar_lea.vmem %s384, 112
        %v478 = vld [vmem:[%s477] sm:$0xff]
        %v479 = vld [vmem:[%s477 + $0x8] sm:$0xff]
        %480 = vst.msk [vmem:[#allocation2 + $0xc8] sm:$0xff] %vm386, %v478
        %481 = vst.msk [vmem:[#allocation2 + $0xd0] sm:$0xff] %vm386, %v479
        %s482 = scalar_lea.vmem %s384, 128
        %v483 = vld [vmem:[%s482] sm:$0xff]
        %v484 = vld [vmem:[%s482 + $0x8] sm:$0xff]
        %485 = vst.msk [vmem:[#allocation2 + $0xe0] sm:$0xff] %vm386, %v483
        %486 = vst.msk [vmem:[#allocation2 + $0xe8] sm:$0xff] %vm386, %v484
        %s487 = scalar_lea.vmem %s384, 144
        %v488 = vld [vmem:[%s487] sm:$0xff]
        %v489 = vld [vmem:[%s487 + $0x8] sm:$0xff]
        %490 = vst.msk [vmem:[#allocation2 + $0xf8] sm:$0xff] %vm386, %v488
        %491 = vst.msk [vmem:[#allocation2 + $0x100] sm:$0xff] %vm386, %v489
        %s492 = scalar_lea.vmem %s384, 160
        %v493 = vld [vmem:[%s492] sm:$0xff]
        %v494 = vld [vmem:[%s492 + $0x8] sm:$0xff]
        %495 = vst.msk [vmem:[#allocation2 + $0x110] sm:$0xff] %vm386, %v493
        %496 = vst.msk [vmem:[#allocation2 + $0x118] sm:$0xff] %vm386, %v494
        %s497 = scalar_lea.vmem %s384, 176
        %v498 = vld [vmem:[%s497] sm:$0xff]
        %v499 = vld [vmem:[%s497 + $0x8] sm:$0xff]
        %500 = vst.msk [vmem:[#allocation2 + $0x128] sm:$0xff] %vm386, %v498
        %501 = vst.msk [vmem:[#allocation2 + $0x130] sm:$0xff] %vm386, %v499
        %s502 = scalar_lea.vmem %s384, 192
        %v503 = vld [vmem:[%s502] sm:$0xff]
        %v504 = vld [vmem:[%s502 + $0x8] sm:$0xff]
        %505 = vst.msk [vmem:[#allocation2 + $0x140] sm:$0xff] %vm386, %v503
        %506 = vst.msk [vmem:[#allocation2 + $0x148] sm:$0xff] %vm386, %v504
        %s507 = scalar_lea.vmem %s384, 208
        %v508 = vld [vmem:[%s507] sm:$0xff]
        %v509 = vld [vmem:[%s507 + $0x8] sm:$0xff]
        %510 = vst.msk [vmem:[#allocation2 + $0x158] sm:$0xff] %vm386, %v508
        %511 = vst.msk [vmem:[#allocation2 + $0x160] sm:$0xff] %vm386, %v509
        %s512 = scalar_lea.vmem %s384, 224
        %v513 = vld [vmem:[%s512] sm:$0xff]
        %v514 = vld [vmem:[%s512 + $0x8] sm:$0xff]
        %515 = vst.msk [vmem:[#allocation2 + $0x170] sm:$0xff] %vm386, %v513
        %516 = vst.msk [vmem:[#allocation2 + $0x178] sm:$0xff] %vm386, %v514
        %s517 = scalar_lea.vmem %s384, 240
        %v518 = vld [vmem:[%s517] sm:$0xff]
        %v519 = vld [vmem:[%s517 + $0x8] sm:$0xff]
        %520 = vst.msk [vmem:[#allocation2 + $0x188] sm:$0xff] %vm386, %v518
        %521 = vst.msk [vmem:[#allocation2 + $0x190] sm:$0xff] %vm386, %v519
        %v522 = vld [vmem:[%s1] sm:$0xff]
        %v523 = vld [vmem:[%s1 + $0x8] sm:$0xff]
        %v524 = vld [vmem:[%s1 + $0x10] sm:$0xff]
        %v525 = vld [vmem:[%s1 + $0x18] sm:$0xff]
        %v526 = vld [vmem:[%s1 + $0x20] sm:$0xff]
        %v527 = vld [vmem:[%s1 + $0x28] sm:$0xff]
        %v528 = vld [vmem:[%s1 + $0x30] sm:$0xff]
        %v529 = vld [vmem:[%s1 + $0x38] sm:$0xff]
        %v530 = vld [vmem:[%s1 + $0x40] sm:$0xff]
        %v531 = vld [vmem:[%s1 + $0x48] sm:$0xff]
        %v532 = vld [vmem:[%s1 + $0x50] sm:$0xff]
        %v533 = vld [vmem:[%s1 + $0x58] sm:$0xff]
        %v534 = vld [vmem:[%s1 + $0x60] sm:$0xff]
        %v535 = vld [vmem:[%s1 + $0x68] sm:$0xff]
        %v536 = vld [vmem:[%s1 + $0x70] sm:$0xff]
        %v537 = vld [vmem:[%s1 + $0x78] sm:$0xff]
        %v538 = vld [vmem:[%s1 + $0x80] sm:$0xff]
        %v539 = vld [vmem:[%s1 + $0x88] sm:$0xff]
        %v540 = vld [vmem:[%s1 + $0x90] sm:$0xff]
        %v541 = vld [vmem:[%s1 + $0x98] sm:$0xff]
        %v542 = vld [vmem:[%s1 + $0xa0] sm:$0xff]
        %v543 = vld [vmem:[%s1 + $0xa8] sm:$0xff]
        %v544 = vld [vmem:[%s1 + $0xb0] sm:$0xff]
        %v545 = vld [vmem:[%s1 + $0xb8] sm:$0xff]
        %v546 = vld [vmem:[%s1 + $0xc0] sm:$0xff]
        %v547 = vld [vmem:[%s1 + $0xc8] sm:$0xff]
        %v548 = vld [vmem:[%s1 + $0xd0] sm:$0xff]
        %v549 = vld [vmem:[%s1 + $0xd8] sm:$0xff]
        %v550 = vld [vmem:[%s1 + $0xe0] sm:$0xff]
        %v551 = vld [vmem:[%s1 + $0xe8] sm:$0xff]
        %v552 = vld [vmem:[%s1 + $0xf0] sm:$0xff]
        %v553 = vld [vmem:[%s1 + $0xf8] sm:$0xff]
        %v554 = vld [vmem:[%s1 + $0x100] sm:$0xff]
        %v555 = vld [vmem:[%s1 + $0x108] sm:$0xff]
        %v556 = vld [vmem:[%s1 + $0x110] sm:$0xff]
        %v557 = vld [vmem:[%s1 + $0x118] sm:$0xff]
        %v558 = vld [vmem:[%s1 + $0x120] sm:$0xff]
        %v559 = vld [vmem:[%s1 + $0x128] sm:$0xff]
        %v560 = vld [vmem:[%s1 + $0x130] sm:$0xff]
        %v561 = vld [vmem:[%s1 + $0x138] sm:$0xff]
        %v562 = vld [vmem:[%s1 + $0x140] sm:$0xff]
        %v563 = vld [vmem:[%s1 + $0x148] sm:$0xff]
        %v564 = vld [vmem:[%s1 + $0x150] sm:$0xff]
        %v565 = vld [vmem:[%s1 + $0x158] sm:$0xff]
        %v566 = vld [vmem:[%s1 + $0x160] sm:$0xff]
        %v567 = vld [vmem:[%s1 + $0x168] sm:$0xff]
        %v568 = vld [vmem:[%s1 + $0x170] sm:$0xff]
        %v569 = vld [vmem:[%s1 + $0x178] sm:$0xff]
        %v570 = vld [vmem:[#allocation2 + $0x7] sm:$0xff]
        %v571 = vld [vmem:[#allocation2 + $0xf] sm:$0xff]
        %v572 = vld [vmem:[#allocation2 + $0x17] sm:$0xff]
        %v573 = vld [vmem:[#allocation2 + $0x1f] sm:$0xff]
        %v574 = vld [vmem:[#allocation2 + $0x27] sm:$0xff]
        %v575 = vld [vmem:[#allocation2 + $0x2f] sm:$0xff]
        %v576 = vld [vmem:[#allocation2 + $0x37] sm:$0xff]
        %v577 = vld [vmem:[#allocation2 + $0x3f] sm:$0xff]
        %v578 = vld [vmem:[#allocation2 + $0x47] sm:$0xff]
        %v579 = vld [vmem:[#allocation2 + $0x4f] sm:$0xff]
        %v580 = vld [vmem:[#allocation2 + $0x57] sm:$0xff]
        %v581 = vld [vmem:[#allocation2 + $0x5f] sm:$0xff]
        %v582 = vld [vmem:[#allocation2 + $0x67] sm:$0xff]
        %v583 = vld [vmem:[#allocation2 + $0x6f] sm:$0xff]
        %v584 = vld [vmem:[#allocation2 + $0x77] sm:$0xff]
        %v585 = vld [vmem:[#allocation2 + $0x7f] sm:$0xff]
        %v586 = vld [vmem:[#allocation2 + $0x87] sm:$0xff]
        %v587 = vld [vmem:[#allocation2 + $0x8f] sm:$0xff]
        %v588 = vld [vmem:[#allocation2 + $0x97] sm:$0xff]
        %v589 = vld [vmem:[#allocation2 + $0x9f] sm:$0xff]
        %v590 = vld [vmem:[#allocation2 + $0xa7] sm:$0xff]
        %v591 = vld [vmem:[#allocation2 + $0xaf] sm:$0xff]
        %v592 = vld [vmem:[#allocation2 + $0xb7] sm:$0xff]
        %v593 = vld [vmem:[#allocation2 + $0xbf] sm:$0xff]
        %v594 = vld [vmem:[#allocation2 + $0xc7] sm:$0xff]
        %v595 = vld [vmem:[#allocation2 + $0xcf] sm:$0xff]
        %v596 = vld [vmem:[#allocation2 + $0xd7] sm:$0xff]
        %v597 = vld [vmem:[#allocation2 + $0xdf] sm:$0xff]
        %v598 = vld [vmem:[#allocation2 + $0xe7] sm:$0xff]
        %v599 = vld [vmem:[#allocation2 + $0xef] sm:$0xff]
        %v600 = vld [vmem:[#allocation2 + $0xf7] sm:$0xff]
        %v601 = vld [vmem:[#allocation2 + $0xff] sm:$0xff]
        %v602 = vld [vmem:[#allocation2 + $0x107] sm:$0xff]
        %v603 = vld [vmem:[#allocation2 + $0x10f] sm:$0xff]
        %v604 = vld [vmem:[#allocation2 + $0x117] sm:$0xff]
        %v605 = vld [vmem:[#allocation2 + $0x11f] sm:$0xff]
        %v606 = vld [vmem:[#allocation2 + $0x127] sm:$0xff]
        %v607 = vld [vmem:[#allocation2 + $0x12f] sm:$0xff]
        %v608 = vld [vmem:[#allocation2 + $0x137] sm:$0xff]
        %v609 = vld [vmem:[#allocation2 + $0x13f] sm:$0xff]
        %v610 = vld [vmem:[#allocation2 + $0x147] sm:$0xff]
        %v611 = vld [vmem:[#allocation2 + $0x14f] sm:$0xff]
        %v612 = vld [vmem:[#allocation2 + $0x157] sm:$0xff]
        %v613 = vld [vmem:[#allocation2 + $0x15f] sm:$0xff]
        %v614 = vld [vmem:[#allocation2 + $0x167] sm:$0xff]
        %v615 = vld [vmem:[#allocation2 + $0x16f] sm:$0xff]
        %v616 = vld [vmem:[#allocation2 + $0x177] sm:$0xff]
        %v617 = vld [vmem:[#allocation2 + $0x17f] sm:$0xff]
        %v618 = vpack.c.bf16 %v571, %v570
        %v619 = vpack.c.bf16 %v573, %v572
        %v620 = vpack.c.bf16 %v575, %v574
        %v621 = vpack.c.bf16 %v577, %v576
        %v622 = vpack.c.bf16 %v579, %v578
        %v623 = vpack.c.bf16 %v581, %v580
        %v624 = vpack.c.bf16 %v583, %v582
        %v625 = vpack.c.bf16 %v585, %v584
        %v626 = vpack.c.bf16 %v587, %v586
        %v627 = vpack.c.bf16 %v589, %v588
        %v628 = vpack.c.bf16 %v591, %v590
        %v629 = vpack.c.bf16 %v593, %v592
        %v630 = vpack.c.bf16 %v595, %v594
        %v631 = vpack.c.bf16 %v597, %v596
        %v632 = vpack.c.bf16 %v599, %v598
        %v633 = vpack.c.bf16 %v601, %v600
        %v634 = vpack.c.bf16 %v603, %v602
        %v635 = vpack.c.bf16 %v605, %v604
        %v636 = vpack.c.bf16 %v607, %v606
        %v637 = vpack.c.bf16 %v609, %v608
        %v638 = vpack.c.bf16 %v611, %v610
        %v639 = vpack.c.bf16 %v613, %v612
        %v640 = vpack.c.bf16 %v615, %v614
        %v641 = vpack.c.bf16 %v617, %v616
        %642 = vst.msk [vmem:[#allocation3] sm:$0xff] %vm386, %v618
        %643 = vst.msk [vmem:[#allocation3 + $0x18] sm:$0xff] %vm386, %v619
        %644 = vst.msk [vmem:[#allocation3 + $0x30] sm:$0xff] %vm386, %v620
        %645 = vst.msk [vmem:[#allocation3 + $0x48] sm:$0xff] %vm386, %v621
        %646 = vst.msk [vmem:[#allocation3 + $0x60] sm:$0xff] %vm386, %v622
        %647 = vst.msk [vmem:[#allocation3 + $0x78] sm:$0xff] %vm386, %v623
        %648 = vst.msk [vmem:[#allocation3 + $0x90] sm:$0xff] %vm386, %v624
        %649 = vst.msk [vmem:[#allocation3 + $0xa8] sm:$0xff] %vm386, %v625
        %650 = vst.msk [vmem:[#allocation3 + $0xc0] sm:$0xff] %vm386, %v626
        %651 = vst.msk [vmem:[#allocation3 + $0xd8] sm:$0xff] %vm386, %v627
        %652 = vst.msk [vmem:[#allocation3 + $0xf0] sm:$0xff] %vm386, %v628
        %653 = vst.msk [vmem:[#allocation3 + $0x108] sm:$0xff] %vm386, %v629
        %654 = vst.msk [vmem:[#allocation3 + $0x120] sm:$0xff] %vm386, %v630
        %655 = vst.msk [vmem:[#allocation3 + $0x138] sm:$0xff] %vm386, %v631
        %656 = vst.msk [vmem:[#allocation3 + $0x150] sm:$0xff] %vm386, %v632
        %657 = vst.msk [vmem:[#allocation3 + $0x168] sm:$0xff] %vm386, %v633
        %658 = vst.msk [vmem:[#allocation3 + $0x180] sm:$0xff] %vm386, %v634
        %659 = vst.msk [vmem:[#allocation3 + $0x198] sm:$0xff] %vm386, %v635
        %660 = vst.msk [vmem:[#allocation3 + $0x1b0] sm:$0xff] %vm386, %v636
        %661 = vst.msk [vmem:[#allocation3 + $0x1c8] sm:$0xff] %vm386, %v637
        %662 = vst.msk [vmem:[#allocation3 + $0x1e0] sm:$0xff] %vm386, %v638
        %663 = vst.msk [vmem:[#allocation3 + $0x1f8] sm:$0xff] %vm386, %v639
        %664 = vst.msk [vmem:[#allocation3 + $0x210] sm:$0xff] %vm386, %v640
        %665 = vst.msk [vmem:[#allocation3 + $0x228] sm:$0xff] %vm386, %v641
        %v666 = vld [vmem:[#allocation2 + $0x8] sm:$0xff]
        %v667 = vld [vmem:[#allocation2 + $0x10] sm:$0xff]
        %v668 = vld [vmem:[#allocation2 + $0x18] sm:$0xff]
        %v669 = vld [vmem:[#allocation2 + $0x20] sm:$0xff]
        %v670 = vld [vmem:[#allocation2 + $0x28] sm:$0xff]
        %v671 = vld [vmem:[#allocation2 + $0x30] sm:$0xff]
        %v672 = vld [vmem:[#allocation2 + $0x38] sm:$0xff]
        %v673 = vld [vmem:[#allocation2 + $0x40] sm:$0xff]
        %v674 = vld [vmem:[#allocation2 + $0x48] sm:$0xff]
        %v675 = vld [vmem:[#allocation2 + $0x50] sm:$0xff]
        %v676 = vld [vmem:[#allocation2 + $0x58] sm:$0xff]
        %v677 = vld [vmem:[#allocation2 + $0x60] sm:$0xff]
        %v678 = vld [vmem:[#allocation2 + $0x68] sm:$0xff]
        %v679 = vld [vmem:[#allocation2 + $0x70] sm:$0xff]
        %v680 = vld [vmem:[#allocation2 + $0x78] sm:$0xff]
        %v681 = vld [vmem:[#allocation2 + $0x80] sm:$0xff]
        %v682 = vld [vmem:[#allocation2 + $0x88] sm:$0xff]
        %v683 = vld [vmem:[#allocation2 + $0x90] sm:$0xff]
        %v684 = vld [vmem:[#allocation2 + $0x98] sm:$0xff]
        %v685 = vld [vmem:[#allocation2 + $0xa0] sm:$0xff]
        %v686 = vld [vmem:[#allocation2 + $0xa8] sm:$0xff]
        %v687 = vld [vmem:[#allocation2 + $0xb0] sm:$0xff]
        %v688 = vld [vmem:[#allocation2 + $0xb8] sm:$0xff]
        %v689 = vld [vmem:[#allocation2 + $0xc0] sm:$0xff]
        %v690 = vld [vmem:[#allocation2 + $0xc8] sm:$0xff]
        %v691 = vld [vmem:[#allocation2 + $0xd0] sm:$0xff]
        %v692 = vld [vmem:[#allocation2 + $0xd8] sm:$0xff]
        %v693 = vld [vmem:[#allocation2 + $0xe0] sm:$0xff]
        %v694 = vld [vmem:[#allocation2 + $0xe8] sm:$0xff]
        %v695 = vld [vmem:[#allocation2 + $0xf0] sm:$0xff]
        %v696 = vld [vmem:[#allocation2 + $0xf8] sm:$0xff]
        %v697 = vld [vmem:[#allocation2 + $0x100] sm:$0xff]
        %v698 = vld [vmem:[#allocation2 + $0x108] sm:$0xff]
        %v699 = vld [vmem:[#allocation2 + $0x110] sm:$0xff]
        %v700 = vld [vmem:[#allocation2 + $0x118] sm:$0xff]
        %v701 = vld [vmem:[#allocation2 + $0x120] sm:$0xff]
        %v702 = vld [vmem:[#allocation2 + $0x128] sm:$0xff]
        %v703 = vld [vmem:[#allocation2 + $0x130] sm:$0xff]
        %v704 = vld [vmem:[#allocation2 + $0x138] sm:$0xff]
        %v705 = vld [vmem:[#allocation2 + $0x140] sm:$0xff]
        %v706 = vld [vmem:[#allocation2 + $0x148] sm:$0xff]
        %v707 = vld [vmem:[#allocation2 + $0x150] sm:$0xff]
        %v708 = vld [vmem:[#allocation2 + $0x158] sm:$0xff]
        %v709 = vld [vmem:[#allocation2 + $0x160] sm:$0xff]
        %v710 = vld [vmem:[#allocation2 + $0x168] sm:$0xff]
        %v711 = vld [vmem:[#allocation2 + $0x170] sm:$0xff]
        %v712 = vld [vmem:[#allocation2 + $0x178] sm:$0xff]
        %v713 = vld [vmem:[#allocation2 + $0x180] sm:$0xff]
        %v714 = vpack.c.bf16 %v667, %v666
        %v715 = vpack.c.bf16 %v669, %v668
        %v716 = vpack.c.bf16 %v671, %v670
        %v717 = vpack.c.bf16 %v673, %v672
        %v718 = vpack.c.bf16 %v675, %v674
        %v719 = vpack.c.bf16 %v677, %v676
        %v720 = vpack.c.bf16 %v679, %v678
        %v721 = vpack.c.bf16 %v681, %v680
        %v722 = vpack.c.bf16 %v683, %v682
        %v723 = vpack.c.bf16 %v685, %v684
        %v724 = vpack.c.bf16 %v687, %v686
        %v725 = vpack.c.bf16 %v689, %v688
        %v726 = vpack.c.bf16 %v691, %v690
        %v727 = vpack.c.bf16 %v693, %v692
        %v728 = vpack.c.bf16 %v695, %v694
        %v729 = vpack.c.bf16 %v697, %v696
        %v730 = vpack.c.bf16 %v699, %v698
        %v731 = vpack.c.bf16 %v701, %v700
        %v732 = vpack.c.bf16 %v703, %v702
        %v733 = vpack.c.bf16 %v705, %v704
        %v734 = vpack.c.bf16 %v707, %v706
        %v735 = vpack.c.bf16 %v709, %v708
        %v736 = vpack.c.bf16 %v711, %v710
        %v737 = vpack.c.bf16 %v713, %v712
        %762 = vrot.lane.b32.xlu0 %v714, 32
        %v763 = vpop.permute.xlu0 %762
        %764 = vrot.lane.b32.xlu0 %v715, 32
        %v765 = vpop.permute.xlu0 %764
        %766 = vrot.lane.b32.xlu0 %v716, 32
        %v767 = vpop.permute.xlu0 %766
        %768 = vrot.lane.b32.xlu0 %v717, 32
        %v769 = vpop.permute.xlu0 %768
        %770 = vrot.lane.b32.xlu0 %v718, 32
        %v771 = vpop.permute.xlu0 %770
        %772 = vrot.lane.b32.xlu0 %v719, 32
        %v773 = vpop.permute.xlu0 %772
        %774 = vrot.lane.b32.xlu0 %v720, 32
        %v775 = vpop.permute.xlu0 %774
        %776 = vrot.lane.b32.xlu0 %v721, 32
        %v777 = vpop.permute.xlu0 %776
        %778 = vrot.lane.b32.xlu0 %v722, 32
        %v779 = vpop.permute.xlu0 %778
        %780 = vrot.lane.b32.xlu0 %v723, 32
        %v781 = vpop.permute.xlu0 %780
        %782 = vrot.lane.b32.xlu0 %v724, 32
        %v783 = vpop.permute.xlu0 %782
        %784 = vrot.lane.b32.xlu0 %v725, 32
        %v785 = vpop.permute.xlu0 %784
        %786 = vrot.lane.b32.xlu0 %v726, 32
        %v787 = vpop.permute.xlu0 %786
        %788 = vrot.lane.b32.xlu0 %v727, 32
        %v789 = vpop.permute.xlu0 %788
        %790 = vrot.lane.b32.xlu0 %v728, 32
        %v791 = vpop.permute.xlu0 %790
        %792 = vrot.lane.b32.xlu0 %v729, 32
        %v793 = vpop.permute.xlu0 %792
        %794 = vrot.lane.b32.xlu0 %v730, 32
        %v795 = vpop.permute.xlu0 %794
        %796 = vrot.lane.b32.xlu0 %v731, 32
        %v797 = vpop.permute.xlu0 %796
        %798 = vrot.lane.b32.xlu0 %v732, 32
        %v799 = vpop.permute.xlu0 %798
        %800 = vrot.lane.b32.xlu0 %v733, 32
        %v801 = vpop.permute.xlu0 %800
        %802 = vrot.lane.b32.xlu0 %v734, 32
        %v803 = vpop.permute.xlu0 %802
        %804 = vrot.lane.b32.xlu0 %v735, 32
        %v805 = vpop.permute.xlu0 %804
        %806 = vrot.lane.b32.xlu0 %v736, 32
        %v807 = vpop.permute.xlu0 %806
        %808 = vrot.lane.b32.xlu0 %v737, 32
        %v809 = vpop.permute.xlu0 %808
        %vm834 = vcmask 523520
        %835 = vst.msk [vmem:[#allocation3] sm:$0xff] %vm834, %v763
        %836 = vst.msk [vmem:[#allocation3 + $0x18] sm:$0xff] %vm834, %v765
        %837 = vst.msk [vmem:[#allocation3 + $0x30] sm:$0xff] %vm834, %v767
        %838 = vst.msk [vmem:[#allocation3 + $0x48] sm:$0xff] %vm834, %v769
        %839 = vst.msk [vmem:[#allocation3 + $0x60] sm:$0xff] %vm834, %v771
        %840 = vst.msk [vmem:[#allocation3 + $0x78] sm:$0xff] %vm834, %v773
        %841 = vst.msk [vmem:[#allocation3 + $0x90] sm:$0xff] %vm834, %v775
        %842 = vst.msk [vmem:[#allocation3 + $0xa8] sm:$0xff] %vm834, %v777
        %843 = vst.msk [vmem:[#allocation3 + $0xc0] sm:$0xff] %vm834, %v779
        %844 = vst.msk [vmem:[#allocation3 + $0xd8] sm:$0xff] %vm834, %v781
        %845 = vst.msk [vmem:[#allocation3 + $0xf0] sm:$0xff] %vm834, %v783
        %846 = vst.msk [vmem:[#allocation3 + $0x108] sm:$0xff] %vm834, %v785
        %847 = vst.msk [vmem:[#allocation3 + $0x120] sm:$0xff] %vm834, %v787
        %848 = vst.msk [vmem:[#allocation3 + $0x138] sm:$0xff] %vm834, %v789
        %849 = vst.msk [vmem:[#allocation3 + $0x150] sm:$0xff] %vm834, %v791
        %850 = vst.msk [vmem:[#allocation3 + $0x168] sm:$0xff] %vm834, %v793
        %851 = vst.msk [vmem:[#allocation3 + $0x180] sm:$0xff] %vm834, %v795
        %852 = vst.msk [vmem:[#allocation3 + $0x198] sm:$0xff] %vm834, %v797
        %853 = vst.msk [vmem:[#allocation3 + $0x1b0] sm:$0xff] %vm834, %v799
        %854 = vst.msk [vmem:[#allocation3 + $0x1c8] sm:$0xff] %vm834, %v801
        %855 = vst.msk [vmem:[#allocation3 + $0x1e0] sm:$0xff] %vm834, %v803
        %856 = vst.msk [vmem:[#allocation3 + $0x1f8] sm:$0xff] %vm834, %v805
        %857 = vst.msk [vmem:[#allocation3 + $0x210] sm:$0xff] %vm834, %v807
        %858 = vst.msk [vmem:[#allocation3 + $0x228] sm:$0xff] %vm834, %v809
        %v859 = vld [vmem:[#allocation2 + $0x9] sm:$0xff]
        %v860 = vld [vmem:[#allocation2 + $0x11] sm:$0xff]
        %v861 = vld [vmem:[#allocation2 + $0x19] sm:$0xff]
        %v862 = vld [vmem:[#allocation2 + $0x21] sm:$0xff]
        %v863 = vld [vmem:[#allocation2 + $0x29] sm:$0xff]
        %v864 = vld [vmem:[#allocation2 + $0x31] sm:$0xff]
        %v865 = vld [vmem:[#allocation2 + $0x39] sm:$0xff]
        %v866 = vld [vmem:[#allocation2 + $0x41] sm:$0xff]
        %v867 = vld [vmem:[#allocation2 + $0x49] sm:$0xff]
        %v868 = vld [vmem:[#allocation2 + $0x51] sm:$0xff]
        %v869 = vld [vmem:[#allocation2 + $0x59] sm:$0xff]
        %v870 = vld [vmem:[#allocation2 + $0x61] sm:$0xff]
        %v871 = vld [vmem:[#allocation2 + $0x69] sm:$0xff]
        %v872 = vld [vmem:[#allocation2 + $0x71] sm:$0xff]
        %v873 = vld [vmem:[#allocation2 + $0x79] sm:$0xff]
        %v874 = vld [vmem:[#allocation2 + $0x81] sm:$0xff]
        %v875 = vld [vmem:[#allocation2 + $0x89] sm:$0xff]
        %v876 = vld [vmem:[#allocation2 + $0x91] sm:$0xff]
        %v877 = vld [vmem:[#allocation2 + $0x99] sm:$0xff]
        %v878 = vld [vmem:[#allocation2 + $0xa1] sm:$0xff]
        %v879 = vld [vmem:[#allocation2 + $0xa9] sm:$0xff]
        %v880 = vld [vmem:[#allocation2 + $0xb1] sm:$0xff]
        %v881 = vld [vmem:[#allocation2 + $0xb9] sm:$0xff]
        %v882 = vld [vmem:[#allocation2 + $0xc1] sm:$0xff]
        %v883 = vld [vmem:[#allocation2 + $0xc9] sm:$0xff]
        %v884 = vld [vmem:[#allocation2 + $0xd1] sm:$0xff]
        %v885 = vld [vmem:[#allocation2 + $0xd9] sm:$0xff]
        %v886 = vld [vmem:[#allocation2 + $0xe1] sm:$0xff]
        %v887 = vld [vmem:[#allocation2 + $0xe9] sm:$0xff]
        %v888 = vld [vmem:[#allocation2 + $0xf1] sm:$0xff]
        %v889 = vld [vmem:[#allocation2 + $0xf9] sm:$0xff]
        %v890 = vld [vmem:[#allocation2 + $0x101] sm:$0xff]
        %v891 = vld [vmem:[#allocation2 + $0x109] sm:$0xff]
        %v892 = vld [vmem:[#allocation2 + $0x111] sm:$0xff]
        %v893 = vld [vmem:[#allocation2 + $0x119] sm:$0xff]
        %v894 = vld [vmem:[#allocation2 + $0x121] sm:$0xff]
        %v895 = vld [vmem:[#allocation2 + $0x129] sm:$0xff]
        %v896 = vld [vmem:[#allocation2 + $0x131] sm:$0xff]
        %v897 = vld [vmem:[#allocation2 + $0x139] sm:$0xff]
        %v898 = vld [vmem:[#allocation2 + $0x141] sm:$0xff]
        %v899 = vld [vmem:[#allocation2 + $0x149] sm:$0xff]
        %v900 = vld [vmem:[#allocation2 + $0x151] sm:$0xff]
        %v901 = vld [vmem:[#allocation2 + $0x159] sm:$0xff]
        %v902 = vld [vmem:[#allocation2 + $0x161] sm:$0xff]
        %v903 = vld [vmem:[#allocation2 + $0x169] sm:$0xff]
        %v904 = vld [vmem:[#allocation2 + $0x171] sm:$0xff]
        %v905 = vld [vmem:[#allocation2 + $0x179] sm:$0xff]
        %v906 = vld [vmem:[#allocation2 + $0x181] sm:$0xff]
        %v907 = vpack.c.bf16 %v860, %v859
        %v908 = vpack.c.bf16 %v862, %v861
        %v909 = vpack.c.bf16 %v864, %v863
        %v910 = vpack.c.bf16 %v866, %v865
        %v911 = vpack.c.bf16 %v868, %v867
        %v912 = vpack.c.bf16 %v870, %v869
        %v913 = vpack.c.bf16 %v872, %v871
        %v914 = vpack.c.bf16 %v874, %v873
        %v915 = vpack.c.bf16 %v876, %v875
        %v916 = vpack.c.bf16 %v878, %v877
        %v917 = vpack.c.bf16 %v880, %v879
        %v918 = vpack.c.bf16 %v882, %v881
        %v919 = vpack.c.bf16 %v884, %v883
        %v920 = vpack.c.bf16 %v886, %v885
        %v921 = vpack.c.bf16 %v888, %v887
        %v922 = vpack.c.bf16 %v890, %v889
        %v923 = vpack.c.bf16 %v892, %v891
        %v924 = vpack.c.bf16 %v894, %v893
        %v925 = vpack.c.bf16 %v896, %v895
        %v926 = vpack.c.bf16 %v898, %v897
        %v927 = vpack.c.bf16 %v900, %v899
        %v928 = vpack.c.bf16 %v902, %v901
        %v929 = vpack.c.bf16 %v904, %v903
        %v930 = vpack.c.bf16 %v906, %v905
        %955 = vrot.lane.b32.xlu0 %v907, 64
        %v956 = vpop.permute.xlu0 %955
        %957 = vrot.lane.b32.xlu0 %v908, 64
        %v958 = vpop.permute.xlu0 %957
        %959 = vrot.lane.b32.xlu0 %v909, 64
        %v960 = vpop.permute.xlu0 %959
        %961 = vrot.lane.b32.xlu0 %v910, 64
        %v962 = vpop.permute.xlu0 %961
        %963 = vrot.lane.b32.xlu0 %v911, 64
        %v964 = vpop.permute.xlu0 %963
        %965 = vrot.lane.b32.xlu0 %v912, 64
        %v966 = vpop.permute.xlu0 %965
        %967 = vrot.lane.b32.xlu0 %v913, 64
        %v968 = vpop.permute.xlu0 %967
        %969 = vrot.lane.b32.xlu0 %v914, 64
        %v970 = vpop.permute.xlu0 %969
        %971 = vrot.lane.b32.xlu0 %v915, 64
        %v972 = vpop.permute.xlu0 %971
        %973 = vrot.lane.b32.xlu0 %v916, 64
        %v974 = vpop.permute.xlu0 %973
        %975 = vrot.lane.b32.xlu0 %v917, 64
        %v976 = vpop.permute.xlu0 %975
        %977 = vrot.lane.b32.xlu0 %v918, 64
        %v978 = vpop.permute.xlu0 %977
        %979 = vrot.lane.b32.xlu0 %v919, 64
        %v980 = vpop.permute.xlu0 %979
        %981 = vrot.lane.b32.xlu0 %v920, 64
        %v982 = vpop.permute.xlu0 %981
        %983 = vrot.lane.b32.xlu0 %v921, 64
        %v984 = vpop.permute.xlu0 %983
        %985 = vrot.lane.b32.xlu0 %v922, 64
        %v986 = vpop.permute.xlu0 %985
        %987 = vrot.lane.b32.xlu0 %v923, 64
        %v988 = vpop.permute.xlu0 %987
        %989 = vrot.lane.b32.xlu0 %v924, 64
        %v990 = vpop.permute.xlu0 %989
        %991 = vrot.lane.b32.xlu0 %v925, 64
        %v992 = vpop.permute.xlu0 %991
        %993 = vrot.lane.b32.xlu0 %v926, 64
        %v994 = vpop.permute.xlu0 %993
        %995 = vrot.lane.b32.xlu0 %v927, 64
        %v996 = vpop.permute.xlu0 %995
        %997 = vrot.lane.b32.xlu0 %v928, 64
        %v998 = vpop.permute.xlu0 %997
        %999 = vrot.lane.b32.xlu0 %v929, 64
        %v1000 = vpop.permute.xlu0 %999
        %1001 = vrot.lane.b32.xlu0 %v930, 64
        %v1002 = vpop.permute.xlu0 %1001
        %vm1027 = vcmask 785920
        %1028 = vst.msk [vmem:[#allocation3] sm:$0xff] %vm1027, %v956
        %1029 = vst.msk [vmem:[#allocation3 + $0x18] sm:$0xff] %vm1027, %v958
        %1030 = vst.msk [vmem:[#allocation3 + $0x30] sm:$0xff] %vm1027, %v960
        %1031 = vst.msk [vmem:[#allocation3 + $0x48] sm:$0xff] %vm1027, %v962
        %1032 = vst.msk [vmem:[#allocation3 + $0x60] sm:$0xff] %vm1027, %v964
        %1033 = vst.msk [vmem:[#allocation3 + $0x78] sm:$0xff] %vm1027, %v966
        %1034 = vst.msk [vmem:[#allocation3 + $0x90] sm:$0xff] %vm1027, %v968
        %1035 = vst.msk [vmem:[#allocation3 + $0xa8] sm:$0xff] %vm1027, %v970
        %1036 = vst.msk [vmem:[#allocation3 + $0xc0] sm:$0xff] %vm1027, %v972
        %1037 = vst.msk [vmem:[#allocation3 + $0xd8] sm:$0xff] %vm1027, %v974
        %1038 = vst.msk [vmem:[#allocation3 + $0xf0] sm:$0xff] %vm1027, %v976
        %1039 = vst.msk [vmem:[#allocation3 + $0x108] sm:$0xff] %vm1027, %v978
        %1040 = vst.msk [vmem:[#allocation3 + $0x120] sm:$0xff] %vm1027, %v980
        %1041 = vst.msk [vmem:[#allocation3 + $0x138] sm:$0xff] %vm1027, %v982
        %1042 = vst.msk [vmem:[#allocation3 + $0x150] sm:$0xff] %vm1027, %v984
        %1043 = vst.msk [vmem:[#allocation3 + $0x168] sm:$0xff] %vm1027, %v986
        %1044 = vst.msk [vmem:[#allocation3 + $0x180] sm:$0xff] %vm1027, %v988
        %1045 = vst.msk [vmem:[#allocation3 + $0x198] sm:$0xff] %vm1027, %v990
        %1046 = vst.msk [vmem:[#allocation3 + $0x1b0] sm:$0xff] %vm1027, %v992
        %1047 = vst.msk [vmem:[#allocation3 + $0x1c8] sm:$0xff] %vm1027, %v994
        %1048 = vst.msk [vmem:[#allocation3 + $0x1e0] sm:$0xff] %vm1027, %v996
        %1049 = vst.msk [vmem:[#allocation3 + $0x1f8] sm:$0xff] %vm1027, %v998
        %1050 = vst.msk [vmem:[#allocation3 + $0x210] sm:$0xff] %vm1027, %v1000
        %1051 = vst.msk [vmem:[#allocation3 + $0x228] sm:$0xff] %vm1027, %v1002
        %v1052 = vld [vmem:[#allocation2 + $0x1f] sm:$0xff]
        %v1053 = vld [vmem:[#allocation2 + $0x27] sm:$0xff]
        %v1054 = vld [vmem:[#allocation2 + $0x2f] sm:$0xff]
        %v1055 = vld [vmem:[#allocation2 + $0x37] sm:$0xff]
        %v1056 = vld [vmem:[#allocation2 + $0x3f] sm:$0xff]
        %v1057 = vld [vmem:[#allocation2 + $0x47] sm:$0xff]
        %v1058 = vld [vmem:[#allocation2 + $0x4f] sm:$0xff]
        %v1059 = vld [vmem:[#allocation2 + $0x57] sm:$0xff]
        %v1060 = vld [vmem:[#allocation2 + $0x5f] sm:$0xff]
        %v1061 = vld [vmem:[#allocation2 + $0x67] sm:$0xff]
        %v1062 = vld [vmem:[#allocation2 + $0x6f] sm:$0xff]
        %v1063 = vld [vmem:[#allocation2 + $0x77] sm:$0xff]
        %v1064 = vld [vmem:[#allocation2 + $0x7f] sm:$0xff]
        %v1065 = vld [vmem:[#allocation2 + $0x87] sm:$0xff]
        %v1066 = vld [vmem:[#allocation2 + $0x8f] sm:$0xff]
        %v1067 = vld [vmem:[#allocation2 + $0x97] sm:$0xff]
        %v1068 = vld [vmem:[#allocation2 + $0x9f] sm:$0xff]
        %v1069 = vld [vmem:[#allocation2 + $0xa7] sm:$0xff]
        %v1070 = vld [vmem:[#allocation2 + $0xaf] sm:$0xff]
        %v1071 = vld [vmem:[#allocation2 + $0xb7] sm:$0xff]
        %v1072 = vld [vmem:[#allocation2 + $0xbf] sm:$0xff]
        %v1073 = vld [vmem:[#allocation2 + $0xc7] sm:$0xff]
        %v1074 = vld [vmem:[#allocation2 + $0xcf] sm:$0xff]
        %v1075 = vld [vmem:[#allocation2 + $0xd7] sm:$0xff]
        %v1076 = vld [vmem:[#allocation2 + $0xdf] sm:$0xff]
        %v1077 = vld [vmem:[#allocation2 + $0xe7] sm:$0xff]
        %v1078 = vld [vmem:[#allocation2 + $0xef] sm:$0xff]
        %v1079 = vld [vmem:[#allocation2 + $0xf7] sm:$0xff]
        %v1080 = vld [vmem:[#allocation2 + $0xff] sm:$0xff]
        %v1081 = vld [vmem:[#allocation2 + $0x107] sm:$0xff]
        %v1082 = vld [vmem:[#allocation2 + $0x10f] sm:$0xff]
        %v1083 = vld [vmem:[#allocation2 + $0x117] sm:$0xff]
        %v1084 = vld [vmem:[#allocation2 + $0x11f] sm:$0xff]
        %v1085 = vld [vmem:[#allocation2 + $0x127] sm:$0xff]
        %v1086 = vld [vmem:[#allocation2 + $0x12f] sm:$0xff]
        %v1087 = vld [vmem:[#allocation2 + $0x137] sm:$0xff]
        %v1088 = vld [vmem:[#allocation2 + $0x13f] sm:$0xff]
        %v1089 = vld [vmem:[#allocation2 + $0x147] sm:$0xff]
        %v1090 = vld [vmem:[#allocation2 + $0x14f] sm:$0xff]
        %v1091 = vld [vmem:[#allocation2 + $0x157] sm:$0xff]
        %v1092 = vld [vmem:[#allocation2 + $0x15f] sm:$0xff]
        %v1093 = vld [vmem:[#allocation2 + $0x167] sm:$0xff]
        %v1094 = vld [vmem:[#allocation2 + $0x16f] sm:$0xff]
        %v1095 = vld [vmem:[#allocation2 + $0x177] sm:$0xff]
        %v1096 = vld [vmem:[#allocation2 + $0x17f] sm:$0xff]
        %v1097 = vld [vmem:[#allocation2 + $0x187] sm:$0xff]
        %v1098 = vld [vmem:[#allocation2 + $0x18f] sm:$0xff]
        %v1099 = vld [vmem:[#allocation2 + $0x197] sm:$0xff]
        %v1100 = vpack.c.bf16 %v1053, %v1052
        %v1101 = vpack.c.bf16 %v1055, %v1054
        %v1102 = vpack.c.bf16 %v1057, %v1056
        %v1103 = vpack.c.bf16 %v1059, %v1058
        %v1104 = vpack.c.bf16 %v1061, %v1060
        %v1105 = vpack.c.bf16 %v1063, %v1062
        %v1106 = vpack.c.bf16 %v1065, %v1064
        %v1107 = vpack.c.bf16 %v1067, %v1066
        %v1108 = vpack.c.bf16 %v1069, %v1068
        %v1109 = vpack.c.bf16 %v1071, %v1070
        %v1110 = vpack.c.bf16 %v1073, %v1072
        %v1111 = vpack.c.bf16 %v1075, %v1074
        %v1112 = vpack.c.bf16 %v1077, %v1076
        %v1113 = vpack.c.bf16 %v1079, %v1078
        %v1114 = vpack.c.bf16 %v1081, %v1080
        %v1115 = vpack.c.bf16 %v1083, %v1082
        %v1116 = vpack.c.bf16 %v1085, %v1084
        %v1117 = vpack.c.bf16 %v1087, %v1086
        %v1118 = vpack.c.bf16 %v1089, %v1088
        %v1119 = vpack.c.bf16 %v1091, %v1090
        %v1120 = vpack.c.bf16 %v1093, %v1092
        %v1121 = vpack.c.bf16 %v1095, %v1094
        %v1122 = vpack.c.bf16 %v1097, %v1096
        %v1123 = vpack.c.bf16 %v1099, %v1098
        %1148 = vrot.lane.b32.xlu0 %v1100, 96
        %v1149 = vpop.permute.xlu0 %1148
        %1150 = vrot.lane.b32.xlu0 %v1101, 96
        %v1151 = vpop.permute.xlu0 %1150
        %1152 = vrot.lane.b32.xlu0 %v1102, 96
        %v1153 = vpop.permute.xlu0 %1152
        %1154 = vrot.lane.b32.xlu0 %v1103, 96
        %v1155 = vpop.permute.xlu0 %1154
        %1156 = vrot.lane.b32.xlu0 %v1104, 96
        %v1157 = vpop.permute.xlu0 %1156
        %1158 = vrot.lane.b32.xlu0 %v1105, 96
        %v1159 = vpop.permute.xlu0 %1158
        %1160 = vrot.lane.b32.xlu0 %v1106, 96
        %v1161 = vpop.permute.xlu0 %1160
        %1162 = vrot.lane.b32.xlu0 %v1107, 96
        %v1163 = vpop.permute.xlu0 %1162
        %1164 = vrot.lane.b32.xlu0 %v1108, 96
        %v1165 = vpop.permute.xlu0 %1164
        %1166 = vrot.lane.b32.xlu0 %v1109, 96
        %v1167 = vpop.permute.xlu0 %1166
        %1168 = vrot.lane.b32.xlu0 %v1110, 96
        %v1169 = vpop.permute.xlu0 %1168
        %1170 = vrot.lane.b32.xlu0 %v1111, 96
        %v1171 = vpop.permute.xlu0 %1170
        %1172 = vrot.lane.b32.xlu0 %v1112, 96
        %v1173 = vpop.permute.xlu0 %1172
        %1174 = vrot.lane.b32.xlu0 %v1113, 96
        %v1175 = vpop.permute.xlu0 %1174
        %1176 = vrot.lane.b32.xlu0 %v1114, 96
        %v1177 = vpop.permute.xlu0 %1176
        %1178 = vrot.lane.b32.xlu0 %v1115, 96
        %v1179 = vpop.permute.xlu0 %1178
        %1180 = vrot.lane.b32.xlu0 %v1116, 96
        %v1181 = vpop.permute.xlu0 %1180
        %1182 = vrot.lane.b32.xlu0 %v1117, 96
        %v1183 = vpop.permute.xlu0 %1182
        %1184 = vrot.lane.b32.xlu0 %v1118, 96
        %v1185 = vpop.permute.xlu0 %1184
        %1186 = vrot.lane.b32.xlu0 %v1119, 96
        %v1187 = vpop.permute.xlu0 %1186
        %1188 = vrot.lane.b32.xlu0 %v1120, 96
        %v1189 = vpop.permute.xlu0 %1188
        %1190 = vrot.lane.b32.xlu0 %v1121, 96
        %v1191 = vpop.permute.xlu0 %1190
        %1192 = vrot.lane.b32.xlu0 %v1122, 96
        %v1193 = vpop.permute.xlu0 %1192
        %1194 = vrot.lane.b32.xlu0 %v1123, 96
        %v1195 = vpop.permute.xlu0 %1194
        %vm1220 = vcmask 1048320
        %1221 = vst.msk [vmem:[#allocation3] sm:$0xff] %vm1220, %v1149
        %1222 = vst.msk [vmem:[#allocation3 + $0x18] sm:$0xff] %vm1220, %v1151
        %1223 = vst.msk [vmem:[#allocation3 + $0x30] sm:$0xff] %vm1220, %v1153
        %1224 = vst.msk [vmem:[#allocation3 + $0x48] sm:$0xff] %vm1220, %v1155
        %1225 = vst.msk [vmem:[#allocation3 + $0x60] sm:$0xff] %vm1220, %v1157
        %1226 = vst.msk [vmem:[#allocation3 + $0x78] sm:$0xff] %vm1220, %v1159
        %1227 = vst.msk [vmem:[#allocation3 + $0x90] sm:$0xff] %vm1220, %v1161
        %1228 = vst.msk [vmem:[#allocation3 + $0xa8] sm:$0xff] %vm1220, %v1163
        %1229 = vst.msk [vmem:[#allocation3 + $0xc0] sm:$0xff] %vm1220, %v1165
        %1230 = vst.msk [vmem:[#allocation3 + $0xd8] sm:$0xff] %vm1220, %v1167
        %1231 = vst.msk [vmem:[#allocation3 + $0xf0] sm:$0xff] %vm1220, %v1169
        %1232 = vst.msk [vmem:[#allocation3 + $0x108] sm:$0xff] %vm1220, %v1171
        %1233 = vst.msk [vmem:[#allocation3 + $0x120] sm:$0xff] %vm1220, %v1173
        %1234 = vst.msk [vmem:[#allocation3 + $0x138] sm:$0xff] %vm1220, %v1175
        %1235 = vst.msk [vmem:[#allocation3 + $0x150] sm:$0xff] %vm1220, %v1177
        %1236 = vst.msk [vmem:[#allocation3 + $0x168] sm:$0xff] %vm1220, %v1179
        %1237 = vst.msk [vmem:[#allocation3 + $0x180] sm:$0xff] %vm1220, %v1181
        %1238 = vst.msk [vmem:[#allocation3 + $0x198] sm:$0xff] %vm1220, %v1183
        %1239 = vst.msk [vmem:[#allocation3 + $0x1b0] sm:$0xff] %vm1220, %v1185
        %1240 = vst.msk [vmem:[#allocation3 + $0x1c8] sm:$0xff] %vm1220, %v1187
        %1241 = vst.msk [vmem:[#allocation3 + $0x1e0] sm:$0xff] %vm1220, %v1189
        %1242 = vst.msk [vmem:[#allocation3 + $0x1f8] sm:$0xff] %vm1220, %v1191
        %1243 = vst.msk [vmem:[#allocation3 + $0x210] sm:$0xff] %vm1220, %v1193
        %1244 = vst.msk [vmem:[#allocation3 + $0x228] sm:$0xff] %vm1220, %v1195
        %v1245 = vld [vmem:[#allocation2 + $0x20] sm:$0xff]
        %v1246 = vld [vmem:[#allocation2 + $0x28] sm:$0xff]
        %v1247 = vld [vmem:[#allocation2 + $0x30] sm:$0xff]
        %v1248 = vld [vmem:[#allocation2 + $0x38] sm:$0xff]
        %v1249 = vld [vmem:[#allocation2 + $0x40] sm:$0xff]
        %v1250 = vld [vmem:[#allocation2 + $0x48] sm:$0xff]
        %v1251 = vld [vmem:[#allocation2 + $0x50] sm:$0xff]
        %v1252 = vld [vmem:[#allocation2 + $0x58] sm:$0xff]
        %v1253 = vld [vmem:[#allocation2 + $0x60] sm:$0xff]
        %v1254 = vld [vmem:[#allocation2 + $0x68] sm:$0xff]
        %v1255 = vld [vmem:[#allocation2 + $0x70] sm:$0xff]
        %v1256 = vld [vmem:[#allocation2 + $0x78] sm:$0xff]
        %v1257 = vld [vmem:[#allocation2 + $0x80] sm:$0xff]
        %v1258 = vld [vmem:[#allocation2 + $0x88] sm:$0xff]
        %v1259 = vld [vmem:[#allocation2 + $0x90] sm:$0xff]
        %v1260 = vld [vmem:[#allocation2 + $0x98] sm:$0xff]
        %v1261 = vld [vmem:[#allocation2 + $0xa0] sm:$0xff]
        %v1262 = vld [vmem:[#allocation2 + $0xa8] sm:$0xff]
        %v1263 = vld [vmem:[#allocation2 + $0xb0] sm:$0xff]
        %v1264 = vld [vmem:[#allocation2 + $0xb8] sm:$0xff]
        %v1265 = vld [vmem:[#allocation2 + $0xc0] sm:$0xff]
        %v1266 = vld [vmem:[#allocation2 + $0xc8] sm:$0xff]
        %v1267 = vld [vmem:[#allocation2 + $0xd0] sm:$0xff]
        %v1268 = vld [vmem:[#allocation2 + $0xd8] sm:$0xff]
        %v1269 = vld [vmem:[#allocation2 + $0xe0] sm:$0xff]
        %v1270 = vld [vmem:[#allocation2 + $0xe8] sm:$0xff]
        %v1271 = vld [vmem:[#allocation2 + $0xf0] sm:$0xff]
        %v1272 = vld [vmem:[#allocation2 + $0xf8] sm:$0xff]
        %v1273 = vld [vmem:[#allocation2 + $0x100] sm:$0xff]
        %v1274 = vld [vmem:[#allocation2 + $0x108] sm:$0xff]
        %v1275 = vld [vmem:[#allocation2 + $0x110] sm:$0xff]
        %v1276 = vld [vmem:[#allocation2 + $0x118] sm:$0xff]
        %v1277 = vld [vmem:[#allocation2 + $0x120] sm:$0xff]
        %v1278 = vld [vmem:[#allocation2 + $0x128] sm:$0xff]
        %v1279 = vld [vmem:[#allocation2 + $0x130] sm:$0xff]
        %v1280 = vld [vmem:[#allocation2 + $0x138] sm:$0xff]
        %v1281 = vld [vmem:[#allocation2 + $0x140] sm:$0xff]
        %v1282 = vld [vmem:[#allocation2 + $0x148] sm:$0xff]
        %v1283 = vld [vmem:[#allocation2 + $0x150] sm:$0xff]
        %v1284 = vld [vmem:[#allocation2 + $0x158] sm:$0xff]
        %v1285 = vld [vmem:[#allocation2 + $0x160] sm:$0xff]
        %v1286 = vld [vmem:[#allocation2 + $0x168] sm:$0xff]
        %v1287 = vld [vmem:[#allocation2 + $0x170] sm:$0xff]
        %v1288 = vld [vmem:[#allocation2 + $0x178] sm:$0xff]
        %v1289 = vld [vmem:[#allocation2 + $0x180] sm:$0xff]
        %v1290 = vld [vmem:[#allocation2 + $0x188] sm:$0xff]
        %v1291 = vld [vmem:[#allocation2 + $0x190] sm:$0xff]
        %v1292 = vld [vmem:[#allocation2 + $0x198] sm:$0xff]
        %v1293 = vpack.c.bf16 %v1246, %v1245
        %v1294 = vpack.c.bf16 %v1248, %v1247
        %v1295 = vpack.c.bf16 %v1250, %v1249
        %v1296 = vpack.c.bf16 %v1252, %v1251
        %v1297 = vpack.c.bf16 %v1254, %v1253
        %v1298 = vpack.c.bf16 %v1256, %v1255
        %v1299 = vpack.c.bf16 %v1258, %v1257
        %v1300 = vpack.c.bf16 %v1260, %v1259
        %v1301 = vpack.c.bf16 %v1262, %v1261
        %v1302 = vpack.c.bf16 %v1264, %v1263
        %v1303 = vpack.c.bf16 %v1266, %v1265
        %v1304 = vpack.c.bf16 %v1268, %v1267
        %v1305 = vpack.c.bf16 %v1270, %v1269
        %v1306 = vpack.c.bf16 %v1272, %v1271
        %v1307 = vpack.c.bf16 %v1274, %v1273
        %v1308 = vpack.c.bf16 %v1276, %v1275
        %v1309 = vpack.c.bf16 %v1278, %v1277
        %v1310 = vpack.c.bf16 %v1280, %v1279
        %v1311 = vpack.c.bf16 %v1282, %v1281
        %v1312 = vpack.c.bf16 %v1284, %v1283
        %v1313 = vpack.c.bf16 %v1286, %v1285
        %v1314 = vpack.c.bf16 %v1288, %v1287
        %v1315 = vpack.c.bf16 %v1290, %v1289
        %v1316 = vpack.c.bf16 %v1292, %v1291
        %1317 = vst.msk [vmem:[#allocation3 + $0x8] sm:$0xff] %vm386, %v1293
        %1318 = vst.msk [vmem:[#allocation3 + $0x20] sm:$0xff] %vm386, %v1294
        %1319 = vst.msk [vmem:[#allocation3 + $0x38] sm:$0xff] %vm386, %v1295
        %1320 = vst.msk [vmem:[#allocation3 + $0x50] sm:$0xff] %vm386, %v1296
        %1321 = vst.msk [vmem:[#allocation3 + $0x68] sm:$0xff] %vm386, %v1297
        %1322 = vst.msk [vmem:[#allocation3 + $0x80] sm:$0xff] %vm386, %v1298
        %1323 = vst.msk [vmem:[#allocation3 + $0x98] sm:$0xff] %vm386, %v1299
        %1324 = vst.msk [vmem:[#allocation3 + $0xb0] sm:$0xff] %vm386, %v1300
        %1325 = vst.msk [vmem:[#allocation3 + $0xc8] sm:$0xff] %vm386, %v1301
        %1326 = vst.msk [vmem:[#allocation3 + $0xe0] sm:$0xff] %vm386, %v1302
        %1327 = vst.msk [vmem:[#allocation3 + $0xf8] sm:$0xff] %vm386, %v1303
        %1328 = vst.msk [vmem:[#allocation3 + $0x110] sm:$0xff] %vm386, %v1304
        %1329 = vst.msk [vmem:[#allocation3 + $0x128] sm:$0xff] %vm386, %v1305
        %1330 = vst.msk [vmem:[#allocation3 + $0x140] sm:$0xff] %vm386, %v1306
        %1331 = vst.msk [vmem:[#allocation3 + $0x158] sm:$0xff] %vm386, %v1307
        %1332 = vst.msk [vmem:[#allocation3 + $0x170] sm:$0xff] %vm386, %v1308
        %1333 = vst.msk [vmem:[#allocation3 + $0x188] sm:$0xff] %vm386, %v1309
        %1334 = vst.msk [vmem:[#allocation3 + $0x1a0] sm:$0xff] %vm386, %v1310
        %1335 = vst.msk [vmem:[#allocation3 + $0x1b8] sm:$0xff] %vm386, %v1311
        %1336 = vst.msk [vmem:[#allocation3 + $0x1d0] sm:$0xff] %vm386, %v1312
        %1337 = vst.msk [vmem:[#allocation3 + $0x1e8] sm:$0xff] %vm386, %v1313
        %1338 = vst.msk [vmem:[#allocation3 + $0x200] sm:$0xff] %vm386, %v1314
        %1339 = vst.msk [vmem:[#allocation3 + $0x218] sm:$0xff] %vm386, %v1315
        %1340 = vst.msk [vmem:[#allocation3 + $0x230] sm:$0xff] %vm386, %v1316
        %v1341 = vld [vmem:[#allocation2 + $0x21] sm:$0xff]
        %v1342 = vld [vmem:[#allocation2 + $0x29] sm:$0xff]
        %v1343 = vld [vmem:[#allocation2 + $0x31] sm:$0xff]
        %v1344 = vld [vmem:[#allocation2 + $0x39] sm:$0xff]
        %v1345 = vld [vmem:[#allocation2 + $0x41] sm:$0xff]
        %v1346 = vld [vmem:[#allocation2 + $0x49] sm:$0xff]
        %v1347 = vld [vmem:[#allocation2 + $0x51] sm:$0xff]
        %v1348 = vld [vmem:[#allocation2 + $0x59] sm:$0xff]
        %v1349 = vld [vmem:[#allocation2 + $0x61] sm:$0xff]
        %v1350 = vld [vmem:[#allocation2 + $0x69] sm:$0xff]
        %v1351 = vld [vmem:[#allocation2 + $0x71] sm:$0xff]
        %v1352 = vld [vmem:[#allocation2 + $0x79] sm:$0xff]
        %v1353 = vld [vmem:[#allocation2 + $0x81] sm:$0xff]
        %v1354 = vld [vmem:[#allocation2 + $0x89] sm:$0xff]
        %v1355 = vld [vmem:[#allocation2 + $0x91] sm:$0xff]
        %v1356 = vld [vmem:[#allocation2 + $0x99] sm:$0xff]
        %v1357 = vld [vmem:[#allocation2 + $0xa1] sm:$0xff]
        %v1358 = vld [vmem:[#allocation2 + $0xa9] sm:$0xff]
        %v1359 = vld [vmem:[#allocation2 + $0xb1] sm:$0xff]
        %v1360 = vld [vmem:[#allocation2 + $0xb9] sm:$0xff]
        %v1361 = vld [vmem:[#allocation2 + $0xc1] sm:$0xff]
        %v1362 = vld [vmem:[#allocation2 + $0xc9] sm:$0xff]
        %v1363 = vld [vmem:[#allocation2 + $0xd1] sm:$0xff]
        %v1364 = vld [vmem:[#allocation2 + $0xd9] sm:$0xff]
        %v1365 = vld [vmem:[#allocation2 + $0xe1] sm:$0xff]
        %v1366 = vld [vmem:[#allocation2 + $0xe9] sm:$0xff]
        %v1367 = vld [vmem:[#allocation2 + $0xf1] sm:$0xff]
        %v1368 = vld [vmem:[#allocation2 + $0xf9] sm:$0xff]
        %v1369 = vld [vmem:[#allocation2 + $0x101] sm:$0xff]
        %v1370 = vld [vmem:[#allocation2 + $0x109] sm:$0xff]
        %v1371 = vld [vmem:[#allocation2 + $0x111] sm:$0xff]
        %v1372 = vld [vmem:[#allocation2 + $0x119] sm:$0xff]
        %v1373 = vld [vmem:[#allocation2 + $0x121] sm:$0xff]
        %v1374 = vld [vmem:[#allocation2 + $0x129] sm:$0xff]
        %v1375 = vld [vmem:[#allocation2 + $0x131] sm:$0xff]
        %v1376 = vld [vmem:[#allocation2 + $0x139] sm:$0xff]
        %v1377 = vld [vmem:[#allocation2 + $0x141] sm:$0xff]
        %v1378 = vld [vmem:[#allocation2 + $0x149] sm:$0xff]
        %v1379 = vld [vmem:[#allocation2 + $0x151] sm:$0xff]
        %v1380 = vld [vmem:[#allocation2 + $0x159] sm:$0xff]
        %v1381 = vld [vmem:[#allocation2 + $0x161] sm:$0xff]
        %v1382 = vld [vmem:[#allocation2 + $0x169] sm:$0xff]
        %v1383 = vld [vmem:[#allocation2 + $0x171] sm:$0xff]
        %v1384 = vld [vmem:[#allocation2 + $0x179] sm:$0xff]
        %v1385 = vld [vmem:[#allocation2 + $0x181] sm:$0xff]
        %v1386 = vld [vmem:[#allocation2 + $0x189] sm:$0xff]
        %v1387 = vld [vmem:[#allocation2 + $0x191] sm:$0xff]
        %v1388 = vld [vmem:[#allocation2 + $0x199] sm:$0xff]
        %v1389 = vpack.c.bf16 %v1342, %v1341
        %v1390 = vpack.c.bf16 %v1344, %v1343
        %v1391 = vpack.c.bf16 %v1346, %v1345
        %v1392 = vpack.c.bf16 %v1348, %v1347
        %v1393 = vpack.c.bf16 %v1350, %v1349
        %v1394 = vpack.c.bf16 %v1352, %v1351
        %v1395 = vpack.c.bf16 %v1354, %v1353
        %v1396 = vpack.c.bf16 %v1356, %v1355
        %v1397 = vpack.c.bf16 %v1358, %v1357
        %v1398 = vpack.c.bf16 %v1360, %v1359
        %v1399 = vpack.c.bf16 %v1362, %v1361
        %v1400 = vpack.c.bf16 %v1364, %v1363
        %v1401 = vpack.c.bf16 %v1366, %v1365
        %v1402 = vpack.c.bf16 %v1368, %v1367
        %v1403 = vpack.c.bf16 %v1370, %v1369
        %v1404 = vpack.c.bf16 %v1372, %v1371
        %v1405 = vpack.c.bf16 %v1374, %v1373
        %v1406 = vpack.c.bf16 %v1376, %v1375
        %v1407 = vpack.c.bf16 %v1378, %v1377
        %v1408 = vpack.c.bf16 %v1380, %v1379
        %v1409 = vpack.c.bf16 %v1382, %v1381
        %v1410 = vpack.c.bf16 %v1384, %v1383
        %v1411 = vpack.c.bf16 %v1386, %v1385
        %v1412 = vpack.c.bf16 %v1388, %v1387
        %1437 = vrot.lane.b32.xlu0 %v1389, 32
        %v1438 = vpop.permute.xlu0 %1437
        %1439 = vrot.lane.b32.xlu0 %v1390, 32
        %v1440 = vpop.permute.xlu0 %1439
        %1441 = vrot.lane.b32.xlu0 %v1391, 32
        %v1442 = vpop.permute.xlu0 %1441
        %1443 = vrot.lane.b32.xlu0 %v1392, 32
        %v1444 = vpop.permute.xlu0 %1443
        %1445 = vrot.lane.b32.xlu0 %v1393, 32
        %v1446 = vpop.permute.xlu0 %1445
        %1447 = vrot.lane.b32.xlu0 %v1394, 32
        %v1448 = vpop.permute.xlu0 %1447
        %1449 = vrot.lane.b32.xlu0 %v1395, 32
        %v1450 = vpop.permute.xlu0 %1449
        %1451 = vrot.lane.b32.xlu0 %v1396, 32
        %v1452 = vpop.permute.xlu0 %1451
        %1453 = vrot.lane.b32.xlu0 %v1397, 32
        %v1454 = vpop.permute.xlu0 %1453
        %1455 = vrot.lane.b32.xlu0 %v1398, 32
        %v1456 = vpop.permute.xlu0 %1455
        %1457 = vrot.lane.b32.xlu0 %v1399, 32
        %v1458 = vpop.permute.xlu0 %1457
        %1459 = vrot.lane.b32.xlu0 %v1400, 32
        %v1460 = vpop.permute.xlu0 %1459
        %1461 = vrot.lane.b32.xlu0 %v1401, 32
        %v1462 = vpop.permute.xlu0 %1461
        %1463 = vrot.lane.b32.xlu0 %v1402, 32
        %v1464 = vpop.permute.xlu0 %1463
        %1465 = vrot.lane.b32.xlu0 %v1403, 32
        %v1466 = vpop.permute.xlu0 %1465
        %1467 = vrot.lane.b32.xlu0 %v1404, 32
        %v1468 = vpop.permute.xlu0 %1467
        %1469 = vrot.lane.b32.xlu0 %v1405, 32
        %v1470 = vpop.permute.xlu0 %1469
        %1471 = vrot.lane.b32.xlu0 %v1406, 32
        %v1472 = vpop.permute.xlu0 %1471
        %1473 = vrot.lane.b32.xlu0 %v1407, 32
        %v1474 = vpop.permute.xlu0 %1473
        %1475 = vrot.lane.b32.xlu0 %v1408, 32
        %v1476 = vpop.permute.xlu0 %1475
        %1477 = vrot.lane.b32.xlu0 %v1409, 32
        %v1478 = vpop.permute.xlu0 %1477
        %1479 = vrot.lane.b32.xlu0 %v1410, 32
        %v1480 = vpop.permute.xlu0 %1479
        %1481 = vrot.lane.b32.xlu0 %v1411, 32
        %v1482 = vpop.permute.xlu0 %1481
        %1483 = vrot.lane.b32.xlu0 %v1412, 32
        %v1484 = vpop.permute.xlu0 %1483
        %1509 = vst.msk [vmem:[#allocation3 + $0x8] sm:$0xff] %vm834, %v1438
        %1510 = vst.msk [vmem:[#allocation3 + $0x20] sm:$0xff] %vm834, %v1440
        %1511 = vst.msk [vmem:[#allocation3 + $0x38] sm:$0xff] %vm834, %v1442
        %1512 = vst.msk [vmem:[#allocation3 + $0x50] sm:$0xff] %vm834, %v1444
        %1513 = vst.msk [vmem:[#allocation3 + $0x68] sm:$0xff] %vm834, %v1446
        %1514 = vst.msk [vmem:[#allocation3 + $0x80] sm:$0xff] %vm834, %v1448
        %1515 = vst.msk [vmem:[#allocation3 + $0x98] sm:$0xff] %vm834, %v1450
        %1516 = vst.msk [vmem:[#allocation3 + $0xb0] sm:$0xff] %vm834, %v1452
        %1517 = vst.msk [vmem:[#allocation3 + $0xc8] sm:$0xff] %vm834, %v1454
        %1518 = vst.msk [vmem:[#allocation3 + $0xe0] sm:$0xff] %vm834, %v1456
        %1519 = vst.msk [vmem:[#allocation3 + $0xf8] sm:$0xff] %vm834, %v1458
        %1520 = vst.msk [vmem:[#allocation3 + $0x110] sm:$0xff] %vm834, %v1460
        %1521 = vst.msk [vmem:[#allocation3 + $0x128] sm:$0xff] %vm834, %v1462
        %1522 = vst.msk [vmem:[#allocation3 + $0x140] sm:$0xff] %vm834, %v1464
        %1523 = vst.msk [vmem:[#allocation3 + $0x158] sm:$0xff] %vm834, %v1466
        %1524 = vst.msk [vmem:[#allocation3 + $0x170] sm:$0xff] %vm834, %v1468
        %1525 = vst.msk [vmem:[#allocation3 + $0x188] sm:$0xff] %vm834, %v1470
        %1526 = vst.msk [vmem:[#allocation3 + $0x1a0] sm:$0xff] %vm834, %v1472
        %1527 = vst.msk [vmem:[#allocation3 + $0x1b8] sm:$0xff] %vm834, %v1474
        %1528 = vst.msk [vmem:[#allocation3 + $0x1d0] sm:$0xff] %vm834, %v1476
        %1529 = vst.msk [vmem:[#allocation3 + $0x1e8] sm:$0xff] %vm834, %v1478
        %1530 = vst.msk [vmem:[#allocation3 + $0x200] sm:$0xff] %vm834, %v1480
        %1531 = vst.msk [vmem:[#allocation3 + $0x218] sm:$0xff] %vm834, %v1482
        %1532 = vst.msk [vmem:[#allocation3 + $0x230] sm:$0xff] %vm834, %v1484
        %v1533 = vld [vmem:[#allocation2 + $0x37] sm:$0xff]
        %v1534 = vld [vmem:[#allocation2 + $0x3f] sm:$0xff]
        %v1535 = vld [vmem:[#allocation2 + $0x47] sm:$0xff]
        %v1536 = vld [vmem:[#allocation2 + $0x4f] sm:$0xff]
        %v1537 = vld [vmem:[#allocation2 + $0x57] sm:$0xff]
        %v1538 = vld [vmem:[#allocation2 + $0x5f] sm:$0xff]
        %v1539 = vld [vmem:[#allocation2 + $0x67] sm:$0xff]
        %v1540 = vld [vmem:[#allocation2 + $0x6f] sm:$0xff]
        %v1541 = vld [vmem:[#allocation2 + $0x77] sm:$0xff]
        %v1542 = vld [vmem:[#allocation2 + $0x7f] sm:$0xff]
        %v1543 = vld [vmem:[#allocation2 + $0x87] sm:$0xff]
        %v1544 = vld [vmem:[#allocation2 + $0x8f] sm:$0xff]
        %v1545 = vld [vmem:[#allocation2 + $0x97] sm:$0xff]
        %v1546 = vld [vmem:[#allocation2 + $0x9f] sm:$0xff]
        %v1547 = vld [vmem:[#allocation2 + $0xa7] sm:$0xff]
        %v1548 = vld [vmem:[#allocation2 + $0xaf] sm:$0xff]
        %v1549 = vld [vmem:[#allocation2 + $0xb7] sm:$0xff]
        %v1550 = vld [vmem:[#allocation2 + $0xbf] sm:$0xff]
        %v1551 = vld [vmem:[#allocation2 + $0xc7] sm:$0xff]
        %v1552 = vld [vmem:[#allocation2 + $0xcf] sm:$0xff]
        %v1553 = vld [vmem:[#allocation2 + $0xd7] sm:$0xff]
        %v1554 = vld [vmem:[#allocation2 + $0xdf] sm:$0xff]
        %v1555 = vld [vmem:[#allocation2 + $0xe7] sm:$0xff]
        %v1556 = vld [vmem:[#allocation2 + $0xef] sm:$0xff]
        %v1557 = vld [vmem:[#allocation2 + $0xf7] sm:$0xff]
        %v1558 = vld [vmem:[#allocation2 + $0xff] sm:$0xff]
        %v1559 = vld [vmem:[#allocation2 + $0x107] sm:$0xff]
        %v1560 = vld [vmem:[#allocation2 + $0x10f] sm:$0xff]
        %v1561 = vld [vmem:[#allocation2 + $0x117] sm:$0xff]
        %v1562 = vld [vmem:[#allocation2 + $0x11f] sm:$0xff]
        %v1563 = vld [vmem:[#allocation2 + $0x127] sm:$0xff]
        %v1564 = vld [vmem:[#allocation2 + $0x12f] sm:$0xff]
        %v1565 = vld [vmem:[#allocation2 + $0x137] sm:$0xff]
        %v1566 = vld [vmem:[#allocation2 + $0x13f] sm:$0xff]
        %v1567 = vld [vmem:[#allocation2 + $0x147] sm:$0xff]
        %v1568 = vld [vmem:[#allocation2 + $0x14f] sm:$0xff]
        %v1569 = vld [vmem:[#allocation2 + $0x157] sm:$0xff]
        %v1570 = vld [vmem:[#allocation2 + $0x15f] sm:$0xff]
        %v1571 = vld [vmem:[#allocation2 + $0x167] sm:$0xff]
        %v1572 = vld [vmem:[#allocation2 + $0x16f] sm:$0xff]
        %v1573 = vld [vmem:[#allocation2 + $0x177] sm:$0xff]
        %v1574 = vld [vmem:[#allocation2 + $0x17f] sm:$0xff]
        %v1575 = vld [vmem:[#allocation2 + $0x187] sm:$0xff]
        %v1576 = vld [vmem:[#allocation2 + $0x18f] sm:$0xff]
        %v1577 = vld [vmem:[#allocation2 + $0x197] sm:$0xff]
        %v1578 = vld [vmem:[#allocation2 + $0x19f] sm:$0xff]
        %v1579 = vld [vmem:[#allocation2 + $0x1a7] sm:$0xff]
        %v1580 = vld [vmem:[#allocation2 + $0x1af] sm:$0xff]
        %v1581 = vpack.c.bf16 %v1534, %v1533
        %v1582 = vpack.c.bf16 %v1536, %v1535
        %v1583 = vpack.c.bf16 %v1538, %v1537
        %v1584 = vpack.c.bf16 %v1540, %v1539
        %v1585 = vpack.c.bf16 %v1542, %v1541
        %v1586 = vpack.c.bf16 %v1544, %v1543
        %v1587 = vpack.c.bf16 %v1546, %v1545
        %v1588 = vpack.c.bf16 %v1548, %v1547
        %v1589 = vpack.c.bf16 %v1550, %v1549
        %v1590 = vpack.c.bf16 %v1552, %v1551
        %v1591 = vpack.c.bf16 %v1554, %v1553
        %v1592 = vpack.c.bf16 %v1556, %v1555
        %v1593 = vpack.c.bf16 %v1558, %v1557
        %v1594 = vpack.c.bf16 %v1560, %v1559
        %v1595 = vpack.c.bf16 %v1562, %v1561
        %v1596 = vpack.c.bf16 %v1564, %v1563
        %v1597 = vpack.c.bf16 %v1566, %v1565
        %v1598 = vpack.c.bf16 %v1568, %v1567
        %v1599 = vpack.c.bf16 %v1570, %v1569
        %v1600 = vpack.c.bf16 %v1572, %v1571
        %v1601 = vpack.c.bf16 %v1574, %v1573
        %v1602 = vpack.c.bf16 %v1576, %v1575
        %v1603 = vpack.c.bf16 %v1578, %v1577
        %v1604 = vpack.c.bf16 %v1580, %v1579
        %1629 = vrot.lane.b32.xlu0 %v1581, 64
        %v1630 = vpop.permute.xlu0 %1629
        %1631 = vrot.lane.b32.xlu0 %v1582, 64
        %v1632 = vpop.permute.xlu0 %1631
        %1633 = vrot.lane.b32.xlu0 %v1583, 64
        %v1634 = vpop.permute.xlu0 %1633
        %1635 = vrot.lane.b32.xlu0 %v1584, 64
        %v1636 = vpop.permute.xlu0 %1635
        %1637 = vrot.lane.b32.xlu0 %v1585, 64
        %v1638 = vpop.permute.xlu0 %1637
        %1639 = vrot.lane.b32.xlu0 %v1586, 64
        %v1640 = vpop.permute.xlu0 %1639
        %1641 = vrot.lane.b32.xlu0 %v1587, 64
        %v1642 = vpop.permute.xlu0 %1641
        %1643 = vrot.lane.b32.xlu0 %v1588, 64
        %v1644 = vpop.permute.xlu0 %1643
        %1645 = vrot.lane.b32.xlu0 %v1589, 64
        %v1646 = vpop.permute.xlu0 %1645
        %1647 = vrot.lane.b32.xlu0 %v1590, 64
        %v1648 = vpop.permute.xlu0 %1647
        %1649 = vrot.lane.b32.xlu0 %v1591, 64
        %v1650 = vpop.permute.xlu0 %1649
        %1651 = vrot.lane.b32.xlu0 %v1592, 64
        %v1652 = vpop.permute.xlu0 %1651
        %1653 = vrot.lane.b32.xlu0 %v1593, 64
        %v1654 = vpop.permute.xlu0 %1653
        %1655 = vrot.lane.b32.xlu0 %v1594, 64
        %v1656 = vpop.permute.xlu0 %1655
        %1657 = vrot.lane.b32.xlu0 %v1595, 64
        %v1658 = vpop.permute.xlu0 %1657
        %1659 = vrot.lane.b32.xlu0 %v1596, 64
        %v1660 = vpop.permute.xlu0 %1659
        %1661 = vrot.lane.b32.xlu0 %v1597, 64
        %v1662 = vpop.permute.xlu0 %1661
        %1663 = vrot.lane.b32.xlu0 %v1598, 64
        %v1664 = vpop.permute.xlu0 %1663
        %1665 = vrot.lane.b32.xlu0 %v1599, 64
        %v1666 = vpop.permute.xlu0 %1665
        %1667 = vrot.lane.b32.xlu0 %v1600, 64
        %v1668 = vpop.permute.xlu0 %1667
        %1669 = vrot.lane.b32.xlu0 %v1601, 64
        %v1670 = vpop.permute.xlu0 %1669
        %1671 = vrot.lane.b32.xlu0 %v1602, 64
        %v1672 = vpop.permute.xlu0 %1671
        %1673 = vrot.lane.b32.xlu0 %v1603, 64
        %v1674 = vpop.permute.xlu0 %1673
        %1675 = vrot.lane.b32.xlu0 %v1604, 64
        %v1676 = vpop.permute.xlu0 %1675
        %1701 = vst.msk [vmem:[#allocation3 + $0x8] sm:$0xff] %vm1027, %v1630
        %1702 = vst.msk [vmem:[#allocation3 + $0x20] sm:$0xff] %vm1027, %v1632
        %1703 = vst.msk [vmem:[#allocation3 + $0x38] sm:$0xff] %vm1027, %v1634
        %1704 = vst.msk [vmem:[#allocation3 + $0x50] sm:$0xff] %vm1027, %v1636
        %1705 = vst.msk [vmem:[#allocation3 + $0x68] sm:$0xff] %vm1027, %v1638
        %1706 = vst.msk [vmem:[#allocation3 + $0x80] sm:$0xff] %vm1027, %v1640
        %1707 = vst.msk [vmem:[#allocation3 + $0x98] sm:$0xff] %vm1027, %v1642
        %1708 = vst.msk [vmem:[#allocation3 + $0xb0] sm:$0xff] %vm1027, %v1644
        %1709 = vst.msk [vmem:[#allocation3 + $0xc8] sm:$0xff] %vm1027, %v1646
        %1710 = vst.msk [vmem:[#allocation3 + $0xe0] sm:$0xff] %vm1027, %v1648
        %1711 = vst.msk [vmem:[#allocation3 + $0xf8] sm:$0xff] %vm1027, %v1650
        %1712 = vst.msk [vmem:[#allocation3 + $0x110] sm:$0xff] %vm1027, %v1652
        %1713 = vst.msk [vmem:[#allocation3 + $0x128] sm:$0xff] %vm1027, %v1654
        %1714 = vst.msk [vmem:[#allocation3 + $0x140] sm:$0xff] %vm1027, %v1656
        %1715 = vst.msk [vmem:[#allocation3 + $0x158] sm:$0xff] %vm1027, %v1658
        %1716 = vst.msk [vmem:[#allocation3 + $0x170] sm:$0xff] %vm1027, %v1660
        %1717 = vst.msk [vmem:[#allocation3 + $0x188] sm:$0xff] %vm1027, %v1662
        %1718 = vst.msk [vmem:[#allocation3 + $0x1a0] sm:$0xff] %vm1027, %v1664
        %1719 = vst.msk [vmem:[#allocation3 + $0x1b8] sm:$0xff] %vm1027, %v1666
        %1720 = vst.msk [vmem:[#allocation3 + $0x1d0] sm:$0xff] %vm1027, %v1668
        %1721 = vst.msk [vmem:[#allocation3 + $0x1e8] sm:$0xff] %vm1027, %v1670
        %1722 = vst.msk [vmem:[#allocation3 + $0x200] sm:$0xff] %vm1027, %v1672
        %1723 = vst.msk [vmem:[#allocation3 + $0x218] sm:$0xff] %vm1027, %v1674
        %1724 = vst.msk [vmem:[#allocation3 + $0x230] sm:$0xff] %vm1027, %v1676
        %v1725 = vld [vmem:[#allocation2 + $0x38] sm:$0xff]
        %v1726 = vld [vmem:[#allocation2 + $0x40] sm:$0xff]
        %v1727 = vld [vmem:[#allocation2 + $0x48] sm:$0xff]
        %v1728 = vld [vmem:[#allocation2 + $0x50] sm:$0xff]
        %v1729 = vld [vmem:[#allocation2 + $0x58] sm:$0xff]
        %v1730 = vld [vmem:[#allocation2 + $0x60] sm:$0xff]
        %v1731 = vld [vmem:[#allocation2 + $0x68] sm:$0xff]
        %v1732 = vld [vmem:[#allocation2 + $0x70] sm:$0xff]
        %v1733 = vld [vmem:[#allocation2 + $0x78] sm:$0xff]
        %v1734 = vld [vmem:[#allocation2 + $0x80] sm:$0xff]
        %v1735 = vld [vmem:[#allocation2 + $0x88] sm:$0xff]
        %v1736 = vld [vmem:[#allocation2 + $0x90] sm:$0xff]
        %v1737 = vld [vmem:[#allocation2 + $0x98] sm:$0xff]
        %v1738 = vld [vmem:[#allocation2 + $0xa0] sm:$0xff]
        %v1739 = vld [vmem:[#allocation2 + $0xa8] sm:$0xff]
        %v1740 = vld [vmem:[#allocation2 + $0xb0] sm:$0xff]
        %v1741 = vld [vmem:[#allocation2 + $0xb8] sm:$0xff]
        %v1742 = vld [vmem:[#allocation2 + $0xc0] sm:$0xff]
        %v1743 = vld [vmem:[#allocation2 + $0xc8] sm:$0xff]
        %v1744 = vld [vmem:[#allocation2 + $0xd0] sm:$0xff]
        %v1745 = vld [vmem:[#allocation2 + $0xd8] sm:$0xff]
        %v1746 = vld [vmem:[#allocation2 + $0xe0] sm:$0xff]
        %v1747 = vld [vmem:[#allocation2 + $0xe8] sm:$0xff]
        %v1748 = vld [vmem:[#allocation2 + $0xf0] sm:$0xff]
        %v1749 = vld [vmem:[#allocation2 + $0xf8] sm:$0xff]
        %v1750 = vld [vmem:[#allocation2 + $0x100] sm:$0xff]
        %v1751 = vld [vmem:[#allocation2 + $0x108] sm:$0xff]
        %v1752 = vld [vmem:[#allocation2 + $0x110] sm:$0xff]
        %v1753 = vld [vmem:[#allocation2 + $0x118] sm:$0xff]
        %v1754 = vld [vmem:[#allocation2 + $0x120] sm:$0xff]
        %v1755 = vld [vmem:[#allocation2 + $0x128] sm:$0xff]
        %v1756 = vld [vmem:[#allocation2 + $0x130] sm:$0xff]
        %v1757 = vld [vmem:[#allocation2 + $0x138] sm:$0xff]
        %v1758 = vld [vmem:[#allocation2 + $0x140] sm:$0xff]
        %v1759 = vld [vmem:[#allocation2 + $0x148] sm:$0xff]
        %v1760 = vld [vmem:[#allocation2 + $0x150] sm:$0xff]
        %v1761 = vld [vmem:[#allocation2 + $0x158] sm:$0xff]
        %v1762 = vld [vmem:[#allocation2 + $0x160] sm:$0xff]
        %v1763 = vld [vmem:[#allocation2 + $0x168] sm:$0xff]
        %v1764 = vld [vmem:[#allocation2 + $0x170] sm:$0xff]
        %v1765 = vld [vmem:[#allocation2 + $0x178] sm:$0xff]
        %v1766 = vld [vmem:[#allocation2 + $0x180] sm:$0xff]
        %v1767 = vld [vmem:[#allocation2 + $0x188] sm:$0xff]
        %v1768 = vld [vmem:[#allocation2 + $0x190] sm:$0xff]
        %v1769 = vld [vmem:[#allocation2 + $0x198] sm:$0xff]
        %v1770 = vld [vmem:[#allocation2 + $0x1a0] sm:$0xff]
        %v1771 = vld [vmem:[#allocation2 + $0x1a8] sm:$0xff]
        %v1772 = vld [vmem:[#allocation2 + $0x1b0] sm:$0xff]
        %v1773 = vpack.c.bf16 %v1726, %v1725
        %v1774 = vpack.c.bf16 %v1728, %v1727
        %v1775 = vpack.c.bf16 %v1730, %v1729
        %v1776 = vpack.c.bf16 %v1732, %v1731
        %v1777 = vpack.c.bf16 %v1734, %v1733
        %v1778 = vpack.c.bf16 %v1736, %v1735
        %v1779 = vpack.c.bf16 %v1738, %v1737
        %v1780 = vpack.c.bf16 %v1740, %v1739
        %v1781 = vpack.c.bf16 %v1742, %v1741
        %v1782 = vpack.c.bf16 %v1744, %v1743
        %v1783 = vpack.c.bf16 %v1746, %v1745
        %v1784 = vpack.c.bf16 %v1748, %v1747
        %v1785 = vpack.c.bf16 %v1750, %v1749
        %v1786 = vpack.c.bf16 %v1752, %v1751
        %v1787 = vpack.c.bf16 %v1754, %v1753
        %v1788 = vpack.c.bf16 %v1756, %v1755
        %v1789 = vpack.c.bf16 %v1758, %v1757
        %v1790 = vpack.c.bf16 %v1760, %v1759
        %v1791 = vpack.c.bf16 %v1762, %v1761
        %v1792 = vpack.c.bf16 %v1764, %v1763
        %v1793 = vpack.c.bf16 %v1766, %v1765
        %v1794 = vpack.c.bf16 %v1768, %v1767
        %v1795 = vpack.c.bf16 %v1770, %v1769
        %v1796 = vpack.c.bf16 %v1772, %v1771
        %1821 = vrot.lane.b32.xlu0 %v1773, 96
        %v1822 = vpop.permute.xlu0 %1821
        %1823 = vrot.lane.b32.xlu0 %v1774, 96
        %v1824 = vpop.permute.xlu0 %1823
        %1825 = vrot.lane.b32.xlu0 %v1775, 96
        %v1826 = vpop.permute.xlu0 %1825
        %1827 = vrot.lane.b32.xlu0 %v1776, 96
        %v1828 = vpop.permute.xlu0 %1827
        %1829 = vrot.lane.b32.xlu0 %v1777, 96
        %v1830 = vpop.permute.xlu0 %1829
        %1831 = vrot.lane.b32.xlu0 %v1778, 96
        %v1832 = vpop.permute.xlu0 %1831
        %1833 = vrot.lane.b32.xlu0 %v1779, 96
        %v1834 = vpop.permute.xlu0 %1833
        %1835 = vrot.lane.b32.xlu0 %v1780, 96
        %v1836 = vpop.permute.xlu0 %1835
        %1837 = vrot.lane.b32.xlu0 %v1781, 96
        %v1838 = vpop.permute.xlu0 %1837
        %1839 = vrot.lane.b32.xlu0 %v1782, 96
        %v1840 = vpop.permute.xlu0 %1839
        %1841 = vrot.lane.b32.xlu0 %v1783, 96
        %v1842 = vpop.permute.xlu0 %1841
        %1843 = vrot.lane.b32.xlu0 %v1784, 96
        %v1844 = vpop.permute.xlu0 %1843
        %1845 = vrot.lane.b32.xlu0 %v1785, 96
        %v1846 = vpop.permute.xlu0 %1845
        %1847 = vrot.lane.b32.xlu0 %v1786, 96
        %v1848 = vpop.permute.xlu0 %1847
        %1849 = vrot.lane.b32.xlu0 %v1787, 96
        %v1850 = vpop.permute.xlu0 %1849
        %1851 = vrot.lane.b32.xlu0 %v1788, 96
        %v1852 = vpop.permute.xlu0 %1851
        %1853 = vrot.lane.b32.xlu0 %v1789, 96
        %v1854 = vpop.permute.xlu0 %1853
        %1855 = vrot.lane.b32.xlu0 %v1790, 96
        %v1856 = vpop.permute.xlu0 %1855
        %1857 = vrot.lane.b32.xlu0 %v1791, 96
        %v1858 = vpop.permute.xlu0 %1857
        %1859 = vrot.lane.b32.xlu0 %v1792, 96
        %v1860 = vpop.permute.xlu0 %1859
        %1861 = vrot.lane.b32.xlu0 %v1793, 96
        %v1862 = vpop.permute.xlu0 %1861
        %1863 = vrot.lane.b32.xlu0 %v1794, 96
        %v1864 = vpop.permute.xlu0 %1863
        %1865 = vrot.lane.b32.xlu0 %v1795, 96
        %v1866 = vpop.permute.xlu0 %1865
        %1867 = vrot.lane.b32.xlu0 %v1796, 96
        %v1868 = vpop.permute.xlu0 %1867
        %1893 = vst.msk [vmem:[#allocation3 + $0x8] sm:$0xff] %vm1220, %v1822
        %1894 = vst.msk [vmem:[#allocation3 + $0x20] sm:$0xff] %vm1220, %v1824
        %1895 = vst.msk [vmem:[#allocation3 + $0x38] sm:$0xff] %vm1220, %v1826
        %1896 = vst.msk [vmem:[#allocation3 + $0x50] sm:$0xff] %vm1220, %v1828
        %1897 = vst.msk [vmem:[#allocation3 + $0x68] sm:$0xff] %vm1220, %v1830
        %1898 = vst.msk [vmem:[#allocation3 + $0x80] sm:$0xff] %vm1220, %v1832
        %1899 = vst.msk [vmem:[#allocation3 + $0x98] sm:$0xff] %vm1220, %v1834
        %1900 = vst.msk [vmem:[#allocation3 + $0xb0] sm:$0xff] %vm1220, %v1836
        %1901 = vst.msk [vmem:[#allocation3 + $0xc8] sm:$0xff] %vm1220, %v1838
        %1902 = vst.msk [vmem:[#allocation3 + $0xe0] sm:$0xff] %vm1220, %v1840
        %1903 = vst.msk [vmem:[#allocation3 + $0xf8] sm:$0xff] %vm1220, %v1842
        %1904 = vst.msk [vmem:[#allocation3 + $0x110] sm:$0xff] %vm1220, %v1844
        %1905 = vst.msk [vmem:[#allocation3 + $0x128] sm:$0xff] %vm1220, %v1846
        %1906 = vst.msk [vmem:[#allocation3 + $0x140] sm:$0xff] %vm1220, %v1848
        %1907 = vst.msk [vmem:[#allocation3 + $0x158] sm:$0xff] %vm1220, %v1850
        %1908 = vst.msk [vmem:[#allocation3 + $0x170] sm:$0xff] %vm1220, %v1852
        %1909 = vst.msk [vmem:[#allocation3 + $0x188] sm:$0xff] %vm1220, %v1854
        %1910 = vst.msk [vmem:[#allocation3 + $0x1a0] sm:$0xff] %vm1220, %v1856
        %1911 = vst.msk [vmem:[#allocation3 + $0x1b8] sm:$0xff] %vm1220, %v1858
        %1912 = vst.msk [vmem:[#allocation3 + $0x1d0] sm:$0xff] %vm1220, %v1860
        %1913 = vst.msk [vmem:[#allocation3 + $0x1e8] sm:$0xff] %vm1220, %v1862
        %1914 = vst.msk [vmem:[#allocation3 + $0x200] sm:$0xff] %vm1220, %v1864
        %1915 = vst.msk [vmem:[#allocation3 + $0x218] sm:$0xff] %vm1220, %v1866
        %1916 = vst.msk [vmem:[#allocation3 + $0x230] sm:$0xff] %vm1220, %v1868
        %v1917 = vld [vmem:[#allocation2 + $0x39] sm:$0xff]
        %v1918 = vld [vmem:[#allocation2 + $0x41] sm:$0xff]
        %v1919 = vld [vmem:[#allocation2 + $0x49] sm:$0xff]
        %v1920 = vld [vmem:[#allocation2 + $0x51] sm:$0xff]
        %v1921 = vld [vmem:[#allocation2 + $0x59] sm:$0xff]
        %v1922 = vld [vmem:[#allocation2 + $0x61] sm:$0xff]
        %v1923 = vld [vmem:[#allocation2 + $0x69] sm:$0xff]
        %v1924 = vld [vmem:[#allocation2 + $0x71] sm:$0xff]
        %v1925 = vld [vmem:[#allocation2 + $0x79] sm:$0xff]
        %v1926 = vld [vmem:[#allocation2 + $0x81] sm:$0xff]
        %v1927 = vld [vmem:[#allocation2 + $0x89] sm:$0xff]
        %v1928 = vld [vmem:[#allocation2 + $0x91] sm:$0xff]
        %v1929 = vld [vmem:[#allocation2 + $0x99] sm:$0xff]
        %v1930 = vld [vmem:[#allocation2 + $0xa1] sm:$0xff]
        %v1931 = vld [vmem:[#allocation2 + $0xa9] sm:$0xff]
        %v1932 = vld [vmem:[#allocation2 + $0xb1] sm:$0xff]
        %v1933 = vld [vmem:[#allocation2 + $0xb9] sm:$0xff]
        %v1934 = vld [vmem:[#allocation2 + $0xc1] sm:$0xff]
        %v1935 = vld [vmem:[#allocation2 + $0xc9] sm:$0xff]
        %v1936 = vld [vmem:[#allocation2 + $0xd1] sm:$0xff]
        %v1937 = vld [vmem:[#allocation2 + $0xd9] sm:$0xff]
        %v1938 = vld [vmem:[#allocation2 + $0xe1] sm:$0xff]
        %v1939 = vld [vmem:[#allocation2 + $0xe9] sm:$0xff]
        %v1940 = vld [vmem:[#allocation2 + $0xf1] sm:$0xff]
        %v1941 = vld [vmem:[#allocation2 + $0xf9] sm:$0xff]
        %v1942 = vld [vmem:[#allocation2 + $0x101] sm:$0xff]
        %v1943 = vld [vmem:[#allocation2 + $0x109] sm:$0xff]
        %v1944 = vld [vmem:[#allocation2 + $0x111] sm:$0xff]
        %v1945 = vld [vmem:[#allocation2 + $0x119] sm:$0xff]
        %v1946 = vld [vmem:[#allocation2 + $0x121] sm:$0xff]
        %v1947 = vld [vmem:[#allocation2 + $0x129] sm:$0xff]
        %v1948 = vld [vmem:[#allocation2 + $0x131] sm:$0xff]
        %v1949 = vld [vmem:[#allocation2 + $0x139] sm:$0xff]
        %v1950 = vld [vmem:[#allocation2 + $0x141] sm:$0xff]
        %v1951 = vld [vmem:[#allocation2 + $0x149] sm:$0xff]
        %v1952 = vld [vmem:[#allocation2 + $0x151] sm:$0xff]
        %v1953 = vld [vmem:[#allocation2 + $0x159] sm:$0xff]
        %v1954 = vld [vmem:[#allocation2 + $0x161] sm:$0xff]
        %v1955 = vld [vmem:[#allocation2 + $0x169] sm:$0xff]
        %v1956 = vld [vmem:[#allocation2 + $0x171] sm:$0xff]
        %v1957 = vld [vmem:[#allocation2 + $0x179] sm:$0xff]
        %v1958 = vld [vmem:[#allocation2 + $0x181] sm:$0xff]
        %v1959 = vld [vmem:[#allocation2 + $0x189] sm:$0xff]
        %v1960 = vld [vmem:[#allocation2 + $0x191] sm:$0xff]
        %v1961 = vld [vmem:[#allocation2 + $0x199] sm:$0xff]
        %v1962 = vld [vmem:[#allocation2 + $0x1a1] sm:$0xff]
        %v1963 = vld [vmem:[#allocation2 + $0x1a9] sm:$0xff]
        %v1964 = vld [vmem:[#allocation2 + $0x1b1] sm:$0xff]
        %v1965 = vpack.c.bf16 %v1918, %v1917
        %v1966 = vpack.c.bf16 %v1920, %v1919
        %v1967 = vpack.c.bf16 %v1922, %v1921
        %v1968 = vpack.c.bf16 %v1924, %v1923
        %v1969 = vpack.c.bf16 %v1926, %v1925
        %v1970 = vpack.c.bf16 %v1928, %v1927
        %v1971 = vpack.c.bf16 %v1930, %v1929
        %v1972 = vpack.c.bf16 %v1932, %v1931
        %v1973 = vpack.c.bf16 %v1934, %v1933
        %v1974 = vpack.c.bf16 %v1936, %v1935
        %v1975 = vpack.c.bf16 %v1938, %v1937
        %v1976 = vpack.c.bf16 %v1940, %v1939
        %v1977 = vpack.c.bf16 %v1942, %v1941
        %v1978 = vpack.c.bf16 %v1944, %v1943
        %v1979 = vpack.c.bf16 %v1946, %v1945
        %v1980 = vpack.c.bf16 %v1948, %v1947
        %v1981 = vpack.c.bf16 %v1950, %v1949
        %v1982 = vpack.c.bf16 %v1952, %v1951
        %v1983 = vpack.c.bf16 %v1954, %v1953
        %v1984 = vpack.c.bf16 %v1956, %v1955
        %v1985 = vpack.c.bf16 %v1958, %v1957
        %v1986 = vpack.c.bf16 %v1960, %v1959
        %v1987 = vpack.c.bf16 %v1962, %v1961
        %v1988 = vpack.c.bf16 %v1964, %v1963
        %1989 = vst.msk [vmem:[#allocation3 + $0x10] sm:$0xff] %vm386, %v1965
        %1990 = vst.msk [vmem:[#allocation3 + $0x28] sm:$0xff] %vm386, %v1966
        %1991 = vst.msk [vmem:[#allocation3 + $0x40] sm:$0xff] %vm386, %v1967
        %1992 = vst.msk [vmem:[#allocation3 + $0x58] sm:$0xff] %vm386, %v1968
        %1993 = vst.msk [vmem:[#allocation3 + $0x70] sm:$0xff] %vm386, %v1969
        %1994 = vst.msk [vmem:[#allocation3 + $0x88] sm:$0xff] %vm386, %v1970
        %1995 = vst.msk [vmem:[#allocation3 + $0xa0] sm:$0xff] %vm386, %v1971
        %1996 = vst.msk [vmem:[#allocation3 + $0xb8] sm:$0xff] %vm386, %v1972
        %1997 = vst.msk [vmem:[#allocation3 + $0xd0] sm:$0xff] %vm386, %v1973
        %1998 = vst.msk [vmem:[#allocation3 + $0xe8] sm:$0xff] %vm386, %v1974
        %1999 = vst.msk [vmem:[#allocation3 + $0x100] sm:$0xff] %vm386, %v1975
        %2000 = vst.msk [vmem:[#allocation3 + $0x118] sm:$0xff] %vm386, %v1976
        %2001 = vst.msk [vmem:[#allocation3 + $0x130] sm:$0xff] %vm386, %v1977
        %2002 = vst.msk [vmem:[#allocation3 + $0x148] sm:$0xff] %vm386, %v1978
        %2003 = vst.msk [vmem:[#allocation3 + $0x160] sm:$0xff] %vm386, %v1979
        %2004 = vst.msk [vmem:[#allocation3 + $0x178] sm:$0xff] %vm386, %v1980
        %2005 = vst.msk [vmem:[#allocation3 + $0x190] sm:$0xff] %vm386, %v1981
        %2006 = vst.msk [vmem:[#allocation3 + $0x1a8] sm:$0xff] %vm386, %v1982
        %2007 = vst.msk [vmem:[#allocation3 + $0x1c0] sm:$0xff] %vm386, %v1983
        %2008 = vst.msk [vmem:[#allocation3 + $0x1d8] sm:$0xff] %vm386, %v1984
        %2009 = vst.msk [vmem:[#allocation3 + $0x1f0] sm:$0xff] %vm386, %v1985
        %2010 = vst.msk [vmem:[#allocation3 + $0x208] sm:$0xff] %vm386, %v1986
        %2011 = vst.msk [vmem:[#allocation3 + $0x220] sm:$0xff] %vm386, %v1987
        %2012 = vst.msk [vmem:[#allocation3 + $0x238] sm:$0xff] %vm386, %v1988
        %v2013 = vld [vmem:[#allocation3] sm:$0xff]
        %v2014 = vld [vmem:[#allocation3 + $0x8] sm:$0xff]
        %v2015 = vld [vmem:[#allocation3 + $0x10] sm:$0xff]
        %v2016 = vld [vmem:[#allocation3 + $0x18] sm:$0xff]
        %v2017 = vld [vmem:[#allocation3 + $0x20] sm:$0xff]
        %v2018 = vld [vmem:[#allocation3 + $0x28] sm:$0xff]
        %v2019 = vld [vmem:[#allocation3 + $0x30] sm:$0xff]
        %v2020 = vld [vmem:[#allocation3 + $0x38] sm:$0xff]
        %v2021 = vld [vmem:[#allocation3 + $0x40] sm:$0xff]
        %v2022 = vld [vmem:[#allocation3 + $0x48] sm:$0xff]
        %v2023 = vld [vmem:[#allocation3 + $0x50] sm:$0xff]
        %v2024 = vld [vmem:[#allocation3 + $0x58] sm:$0xff]
        %v2025 = vld [vmem:[#allocation3 + $0x60] sm:$0xff]
        %v2026 = vld [vmem:[#allocation3 + $0x68] sm:$0xff]
        %v2027 = vld [vmem:[#allocation3 + $0x70] sm:$0xff]
        %v2028 = vld [vmem:[#allocation3 + $0x78] sm:$0xff]
        %v2029 = vld [vmem:[#allocation3 + $0x80] sm:$0xff]
        %v2030 = vld [vmem:[#allocation3 + $0x88] sm:$0xff]
        %v2031 = vld [vmem:[#allocation3 + $0x90] sm:$0xff]
        %v2032 = vld [vmem:[#allocation3 + $0x98] sm:$0xff]
        %v2033 = vld [vmem:[#allocation3 + $0xa0] sm:$0xff]
        %v2034 = vld [vmem:[#allocation3 + $0xa8] sm:$0xff]
        %v2035 = vld [vmem:[#allocation3 + $0xb0] sm:$0xff]
        %v2036 = vld [vmem:[#allocation3 + $0xb8] sm:$0xff]
        %v2037 = vld [vmem:[#allocation3 + $0xc0] sm:$0xff]
        %v2038 = vld [vmem:[#allocation3 + $0xc8] sm:$0xff]
        %v2039 = vld [vmem:[#allocation3 + $0xd0] sm:$0xff]
        %v2040 = vld [vmem:[#allocation3 + $0xd8] sm:$0xff]
        %v2041 = vld [vmem:[#allocation3 + $0xe0] sm:$0xff]
        %v2042 = vld [vmem:[#allocation3 + $0xe8] sm:$0xff]
        %v2043 = vld [vmem:[#allocation3 + $0xf0] sm:$0xff]
        %v2044 = vld [vmem:[#allocation3 + $0xf8] sm:$0xff]
        %v2045 = vld [vmem:[#allocation3 + $0x100] sm:$0xff]
        %v2046 = vld [vmem:[#allocation3 + $0x108] sm:$0xff]
        %v2047 = vld [vmem:[#allocation3 + $0x110] sm:$0xff]
        %v2048 = vld [vmem:[#allocation3 + $0x118] sm:$0xff]
        %v2049 = vld [vmem:[#allocation3 + $0x120] sm:$0xff]
        %v2050 = vld [vmem:[#allocation3 + $0x128] sm:$0xff]
        %v2051 = vld [vmem:[#allocation3 + $0x130] sm:$0xff]
        %v2052 = vld [vmem:[#allocation3 + $0x138] sm:$0xff]
        %v2053 = vld [vmem:[#allocation3 + $0x140] sm:$0xff]
        %v2054 = vld [vmem:[#allocation3 + $0x148] sm:$0xff]
        %v2055 = vld [vmem:[#allocation3 + $0x150] sm:$0xff]
        %v2056 = vld [vmem:[#allocation3 + $0x158] sm:$0xff]
        %v2057 = vld [vmem:[#allocation3 + $0x160] sm:$0xff]
        %v2058 = vld [vmem:[#allocation3 + $0x168] sm:$0xff]
        %v2059 = vld [vmem:[#allocation3 + $0x170] sm:$0xff]
        %v2060 = vld [vmem:[#allocation3 + $0x178] sm:$0xff]
        %v2061 = vld [vmem:[#allocation3 + $0x180] sm:$0xff]
        %v2062 = vld [vmem:[#allocation3 + $0x188] sm:$0xff]
        %v2063 = vld [vmem:[#allocation3 + $0x190] sm:$0xff]
        %v2064 = vld [vmem:[#allocation3 + $0x198] sm:$0xff]
        %v2065 = vld [vmem:[#allocation3 + $0x1a0] sm:$0xff]
        %v2066 = vld [vmem:[#allocation3 + $0x1a8] sm:$0xff]
        %v2067 = vld [vmem:[#allocation3 + $0x1b0] sm:$0xff]
        %v2068 = vld [vmem:[#allocation3 + $0x1b8] sm:$0xff]
        %v2069 = vld [vmem:[#allocation3 + $0x1c0] sm:$0xff]
        %v2070 = vld [vmem:[#allocation3 + $0x1c8] sm:$0xff]
        %v2071 = vld [vmem:[#allocation3 + $0x1d0] sm:$0xff]
        %v2072 = vld [vmem:[#allocation3 + $0x1d8] sm:$0xff]
        %v2073 = vld [vmem:[#allocation3 + $0x1e0] sm:$0xff]
        %v2074 = vld [vmem:[#allocation3 + $0x1e8] sm:$0xff]
        %v2075 = vld [vmem:[#allocation3 + $0x1f0] sm:$0xff]
        %v2076 = vld [vmem:[#allocation3 + $0x1f8] sm:$0xff]
        %v2077 = vld [vmem:[#allocation3 + $0x200] sm:$0xff]
        %v2078 = vld [vmem:[#allocation3 + $0x208] sm:$0xff]
        %v2079 = vld [vmem:[#allocation3 + $0x210] sm:$0xff]
        %v2080 = vld [vmem:[#allocation3 + $0x218] sm:$0xff]
        %v2081 = vld [vmem:[#allocation3 + $0x220] sm:$0xff]
        %v2082 = vld [vmem:[#allocation3 + $0x228] sm:$0xff]
        %v2083 = vld [vmem:[#allocation3 + $0x230] sm:$0xff]
        %v2084 = vld [vmem:[#allocation3 + $0x238] sm:$0xff]
        %v2085 = vld [vmem:[%s3] sm:$0xf]
        %v2086 = vld [vmem:[%s3 + $0x4] sm:$0xf]
        %v2087 = vld [vmem:[%s3 + $0x8] sm:$0xf]
        %v2088 = vld [vmem:[%s3 + $0xc] sm:$0xf]
        %v2089 = vld [vmem:[%s3 + $0x10] sm:$0xf]
        %v2090 = vld [vmem:[%s3 + $0x14] sm:$0xf]
        %v2091 = vld [vmem:[%s3 + $0x18] sm:$0xf]
        %v2092 = vld [vmem:[%s3 + $0x1c] sm:$0xf]
        %v2093 = vld [vmem:[%s3 + $0x20] sm:$0xf]
        %v2094 = vld [vmem:[%s3 + $0x24] sm:$0xf]
        %v2095 = vld [vmem:[%s3 + $0x28] sm:$0xf]
        %v2096 = vld [vmem:[%s3 + $0x2c] sm:$0xf]
        %v2097 = vld [vmem:[%s3 + $0x30] sm:$0xf]
        %v2098 = vld [vmem:[%s3 + $0x34] sm:$0xf]
        %v2099 = vld [vmem:[%s3 + $0x38] sm:$0xf]
        %v2100 = vld [vmem:[%s3 + $0x3c] sm:$0xf]
        %v2101 = vld [vmem:[%s3 + $0x40] sm:$0xf]
        %v2102 = vld [vmem:[%s3 + $0x44] sm:$0xf]
        %v2103 = vld [vmem:[%s3 + $0x48] sm:$0xf]
        %v2104 = vld [vmem:[%s3 + $0x4c] sm:$0xf]
        %v2105 = vld [vmem:[%s3 + $0x50] sm:$0xf]
        %v2106 = vld [vmem:[%s3 + $0x54] sm:$0xf]
        %v2107 = vld [vmem:[%s3 + $0x58] sm:$0xf]
        %v2108 = vld [vmem:[%s3 + $0x5c] sm:$0xf]
        %v2109 = vld [vmem:[%s3 + $0x60] sm:$0xf]
        %v2110 = vld [vmem:[%s3 + $0x64] sm:$0xf]
        %v2111 = vld [vmem:[%s3 + $0x68] sm:$0xf]
        %v2112 = vld [vmem:[%s3 + $0x6c] sm:$0xf]
        %v2113 = vld [vmem:[%s3 + $0x70] sm:$0xf]
        %v2114 = vld [vmem:[%s3 + $0x74] sm:$0xf]
        %v2115 = vld [vmem:[%s3 + $0x78] sm:$0xf]
        %v2116 = vld [vmem:[%s3 + $0x7c] sm:$0xf]
        %v2117 = vld [vmem:[%s3 + $0x80] sm:$0xf]
        %v2118 = vld [vmem:[%s3 + $0x84] sm:$0xf]
        %v2119 = vld [vmem:[%s3 + $0x88] sm:$0xf]
        %v2120 = vld [vmem:[%s3 + $0x8c] sm:$0xf]
        %v2157 = vunpack.c.l.b16 %v2085
        %v2158 = vunpack.c.l.b16 %v2086
        %v2159 = vunpack.c.l.b16 %v2087
        %v2160 = vunpack.c.l.b16 %v2088
        %v2161 = vunpack.c.l.b16 %v2089
        %v2162 = vunpack.c.l.b16 %v2090
        %v2163 = vunpack.c.l.b16 %v2091
        %v2164 = vunpack.c.l.b16 %v2092
        %v2165 = vunpack.c.l.b16 %v2093
        %v2166 = vunpack.c.l.b16 %v2094
        %v2167 = vunpack.c.l.b16 %v2095
        %v2168 = vunpack.c.l.b16 %v2096
        %v2169 = vunpack.c.l.b16 %v2097
        %v2170 = vunpack.c.l.b16 %v2098
        %v2171 = vunpack.c.l.b16 %v2099
        %v2172 = vunpack.c.l.b16 %v2100
        %v2173 = vunpack.c.l.b16 %v2101
        %v2174 = vunpack.c.l.b16 %v2102
        %v2175 = vunpack.c.l.b16 %v2103
        %v2176 = vunpack.c.l.b16 %v2104
        %v2177 = vunpack.c.l.b16 %v2105
        %v2178 = vunpack.c.l.b16 %v2106
        %v2179 = vunpack.c.l.b16 %v2107
        %v2180 = vunpack.c.l.b16 %v2108
        %v2181 = vunpack.c.l.b16 %v2109
        %v2182 = vunpack.c.l.b16 %v2110
        %v2183 = vunpack.c.l.b16 %v2111
        %v2184 = vunpack.c.l.b16 %v2112
        %v2185 = vunpack.c.l.b16 %v2113
        %v2186 = vunpack.c.l.b16 %v2114
        %v2187 = vunpack.c.l.b16 %v2115
        %v2188 = vunpack.c.l.b16 %v2116
        %v2189 = vunpack.c.l.b16 %v2117
        %v2190 = vunpack.c.l.b16 %v2118
        %v2191 = vunpack.c.l.b16 %v2119
        %v2192 = vunpack.c.l.b16 %v2120
        %v2193 = vpack.c.b16 %v2158, %v2157
        %v2194 = vpack.c.b16 %v2160, %v2159
        %v2195 = vpack.c.b16 %v2162, %v2161
        %v2196 = vpack.c.b16 %v2164, %v2163
        %v2197 = vpack.c.b16 %v2166, %v2165
        %v2198 = vpack.c.b16 %v2168, %v2167
        %v2199 = vpack.c.b16 %v2170, %v2169
        %v2200 = vpack.c.b16 %v2172, %v2171
        %v2201 = vpack.c.b16 %v2174, %v2173
        %v2202 = vpack.c.b16 %v2176, %v2175
        %v2203 = vpack.c.b16 %v2178, %v2177
        %v2204 = vpack.c.b16 %v2180, %v2179
        %v2205 = vpack.c.b16 %v2182, %v2181
        %v2206 = vpack.c.b16 %v2184, %v2183
        %v2207 = vpack.c.b16 %v2186, %v2185
        %v2208 = vpack.c.b16 %v2188, %v2187
        %v2209 = vpack.c.b16 %v2190, %v2189
        %v2210 = vpack.c.b16 %v2192, %v2191
        %v2230 = vsel %vm386, %v2015, 0
        %v2233 = vsel %vm386, %v2018, 0
        %v2236 = vsel %vm386, %v2021, 0
        %v2239 = vsel %vm386, %v2024, 0
        %v2242 = vsel %vm386, %v2027, 0
        %v2245 = vsel %vm386, %v2030, 0
        %v2248 = vsel %vm386, %v2033, 0
        %v2251 = vsel %vm386, %v2036, 0
        %v2254 = vsel %vm386, %v2039, 0
        %v2257 = vsel %vm386, %v2042, 0
        %v2260 = vsel %vm386, %v2045, 0
        %v2263 = vsel %vm386, %v2048, 0
        %v2266 = vsel %vm386, %v2051, 0
        %v2269 = vsel %vm386, %v2054, 0
        %v2272 = vsel %vm386, %v2057, 0
        %v2275 = vsel %vm386, %v2060, 0
        %v2278 = vsel %vm386, %v2063, 0
        %v2281 = vsel %vm386, %v2066, 0
        %v2284 = vsel %vm386, %v2069, 0
        %v2287 = vsel %vm386, %v2072, 0
        %v2290 = vsel %vm386, %v2075, 0
        %v2293 = vsel %vm386, %v2078, 0
        %v2296 = vsel %vm386, %v2081, 0
        %v2299 = vsel %vm386, %v2084, 0
        %2301 = vmatprep.subr.bf16.mxu0 0
        %2302 = vmatpush1.bf16.msra.mxu0 %v2193
        %2303 = vmatprep.subr.bf16.mxu0 0
        %2304 = vmatpush1.bf16.msra.mxu0 %v2194
        %2305 = vmatprep.subr.bf16.mxu0 0
        %2306 = vmatpush1.bf16.msra.mxu0 %v2195
        %2307 = vmatprep.subr.bf16.mxu0 0
        %2308 = vmatpush1.bf16.msra.mxu0 %v2196
        %2309 = vmatprep.subr.bf16.mxu0 0
        %2310 = vmatpush1.bf16.msra.mxu0 %v2197
        %2311 = vmatprep.subr.bf16.mxu0 0
        %2312 = vmatpush1.bf16.msra.mxu0 %v2198
        %2313 = vmatprep.subr.bf16.mxu0 0
        %2314 = vmatpush1.bf16.msra.mxu0 %v2199
        %2315 = vmatprep.subr.bf16.mxu0 0
        %2316 = vmatpush1.bf16.msra.mxu0 %v2200
        %2317 = vmatprep.subr.bf16.mxu0 0
        %2318 = vmatpush1.bf16.msra.mxu0 %v2201
        %2319 = vmatprep.subr.bf16.mxu0 0
        %2320 = vmatpush1.bf16.msra.mxu0 %v2202
        %2321 = vmatprep.subr.bf16.mxu0 0
        %2322 = vmatpush1.bf16.msra.mxu0 %v2203
        %2323 = vmatprep.subr.bf16.mxu0 0
        %2324 = vmatpush1.bf16.msra.mxu0 %v2204
        %2325 = vmatprep.subr.bf16.mxu0 0
        %2326 = vmatpush1.bf16.msra.mxu0 %v2205
        %2327 = vmatprep.subr.bf16.mxu0 0
        %2328 = vmatpush1.bf16.msra.mxu0 %v2206
        %2329 = vmatprep.subr.bf16.mxu0 0
        %2330 = vmatpush1.bf16.msra.mxu0 %v2207
        %2331 = vmatprep.subr.bf16.mxu0 0
        %2332 = vmatpush1.bf16.msra.mxu0 %v2208
        %2333 = vmatprep.mubr.bf16.mxu0 %v2014
        %2334 = vmatmul.mubr.bf16.gmra.mrb[0].mxu0 %v2013
        %v2335 = vpop.f32.mrb[0].mxu0
        %v2336 = vadd.f32 0.0, %v2335
        %v2337 = vpop.f32.mrb[0].mxu0
        %v2338 = vpop.f32.mrb[0].mxu0
        %v2339 = vadd.f32 0.0, %v2338
        %v2340 = vpop.f32.mrb[0].mxu0
        %2341 = vmatprep.mubr.bf16.mxu0 %v2017
        %2342 = vmatmul.mubr.bf16.gmra.mrb[0].mxu0 %v2016
        %v2343 = vpop.f32.mrb[0].mxu0
        %v2344 = vadd.f32 0.0, %v2343
        %v2345 = vpop.f32.mrb[0].mxu0
        %v2346 = vpop.f32.mrb[0].mxu0
        %v2347 = vadd.f32 0.0, %v2346
        %v2348 = vpop.f32.mrb[0].mxu0
        %2349 = vmatprep.mubr.bf16.mxu0 %v2020
        %2350 = vmatmul.mubr.bf16.gmra.mrb[0].mxu0 %v2019
        %v2351 = vpop.f32.mrb[0].mxu0
        %v2352 = vadd.f32 0.0, %v2351
        %v2353 = vpop.f32.mrb[0].mxu0
        %v2354 = vpop.f32.mrb[0].mxu0
        %v2355 = vadd.f32 0.0, %v2354
        %v2356 = vpop.f32.mrb[0].mxu0
        %2357 = vmatprep.mubr.bf16.mxu0 %v2023
        %2358 = vmatmul.mubr.bf16.gmra.mrb[0].mxu0 %v2022
        %v2359 = vpop.f32.mrb[0].mxu0
        %v2360 = vadd.f32 0.0, %v2359
        %v2361 = vpop.f32.mrb[0].mxu0
        %v2362 = vpop.f32.mrb[0].mxu0
        %v2363 = vadd.f32 0.0, %v2362
        %v2364 = vpop.f32.mrb[0].mxu0
        %2365 = vmatprep.mubr.bf16.mxu0 %v2026
        %2366 = vmatmul.mubr.bf16.gmra.mrb[0].mxu0 %v2025
        %v2367 = vpop.f32.mrb[0].mxu0
        %v2368 = vadd.f32 0.0, %v2367
        %v2369 = vpop.f32.mrb[0].mxu0
        %v2370 = vpop.f32.mrb[0].mxu0
        %v2371 = vadd.f32 0.0, %v2370
        %v2372 = vpop.f32.mrb[0].mxu0
        %2373 = vmatprep.mubr.bf16.mxu0 %v2029
        %2374 = vmatmul.mubr.bf16.gmra.mrb[0].mxu0 %v2028
        %v2375 = vpop.f32.mrb[0].mxu0
        %v2376 = vadd.f32 0.0, %v2375
        %v2377 = vpop.f32.mrb[0].mxu0
        %v2378 = vpop.f32.mrb[0].mxu0
        %v2379 = vadd.f32 0.0, %v2378
        %v2380 = vpop.f32.mrb[0].mxu0
        %2381 = vmatprep.mubr.bf16.mxu0 %v2032
        %2382 = vmatmul.mubr.bf16.gmra.mrb[0].mxu0 %v2031
        %v2383 = vpop.f32.mrb[0].mxu0
        %v2384 = vadd.f32 0.0, %v2383
        %v2385 = vpop.f32.mrb[0].mxu0
        %v2386 = vpop.f32.mrb[0].mxu0
        %v2387 = vadd.f32 0.0, %v2386
        %v2388 = vpop.f32.mrb[0].mxu0
        %2389 = vmatprep.mubr.bf16.mxu0 %v2035
        %2390 = vmatmul.mubr.bf16.gmra.mrb[0].mxu0 %v2034
        %v2391 = vpop.f32.mrb[0].mxu0
        %v2392 = vadd.f32 0.0, %v2391
        %v2393 = vpop.f32.mrb[0].mxu0
        %v2394 = vpop.f32.mrb[0].mxu0
        %v2395 = vadd.f32 0.0, %v2394
        %v2396 = vpop.f32.mrb[0].mxu0
        %2397 = vmatprep.mubr.bf16.mxu0 %v2038
        %2398 = vmatmul.mubr.bf16.gmra.mrb[0].mxu0 %v2037
        %v2399 = vpop.f32.mrb[0].mxu0
        %v2400 = vadd.f32 0.0, %v2399
        %v2401 = vpop.f32.mrb[0].mxu0
        %v2402 = vpop.f32.mrb[0].mxu0
        %v2403 = vadd.f32 0.0, %v2402
        %v2404 = vpop.f32.mrb[0].mxu0
        %2405 = vmatprep.mubr.bf16.mxu0 %v2041
        %2406 = vmatmul.mubr.bf16.gmra.mrb[0].mxu0 %v2040
        %v2407 = vpop.f32.mrb[0].mxu0
        %v2408 = vadd.f32 0.0, %v2407
        %v2409 = vpop.f32.mrb[0].mxu0
        %v2410 = vpop.f32.mrb[0].mxu0
        %v2411 = vadd.f32 0.0, %v2410
        %v2412 = vpop.f32.mrb[0].mxu0
        %2413 = vmatprep.mubr.bf16.mxu0 %v2044
        %2414 = vmatmul.mubr.bf16.gmra.mrb[0].mxu0 %v2043
        %v2415 = vpop.f32.mrb[0].mxu0
        %v2416 = vadd.f32 0.0, %v2415
        %v2417 = vpop.f32.mrb[0].mxu0
        %v2418 = vpop.f32.mrb[0].mxu0
        %v2419 = vadd.f32 0.0, %v2418
        %v2420 = vpop.f32.mrb[0].mxu0
        %2421 = vmatprep.mubr.bf16.mxu0 %v2047
        %2422 = vmatmul.mubr.bf16.gmra.mrb[0].mxu0 %v2046
        %v2423 = vpop.f32.mrb[0].mxu0
        %v2424 = vadd.f32 0.0, %v2423
        %v2425 = vpop.f32.mrb[0].mxu0
        %v2426 = vpop.f32.mrb[0].mxu0
        %v2427 = vadd.f32 0.0, %v2426
        %v2428 = vpop.f32.mrb[0].mxu0
        %2429 = vmatprep.mubr.bf16.mxu0 %v2050
        %2430 = vmatmul.mubr.bf16.gmra.mrb[0].mxu0 %v2049
        %v2431 = vpop.f32.mrb[0].mxu0
        %v2432 = vadd.f32 0.0, %v2431
        %v2433 = vpop.f32.mrb[0].mxu0
        %v2434 = vpop.f32.mrb[0].mxu0
        %v2435 = vadd.f32 0.0, %v2434
        %v2436 = vpop.f32.mrb[0].mxu0
        %2437 = vmatprep.mubr.bf16.mxu0 %v2053
        %2438 = vmatmul.mubr.bf16.gmra.mrb[0].mxu0 %v2052
        %v2439 = vpop.f32.mrb[0].mxu0
        %v2440 = vadd.f32 0.0, %v2439
        %v2441 = vpop.f32.mrb[0].mxu0
        %v2442 = vpop.f32.mrb[0].mxu0
        %v2443 = vadd.f32 0.0, %v2442
        %v2444 = vpop.f32.mrb[0].mxu0
        %2445 = vmatprep.mubr.bf16.mxu0 %v2056
        %2446 = vmatmul.mubr.bf16.gmra.mrb[0].mxu0 %v2055
        %v2447 = vpop.f32.mrb[0].mxu0
        %v2448 = vadd.f32 0.0, %v2447
        %v2449 = vpop.f32.mrb[0].mxu0
        %v2450 = vpop.f32.mrb[0].mxu0
        %v2451 = vadd.f32 0.0, %v2450
        %v2452 = vpop.f32.mrb[0].mxu0
        %2453 = vmatprep.mubr.bf16.mxu0 %v2059
        %2454 = vmatmul.mubr.bf16.gmra.mrb[0].mxu0 %v2058
        %v2455 = vpop.f32.mrb[0].mxu0
        %v2456 = vadd.f32 0.0, %v2455
        %v2457 = vpop.f32.mrb[0].mxu0
        %v2458 = vpop.f32.mrb[0].mxu0
        %v2459 = vadd.f32 0.0, %v2458
        %v2460 = vpop.f32.mrb[0].mxu0
        %2461 = vmatprep.mubr.bf16.mxu0 %v2062
        %2462 = vmatmul.mubr.bf16.gmra.mrb[0].mxu0 %v2061
        %v2463 = vpop.f32.mrb[0].mxu0
        %v2464 = vadd.f32 0.0, %v2463
        %v2465 = vpop.f32.mrb[0].mxu0
        %v2466 = vpop.f32.mrb[0].mxu0
        %v2467 = vadd.f32 0.0, %v2466
        %v2468 = vpop.f32.mrb[0].mxu0
        %2469 = vmatprep.mubr.bf16.mxu0 %v2065
        %2470 = vmatmul.mubr.bf16.gmra.mrb[0].mxu0 %v2064
        %v2471 = vpop.f32.mrb[0].mxu0
        %v2472 = vadd.f32 0.0, %v2471
        %v2473 = vpop.f32.mrb[0].mxu0
        %v2474 = vpop.f32.mrb[0].mxu0
        %v2475 = vadd.f32 0.0, %v2474
        %v2476 = vpop.f32.mrb[0].mxu0
        %2477 = vmatprep.mubr.bf16.mxu0 %v2068
        %2478 = vmatmul.mubr.bf16.gmra.mrb[0].mxu0 %v2067
        %v2479 = vpop.f32.mrb[0].mxu0
        %v2480 = vadd.f32 0.0, %v2479
        %v2481 = vpop.f32.mrb[0].mxu0
        %v2482 = vpop.f32.mrb[0].mxu0
        %v2483 = vadd.f32 0.0, %v2482
        %v2484 = vpop.f32.mrb[0].mxu0
        %2485 = vmatprep.mubr.bf16.mxu0 %v2071
        %2486 = vmatmul.mubr.bf16.gmra.mrb[0].mxu0 %v2070
        %v2487 = vpop.f32.mrb[0].mxu0
        %v2488 = vadd.f32 0.0, %v2487
        %v2489 = vpop.f32.mrb[0].mxu0
        %v2490 = vpop.f32.mrb[0].mxu0
        %v2491 = vadd.f32 0.0, %v2490
        %v2492 = vpop.f32.mrb[0].mxu0
        %2493 = vmatprep.mubr.bf16.mxu0 %v2074
        %2494 = vmatmul.mubr.bf16.gmra.mrb[0].mxu0 %v2073
        %v2495 = vpop.f32.mrb[0].mxu0
        %v2496 = vadd.f32 0.0, %v2495
        %v2497 = vpop.f32.mrb[0].mxu0
        %v2498 = vpop.f32.mrb[0].mxu0
        %v2499 = vadd.f32 0.0, %v2498
        %v2500 = vpop.f32.mrb[0].mxu0
        %2501 = vmatprep.mubr.bf16.mxu0 %v2077
        %2502 = vmatmul.mubr.bf16.gmra.mrb[0].mxu0 %v2076
        %v2503 = vpop.f32.mrb[0].mxu0
        %v2504 = vadd.f32 0.0, %v2503
        %v2505 = vpop.f32.mrb[0].mxu0
        %v2506 = vpop.f32.mrb[0].mxu0
        %v2507 = vadd.f32 0.0, %v2506
        %v2508 = vpop.f32.mrb[0].mxu0
        %2509 = vmatprep.mubr.bf16.mxu0 %v2080
        %2510 = vmatmul.mubr.bf16.gmra.mrb[0].mxu0 %v2079
        %v2511 = vpop.f32.mrb[0].mxu0
        %v2512 = vadd.f32 0.0, %v2511
        %v2513 = vpop.f32.mrb[0].mxu0
        %v2514 = vpop.f32.mrb[0].mxu0
        %v2515 = vadd.f32 0.0, %v2514
        %v2516 = vpop.f32.mrb[0].mxu0
        %2517 = vmatprep.mubr.bf16.mxu0 %v2083
        %2518 = vmatmul.mubr.bf16.gmra.mrb[0].mxu0 %v2082
        %v2519 = vpop.f32.mrb[0].mxu0
        %v2520 = vadd.f32 0.0, %v2519
        %v2521 = vpop.f32.mrb[0].mxu0
        %v2522 = vpop.f32.mrb[0].mxu0
        %v2523 = vadd.f32 0.0, %v2522
        %v2524 = vpop.f32.mrb[0].mxu0
        %2525 = vdwg.mxu0
        %2526 = vmatprep.subr.bf16.mxu0 0
        %2527 = vmatpush1.bf16.msra.mxu0 %v2209
        %2528 = vmatprep.subr.bf16.mxu0 0
        %2529 = vmatpush1.bf16.msra.mxu0 %v2210
        %2530 = vmatprep.subr.bf16.mxu0 0
        %2531 = vmatpush1.bf16.msra.mxu0 0
        %2532 = vmatprep.subr.bf16.mxu0 0
        %2533 = vmatpush1.bf16.msra.mxu0 0
        %2534 = vmatprep.subr.bf16.mxu0 0
        %2535 = vmatpush1.bf16.msra.mxu0 0
        %2536 = vmatprep.subr.bf16.mxu0 0
        %2537 = vmatpush1.bf16.msra.mxu0 0
        %2538 = vmatprep.subr.bf16.mxu0 0
        %2539 = vmatpush1.bf16.msra.mxu0 0
        %2540 = vmatprep.subr.bf16.mxu0 0
        %2541 = vmatpush1.bf16.msra.mxu0 0
        %2542 = vmatprep.subr.bf16.mxu0 0
        %2543 = vmatpush1.bf16.msra.mxu0 0
        %2544 = vmatprep.subr.bf16.mxu0 0
        %2545 = vmatpush1.bf16.msra.mxu0 0
        %2546 = vmatprep.subr.bf16.mxu0 0
        %2547 = vmatpush1.bf16.msra.mxu0 0
        %2548 = vmatprep.subr.bf16.mxu0 0
        %2549 = vmatpush1.bf16.msra.mxu0 0
        %2550 = vmatprep.subr.bf16.mxu0 0
        %2551 = vmatpush1.bf16.msra.mxu0 0
        %2552 = vmatprep.subr.bf16.mxu0 0
        %2553 = vmatpush1.bf16.msra.mxu0 0
        %2554 = vmatprep.subr.bf16.mxu0 0
        %2555 = vmatpush1.bf16.msra.mxu0 0
        %2556 = vmatprep.subr.bf16.mxu0 0
        %2557 = vmatpush1.bf16.msra.mxu0 0
        %2558 = vmatprep.mubr.bf16.mxu0 0
        %2559 = vmatmul.mubr.bf16.gmra.mrb[0].mxu0 %v2230
        %v2560 = vpop.f32.mrb[0].mxu0
        %v2561 = vadd.f32 %v2336, %v2560
        %v2562 = vpop.f32.mrb[0].mxu0
        %v2563 = vpop.f32.mrb[0].mxu0
        %v2564 = vadd.f32 %v2339, %v2563
        %v2565 = vpop.f32.mrb[0].mxu0
        %2566 = vmatprep.mubr.bf16.mxu0 0
        %2567 = vmatmul.mubr.bf16.gmra.mrb[0].mxu0 %v2233
        %v2568 = vpop.f32.mrb[0].mxu0
        %v2569 = vadd.f32 %v2344, %v2568
        %v2570 = vpop.f32.mrb[0].mxu0
        %v2571 = vpop.f32.mrb[0].mxu0
        %v2572 = vadd.f32 %v2347, %v2571
        %v2573 = vpop.f32.mrb[0].mxu0
        %2574 = vmatprep.mubr.bf16.mxu0 0
        %2575 = vmatmul.mubr.bf16.gmra.mrb[0].mxu0 %v2236
        %v2576 = vpop.f32.mrb[0].mxu0
        %v2577 = vadd.f32 %v2352, %v2576
        %v2578 = vpop.f32.mrb[0].mxu0
        %v2579 = vpop.f32.mrb[0].mxu0
        %v2580 = vadd.f32 %v2355, %v2579
        %v2581 = vpop.f32.mrb[0].mxu0
        %2582 = vmatprep.mubr.bf16.mxu0 0
        %2583 = vmatmul.mubr.bf16.gmra.mrb[0].mxu0 %v2239
        %v2584 = vpop.f32.mrb[0].mxu0
        %v2585 = vadd.f32 %v2360, %v2584
        %v2586 = vpop.f32.mrb[0].mxu0
        %v2587 = vpop.f32.mrb[0].mxu0
        %v2588 = vadd.f32 %v2363, %v2587
        %v2589 = vpop.f32.mrb[0].mxu0
        %2590 = vmatprep.mubr.bf16.mxu0 0
        %2591 = vmatmul.mubr.bf16.gmra.mrb[0].mxu0 %v2242
        %v2592 = vpop.f32.mrb[0].mxu0
        %v2593 = vadd.f32 %v2368, %v2592
        %v2594 = vpop.f32.mrb[0].mxu0
        %v2595 = vpop.f32.mrb[0].mxu0
        %v2596 = vadd.f32 %v2371, %v2595
        %v2597 = vpop.f32.mrb[0].mxu0
        %2598 = vmatprep.mubr.bf16.mxu0 0
        %2599 = vmatmul.mubr.bf16.gmra.mrb[0].mxu0 %v2245
        %v2600 = vpop.f32.mrb[0].mxu0
        %v2601 = vadd.f32 %v2376, %v2600
        %v2602 = vpop.f32.mrb[0].mxu0
        %v2603 = vpop.f32.mrb[0].mxu0
        %v2604 = vadd.f32 %v2379, %v2603
        %v2605 = vpop.f32.mrb[0].mxu0
        %2606 = vmatprep.mubr.bf16.mxu0 0
        %2607 = vmatmul.mubr.bf16.gmra.mrb[0].mxu0 %v2248
        %v2608 = vpop.f32.mrb[0].mxu0
        %v2609 = vadd.f32 %v2384, %v2608
        %v2610 = vpop.f32.mrb[0].mxu0
        %v2611 = vpop.f32.mrb[0].mxu0
        %v2612 = vadd.f32 %v2387, %v2611
        %v2613 = vpop.f32.mrb[0].mxu0
        %2614 = vmatprep.mubr.bf16.mxu0 0
        %2615 = vmatmul.mubr.bf16.gmra.mrb[0].mxu0 %v2251
        %v2616 = vpop.f32.mrb[0].mxu0
        %v2617 = vadd.f32 %v2392, %v2616
        %v2618 = vpop.f32.mrb[0].mxu0
        %v2619 = vpop.f32.mrb[0].mxu0
        %v2620 = vadd.f32 %v2395, %v2619
        %v2621 = vpop.f32.mrb[0].mxu0
        %2622 = vmatprep.mubr.bf16.mxu0 0
        %2623 = vmatmul.mubr.bf16.gmra.mrb[0].mxu0 %v2254
        %v2624 = vpop.f32.mrb[0].mxu0
        %v2625 = vadd.f32 %v2400, %v2624
        %v2626 = vpop.f32.mrb[0].mxu0
        %v2627 = vpop.f32.mrb[0].mxu0
        %v2628 = vadd.f32 %v2403, %v2627
        %v2629 = vpop.f32.mrb[0].mxu0
        %2630 = vmatprep.mubr.bf16.mxu0 0
        %2631 = vmatmul.mubr.bf16.gmra.mrb[0].mxu0 %v2257
        %v2632 = vpop.f32.mrb[0].mxu0
        %v2633 = vadd.f32 %v2408, %v2632
        %v2634 = vpop.f32.mrb[0].mxu0
        %v2635 = vpop.f32.mrb[0].mxu0
        %v2636 = vadd.f32 %v2411, %v2635
        %v2637 = vpop.f32.mrb[0].mxu0
        %2638 = vmatprep.mubr.bf16.mxu0 0
        %2639 = vmatmul.mubr.bf16.gmra.mrb[0].mxu0 %v2260
        %v2640 = vpop.f32.mrb[0].mxu0
        %v2641 = vadd.f32 %v2416, %v2640
        %v2642 = vpop.f32.mrb[0].mxu0
        %v2643 = vpop.f32.mrb[0].mxu0
        %v2644 = vadd.f32 %v2419, %v2643
        %v2645 = vpop.f32.mrb[0].mxu0
        %2646 = vmatprep.mubr.bf16.mxu0 0
        %2647 = vmatmul.mubr.bf16.gmra.mrb[0].mxu0 %v2263
        %v2648 = vpop.f32.mrb[0].mxu0
        %v2649 = vadd.f32 %v2424, %v2648
        %v2650 = vpop.f32.mrb[0].mxu0
        %v2651 = vpop.f32.mrb[0].mxu0
        %v2652 = vadd.f32 %v2427, %v2651
        %v2653 = vpop.f32.mrb[0].mxu0
        %2654 = vmatprep.mubr.bf16.mxu0 0
        %2655 = vmatmul.mubr.bf16.gmra.mrb[0].mxu0 %v2266
        %v2656 = vpop.f32.mrb[0].mxu0
        %v2657 = vadd.f32 %v2432, %v2656
        %v2658 = vpop.f32.mrb[0].mxu0
        %v2659 = vpop.f32.mrb[0].mxu0
        %v2660 = vadd.f32 %v2435, %v2659
        %v2661 = vpop.f32.mrb[0].mxu0
        %2662 = vmatprep.mubr.bf16.mxu0 0
        %2663 = vmatmul.mubr.bf16.gmra.mrb[0].mxu0 %v2269
        %v2664 = vpop.f32.mrb[0].mxu0
        %v2665 = vadd.f32 %v2440, %v2664
        %v2666 = vpop.f32.mrb[0].mxu0
        %v2667 = vpop.f32.mrb[0].mxu0
        %v2668 = vadd.f32 %v2443, %v2667
        %v2669 = vpop.f32.mrb[0].mxu0
        %2670 = vmatprep.mubr.bf16.mxu0 0
        %2671 = vmatmul.mubr.bf16.gmra.mrb[0].mxu0 %v2272
        %v2672 = vpop.f32.mrb[0].mxu0
        %v2673 = vadd.f32 %v2448, %v2672
        %v2674 = vpop.f32.mrb[0].mxu0
        %v2675 = vpop.f32.mrb[0].mxu0
        %v2676 = vadd.f32 %v2451, %v2675
        %v2677 = vpop.f32.mrb[0].mxu0
        %2678 = vmatprep.mubr.bf16.mxu0 0
        %2679 = vmatmul.mubr.bf16.gmra.mrb[0].mxu0 %v2275
        %v2680 = vpop.f32.mrb[0].mxu0
        %v2681 = vadd.f32 %v2456, %v2680
        %v2682 = vpop.f32.mrb[0].mxu0
        %v2683 = vpop.f32.mrb[0].mxu0
        %v2684 = vadd.f32 %v2459, %v2683
        %v2685 = vpop.f32.mrb[0].mxu0
        %2686 = vmatprep.mubr.bf16.mxu0 0
        %2687 = vmatmul.mubr.bf16.gmra.mrb[0].mxu0 %v2278
        %v2688 = vpop.f32.mrb[0].mxu0
        %v2689 = vadd.f32 %v2464, %v2688
        %v2690 = vpop.f32.mrb[0].mxu0
        %v2691 = vpop.f32.mrb[0].mxu0
        %v2692 = vadd.f32 %v2467, %v2691
        %v2693 = vpop.f32.mrb[0].mxu0
        %2694 = vmatprep.mubr.bf16.mxu0 0
        %2695 = vmatmul.mubr.bf16.gmra.mrb[0].mxu0 %v2281
        %v2696 = vpop.f32.mrb[0].mxu0
        %v2697 = vadd.f32 %v2472, %v2696
        %v2698 = vpop.f32.mrb[0].mxu0
        %v2699 = vpop.f32.mrb[0].mxu0
        %v2700 = vadd.f32 %v2475, %v2699
        %v2701 = vpop.f32.mrb[0].mxu0
        %2702 = vmatprep.mubr.bf16.mxu0 0
        %2703 = vmatmul.mubr.bf16.gmra.mrb[0].mxu0 %v2284
        %v2704 = vpop.f32.mrb[0].mxu0
        %v2705 = vadd.f32 %v2480, %v2704
        %v2706 = vpop.f32.mrb[0].mxu0
        %v2707 = vpop.f32.mrb[0].mxu0
        %v2708 = vadd.f32 %v2483, %v2707
        %v2709 = vpop.f32.mrb[0].mxu0
        %2710 = vmatprep.mubr.bf16.mxu0 0
        %2711 = vmatmul.mubr.bf16.gmra.mrb[0].mxu0 %v2287
        %v2712 = vpop.f32.mrb[0].mxu0
        %v2713 = vadd.f32 %v2488, %v2712
        %v2714 = vpop.f32.mrb[0].mxu0
        %v2715 = vpop.f32.mrb[0].mxu0
        %v2716 = vadd.f32 %v2491, %v2715
        %v2717 = vpop.f32.mrb[0].mxu0
        %2718 = vmatprep.mubr.bf16.mxu0 0
        %2719 = vmatmul.mubr.bf16.gmra.mrb[0].mxu0 %v2290
        %v2720 = vpop.f32.mrb[0].mxu0
        %v2721 = vadd.f32 %v2496, %v2720
        %v2722 = vpop.f32.mrb[0].mxu0
        %v2723 = vpop.f32.mrb[0].mxu0
        %v2724 = vadd.f32 %v2499, %v2723
        %v2725 = vpop.f32.mrb[0].mxu0
        %2726 = vmatprep.mubr.bf16.mxu0 0
        %2727 = vmatmul.mubr.bf16.gmra.mrb[0].mxu0 %v2293
        %v2728 = vpop.f32.mrb[0].mxu0
        %v2729 = vadd.f32 %v2504, %v2728
        %v2730 = vpop.f32.mrb[0].mxu0
        %v2731 = vpop.f32.mrb[0].mxu0
        %v2732 = vadd.f32 %v2507, %v2731
        %v2733 = vpop.f32.mrb[0].mxu0
        %2734 = vmatprep.mubr.bf16.mxu0 0
        %2735 = vmatmul.mubr.bf16.gmra.mrb[0].mxu0 %v2296
        %v2736 = vpop.f32.mrb[0].mxu0
        %v2737 = vadd.f32 %v2512, %v2736
        %v2738 = vpop.f32.mrb[0].mxu0
        %v2739 = vpop.f32.mrb[0].mxu0
        %v2740 = vadd.f32 %v2515, %v2739
        %v2741 = vpop.f32.mrb[0].mxu0
        %2742 = vmatprep.mubr.bf16.mxu0 0
        %2743 = vmatmul.mubr.bf16.gmra.mrb[0].mxu0 %v2299
        %v2744 = vpop.f32.mrb[0].mxu0
        %v2745 = vadd.f32 %v2520, %v2744
        %v2746 = vpop.f32.mrb[0].mxu0
        %v2747 = vpop.f32.mrb[0].mxu0
        %v2748 = vadd.f32 %v2523, %v2747
        %v2749 = vpop.f32.mrb[0].mxu0
        %2750 = vdwg.mxu0
        %2752 = vset.pattern.permute.xlu0 0
        %2753 = vperm.xlu0 %2752, %v522
        %v2754 = vpop.permute.xlu0 %2753
        %2757 = vset.pattern.permute.xlu0 0
        %2758 = vperm.xlu0 %2757, %v523
        %v2759 = vpop.permute.xlu0 %2758
        %2762 = vset.pattern.permute.xlu0 0
        %2763 = vperm.xlu0 %2762, %v524
        %v2764 = vpop.permute.xlu0 %2763
        %2767 = vset.pattern.permute.xlu0 0
        %2768 = vperm.xlu0 %2767, %v525
        %v2769 = vpop.permute.xlu0 %2768
        %2772 = vset.pattern.permute.xlu0 0
        %2773 = vperm.xlu0 %2772, %v526
        %v2774 = vpop.permute.xlu0 %2773
        %2777 = vset.pattern.permute.xlu0 0
        %2778 = vperm.xlu0 %2777, %v527
        %v2779 = vpop.permute.xlu0 %2778
        %2782 = vset.pattern.permute.xlu0 0
        %2783 = vperm.xlu0 %2782, %v528
        %v2784 = vpop.permute.xlu0 %2783
        %2787 = vset.pattern.permute.xlu0 0
        %2788 = vperm.xlu0 %2787, %v529
        %v2789 = vpop.permute.xlu0 %2788
        %2792 = vset.pattern.permute.xlu0 0
        %2793 = vperm.xlu0 %2792, %v530
        %v2794 = vpop.permute.xlu0 %2793
        %2797 = vset.pattern.permute.xlu0 0
        %2798 = vperm.xlu0 %2797, %v531
        %v2799 = vpop.permute.xlu0 %2798
        %2802 = vset.pattern.permute.xlu0 0
        %2803 = vperm.xlu0 %2802, %v532
        %v2804 = vpop.permute.xlu0 %2803
        %2807 = vset.pattern.permute.xlu0 0
        %2808 = vperm.xlu0 %2807, %v533
        %v2809 = vpop.permute.xlu0 %2808
        %2812 = vset.pattern.permute.xlu0 0
        %2813 = vperm.xlu0 %2812, %v534
        %v2814 = vpop.permute.xlu0 %2813
        %2817 = vset.pattern.permute.xlu0 0
        %2818 = vperm.xlu0 %2817, %v535
        %v2819 = vpop.permute.xlu0 %2818
        %2822 = vset.pattern.permute.xlu0 0
        %2823 = vperm.xlu0 %2822, %v536
        %v2824 = vpop.permute.xlu0 %2823
        %2827 = vset.pattern.permute.xlu0 0
        %2828 = vperm.xlu0 %2827, %v537
        %v2829 = vpop.permute.xlu0 %2828
        %2832 = vset.pattern.permute.xlu0 0
        %2833 = vperm.xlu0 %2832, %v538
        %v2834 = vpop.permute.xlu0 %2833
        %2837 = vset.pattern.permute.xlu0 0
        %2838 = vperm.xlu0 %2837, %v539
        %v2839 = vpop.permute.xlu0 %2838
        %2842 = vset.pattern.permute.xlu0 0
        %2843 = vperm.xlu0 %2842, %v540
        %v2844 = vpop.permute.xlu0 %2843
        %2847 = vset.pattern.permute.xlu0 0
        %2848 = vperm.xlu0 %2847, %v541
        %v2849 = vpop.permute.xlu0 %2848
        %2852 = vset.pattern.permute.xlu0 0
        %2853 = vperm.xlu0 %2852, %v542
        %v2854 = vpop.permute.xlu0 %2853
        %2857 = vset.pattern.permute.xlu0 0
        %2858 = vperm.xlu0 %2857, %v543
        %v2859 = vpop.permute.xlu0 %2858
        %2862 = vset.pattern.permute.xlu0 0
        %2863 = vperm.xlu0 %2862, %v544
        %v2864 = vpop.permute.xlu0 %2863
        %2867 = vset.pattern.permute.xlu0 0
        %2868 = vperm.xlu0 %2867, %v545
        %v2869 = vpop.permute.xlu0 %2868
        %2872 = vset.pattern.permute.xlu0 0
        %2873 = vperm.xlu0 %2872, %v546
        %v2874 = vpop.permute.xlu0 %2873
        %2877 = vset.pattern.permute.xlu0 0
        %2878 = vperm.xlu0 %2877, %v547
        %v2879 = vpop.permute.xlu0 %2878
        %2882 = vset.pattern.permute.xlu0 0
        %2883 = vperm.xlu0 %2882, %v548
        %v2884 = vpop.permute.xlu0 %2883
        %2887 = vset.pattern.permute.xlu0 0
        %2888 = vperm.xlu0 %2887, %v549
        %v2889 = vpop.permute.xlu0 %2888
        %2892 = vset.pattern.permute.xlu0 0
        %2893 = vperm.xlu0 %2892, %v550
        %v2894 = vpop.permute.xlu0 %2893
        %2897 = vset.pattern.permute.xlu0 0
        %2898 = vperm.xlu0 %2897, %v551
        %v2899 = vpop.permute.xlu0 %2898
        %2902 = vset.pattern.permute.xlu0 0
        %2903 = vperm.xlu0 %2902, %v552
        %v2904 = vpop.permute.xlu0 %2903
        %2907 = vset.pattern.permute.xlu0 0
        %2908 = vperm.xlu0 %2907, %v553
        %v2909 = vpop.permute.xlu0 %2908
        %2912 = vset.pattern.permute.xlu0 0
        %2913 = vperm.xlu0 %2912, %v554
        %v2914 = vpop.permute.xlu0 %2913
        %2917 = vset.pattern.permute.xlu0 0
        %2918 = vperm.xlu0 %2917, %v555
        %v2919 = vpop.permute.xlu0 %2918
        %2922 = vset.pattern.permute.xlu0 0
        %2923 = vperm.xlu0 %2922, %v556
        %v2924 = vpop.permute.xlu0 %2923
        %2927 = vset.pattern.permute.xlu0 0
        %2928 = vperm.xlu0 %2927, %v557
        %v2929 = vpop.permute.xlu0 %2928
        %2932 = vset.pattern.permute.xlu0 0
        %2933 = vperm.xlu0 %2932, %v558
        %v2934 = vpop.permute.xlu0 %2933
        %2937 = vset.pattern.permute.xlu0 0
        %2938 = vperm.xlu0 %2937, %v559
        %v2939 = vpop.permute.xlu0 %2938
        %2942 = vset.pattern.permute.xlu0 0
        %2943 = vperm.xlu0 %2942, %v560
        %v2944 = vpop.permute.xlu0 %2943
        %2947 = vset.pattern.permute.xlu0 0
        %2948 = vperm.xlu0 %2947, %v561
        %v2949 = vpop.permute.xlu0 %2948
        %2952 = vset.pattern.permute.xlu0 0
        %2953 = vperm.xlu0 %2952, %v562
        %v2954 = vpop.permute.xlu0 %2953
        %2957 = vset.pattern.permute.xlu0 0
        %2958 = vperm.xlu0 %2957, %v563
        %v2959 = vpop.permute.xlu0 %2958
        %2962 = vset.pattern.permute.xlu0 0
        %2963 = vperm.xlu0 %2962, %v564
        %v2964 = vpop.permute.xlu0 %2963
        %2967 = vset.pattern.permute.xlu0 0
        %2968 = vperm.xlu0 %2967, %v565
        %v2969 = vpop.permute.xlu0 %2968
        %2972 = vset.pattern.permute.xlu0 0
        %2973 = vperm.xlu0 %2972, %v566
        %v2974 = vpop.permute.xlu0 %2973
        %2977 = vset.pattern.permute.xlu0 0
        %2978 = vperm.xlu0 %2977, %v567
        %v2979 = vpop.permute.xlu0 %2978
        %2982 = vset.pattern.permute.xlu0 0
        %2983 = vperm.xlu0 %2982, %v568
        %v2984 = vpop.permute.xlu0 %2983
        %2987 = vset.pattern.permute.xlu0 0
        %2988 = vperm.xlu0 %2987, %v569
        %v2989 = vpop.permute.xlu0 %2988
        %v2991 = vmul.f32 %v2561, %v2754
        %v2992 = vmul.f32 %v2564, %v2759
        %v2993 = vmul.f32 %v2569, %v2764
        %v2994 = vmul.f32 %v2572, %v2769
        %v2995 = vmul.f32 %v2577, %v2774
        %v2996 = vmul.f32 %v2580, %v2779
        %v2997 = vmul.f32 %v2585, %v2784
        %v2998 = vmul.f32 %v2588, %v2789
        %v2999 = vmul.f32 %v2593, %v2794
        %v3000 = vmul.f32 %v2596, %v2799
        %v3001 = vmul.f32 %v2601, %v2804
        %v3002 = vmul.f32 %v2604, %v2809
        %v3003 = vmul.f32 %v2609, %v2814
        %v3004 = vmul.f32 %v2612, %v2819
        %v3005 = vmul.f32 %v2617, %v2824
        %v3006 = vmul.f32 %v2620, %v2829
        %v3007 = vmul.f32 %v2625, %v2834
        %v3008 = vmul.f32 %v2628, %v2839
        %v3009 = vmul.f32 %v2633, %v2844
        %v3010 = vmul.f32 %v2636, %v2849
        %v3011 = vmul.f32 %v2641, %v2854
        %v3012 = vmul.f32 %v2644, %v2859
        %v3013 = vmul.f32 %v2649, %v2864
        %v3014 = vmul.f32 %v2652, %v2869
        %v3015 = vmul.f32 %v2657, %v2874
        %v3016 = vmul.f32 %v2660, %v2879
        %v3017 = vmul.f32 %v2665, %v2884
        %v3018 = vmul.f32 %v2668, %v2889
        %v3019 = vmul.f32 %v2673, %v2894
        %v3020 = vmul.f32 %v2676, %v2899
        %v3021 = vmul.f32 %v2681, %v2904
        %v3022 = vmul.f32 %v2684, %v2909
        %v3023 = vmul.f32 %v2689, %v2914
        %v3024 = vmul.f32 %v2692, %v2919
        %v3025 = vmul.f32 %v2697, %v2924
        %v3026 = vmul.f32 %v2700, %v2929
        %v3027 = vmul.f32 %v2705, %v2934
        %v3028 = vmul.f32 %v2708, %v2939
        %v3029 = vmul.f32 %v2713, %v2944
        %v3030 = vmul.f32 %v2716, %v2949
        %v3031 = vmul.f32 %v2721, %v2954
        %v3032 = vmul.f32 %v2724, %v2959
        %v3033 = vmul.f32 %v2729, %v2964
        %v3034 = vmul.f32 %v2732, %v2969
        %v3035 = vmul.f32 %v2737, %v2974
        %v3036 = vmul.f32 %v2740, %v2979
        %v3037 = vmul.f32 %v2745, %v2984
        %v3038 = vmul.f32 %v2748, %v2989
        %v3039 = vsel %vm386, %v2991, 0.0
        %v3040 = vsel %vm386, %v2992, 0.0
        %v3041 = vadd.f32 %v3039, %v3040
        %v3042 = vsel %vm386, %v2993, 0.0
        %v3043 = vadd.f32 %v3041, %v3042
        %v3044 = vsel %vm386, %v2994, 0.0
        %v3045 = vadd.f32 %v3043, %v3044
        %v3046 = vsel %vm386, %v2995, 0.0
        %v3047 = vadd.f32 %v3045, %v3046
        %v3048 = vsel %vm386, %v2996, 0.0
        %v3049 = vadd.f32 %v3047, %v3048
        %v3050 = vsel %vm386, %v2997, 0.0
        %v3051 = vadd.f32 %v3049, %v3050
        %v3052 = vsel %vm386, %v2998, 0.0
        %v3053 = vadd.f32 %v3051, %v3052
        %v3054 = vsel %vm386, %v2999, 0.0
        %v3055 = vadd.f32 %v3053, %v3054
        %v3056 = vsel %vm386, %v3000, 0.0
        %v3057 = vadd.f32 %v3055, %v3056
        %v3058 = vsel %vm386, %v3001, 0.0
        %v3059 = vadd.f32 %v3057, %v3058
        %v3060 = vsel %vm386, %v3002, 0.0
        %v3061 = vadd.f32 %v3059, %v3060
        %v3062 = vsel %vm386, %v3003, 0.0
        %v3063 = vadd.f32 %v3061, %v3062
        %v3064 = vsel %vm386, %v3004, 0.0
        %v3065 = vadd.f32 %v3063, %v3064
        %v3066 = vsel %vm386, %v3005, 0.0
        %v3067 = vadd.f32 %v3065, %v3066
        %v3068 = vsel %vm386, %v3006, 0.0
        %v3069 = vadd.f32 %v3067, %v3068
        %v3070 = vsel %vm386, %v3007, 0.0
        %v3071 = vadd.f32 %v3069, %v3070
        %v3072 = vsel %vm386, %v3008, 0.0
        %v3073 = vadd.f32 %v3071, %v3072
        %v3074 = vsel %vm386, %v3009, 0.0
        %v3075 = vadd.f32 %v3073, %v3074
        %v3076 = vsel %vm386, %v3010, 0.0
        %v3077 = vadd.f32 %v3075, %v3076
        %v3078 = vsel %vm386, %v3011, 0.0
        %v3079 = vadd.f32 %v3077, %v3078
        %v3080 = vsel %vm386, %v3012, 0.0
        %v3081 = vadd.f32 %v3079, %v3080
        %v3082 = vsel %vm386, %v3013, 0.0
        %v3083 = vadd.f32 %v3081, %v3082
        %v3084 = vsel %vm386, %v3014, 0.0
        %v3085 = vadd.f32 %v3083, %v3084
        %v3086 = vsel %vm386, %v3015, 0.0
        %v3087 = vadd.f32 %v3085, %v3086
        %v3088 = vsel %vm386, %v3016, 0.0
        %v3089 = vadd.f32 %v3087, %v3088
        %v3090 = vsel %vm386, %v3017, 0.0
        %v3091 = vadd.f32 %v3089, %v3090
        %v3092 = vsel %vm386, %v3018, 0.0
        %v3093 = vadd.f32 %v3091, %v3092
        %v3094 = vsel %vm386, %v3019, 0.0
        %v3095 = vadd.f32 %v3093, %v3094
        %v3096 = vsel %vm386, %v3020, 0.0
        %v3097 = vadd.f32 %v3095, %v3096
        %v3098 = vsel %vm386, %v3021, 0.0
        %v3099 = vadd.f32 %v3097, %v3098
        %v3100 = vsel %vm386, %v3022, 0.0
        %v3101 = vadd.f32 %v3099, %v3100
        %v3102 = vsel %vm386, %v3023, 0.0
        %v3103 = vadd.f32 %v3101, %v3102
        %v3104 = vsel %vm386, %v3024, 0.0
        %v3105 = vadd.f32 %v3103, %v3104
        %v3106 = vsel %vm386, %v3025, 0.0
        %v3107 = vadd.f32 %v3105, %v3106
        %v3108 = vsel %vm386, %v3026, 0.0
        %v3109 = vadd.f32 %v3107, %v3108
        %v3110 = vsel %vm386, %v3027, 0.0
        %v3111 = vadd.f32 %v3109, %v3110
        %v3112 = vsel %vm386, %v3028, 0.0
        %v3113 = vadd.f32 %v3111, %v3112
        %v3114 = vsel %vm386, %v3029, 0.0
        %v3115 = vadd.f32 %v3113, %v3114
        %v3116 = vsel %vm386, %v3030, 0.0
        %v3117 = vadd.f32 %v3115, %v3116
        %v3118 = vsel %vm386, %v3031, 0.0
        %v3119 = vadd.f32 %v3117, %v3118
        %v3120 = vsel %vm386, %v3032, 0.0
        %v3121 = vadd.f32 %v3119, %v3120
        %v3122 = vsel %vm386, %v3033, 0.0
        %v3123 = vadd.f32 %v3121, %v3122
        %v3124 = vsel %vm386, %v3034, 0.0
        %v3125 = vadd.f32 %v3123, %v3124
        %v3126 = vsel %vm386, %v3035, 0.0
        %v3127 = vadd.f32 %v3125, %v3126
        %v3128 = vsel %vm386, %v3036, 0.0
        %v3129 = vadd.f32 %v3127, %v3128
        %v3130 = vsel %vm386, %v3037, 0.0
        %v3131 = vadd.f32 %v3129, %v3130
        %v3132 = vsel %vm386, %v3038, 0.0
        %v3133 = vadd.f32 %v3131, %v3132
        %v3134 = vrot.slane %v3133, 4
        %v3135 = vadd.f32 %v3133, %v3134
        %v3136 = vrot.slane %v3135, 2
        %v3137 = vadd.f32 %v3135, %v3136
        %v3138 = vrot.slane %v3137, 1
        %v3139 = vadd.f32 %v3137, %v3138
        %v3140 = vmul.f32 %v3139, 0.00390625
        %v3141 = vmul.f32 %v2991, %v2991
        %v3142 = vmul.f32 %v2992, %v2992
        %v3143 = vmul.f32 %v2993, %v2993
        %v3144 = vmul.f32 %v2994, %v2994
        %v3145 = vmul.f32 %v2995, %v2995
        %v3146 = vmul.f32 %v2996, %v2996
        %v3147 = vmul.f32 %v2997, %v2997
        %v3148 = vmul.f32 %v2998, %v2998
        %v3149 = vmul.f32 %v2999, %v2999
        %v3150 = vmul.f32 %v3000, %v3000
        %v3151 = vmul.f32 %v3001, %v3001
        %v3152 = vmul.f32 %v3002, %v3002
        %v3153 = vmul.f32 %v3003, %v3003
        %v3154 = vmul.f32 %v3004, %v3004
        %v3155 = vmul.f32 %v3005, %v3005
        %v3156 = vmul.f32 %v3006, %v3006
        %v3157 = vmul.f32 %v3007, %v3007
        %v3158 = vmul.f32 %v3008, %v3008
        %v3159 = vmul.f32 %v3009, %v3009
        %v3160 = vmul.f32 %v3010, %v3010
        %v3161 = vmul.f32 %v3011, %v3011
        %v3162 = vmul.f32 %v3012, %v3012
        %v3163 = vmul.f32 %v3013, %v3013
        %v3164 = vmul.f32 %v3014, %v3014
        %v3165 = vmul.f32 %v3015, %v3015
        %v3166 = vmul.f32 %v3016, %v3016
        %v3167 = vmul.f32 %v3017, %v3017
        %v3168 = vmul.f32 %v3018, %v3018
        %v3169 = vmul.f32 %v3019, %v3019
        %v3170 = vmul.f32 %v3020, %v3020
        %v3171 = vmul.f32 %v3021, %v3021
        %v3172 = vmul.f32 %v3022, %v3022
        %v3173 = vmul.f32 %v3023, %v3023
        %v3174 = vmul.f32 %v3024, %v3024
        %v3175 = vmul.f32 %v3025, %v3025
        %v3176 = vmul.f32 %v3026, %v3026
        %v3177 = vmul.f32 %v3027, %v3027
        %v3178 = vmul.f32 %v3028, %v3028
        %v3179 = vmul.f32 %v3029, %v3029
        %v3180 = vmul.f32 %v3030, %v3030
        %v3181 = vmul.f32 %v3031, %v3031
        %v3182 = vmul.f32 %v3032, %v3032
        %v3183 = vmul.f32 %v3033, %v3033
        %v3184 = vmul.f32 %v3034, %v3034
        %v3185 = vmul.f32 %v3035, %v3035
        %v3186 = vmul.f32 %v3036, %v3036
        %v3187 = vmul.f32 %v3037, %v3037
        %v3188 = vmul.f32 %v3038, %v3038
        %v3189 = vsel %vm386, %v3141, 0.0
        %v3190 = vsel %vm386, %v3142, 0.0
        %v3191 = vadd.f32 %v3189, %v3190
        %v3192 = vsel %vm386, %v3143, 0.0
        %v3193 = vadd.f32 %v3191, %v3192
        %v3194 = vsel %vm386, %v3144, 0.0
        %v3195 = vadd.f32 %v3193, %v3194
        %v3196 = vsel %vm386, %v3145, 0.0
        %v3197 = vadd.f32 %v3195, %v3196
        %v3198 = vsel %vm386, %v3146, 0.0
        %v3199 = vadd.f32 %v3197, %v3198
        %v3200 = vsel %vm386, %v3147, 0.0
        %v3201 = vadd.f32 %v3199, %v3200
        %v3202 = vsel %vm386, %v3148, 0.0
        %v3203 = vadd.f32 %v3201, %v3202
        %v3204 = vsel %vm386, %v3149, 0.0
        %v3205 = vadd.f32 %v3203, %v3204
        %v3206 = vsel %vm386, %v3150, 0.0
        %v3207 = vadd.f32 %v3205, %v3206
        %v3208 = vsel %vm386, %v3151, 0.0
        %v3209 = vadd.f32 %v3207, %v3208
        %v3210 = vsel %vm386, %v3152, 0.0
        %v3211 = vadd.f32 %v3209, %v3210
        %v3212 = vsel %vm386, %v3153, 0.0
        %v3213 = vadd.f32 %v3211, %v3212
        %v3214 = vsel %vm386, %v3154, 0.0
        %v3215 = vadd.f32 %v3213, %v3214
        %v3216 = vsel %vm386, %v3155, 0.0
        %v3217 = vadd.f32 %v3215, %v3216
        %v3218 = vsel %vm386, %v3156, 0.0
        %v3219 = vadd.f32 %v3217, %v3218
        %v3220 = vsel %vm386, %v3157, 0.0
        %v3221 = vadd.f32 %v3219, %v3220
        %v3222 = vsel %vm386, %v3158, 0.0
        %v3223 = vadd.f32 %v3221, %v3222
        %v3224 = vsel %vm386, %v3159, 0.0
        %v3225 = vadd.f32 %v3223, %v3224
        %v3226 = vsel %vm386, %v3160, 0.0
        %v3227 = vadd.f32 %v3225, %v3226
        %v3228 = vsel %vm386, %v3161, 0.0
        %v3229 = vadd.f32 %v3227, %v3228
        %v3230 = vsel %vm386, %v3162, 0.0
        %v3231 = vadd.f32 %v3229, %v3230
        %v3232 = vsel %vm386, %v3163, 0.0
        %v3233 = vadd.f32 %v3231, %v3232
        %v3234 = vsel %vm386, %v3164, 0.0
        %v3235 = vadd.f32 %v3233, %v3234
        %v3236 = vsel %vm386, %v3165, 0.0
        %v3237 = vadd.f32 %v3235, %v3236
        %v3238 = vsel %vm386, %v3166, 0.0
        %v3239 = vadd.f32 %v3237, %v3238
        %v3240 = vsel %vm386, %v3167, 0.0
        %v3241 = vadd.f32 %v3239, %v3240
        %v3242 = vsel %vm386, %v3168, 0.0
        %v3243 = vadd.f32 %v3241, %v3242
        %v3244 = vsel %vm386, %v3169, 0.0
        %v3245 = vadd.f32 %v3243, %v3244
        %v3246 = vsel %vm386, %v3170, 0.0
        %v3247 = vadd.f32 %v3245, %v3246
        %v3248 = vsel %vm386, %v3171, 0.0
        %v3249 = vadd.f32 %v3247, %v3248
        %v3250 = vsel %vm386, %v3172, 0.0
        %v3251 = vadd.f32 %v3249, %v3250
        %v3252 = vsel %vm386, %v3173, 0.0
        %v3253 = vadd.f32 %v3251, %v3252
        %v3254 = vsel %vm386, %v3174, 0.0
        %v3255 = vadd.f32 %v3253, %v3254
        %v3256 = vsel %vm386, %v3175, 0.0
        %v3257 = vadd.f32 %v3255, %v3256
        %v3258 = vsel %vm386, %v3176, 0.0
        %v3259 = vadd.f32 %v3257, %v3258
        %v3260 = vsel %vm386, %v3177, 0.0
        %v3261 = vadd.f32 %v3259, %v3260
        %v3262 = vsel %vm386, %v3178, 0.0
        %v3263 = vadd.f32 %v3261, %v3262
        %v3264 = vsel %vm386, %v3179, 0.0
        %v3265 = vadd.f32 %v3263, %v3264
        %v3266 = vsel %vm386, %v3180, 0.0
        %v3267 = vadd.f32 %v3265, %v3266
        %v3268 = vsel %vm386, %v3181, 0.0
        %v3269 = vadd.f32 %v3267, %v3268
        %v3270 = vsel %vm386, %v3182, 0.0
        %v3271 = vadd.f32 %v3269, %v3270
        %v3272 = vsel %vm386, %v3183, 0.0
        %v3273 = vadd.f32 %v3271, %v3272
        %v3274 = vsel %vm386, %v3184, 0.0
        %v3275 = vadd.f32 %v3273, %v3274
        %v3276 = vsel %vm386, %v3185, 0.0
        %v3277 = vadd.f32 %v3275, %v3276
        %v3278 = vsel %vm386, %v3186, 0.0
        %v3279 = vadd.f32 %v3277, %v3278
        %v3280 = vsel %vm386, %v3187, 0.0
        %v3281 = vadd.f32 %v3279, %v3280
        %v3282 = vsel %vm386, %v3188, 0.0
        %v3283 = vadd.f32 %v3281, %v3282
        %v3284 = vrot.slane %v3283, 4
        %v3285 = vadd.f32 %v3283, %v3284
        %v3286 = vrot.slane %v3285, 2
        %v3287 = vadd.f32 %v3285, %v3286
        %v3288 = vrot.slane %v3287, 1
        %v3289 = vadd.f32 %v3287, %v3288
        %v3290 = vmul.f32 %v3289, 0.00390625
        %vm3291 = vcmask 1040384
        %v3292 = vsel %vm3291, %v3140, %v3290
        %v3293 = vld [vmem:[%s2] sm:$0xff]
        %v3294 = vld [vmem:[%s2 + $0x8] sm:$0xff]
        %v3295 = vld [vmem:[%s2 + $0x10] sm:$0xff]
        %v3296 = vld [vmem:[%s2 + $0x18] sm:$0xff]
        %v3298 = vsel %vm386, %v3292, 0
        %3300 = vmatprep.subr.mxu0 0.0
        %3301 = vmatpush1.msra.mxu0 %v3293
        %3302 = vmatprep.subr.mxu0 0.0
        %3303 = vmatpush1.msra.mxu0 %v3294
        %3304 = vmatprep.subr.mxu0 0.0
        %3305 = vmatpush1.msra.mxu0 %v3295
        %3306 = vmatprep.subr.mxu0 0.0
        %3307 = vmatpush1.msra.mxu0 %v3296
        %3308 = vmatprep.subr.mxu0 0.0
        %3309 = vmatpush1.msra.mxu0 0.0
        %3310 = vmatprep.subr.mxu0 0.0
        %3311 = vmatpush1.msra.mxu0 0.0
        %3312 = vmatprep.subr.mxu0 0.0
        %3313 = vmatpush1.msra.mxu0 0.0
        %3314 = vmatprep.subr.mxu0 0.0
        %3315 = vmatpush1.msra.mxu0 0.0
        %3316 = vmatprep.subr.mxu0 0.0
        %3317 = vmatpush1.msra.mxu0 0.0
        %3318 = vmatprep.subr.mxu0 0.0
        %3319 = vmatpush1.msra.mxu0 0.0
        %3320 = vmatprep.subr.mxu0 0.0
        %3321 = vmatpush1.msra.mxu0 0.0
        %3322 = vmatprep.subr.mxu0 0.0
        %3323 = vmatpush1.msra.mxu0 0.0
        %3324 = vmatprep.subr.mxu0 0.0
        %3325 = vmatpush1.msra.mxu0 0.0
        %3326 = vmatprep.subr.mxu0 0.0
        %3327 = vmatpush1.msra.mxu0 0.0
        %3328 = vmatprep.subr.mxu0 0.0
        %3329 = vmatpush1.msra.mxu0 0.0
        %3330 = vmatprep.subr.mxu0 0.0
        %3331 = vmatpush1.msra.mxu0 0.0
        %3332 = vmatprep.subr.mxu0 0.0
        %3333 = vmatpush1.msra.mxu0 0.0
        %3334 = vmatprep.subr.mxu0 0.0
        %3335 = vmatpush1.msra.mxu0 0.0
        %3336 = vmatprep.subr.mxu0 0.0
        %3337 = vmatpush1.msra.mxu0 0.0
        %3338 = vmatprep.subr.mxu0 0.0
        %3339 = vmatpush1.msra.mxu0 0.0
        %3340 = vmatprep.subr.mxu0 0.0
        %3341 = vmatpush1.msra.mxu0 0.0
        %3342 = vmatprep.subr.mxu0 0.0
        %3343 = vmatpush1.msra.mxu0 0.0
        %3344 = vmatprep.subr.mxu0 0.0
        %3345 = vmatpush1.msra.mxu0 0.0
        %3346 = vmatprep.subr.mxu0 0.0
        %3347 = vmatpush1.msra.mxu0 0.0
        %3348 = vmatprep.subr.mxu0 0.0
        %3349 = vmatpush1.msra.mxu0 0.0
        %3350 = vmatprep.subr.mxu0 0.0
        %3351 = vmatpush1.msra.mxu0 0.0
        %3352 = vmatprep.subr.mxu0 0.0
        %3353 = vmatpush1.msra.mxu0 0.0
        %3354 = vmatprep.subr.mxu0 0.0
        %3355 = vmatpush1.msra.mxu0 0.0
        %3356 = vmatprep.subr.mxu0 0.0
        %3357 = vmatpush1.msra.mxu0 0.0
        %3358 = vmatprep.subr.mxu0 0.0
        %3359 = vmatpush1.msra.mxu0 0.0
        %3360 = vmatprep.subr.mxu0 0.0
        %3361 = vmatpush1.msra.mxu0 0.0
        %3362 = vmatprep.subr.mxu0 0.0
        %3363 = vmatpush1.msra.mxu0 0.0
        %3364 = vmatprep.mubr.f32.mxu0 0.0
        %3365 = vmatmul.mubr.f32.gmra.mrb[0].mxu0 %v3298
        %v3366 = vpop.f32.mrb[0].mxu0
        %v3367 = vadd.f32 0.0, %v3366
        %v3368 = vpop.f32.mrb[0].mxu0
        %3369 = vdwg.mxu0
        %v3370 = vmul.f32 %v3367, %v3367
        %v3372 = vrot.slane %v3370, 7
        %v3374 = vsub.f32 %v3367, %v3372
        %v3375 = vmax.f32 %v3374, 0.0
        %v3376 = vlaneseq
        %v3377 = vshrl.u32 %v3376, 7
        %v3378 = vsub.s32 0, %v3377
        %v3379 = vrot.slane %v3367, %v3378
        %v3380 = vsub.f32 %v2561, %v3379
        %v3381 = vsub.f32 %v2564, %v3379
        %v3382 = vsub.f32 %v2569, %v3379
        %v3383 = vsub.f32 %v2572, %v3379
        %v3384 = vsub.f32 %v2577, %v3379
        %v3385 = vsub.f32 %v2580, %v3379
        %v3386 = vsub.f32 %v2585, %v3379
        %v3387 = vsub.f32 %v2588, %v3379
        %v3388 = vsub.f32 %v2593, %v3379
        %v3389 = vsub.f32 %v2596, %v3379
        %v3390 = vsub.f32 %v2601, %v3379
        %v3391 = vsub.f32 %v2604, %v3379
        %v3392 = vsub.f32 %v2609, %v3379
        %v3393 = vsub.f32 %v2612, %v3379
        %v3394 = vsub.f32 %v2617, %v3379
        %v3395 = vsub.f32 %v2620, %v3379
        %v3396 = vsub.f32 %v2625, %v3379
        %v3397 = vsub.f32 %v2628, %v3379
        %v3398 = vsub.f32 %v2633, %v3379
        %v3399 = vsub.f32 %v2636, %v3379
        %v3400 = vsub.f32 %v2641, %v3379
        %v3401 = vsub.f32 %v2644, %v3379
        %v3402 = vsub.f32 %v2649, %v3379
        %v3403 = vsub.f32 %v2652, %v3379
        %v3404 = vsub.f32 %v2657, %v3379
        %v3405 = vsub.f32 %v2660, %v3379
        %v3406 = vsub.f32 %v2665, %v3379
        %v3407 = vsub.f32 %v2668, %v3379
        %v3408 = vsub.f32 %v2673, %v3379
        %v3409 = vsub.f32 %v2676, %v3379
        %v3410 = vsub.f32 %v2681, %v3379
        %v3411 = vsub.f32 %v2684, %v3379
        %v3412 = vsub.f32 %v2689, %v3379
        %v3413 = vsub.f32 %v2692, %v3379
        %v3414 = vsub.f32 %v2697, %v3379
        %v3415 = vsub.f32 %v2700, %v3379
        %v3416 = vsub.f32 %v2705, %v3379
        %v3417 = vsub.f32 %v2708, %v3379
        %v3418 = vsub.f32 %v2713, %v3379
        %v3419 = vsub.f32 %v2716, %v3379
        %v3420 = vsub.f32 %v2721, %v3379
        %v3421 = vsub.f32 %v2724, %v3379
        %v3422 = vsub.f32 %v2729, %v3379
        %v3423 = vsub.f32 %v2732, %v3379
        %v3424 = vsub.f32 %v2737, %v3379
        %v3425 = vsub.f32 %v2740, %v3379
        %v3426 = vsub.f32 %v2745, %v3379
        %v3427 = vsub.f32 %v2748, %v3379
        %v3428 = vadd.f32 %v3375, 1e-05
        %v3429 = vrsqrt.pop %v3428
        %v3430 = vlaneseq
        %v3431 = vshrl.u32 %v3430, 7
        %v3432 = vsub.s32 1, %v3431
        %v3433 = vrot.slane %v3429, %v3432
        %v3434 = vmul.f32 %v3380, %v3433
        %v3435 = vmul.f32 %v3381, %v3433
        %v3436 = vmul.f32 %v3382, %v3433
        %v3437 = vmul.f32 %v3383, %v3433
        %v3438 = vmul.f32 %v3384, %v3433
        %v3439 = vmul.f32 %v3385, %v3433
        %v3440 = vmul.f32 %v3386, %v3433
        %v3441 = vmul.f32 %v3387, %v3433
        %v3442 = vmul.f32 %v3388, %v3433
        %v3443 = vmul.f32 %v3389, %v3433
        %v3444 = vmul.f32 %v3390, %v3433
        %v3445 = vmul.f32 %v3391, %v3433
        %v3446 = vmul.f32 %v3392, %v3433
        %v3447 = vmul.f32 %v3393, %v3433
        %v3448 = vmul.f32 %v3394, %v3433
        %v3449 = vmul.f32 %v3395, %v3433
        %v3450 = vmul.f32 %v3396, %v3433
        %v3451 = vmul.f32 %v3397, %v3433
        %v3452 = vmul.f32 %v3398, %v3433
        %v3453 = vmul.f32 %v3399, %v3433
        %v3454 = vmul.f32 %v3400, %v3433
        %v3455 = vmul.f32 %v3401, %v3433
        %v3456 = vmul.f32 %v3402, %v3433
        %v3457 = vmul.f32 %v3403, %v3433
        %v3458 = vmul.f32 %v3404, %v3433
        %v3459 = vmul.f32 %v3405, %v3433
        %v3460 = vmul.f32 %v3406, %v3433
        %v3461 = vmul.f32 %v3407, %v3433
        %v3462 = vmul.f32 %v3408, %v3433
        %v3463 = vmul.f32 %v3409, %v3433
        %v3464 = vmul.f32 %v3410, %v3433
        %v3465 = vmul.f32 %v3411, %v3433
        %v3466 = vmul.f32 %v3412, %v3433
        %v3467 = vmul.f32 %v3413, %v3433
        %v3468 = vmul.f32 %v3414, %v3433
        %v3469 = vmul.f32 %v3415, %v3433
        %v3470 = vmul.f32 %v3416, %v3433
        %v3471 = vmul.f32 %v3417, %v3433
        %v3472 = vmul.f32 %v3418, %v3433
        %v3473 = vmul.f32 %v3419, %v3433
        %v3474 = vmul.f32 %v3420, %v3433
        %v3475 = vmul.f32 %v3421, %v3433
        %v3476 = vmul.f32 %v3422, %v3433
        %v3477 = vmul.f32 %v3423, %v3433
        %v3478 = vmul.f32 %v3424, %v3433
        %v3479 = vmul.f32 %v3425, %v3433
        %v3480 = vmul.f32 %v3426, %v3433
        %v3481 = vmul.f32 %v3427, %v3433
        %v3482 = vld [vmem:[%s4] sm:$0x1]
        %v3484 = vlaneseq
        %v3485 = vshrl.u32 %v3484, 7
        %v3486 = vsub.s32 0, %v3485
        %v3487 = vrot.slane %v3482, %v3486
        %v3489 = vmul.f32 %v3434, %v3487
        %v3490 = vmul.f32 %v3435, %v3487
        %v3491 = vmul.f32 %v3436, %v3487
        %v3492 = vmul.f32 %v3437, %v3487
        %v3493 = vmul.f32 %v3438, %v3487
        %v3494 = vmul.f32 %v3439, %v3487
        %v3495 = vmul.f32 %v3440, %v3487
        %v3496 = vmul.f32 %v3441, %v3487
        %v3497 = vmul.f32 %v3442, %v3487
        %v3498 = vmul.f32 %v3443, %v3487
        %v3499 = vmul.f32 %v3444, %v3487
        %v3500 = vmul.f32 %v3445, %v3487
        %v3501 = vmul.f32 %v3446, %v3487
        %v3502 = vmul.f32 %v3447, %v3487
        %v3503 = vmul.f32 %v3448, %v3487
        %v3504 = vmul.f32 %v3449, %v3487
        %v3505 = vmul.f32 %v3450, %v3487
        %v3506 = vmul.f32 %v3451, %v3487
        %v3507 = vmul.f32 %v3452, %v3487
        %v3508 = vmul.f32 %v3453, %v3487
        %v3509 = vmul.f32 %v3454, %v3487
        %v3510 = vmul.f32 %v3455, %v3487
        %v3511 = vmul.f32 %v3456, %v3487
        %v3512 = vmul.f32 %v3457, %v3487
        %v3513 = vmul.f32 %v3458, %v3487
        %v3514 = vmul.f32 %v3459, %v3487
        %v3515 = vmul.f32 %v3460, %v3487
        %v3516 = vmul.f32 %v3461, %v3487
        %v3517 = vmul.f32 %v3462, %v3487
        %v3518 = vmul.f32 %v3463, %v3487
        %v3519 = vmul.f32 %v3464, %v3487
        %v3520 = vmul.f32 %v3465, %v3487
        %v3521 = vmul.f32 %v3466, %v3487
        %v3522 = vmul.f32 %v3467, %v3487
        %v3523 = vmul.f32 %v3468, %v3487
        %v3524 = vmul.f32 %v3469, %v3487
        %v3525 = vmul.f32 %v3470, %v3487
        %v3526 = vmul.f32 %v3471, %v3487
        %v3527 = vmul.f32 %v3472, %v3487
        %v3528 = vmul.f32 %v3473, %v3487
        %v3529 = vmul.f32 %v3474, %v3487
        %v3530 = vmul.f32 %v3475, %v3487
        %v3531 = vmul.f32 %v3476, %v3487
        %v3532 = vmul.f32 %v3477, %v3487
        %v3533 = vmul.f32 %v3478, %v3487
        %v3534 = vmul.f32 %v3479, %v3487
        %v3535 = vmul.f32 %v3480, %v3487
        %v3536 = vmul.f32 %v3481, %v3487
        %v3537 = vld [vmem:[%s5] sm:$0x1]
        %v3539 = vlaneseq
        %v3540 = vshrl.u32 %v3539, 7
        %v3541 = vsub.s32 0, %v3540
        %v3542 = vrot.slane %v3537, %v3541
        %v3544 = vadd.f32 %v3489, %v3542
        %v3545 = vadd.f32 %v3490, %v3542
        %v3546 = vadd.f32 %v3491, %v3542
        %v3547 = vadd.f32 %v3492, %v3542
        %v3548 = vadd.f32 %v3493, %v3542
        %v3549 = vadd.f32 %v3494, %v3542
        %v3550 = vadd.f32 %v3495, %v3542
        %v3551 = vadd.f32 %v3496, %v3542
        %v3552 = vadd.f32 %v3497, %v3542
        %v3553 = vadd.f32 %v3498, %v3542
        %v3554 = vadd.f32 %v3499, %v3542
        %v3555 = vadd.f32 %v3500, %v3542
        %v3556 = vadd.f32 %v3501, %v3542
        %v3557 = vadd.f32 %v3502, %v3542
        %v3558 = vadd.f32 %v3503, %v3542
        %v3559 = vadd.f32 %v3504, %v3542
        %v3560 = vadd.f32 %v3505, %v3542
        %v3561 = vadd.f32 %v3506, %v3542
        %v3562 = vadd.f32 %v3507, %v3542
        %v3563 = vadd.f32 %v3508, %v3542
        %v3564 = vadd.f32 %v3509, %v3542
        %v3565 = vadd.f32 %v3510, %v3542
        %v3566 = vadd.f32 %v3511, %v3542
        %v3567 = vadd.f32 %v3512, %v3542
        %v3568 = vadd.f32 %v3513, %v3542
        %v3569 = vadd.f32 %v3514, %v3542
        %v3570 = vadd.f32 %v3515, %v3542
        %v3571 = vadd.f32 %v3516, %v3542
        %v3572 = vadd.f32 %v3517, %v3542
        %v3573 = vadd.f32 %v3518, %v3542
        %v3574 = vadd.f32 %v3519, %v3542
        %v3575 = vadd.f32 %v3520, %v3542
        %v3576 = vadd.f32 %v3521, %v3542
        %v3577 = vadd.f32 %v3522, %v3542
        %v3578 = vadd.f32 %v3523, %v3542
        %v3579 = vadd.f32 %v3524, %v3542
        %v3580 = vadd.f32 %v3525, %v3542
        %v3581 = vadd.f32 %v3526, %v3542
        %v3582 = vadd.f32 %v3527, %v3542
        %v3583 = vadd.f32 %v3528, %v3542
        %v3584 = vadd.f32 %v3529, %v3542
        %v3585 = vadd.f32 %v3530, %v3542
        %v3586 = vadd.f32 %v3531, %v3542
        %v3587 = vadd.f32 %v3532, %v3542
        %v3588 = vadd.f32 %v3533, %v3542
        %v3589 = vadd.f32 %v3534, %v3542
        %v3590 = vadd.f32 %v3535, %v3542
        %v3591 = vadd.f32 %v3536, %v3542
        %v3592 = vmax.f32 %v3544, 0.0
        %v3593 = vmax.f32 %v3545, 0.0
        %v3594 = vmax.f32 %v3546, 0.0
        %v3595 = vmax.f32 %v3547, 0.0
        %v3596 = vmax.f32 %v3548, 0.0
        %v3597 = vmax.f32 %v3549, 0.0
        %v3598 = vmax.f32 %v3550, 0.0
        %v3599 = vmax.f32 %v3551, 0.0
        %v3600 = vmax.f32 %v3552, 0.0
        %v3601 = vmax.f32 %v3553, 0.0
        %v3602 = vmax.f32 %v3554, 0.0
        %v3603 = vmax.f32 %v3555, 0.0
        %v3604 = vmax.f32 %v3556, 0.0
        %v3605 = vmax.f32 %v3557, 0.0
        %v3606 = vmax.f32 %v3558, 0.0
        %v3607 = vmax.f32 %v3559, 0.0
        %v3608 = vmax.f32 %v3560, 0.0
        %v3609 = vmax.f32 %v3561, 0.0
        %v3610 = vmax.f32 %v3562, 0.0
        %v3611 = vmax.f32 %v3563, 0.0
        %v3612 = vmax.f32 %v3564, 0.0
        %v3613 = vmax.f32 %v3565, 0.0
        %v3614 = vmax.f32 %v3566, 0.0
        %v3615 = vmax.f32 %v3567, 0.0
        %v3616 = vmax.f32 %v3568, 0.0
        %v3617 = vmax.f32 %v3569, 0.0
        %v3618 = vmax.f32 %v3570, 0.0
        %v3619 = vmax.f32 %v3571, 0.0
        %v3620 = vmax.f32 %v3572, 0.0
        %v3621 = vmax.f32 %v3573, 0.0
        %v3622 = vmax.f32 %v3574, 0.0
        %v3623 = vmax.f32 %v3575, 0.0
        %v3624 = vmax.f32 %v3576, 0.0
        %v3625 = vmax.f32 %v3577, 0.0
        %v3626 = vmax.f32 %v3578, 0.0
        %v3627 = vmax.f32 %v3579, 0.0
        %v3628 = vmax.f32 %v3580, 0.0
        %v3629 = vmax.f32 %v3581, 0.0
        %v3630 = vmax.f32 %v3582, 0.0
        %v3631 = vmax.f32 %v3583, 0.0
        %v3632 = vmax.f32 %v3584, 0.0
        %v3633 = vmax.f32 %v3585, 0.0
        %v3634 = vmax.f32 %v3586, 0.0
        %v3635 = vmax.f32 %v3587, 0.0
        %v3636 = vmax.f32 %v3588, 0.0
        %v3637 = vmax.f32 %v3589, 0.0
        %v3638 = vmax.f32 %v3590, 0.0
        %v3639 = vmax.f32 %v3591, 0.0
        %v3640 = vmul.f32 %v3592, %v2754
        %v3641 = vmul.f32 %v3593, %v2759
        %v3642 = vmul.f32 %v3594, %v2764
        %v3643 = vmul.f32 %v3595, %v2769
        %v3644 = vmul.f32 %v3596, %v2774
        %v3645 = vmul.f32 %v3597, %v2779
        %v3646 = vmul.f32 %v3598, %v2784
        %v3647 = vmul.f32 %v3599, %v2789
        %v3648 = vmul.f32 %v3600, %v2794
        %v3649 = vmul.f32 %v3601, %v2799
        %v3650 = vmul.f32 %v3602, %v2804
        %v3651 = vmul.f32 %v3603, %v2809
        %v3652 = vmul.f32 %v3604, %v2814
        %v3653 = vmul.f32 %v3605, %v2819
        %v3654 = vmul.f32 %v3606, %v2824
        %v3655 = vmul.f32 %v3607, %v2829
        %v3656 = vmul.f32 %v3608, %v2834
        %v3657 = vmul.f32 %v3609, %v2839
        %v3658 = vmul.f32 %v3610, %v2844
        %v3659 = vmul.f32 %v3611, %v2849
        %v3660 = vmul.f32 %v3612, %v2854
        %v3661 = vmul.f32 %v3613, %v2859
        %v3662 = vmul.f32 %v3614, %v2864
        %v3663 = vmul.f32 %v3615, %v2869
        %v3664 = vmul.f32 %v3616, %v2874
        %v3665 = vmul.f32 %v3617, %v2879
        %v3666 = vmul.f32 %v3618, %v2884
        %v3667 = vmul.f32 %v3619, %v2889
        %v3668 = vmul.f32 %v3620, %v2894
        %v3669 = vmul.f32 %v3621, %v2899
        %v3670 = vmul.f32 %v3622, %v2904
        %v3671 = vmul.f32 %v3623, %v2909
        %v3672 = vmul.f32 %v3624, %v2914
        %v3673 = vmul.f32 %v3625, %v2919
        %v3674 = vmul.f32 %v3626, %v2924
        %v3675 = vmul.f32 %v3627, %v2929
        %v3676 = vmul.f32 %v3628, %v2934
        %v3677 = vmul.f32 %v3629, %v2939
        %v3678 = vmul.f32 %v3630, %v2944
        %v3679 = vmul.f32 %v3631, %v2949
        %v3680 = vmul.f32 %v3632, %v2954
        %v3681 = vmul.f32 %v3633, %v2959
        %v3682 = vmul.f32 %v3634, %v2964
        %v3683 = vmul.f32 %v3635, %v2969
        %v3684 = vmul.f32 %v3636, %v2974
        %v3685 = vmul.f32 %v3637, %v2979
        %v3686 = vmul.f32 %v3638, %v2984
        %v3687 = vmul.f32 %v3639, %v2989
        %3688 = vst.msk [vmem:[#allocation2 + $0x20] sm:$0xff] %vm386, %v3640
        %3689 = vst.msk [vmem:[#allocation2 + $0x28] sm:$0xff] %vm386, %v3641
        %3690 = vst.msk [vmem:[#allocation2 + $0x30] sm:$0xff] %vm386, %v3642
        %3691 = vst.msk [vmem:[#allocation2 + $0x38] sm:$0xff] %vm386, %v3643
        %3692 = vst.msk [vmem:[#allocation2 + $0x40] sm:$0xff] %vm386, %v3644
        %3693 = vst.msk [vmem:[#allocation2 + $0x48] sm:$0xff] %vm386, %v3645
        %3694 = vst.msk [vmem:[#allocation2 + $0x50] sm:$0xff] %vm386, %v3646
        %3695 = vst.msk [vmem:[#allocation2 + $0x58] sm:$0xff] %vm386, %v3647
        %3696 = vst.msk [vmem:[#allocation2 + $0x60] sm:$0xff] %vm386, %v3648
        %3697 = vst.msk [vmem:[#allocation2 + $0x68] sm:$0xff] %vm386, %v3649
        %3698 = vst.msk [vmem:[#allocation2 + $0x70] sm:$0xff] %vm386, %v3650
        %3699 = vst.msk [vmem:[#allocation2 + $0x78] sm:$0xff] %vm386, %v3651
        %3700 = vst.msk [vmem:[#allocation2 + $0x80] sm:$0xff] %vm386, %v3652
        %3701 = vst.msk [vmem:[#allocation2 + $0x88] sm:$0xff] %vm386, %v3653
        %3702 = vst.msk [vmem:[#allocation2 + $0x90] sm:$0xff] %vm386, %v3654
        %3703 = vst.msk [vmem:[#allocation2 + $0x98] sm:$0xff] %vm386, %v3655
        %3704 = vst.msk [vmem:[#allocation2 + $0xa0] sm:$0xff] %vm386, %v3656
        %3705 = vst.msk [vmem:[#allocation2 + $0xa8] sm:$0xff] %vm386, %v3657
        %3706 = vst.msk [vmem:[#allocation2 + $0xb0] sm:$0xff] %vm386, %v3658
        %3707 = vst.msk [vmem:[#allocation2 + $0xb8] sm:$0xff] %vm386, %v3659
        %3708 = vst.msk [vmem:[#allocation2 + $0xc0] sm:$0xff] %vm386, %v3660
        %3709 = vst.msk [vmem:[#allocation2 + $0xc8] sm:$0xff] %vm386, %v3661
        %3710 = vst.msk [vmem:[#allocation2 + $0xd0] sm:$0xff] %vm386, %v3662
        %3711 = vst.msk [vmem:[#allocation2 + $0xd8] sm:$0xff] %vm386, %v3663
        %3712 = vst.msk [vmem:[#allocation2 + $0xe0] sm:$0xff] %vm386, %v3664
        %3713 = vst.msk [vmem:[#allocation2 + $0xe8] sm:$0xff] %vm386, %v3665
        %3714 = vst.msk [vmem:[#allocation2 + $0xf0] sm:$0xff] %vm386, %v3666
        %3715 = vst.msk [vmem:[#allocation2 + $0xf8] sm:$0xff] %vm386, %v3667
        %3716 = vst.msk [vmem:[#allocation2 + $0x100] sm:$0xff] %vm386, %v3668
        %3717 = vst.msk [vmem:[#allocation2 + $0x108] sm:$0xff] %vm386, %v3669
        %3718 = vst.msk [vmem:[#allocation2 + $0x110] sm:$0xff] %vm386, %v3670
        %3719 = vst.msk [vmem:[#allocation2 + $0x118] sm:$0xff] %vm386, %v3671
        %3720 = vst.msk [vmem:[#allocation2 + $0x120] sm:$0xff] %vm386, %v3672
        %3721 = vst.msk [vmem:[#allocation2 + $0x128] sm:$0xff] %vm386, %v3673
        %3722 = vst.msk [vmem:[#allocation2 + $0x130] sm:$0xff] %vm386, %v3674
        %3723 = vst.msk [vmem:[#allocation2 + $0x138] sm:$0xff] %vm386, %v3675
        %3724 = vst.msk [vmem:[#allocation2 + $0x140] sm:$0xff] %vm386, %v3676
        %3725 = vst.msk [vmem:[#allocation2 + $0x148] sm:$0xff] %vm386, %v3677
        %3726 = vst.msk [vmem:[#allocation2 + $0x150] sm:$0xff] %vm386, %v3678
        %3727 = vst.msk [vmem:[#allocation2 + $0x158] sm:$0xff] %vm386, %v3679
        %3728 = vst.msk [vmem:[#allocation2 + $0x160] sm:$0xff] %vm386, %v3680
        %3729 = vst.msk [vmem:[#allocation2 + $0x168] sm:$0xff] %vm386, %v3681
        %3730 = vst.msk [vmem:[#allocation2 + $0x170] sm:$0xff] %vm386, %v3682
        %3731 = vst.msk [vmem:[#allocation2 + $0x178] sm:$0xff] %vm386, %v3683
        %3732 = vst.msk [vmem:[#allocation2 + $0x180] sm:$0xff] %vm386, %v3684
        %3733 = vst.msk [vmem:[#allocation2 + $0x188] sm:$0xff] %vm386, %v3685
        %3734 = vst.msk [vmem:[#allocation2 + $0x190] sm:$0xff] %vm386, %v3686
        %3735 = vst.msk [vmem:[#allocation2 + $0x198] sm:$0xff] %vm386, %v3687
        %v3736 = vld [vmem:[#allocation2 + $0x7] sm:$0xff]
        %v3737 = vld [vmem:[#allocation2 + $0xf] sm:$0xff]
        %v3738 = vld [vmem:[#allocation2 + $0x17] sm:$0xff]
        %v3739 = vld [vmem:[#allocation2 + $0x1f] sm:$0xff]
        %v3740 = vld [vmem:[#allocation2 + $0x27] sm:$0xff]
        %v3741 = vld [vmem:[#allocation2 + $0x2f] sm:$0xff]
        %v3742 = vld [vmem:[#allocation2 + $0x37] sm:$0xff]
        %v3743 = vld [vmem:[#allocation2 + $0x3f] sm:$0xff]
        %v3744 = vld [vmem:[#allocation2 + $0x47] sm:$0xff]
        %v3745 = vld [vmem:[#allocation2 + $0x4f] sm:$0xff]
        %v3746 = vld [vmem:[#allocation2 + $0x57] sm:$0xff]
        %v3747 = vld [vmem:[#allocation2 + $0x5f] sm:$0xff]
        %v3748 = vld [vmem:[#allocation2 + $0x67] sm:$0xff]
        %v3749 = vld [vmem:[#allocation2 + $0x6f] sm:$0xff]
        %v3750 = vld [vmem:[#allocation2 + $0x77] sm:$0xff]
        %v3751 = vld [vmem:[#allocation2 + $0x7f] sm:$0xff]
        %v3752 = vld [vmem:[#allocation2 + $0x87] sm:$0xff]
        %v3753 = vld [vmem:[#allocation2 + $0x8f] sm:$0xff]
        %v3754 = vld [vmem:[#allocation2 + $0x97] sm:$0xff]
        %v3755 = vld [vmem:[#allocation2 + $0x9f] sm:$0xff]
        %v3756 = vld [vmem:[#allocation2 + $0xa7] sm:$0xff]
        %v3757 = vld [vmem:[#allocation2 + $0xaf] sm:$0xff]
        %v3758 = vld [vmem:[#allocation2 + $0xb7] sm:$0xff]
        %v3759 = vld [vmem:[#allocation2 + $0xbf] sm:$0xff]
        %v3760 = vld [vmem:[#allocation2 + $0xc7] sm:$0xff]
        %v3761 = vld [vmem:[#allocation2 + $0xcf] sm:$0xff]
        %v3762 = vld [vmem:[#allocation2 + $0xd7] sm:$0xff]
        %v3763 = vld [vmem:[#allocation2 + $0xdf] sm:$0xff]
        %v3764 = vld [vmem:[#allocation2 + $0xe7] sm:$0xff]
        %v3765 = vld [vmem:[#allocation2 + $0xef] sm:$0xff]
        %v3766 = vld [vmem:[#allocation2 + $0xf7] sm:$0xff]
        %v3767 = vld [vmem:[#allocation2 + $0xff] sm:$0xff]
        %v3768 = vld [vmem:[#allocation2 + $0x107] sm:$0xff]
        %v3769 = vld [vmem:[#allocation2 + $0x10f] sm:$0xff]
        %v3770 = vld [vmem:[#allocation2 + $0x117] sm:$0xff]
        %v3771 = vld [vmem:[#allocation2 + $0x11f] sm:$0xff]
        %v3772 = vld [vmem:[#allocation2 + $0x127] sm:$0xff]
        %v3773 = vld [vmem:[#allocation2 + $0x12f] sm:$0xff]
        %v3774 = vld [vmem:[#allocation2 + $0x137] sm:$0xff]
        %v3775 = vld [vmem:[#allocation2 + $0x13f] sm:$0xff]
        %v3776 = vld [vmem:[#allocation2 + $0x147] sm:$0xff]
        %v3777 = vld [vmem:[#allocation2 + $0x14f] sm:$0xff]
        %v3778 = vld [vmem:[#allocation2 + $0x157] sm:$0xff]
        %v3779 = vld [vmem:[#allocation2 + $0x15f] sm:$0xff]
        %v3780 = vld [vmem:[#allocation2 + $0x167] sm:$0xff]
        %v3781 = vld [vmem:[#allocation2 + $0x16f] sm:$0xff]
        %v3782 = vld [vmem:[#allocation2 + $0x177] sm:$0xff]
        %v3783 = vld [vmem:[#allocation2 + $0x17f] sm:$0xff]
        %v3784 = vpack.c.bf16 %v3737, %v3736
        %v3785 = vpack.c.bf16 %v3739, %v3738
        %v3786 = vpack.c.bf16 %v3741, %v3740
        %v3787 = vpack.c.bf16 %v3743, %v3742
        %v3788 = vpack.c.bf16 %v3745, %v3744
        %v3789 = vpack.c.bf16 %v3747, %v3746
        %v3790 = vpack.c.bf16 %v3749, %v3748
        %v3791 = vpack.c.bf16 %v3751, %v3750
        %v3792 = vpack.c.bf16 %v3753, %v3752
        %v3793 = vpack.c.bf16 %v3755, %v3754
        %v3794 = vpack.c.bf16 %v3757, %v3756
        %v3795 = vpack.c.bf16 %v3759, %v3758
        %v3796 = vpack.c.bf16 %v3761, %v3760
        %v3797 = vpack.c.bf16 %v3763, %v3762
        %v3798 = vpack.c.bf16 %v3765, %v3764
        %v3799 = vpack.c.bf16 %v3767, %v3766
        %v3800 = vpack.c.bf16 %v3769, %v3768
        %v3801 = vpack.c.bf16 %v3771, %v3770
        %v3802 = vpack.c.bf16 %v3773, %v3772
        %v3803 = vpack.c.bf16 %v3775, %v3774
        %v3804 = vpack.c.bf16 %v3777, %v3776
        %v3805 = vpack.c.bf16 %v3779, %v3778
        %v3806 = vpack.c.bf16 %v3781, %v3780
        %v3807 = vpack.c.bf16 %v3783, %v3782
        %3808 = vst.msk [vmem:[#allocation3] sm:$0xff] %vm386, %v3784
        %3809 = vst.msk [vmem:[#allocation3 + $0x18] sm:$0xff] %vm386, %v3785
        %3810 = vst.msk [vmem:[#allocation3 + $0x30] sm:$0xff] %vm386, %v3786
        %3811 = vst.msk [vmem:[#allocation3 + $0x48] sm:$0xff] %vm386, %v3787
        %3812 = vst.msk [vmem:[#allocation3 + $0x60] sm:$0xff] %vm386, %v3788
        %3813 = vst.msk [vmem:[#allocation3 + $0x78] sm:$0xff] %vm386, %v3789
        %3814 = vst.msk [vmem:[#allocation3 + $0x90] sm:$0xff] %vm386, %v3790
        %3815 = vst.msk [vmem:[#allocation3 + $0xa8] sm:$0xff] %vm386, %v3791
        %3816 = vst.msk [vmem:[#allocation3 + $0xc0] sm:$0xff] %vm386, %v3792
        %3817 = vst.msk [vmem:[#allocation3 + $0xd8] sm:$0xff] %vm386, %v3793
        %3818 = vst.msk [vmem:[#allocation3 + $0xf0] sm:$0xff] %vm386, %v3794
        %3819 = vst.msk [vmem:[#allocation3 + $0x108] sm:$0xff] %vm386, %v3795
        %3820 = vst.msk [vmem:[#allocation3 + $0x120] sm:$0xff] %vm386, %v3796
        %3821 = vst.msk [vmem:[#allocation3 + $0x138] sm:$0xff] %vm386, %v3797
        %3822 = vst.msk [vmem:[#allocation3 + $0x150] sm:$0xff] %vm386, %v3798
        %3823 = vst.msk [vmem:[#allocation3 + $0x168] sm:$0xff] %vm386, %v3799
        %3824 = vst.msk [vmem:[#allocation3 + $0x180] sm:$0xff] %vm386, %v3800
        %3825 = vst.msk [vmem:[#allocation3 + $0x198] sm:$0xff] %vm386, %v3801
        %3826 = vst.msk [vmem:[#allocation3 + $0x1b0] sm:$0xff] %vm386, %v3802
        %3827 = vst.msk [vmem:[#allocation3 + $0x1c8] sm:$0xff] %vm386, %v3803
        %3828 = vst.msk [vmem:[#allocation3 + $0x1e0] sm:$0xff] %vm386, %v3804
        %3829 = vst.msk [vmem:[#allocation3 + $0x1f8] sm:$0xff] %vm386, %v3805
        %3830 = vst.msk [vmem:[#allocation3 + $0x210] sm:$0xff] %vm386, %v3806
        %3831 = vst.msk [vmem:[#allocation3 + $0x228] sm:$0xff] %vm386, %v3807
        %v3832 = vld [vmem:[#allocation2 + $0x8] sm:$0xff]
        %v3833 = vld [vmem:[#allocation2 + $0x10] sm:$0xff]
        %v3834 = vld [vmem:[#allocation2 + $0x18] sm:$0xff]
        %v3835 = vld [vmem:[#allocation2 + $0x20] sm:$0xff]
        %v3836 = vld [vmem:[#allocation2 + $0x28] sm:$0xff]
        %v3837 = vld [vmem:[#allocation2 + $0x30] sm:$0xff]
        %v3838 = vld [vmem:[#allocation2 + $0x38] sm:$0xff]
        %v3839 = vld [vmem:[#allocation2 + $0x40] sm:$0xff]
        %v3840 = vld [vmem:[#allocation2 + $0x48] sm:$0xff]
        %v3841 = vld [vmem:[#allocation2 + $0x50] sm:$0xff]
        %v3842 = vld [vmem:[#allocation2 + $0x58] sm:$0xff]
        %v3843 = vld [vmem:[#allocation2 + $0x60] sm:$0xff]
        %v3844 = vld [vmem:[#allocation2 + $0x68] sm:$0xff]
        %v3845 = vld [vmem:[#allocation2 + $0x70] sm:$0xff]
        %v3846 = vld [vmem:[#allocation2 + $0x78] sm:$0xff]
        %v3847 = vld [vmem:[#allocation2 + $0x80] sm:$0xff]
        %v3848 = vld [vmem:[#allocation2 + $0x88] sm:$0xff]
        %v3849 = vld [vmem:[#allocation2 + $0x90] sm:$0xff]
        %v3850 = vld [vmem:[#allocation2 + $0x98] sm:$0xff]
        %v3851 = vld [vmem:[#allocation2 + $0xa0] sm:$0xff]
        %v3852 = vld [vmem:[#allocation2 + $0xa8] sm:$0xff]
        %v3853 = vld [vmem:[#allocation2 + $0xb0] sm:$0xff]
        %v3854 = vld [vmem:[#allocation2 + $0xb8] sm:$0xff]
        %v3855 = vld [vmem:[#allocation2 + $0xc0] sm:$0xff]
        %v3856 = vld [vmem:[#allocation2 + $0xc8] sm:$0xff]
        %v3857 = vld [vmem:[#allocation2 + $0xd0] sm:$0xff]
        %v3858 = vld [vmem:[#allocation2 + $0xd8] sm:$0xff]
        %v3859 = vld [vmem:[#allocation2 + $0xe0] sm:$0xff]
        %v3860 = vld [vmem:[#allocation2 + $0xe8] sm:$0xff]
        %v3861 = vld [vmem:[#allocation2 + $0xf0] sm:$0xff]
        %v3862 = vld [vmem:[#allocation2 + $0xf8] sm:$0xff]
        %v3863 = vld [vmem:[#allocation2 + $0x100] sm:$0xff]
        %v3864 = vld [vmem:[#allocation2 + $0x108] sm:$0xff]
        %v3865 = vld [vmem:[#allocation2 + $0x110] sm:$0xff]
        %v3866 = vld [vmem:[#allocation2 + $0x118] sm:$0xff]
        %v3867 = vld [vmem:[#allocation2 + $0x120] sm:$0xff]
        %v3868 = vld [vmem:[#allocation2 + $0x128] sm:$0xff]
        %v3869 = vld [vmem:[#allocation2 + $0x130] sm:$0xff]
        %v3870 = vld [vmem:[#allocation2 + $0x138] sm:$0xff]
        %v3871 = vld [vmem:[#allocation2 + $0x140] sm:$0xff]
        %v3872 = vld [vmem:[#allocation2 + $0x148] sm:$0xff]
        %v3873 = vld [vmem:[#allocation2 + $0x150] sm:$0xff]
        %v3874 = vld [vmem:[#allocation2 + $0x158] sm:$0xff]
        %v3875 = vld [vmem:[#allocation2 + $0x160] sm:$0xff]
        %v3876 = vld [vmem:[#allocation2 + $0x168] sm:$0xff]
        %v3877 = vld [vmem:[#allocation2 + $0x170] sm:$0xff]
        %v3878 = vld [vmem:[#allocation2 + $0x178] sm:$0xff]
        %v3879 = vld [vmem:[#allocation2 + $0x180] sm:$0xff]
        %v3880 = vpack.c.bf16 %v3833, %v3832
        %v3881 = vpack.c.bf16 %v3835, %v3834
        %v3882 = vpack.c.bf16 %v3837, %v3836
        %v3883 = vpack.c.bf16 %v3839, %v3838
        %v3884 = vpack.c.bf16 %v3841, %v3840
        %v3885 = vpack.c.bf16 %v3843, %v3842
        %v3886 = vpack.c.bf16 %v3845, %v3844
        %v3887 = vpack.c.bf16 %v3847, %v3846
        %v3888 = vpack.c.bf16 %v3849, %v3848
        %v3889 = vpack.c.bf16 %v3851, %v3850
        %v3890 = vpack.c.bf16 %v3853, %v3852
        %v3891 = vpack.c.bf16 %v3855, %v3854
        %v3892 = vpack.c.bf16 %v3857, %v3856
        %v3893 = vpack.c.bf16 %v3859, %v3858
        %v3894 = vpack.c.bf16 %v3861, %v3860
        %v3895 = vpack.c.bf16 %v3863, %v3862
        %v3896 = vpack.c.bf16 %v3865, %v3864
        %v3897 = vpack.c.bf16 %v3867, %v3866
        %v3898 = vpack.c.bf16 %v3869, %v3868
        %v3899 = vpack.c.bf16 %v3871, %v3870
        %v3900 = vpack.c.bf16 %v3873, %v3872
        %v3901 = vpack.c.bf16 %v3875, %v3874
        %v3902 = vpack.c.bf16 %v3877, %v3876
        %v3903 = vpack.c.bf16 %v3879, %v3878
        %3928 = vrot.lane.b32.xlu0 %v3880, 32
        %v3929 = vpop.permute.xlu0 %3928
        %3930 = vrot.lane.b32.xlu0 %v3881, 32
        %v3931 = vpop.permute.xlu0 %3930
        %3932 = vrot.lane.b32.xlu0 %v3882, 32
        %v3933 = vpop.permute.xlu0 %3932
        %3934 = vrot.lane.b32.xlu0 %v3883, 32
        %v3935 = vpop.permute.xlu0 %3934
        %3936 = vrot.lane.b32.xlu0 %v3884, 32
        %v3937 = vpop.permute.xlu0 %3936
        %3938 = vrot.lane.b32.xlu0 %v3885, 32
        %v3939 = vpop.permute.xlu0 %3938
        %3940 = vrot.lane.b32.xlu0 %v3886, 32
        %v3941 = vpop.permute.xlu0 %3940
        %3942 = vrot.lane.b32.xlu0 %v3887, 32
        %v3943 = vpop.permute.xlu0 %3942
        %3944 = vrot.lane.b32.xlu0 %v3888, 32
        %v3945 = vpop.permute.xlu0 %3944
        %3946 = vrot.lane.b32.xlu0 %v3889, 32
        %v3947 = vpop.permute.xlu0 %3946
        %3948 = vrot.lane.b32.xlu0 %v3890, 32
        %v3949 = vpop.permute.xlu0 %3948
        %3950 = vrot.lane.b32.xlu0 %v3891, 32
        %v3951 = vpop.permute.xlu0 %3950
        %3952 = vrot.lane.b32.xlu0 %v3892, 32
        %v3953 = vpop.permute.xlu0 %3952
        %3954 = vrot.lane.b32.xlu0 %v3893, 32
        %v3955 = vpop.permute.xlu0 %3954
        %3956 = vrot.lane.b32.xlu0 %v3894, 32
        %v3957 = vpop.permute.xlu0 %3956
        %3958 = vrot.lane.b32.xlu0 %v3895, 32
        %v3959 = vpop.permute.xlu0 %3958
        %3960 = vrot.lane.b32.xlu0 %v3896, 32
        %v3961 = vpop.permute.xlu0 %3960
        %3962 = vrot.lane.b32.xlu0 %v3897, 32
        %v3963 = vpop.permute.xlu0 %3962
        %3964 = vrot.lane.b32.xlu0 %v3898, 32
        %v3965 = vpop.permute.xlu0 %3964
        %3966 = vrot.lane.b32.xlu0 %v3899, 32
        %v3967 = vpop.permute.xlu0 %3966
        %3968 = vrot.lane.b32.xlu0 %v3900, 32
        %v3969 = vpop.permute.xlu0 %3968
        %3970 = vrot.lane.b32.xlu0 %v3901, 32
        %v3971 = vpop.permute.xlu0 %3970
        %3972 = vrot.lane.b32.xlu0 %v3902, 32
        %v3973 = vpop.permute.xlu0 %3972
        %3974 = vrot.lane.b32.xlu0 %v3903, 32
        %v3975 = vpop.permute.xlu0 %3974
        %4000 = vst.msk [vmem:[#allocation3] sm:$0xff] %vm834, %v3929
        %4001 = vst.msk [vmem:[#allocation3 + $0x18] sm:$0xff] %vm834, %v3931
        %4002 = vst.msk [vmem:[#allocation3 + $0x30] sm:$0xff] %vm834, %v3933
        %4003 = vst.msk [vmem:[#allocation3 + $0x48] sm:$0xff] %vm834, %v3935
        %4004 = vst.msk [vmem:[#allocation3 + $0x60] sm:$0xff] %vm834, %v3937
        %4005 = vst.msk [vmem:[#allocation3 + $0x78] sm:$0xff] %vm834, %v3939
        %4006 = vst.msk [vmem:[#allocation3 + $0x90] sm:$0xff] %vm834, %v3941
        %4007 = vst.msk [vmem:[#allocation3 + $0xa8] sm:$0xff] %vm834, %v3943
        %4008 = vst.msk [vmem:[#allocation3 + $0xc0] sm:$0xff] %vm834, %v3945
        %4009 = vst.msk [vmem:[#allocation3 + $0xd8] sm:$0xff] %vm834, %v3947
        %4010 = vst.msk [vmem:[#allocation3 + $0xf0] sm:$0xff] %vm834, %v3949
        %4011 = vst.msk [vmem:[#allocation3 + $0x108] sm:$0xff] %vm834, %v3951
        %4012 = vst.msk [vmem:[#allocation3 + $0x120] sm:$0xff] %vm834, %v3953
        %4013 = vst.msk [vmem:[#allocation3 + $0x138] sm:$0xff] %vm834, %v3955
        %4014 = vst.msk [vmem:[#allocation3 + $0x150] sm:$0xff] %vm834, %v3957
        %4015 = vst.msk [vmem:[#allocation3 + $0x168] sm:$0xff] %vm834, %v3959
        %4016 = vst.msk [vmem:[#allocation3 + $0x180] sm:$0xff] %vm834, %v3961
        %4017 = vst.msk [vmem:[#allocation3 + $0x198] sm:$0xff] %vm834, %v3963
        %4018 = vst.msk [vmem:[#allocation3 + $0x1b0] sm:$0xff] %vm834, %v3965
        %4019 = vst.msk [vmem:[#allocation3 + $0x1c8] sm:$0xff] %vm834, %v3967
        %4020 = vst.msk [vmem:[#allocation3 + $0x1e0] sm:$0xff] %vm834, %v3969
        %4021 = vst.msk [vmem:[#allocation3 + $0x1f8] sm:$0xff] %vm834, %v3971
        %4022 = vst.msk [vmem:[#allocation3 + $0x210] sm:$0xff] %vm834, %v3973
        %4023 = vst.msk [vmem:[#allocation3 + $0x228] sm:$0xff] %vm834, %v3975
        %v4024 = vld [vmem:[#allocation2 + $0x9] sm:$0xff]
        %v4025 = vld [vmem:[#allocation2 + $0x11] sm:$0xff]
        %v4026 = vld [vmem:[#allocation2 + $0x19] sm:$0xff]
        %v4027 = vld [vmem:[#allocation2 + $0x21] sm:$0xff]
        %v4028 = vld [vmem:[#allocation2 + $0x29] sm:$0xff]
        %v4029 = vld [vmem:[#allocation2 + $0x31] sm:$0xff]
        %v4030 = vld [vmem:[#allocation2 + $0x39] sm:$0xff]
        %v4031 = vld [vmem:[#allocation2 + $0x41] sm:$0xff]
        %v4032 = vld [vmem:[#allocation2 + $0x49] sm:$0xff]
        %v4033 = vld [vmem:[#allocation2 + $0x51] sm:$0xff]
        %v4034 = vld [vmem:[#allocation2 + $0x59] sm:$0xff]
        %v4035 = vld [vmem:[#allocation2 + $0x61] sm:$0xff]
        %v4036 = vld [vmem:[#allocation2 + $0x69] sm:$0xff]
        %v4037 = vld [vmem:[#allocation2 + $0x71] sm:$0xff]
        %v4038 = vld [vmem:[#allocation2 + $0x79] sm:$0xff]
        %v4039 = vld [vmem:[#allocation2 + $0x81] sm:$0xff]
        %v4040 = vld [vmem:[#allocation2 + $0x89] sm:$0xff]
        %v4041 = vld [vmem:[#allocation2 + $0x91] sm:$0xff]
        %v4042 = vld [vmem:[#allocation2 + $0x99] sm:$0xff]
        %v4043 = vld [vmem:[#allocation2 + $0xa1] sm:$0xff]
        %v4044 = vld [vmem:[#allocation2 + $0xa9] sm:$0xff]
        %v4045 = vld [vmem:[#allocation2 + $0xb1] sm:$0xff]
        %v4046 = vld [vmem:[#allocation2 + $0xb9] sm:$0xff]
        %v4047 = vld [vmem:[#allocation2 + $0xc1] sm:$0xff]
        %v4048 = vld [vmem:[#allocation2 + $0xc9] sm:$0xff]
        %v4049 = vld [vmem:[#allocation2 + $0xd1] sm:$0xff]
        %v4050 = vld [vmem:[#allocation2 + $0xd9] sm:$0xff]
        %v4051 = vld [vmem:[#allocation2 + $0xe1] sm:$0xff]
        %v4052 = vld [vmem:[#allocation2 + $0xe9] sm:$0xff]
        %v4053 = vld [vmem:[#allocation2 + $0xf1] sm:$0xff]
        %v4054 = vld [vmem:[#allocation2 + $0xf9] sm:$0xff]
        %v4055 = vld [vmem:[#allocation2 + $0x101] sm:$0xff]
        %v4056 = vld [vmem:[#allocation2 + $0x109] sm:$0xff]
        %v4057 = vld [vmem:[#allocation2 + $0x111] sm:$0xff]
        %v4058 = vld [vmem:[#allocation2 + $0x119] sm:$0xff]
        %v4059 = vld [vmem:[#allocation2 + $0x121] sm:$0xff]
        %v4060 = vld [vmem:[#allocation2 + $0x129] sm:$0xff]
        %v4061 = vld [vmem:[#allocation2 + $0x131] sm:$0xff]
        %v4062 = vld [vmem:[#allocation2 + $0x139] sm:$0xff]
        %v4063 = vld [vmem:[#allocation2 + $0x141] sm:$0xff]
        %v4064 = vld [vmem:[#allocation2 + $0x149] sm:$0xff]
        %v4065 = vld [vmem:[#allocation2 + $0x151] sm:$0xff]
        %v4066 = vld [vmem:[#allocation2 + $0x159] sm:$0xff]
        %v4067 = vld [vmem:[#allocation2 + $0x161] sm:$0xff]
        %v4068 = vld [vmem:[#allocation2 + $0x169] sm:$0xff]
        %v4069 = vld [vmem:[#allocation2 + $0x171] sm:$0xff]
        %v4070 = vld [vmem:[#allocation2 + $0x179] sm:$0xff]
        %v4071 = vld [vmem:[#allocation2 + $0x181] sm:$0xff]
        %v4072 = vpack.c.bf16 %v4025, %v4024
        %v4073 = vpack.c.bf16 %v4027, %v4026
        %v4074 = vpack.c.bf16 %v4029, %v4028
        %v4075 = vpack.c.bf16 %v4031, %v4030
        %v4076 = vpack.c.bf16 %v4033, %v4032
        %v4077 = vpack.c.bf16 %v4035, %v4034
        %v4078 = vpack.c.bf16 %v4037, %v4036
        %v4079 = vpack.c.bf16 %v4039, %v4038
        %v4080 = vpack.c.bf16 %v4041, %v4040
        %v4081 = vpack.c.bf16 %v4043, %v4042
        %v4082 = vpack.c.bf16 %v4045, %v4044
        %v4083 = vpack.c.bf16 %v4047, %v4046
        %v4084 = vpack.c.bf16 %v4049, %v4048
        %v4085 = vpack.c.bf16 %v4051, %v4050
        %v4086 = vpack.c.bf16 %v4053, %v4052
        %v4087 = vpack.c.bf16 %v4055, %v4054
        %v4088 = vpack.c.bf16 %v4057, %v4056
        %v4089 = vpack.c.bf16 %v4059, %v4058
        %v4090 = vpack.c.bf16 %v4061, %v4060
        %v4091 = vpack.c.bf16 %v4063, %v4062
        %v4092 = vpack.c.bf16 %v4065, %v4064
        %v4093 = vpack.c.bf16 %v4067, %v4066
        %v4094 = vpack.c.bf16 %v4069, %v4068
        %v4095 = vpack.c.bf16 %v4071, %v4070
        %4120 = vrot.lane.b32.xlu0 %v4072, 64
        %v4121 = vpop.permute.xlu0 %4120
        %4122 = vrot.lane.b32.xlu0 %v4073, 64
        %v4123 = vpop.permute.xlu0 %4122
        %4124 = vrot.lane.b32.xlu0 %v4074, 64
        %v4125 = vpop.permute.xlu0 %4124
        %4126 = vrot.lane.b32.xlu0 %v4075, 64
        %v4127 = vpop.permute.xlu0 %4126
        %4128 = vrot.lane.b32.xlu0 %v4076, 64
        %v4129 = vpop.permute.xlu0 %4128
        %4130 = vrot.lane.b32.xlu0 %v4077, 64
        %v4131 = vpop.permute.xlu0 %4130
        %4132 = vrot.lane.b32.xlu0 %v4078, 64
        %v4133 = vpop.permute.xlu0 %4132
        %4134 = vrot.lane.b32.xlu0 %v4079, 64
        %v4135 = vpop.permute.xlu0 %4134
        %4136 = vrot.lane.b32.xlu0 %v4080, 64
        %v4137 = vpop.permute.xlu0 %4136
        %4138 = vrot.lane.b32.xlu0 %v4081, 64
        %v4139 = vpop.permute.xlu0 %4138
        %4140 = vrot.lane.b32.xlu0 %v4082, 64
        %v4141 = vpop.permute.xlu0 %4140
        %4142 = vrot.lane.b32.xlu0 %v4083, 64
        %v4143 = vpop.permute.xlu0 %4142
        %4144 = vrot.lane.b32.xlu0 %v4084, 64
        %v4145 = vpop.permute.xlu0 %4144
        %4146 = vrot.lane.b32.xlu0 %v4085, 64
        %v4147 = vpop.permute.xlu0 %4146
        %4148 = vrot.lane.b32.xlu0 %v4086, 64
        %v4149 = vpop.permute.xlu0 %4148
        %4150 = vrot.lane.b32.xlu0 %v4087, 64
        %v4151 = vpop.permute.xlu0 %4150
        %4152 = vrot.lane.b32.xlu0 %v4088, 64
        %v4153 = vpop.permute.xlu0 %4152
        %4154 = vrot.lane.b32.xlu0 %v4089, 64
        %v4155 = vpop.permute.xlu0 %4154
        %4156 = vrot.lane.b32.xlu0 %v4090, 64
        %v4157 = vpop.permute.xlu0 %4156
        %4158 = vrot.lane.b32.xlu0 %v4091, 64
        %v4159 = vpop.permute.xlu0 %4158
        %4160 = vrot.lane.b32.xlu0 %v4092, 64
        %v4161 = vpop.permute.xlu0 %4160
        %4162 = vrot.lane.b32.xlu0 %v4093, 64
        %v4163 = vpop.permute.xlu0 %4162
        %4164 = vrot.lane.b32.xlu0 %v4094, 64
        %v4165 = vpop.permute.xlu0 %4164
        %4166 = vrot.lane.b32.xlu0 %v4095, 64
        %v4167 = vpop.permute.xlu0 %4166
        %4192 = vst.msk [vmem:[#allocation3] sm:$0xff] %vm1027, %v4121
        %4193 = vst.msk [vmem:[#allocation3 + $0x18] sm:$0xff] %vm1027, %v4123
        %4194 = vst.msk [vmem:[#allocation3 + $0x30] sm:$0xff] %vm1027, %v4125
        %4195 = vst.msk [vmem:[#allocation3 + $0x48] sm:$0xff] %vm1027, %v4127
        %4196 = vst.msk [vmem:[#allocation3 + $0x60] sm:$0xff] %vm1027, %v4129
        %4197 = vst.msk [vmem:[#allocation3 + $0x78] sm:$0xff] %vm1027, %v4131
        %4198 = vst.msk [vmem:[#allocation3 + $0x90] sm:$0xff] %vm1027, %v4133
        %4199 = vst.msk [vmem:[#allocation3 + $0xa8] sm:$0xff] %vm1027, %v4135
        %4200 = vst.msk [vmem:[#allocation3 + $0xc0] sm:$0xff] %vm1027, %v4137
        %4201 = vst.msk [vmem:[#allocation3 + $0xd8] sm:$0xff] %vm1027, %v4139
        %4202 = vst.msk [vmem:[#allocation3 + $0xf0] sm:$0xff] %vm1027, %v4141
        %4203 = vst.msk [vmem:[#allocation3 + $0x108] sm:$0xff] %vm1027, %v4143
        %4204 = vst.msk [vmem:[#allocation3 + $0x120] sm:$0xff] %vm1027, %v4145
        %4205 = vst.msk [vmem:[#allocation3 + $0x138] sm:$0xff] %vm1027, %v4147
        %4206 = vst.msk [vmem:[#allocation3 + $0x150] sm:$0xff] %vm1027, %v4149
        %4207 = vst.msk [vmem:[#allocation3 + $0x168] sm:$0xff] %vm1027, %v4151
        %4208 = vst.msk [vmem:[#allocation3 + $0x180] sm:$0xff] %vm1027, %v4153
        %4209 = vst.msk [vmem:[#allocation3 + $0x198] sm:$0xff] %vm1027, %v4155
        %4210 = vst.msk [vmem:[#allocation3 + $0x1b0] sm:$0xff] %vm1027, %v4157
        %4211 = vst.msk [vmem:[#allocation3 + $0x1c8] sm:$0xff] %vm1027, %v4159
        %4212 = vst.msk [vmem:[#allocation3 + $0x1e0] sm:$0xff] %vm1027, %v4161
        %4213 = vst.msk [vmem:[#allocation3 + $0x1f8] sm:$0xff] %vm1027, %v4163
        %4214 = vst.msk [vmem:[#allocation3 + $0x210] sm:$0xff] %vm1027, %v4165
        %4215 = vst.msk [vmem:[#allocation3 + $0x228] sm:$0xff] %vm1027, %v4167
        %v4216 = vld [vmem:[#allocation2 + $0x1f] sm:$0xff]
        %v4217 = vld [vmem:[#allocation2 + $0x27] sm:$0xff]
        %v4218 = vld [vmem:[#allocation2 + $0x2f] sm:$0xff]
        %v4219 = vld [vmem:[#allocation2 + $0x37] sm:$0xff]
        %v4220 = vld [vmem:[#allocation2 + $0x3f] sm:$0xff]
        %v4221 = vld [vmem:[#allocation2 + $0x47] sm:$0xff]
        %v4222 = vld [vmem:[#allocation2 + $0x4f] sm:$0xff]
        %v4223 = vld [vmem:[#allocation2 + $0x57] sm:$0xff]
        %v4224 = vld [vmem:[#allocation2 + $0x5f] sm:$0xff]
        %v4225 = vld [vmem:[#allocation2 + $0x67] sm:$0xff]
        %v4226 = vld [vmem:[#allocation2 + $0x6f] sm:$0xff]
        %v4227 = vld [vmem:[#allocation2 + $0x77] sm:$0xff]
        %v4228 = vld [vmem:[#allocation2 + $0x7f] sm:$0xff]
        %v4229 = vld [vmem:[#allocation2 + $0x87] sm:$0xff]
        %v4230 = vld [vmem:[#allocation2 + $0x8f] sm:$0xff]
        %v4231 = vld [vmem:[#allocation2 + $0x97] sm:$0xff]
        %v4232 = vld [vmem:[#allocation2 + $0x9f] sm:$0xff]
        %v4233 = vld [vmem:[#allocation2 + $0xa7] sm:$0xff]
        %v4234 = vld [vmem:[#allocation2 + $0xaf] sm:$0xff]
        %v4235 = vld [vmem:[#allocation2 + $0xb7] sm:$0xff]
        %v4236 = vld [vmem:[#allocation2 + $0xbf] sm:$0xff]
        %v4237 = vld [vmem:[#allocation2 + $0xc7] sm:$0xff]
        %v4238 = vld [vmem:[#allocation2 + $0xcf] sm:$0xff]
        %v4239 = vld [vmem:[#allocation2 + $0xd7] sm:$0xff]
        %v4240 = vld [vmem:[#allocation2 + $0xdf] sm:$0xff]
        %v4241 = vld [vmem:[#allocation2 + $0xe7] sm:$0xff]
        %v4242 = vld [vmem:[#allocation2 + $0xef] sm:$0xff]
        %v4243 = vld [vmem:[#allocation2 + $0xf7] sm:$0xff]
        %v4244 = vld [vmem:[#allocation2 + $0xff] sm:$0xff]
        %v4245 = vld [vmem:[#allocation2 + $0x107] sm:$0xff]
        %v4246 = vld [vmem:[#allocation2 + $0x10f] sm:$0xff]
        %v4247 = vld [vmem:[#allocation2 + $0x117] sm:$0xff]
        %v4248 = vld [vmem:[#allocation2 + $0x11f] sm:$0xff]
        %v4249 = vld [vmem:[#allocation2 + $0x127] sm:$0xff]
        %v4250 = vld [vmem:[#allocation2 + $0x12f] sm:$0xff]
        %v4251 = vld [vmem:[#allocation2 + $0x137] sm:$0xff]
        %v4252 = vld [vmem:[#allocation2 + $0x13f] sm:$0xff]
        %v4253 = vld [vmem:[#allocation2 + $0x147] sm:$0xff]
        %v4254 = vld [vmem:[#allocation2 + $0x14f] sm:$0xff]
        %v4255 = vld [vmem:[#allocation2 + $0x157] sm:$0xff]
        %v4256 = vld [vmem:[#allocation2 + $0x15f] sm:$0xff]
        %v4257 = vld [vmem:[#allocation2 + $0x167] sm:$0xff]
        %v4258 = vld [vmem:[#allocation2 + $0x16f] sm:$0xff]
        %v4259 = vld [vmem:[#allocation2 + $0x177] sm:$0xff]
        %v4260 = vld [vmem:[#allocation2 + $0x17f] sm:$0xff]
        %v4261 = vld [vmem:[#allocation2 + $0x187] sm:$0xff]
        %v4262 = vld [vmem:[#allocation2 + $0x18f] sm:$0xff]
        %v4263 = vld [vmem:[#allocation2 + $0x197] sm:$0xff]
        %v4264 = vpack.c.bf16 %v4217, %v4216
        %v4265 = vpack.c.bf16 %v4219, %v4218
        %v4266 = vpack.c.bf16 %v4221, %v4220
        %v4267 = vpack.c.bf16 %v4223, %v4222
        %v4268 = vpack.c.bf16 %v4225, %v4224
        %v4269 = vpack.c.bf16 %v4227, %v4226
        %v4270 = vpack.c.bf16 %v4229, %v4228
        %v4271 = vpack.c.bf16 %v4231, %v4230
        %v4272 = vpack.c.bf16 %v4233, %v4232
        %v4273 = vpack.c.bf16 %v4235, %v4234
        %v4274 = vpack.c.bf16 %v4237, %v4236
        %v4275 = vpack.c.bf16 %v4239, %v4238
        %v4276 = vpack.c.bf16 %v4241, %v4240
        %v4277 = vpack.c.bf16 %v4243, %v4242
        %v4278 = vpack.c.bf16 %v4245, %v4244
        %v4279 = vpack.c.bf16 %v4247, %v4246
        %v4280 = vpack.c.bf16 %v4249, %v4248
        %v4281 = vpack.c.bf16 %v4251, %v4250
        %v4282 = vpack.c.bf16 %v4253, %v4252
        %v4283 = vpack.c.bf16 %v4255, %v4254
        %v4284 = vpack.c.bf16 %v4257, %v4256
        %v4285 = vpack.c.bf16 %v4259, %v4258
        %v4286 = vpack.c.bf16 %v4261, %v4260
        %v4287 = vpack.c.bf16 %v4263, %v4262
        %4312 = vrot.lane.b32.xlu0 %v4264, 96
        %v4313 = vpop.permute.xlu0 %4312
        %4314 = vrot.lane.b32.xlu0 %v4265, 96
        %v4315 = vpop.permute.xlu0 %4314
        %4316 = vrot.lane.b32.xlu0 %v4266, 96
        %v4317 = vpop.permute.xlu0 %4316
        %4318 = vrot.lane.b32.xlu0 %v4267, 96
        %v4319 = vpop.permute.xlu0 %4318
        %4320 = vrot.lane.b32.xlu0 %v4268, 96
        %v4321 = vpop.permute.xlu0 %4320
        %4322 = vrot.lane.b32.xlu0 %v4269, 96
        %v4323 = vpop.permute.xlu0 %4322
        %4324 = vrot.lane.b32.xlu0 %v4270, 96
        %v4325 = vpop.permute.xlu0 %4324
        %4326 = vrot.lane.b32.xlu0 %v4271, 96
        %v4327 = vpop.permute.xlu0 %4326
        %4328 = vrot.lane.b32.xlu0 %v4272, 96
        %v4329 = vpop.permute.xlu0 %4328
        %4330 = vrot.lane.b32.xlu0 %v4273, 96
        %v4331 = vpop.permute.xlu0 %4330
        %4332 = vrot.lane.b32.xlu0 %v4274, 96
        %v4333 = vpop.permute.xlu0 %4332
        %4334 = vrot.lane.b32.xlu0 %v4275, 96
        %v4335 = vpop.permute.xlu0 %4334
        %4336 = vrot.lane.b32.xlu0 %v4276, 96
        %v4337 = vpop.permute.xlu0 %4336
        %4338 = vrot.lane.b32.xlu0 %v4277, 96
        %v4339 = vpop.permute.xlu0 %4338
        %4340 = vrot.lane.b32.xlu0 %v4278, 96
        %v4341 = vpop.permute.xlu0 %4340
        %4342 = vrot.lane.b32.xlu0 %v4279, 96
        %v4343 = vpop.permute.xlu0 %4342
        %4344 = vrot.lane.b32.xlu0 %v4280, 96
        %v4345 = vpop.permute.xlu0 %4344
        %4346 = vrot.lane.b32.xlu0 %v4281, 96
        %v4347 = vpop.permute.xlu0 %4346
        %4348 = vrot.lane.b32.xlu0 %v4282, 96
        %v4349 = vpop.permute.xlu0 %4348
        %4350 = vrot.lane.b32.xlu0 %v4283, 96
        %v4351 = vpop.permute.xlu0 %4350
        %4352 = vrot.lane.b32.xlu0 %v4284, 96
        %v4353 = vpop.permute.xlu0 %4352
        %4354 = vrot.lane.b32.xlu0 %v4285, 96
        %v4355 = vpop.permute.xlu0 %4354
        %4356 = vrot.lane.b32.xlu0 %v4286, 96
        %v4357 = vpop.permute.xlu0 %4356
        %4358 = vrot.lane.b32.xlu0 %v4287, 96
        %v4359 = vpop.permute.xlu0 %4358
        %4384 = vst.msk [vmem:[#allocation3] sm:$0xff] %vm1220, %v4313
        %4385 = vst.msk [vmem:[#allocation3 + $0x18] sm:$0xff] %vm1220, %v4315
        %4386 = vst.msk [vmem:[#allocation3 + $0x30] sm:$0xff] %vm1220, %v4317
        %4387 = vst.msk [vmem:[#allocation3 + $0x48] sm:$0xff] %vm1220, %v4319
        %4388 = vst.msk [vmem:[#allocation3 + $0x60] sm:$0xff] %vm1220, %v4321
        %4389 = vst.msk [vmem:[#allocation3 + $0x78] sm:$0xff] %vm1220, %v4323
        %4390 = vst.msk [vmem:[#allocation3 + $0x90] sm:$0xff] %vm1220, %v4325
        %4391 = vst.msk [vmem:[#allocation3 + $0xa8] sm:$0xff] %vm1220, %v4327
        %4392 = vst.msk [vmem:[#allocation3 + $0xc0] sm:$0xff] %vm1220, %v4329
        %4393 = vst.msk [vmem:[#allocation3 + $0xd8] sm:$0xff] %vm1220, %v4331
        %4394 = vst.msk [vmem:[#allocation3 + $0xf0] sm:$0xff] %vm1220, %v4333
        %4395 = vst.msk [vmem:[#allocation3 + $0x108] sm:$0xff] %vm1220, %v4335
        %4396 = vst.msk [vmem:[#allocation3 + $0x120] sm:$0xff] %vm1220, %v4337
        %4397 = vst.msk [vmem:[#allocation3 + $0x138] sm:$0xff] %vm1220, %v4339
        %4398 = vst.msk [vmem:[#allocation3 + $0x150] sm:$0xff] %vm1220, %v4341
        %4399 = vst.msk [vmem:[#allocation3 + $0x168] sm:$0xff] %vm1220, %v4343
        %4400 = vst.msk [vmem:[#allocation3 + $0x180] sm:$0xff] %vm1220, %v4345
        %4401 = vst.msk [vmem:[#allocation3 + $0x198] sm:$0xff] %vm1220, %v4347
        %4402 = vst.msk [vmem:[#allocation3 + $0x1b0] sm:$0xff] %vm1220, %v4349
        %4403 = vst.msk [vmem:[#allocation3 + $0x1c8] sm:$0xff] %vm1220, %v4351
        %4404 = vst.msk [vmem:[#allocation3 + $0x1e0] sm:$0xff] %vm1220, %v4353
        %4405 = vst.msk [vmem:[#allocation3 + $0x1f8] sm:$0xff] %vm1220, %v4355
        %4406 = vst.msk [vmem:[#allocation3 + $0x210] sm:$0xff] %vm1220, %v4357
        %4407 = vst.msk [vmem:[#allocation3 + $0x228] sm:$0xff] %vm1220, %v4359
        %v4408 = vld [vmem:[#allocation2 + $0x20] sm:$0xff]
        %v4409 = vld [vmem:[#allocation2 + $0x28] sm:$0xff]
        %v4410 = vld [vmem:[#allocation2 + $0x30] sm:$0xff]
        %v4411 = vld [vmem:[#allocation2 + $0x38] sm:$0xff]
        %v4412 = vld [vmem:[#allocation2 + $0x40] sm:$0xff]
        %v4413 = vld [vmem:[#allocation2 + $0x48] sm:$0xff]
        %v4414 = vld [vmem:[#allocation2 + $0x50] sm:$0xff]
        %v4415 = vld [vmem:[#allocation2 + $0x58] sm:$0xff]
        %v4416 = vld [vmem:[#allocation2 + $0x60] sm:$0xff]
        %v4417 = vld [vmem:[#allocation2 + $0x68] sm:$0xff]
        %v4418 = vld [vmem:[#allocation2 + $0x70] sm:$0xff]
        %v4419 = vld [vmem:[#allocation2 + $0x78] sm:$0xff]
        %v4420 = vld [vmem:[#allocation2 + $0x80] sm:$0xff]
        %v4421 = vld [vmem:[#allocation2 + $0x88] sm:$0xff]
        %v4422 = vld [vmem:[#allocation2 + $0x90] sm:$0xff]
        %v4423 = vld [vmem:[#allocation2 + $0x98] sm:$0xff]
        %v4424 = vld [vmem:[#allocation2 + $0xa0] sm:$0xff]
        %v4425 = vld [vmem:[#allocation2 + $0xa8] sm:$0xff]
        %v4426 = vld [vmem:[#allocation2 + $0xb0] sm:$0xff]
        %v4427 = vld [vmem:[#allocation2 + $0xb8] sm:$0xff]
        %v4428 = vld [vmem:[#allocation2 + $0xc0] sm:$0xff]
        %v4429 = vld [vmem:[#allocation2 + $0xc8] sm:$0xff]
        %v4430 = vld [vmem:[#allocation2 + $0xd0] sm:$0xff]
        %v4431 = vld [vmem:[#allocation2 + $0xd8] sm:$0xff]
        %v4432 = vld [vmem:[#allocation2 + $0xe0] sm:$0xff]
        %v4433 = vld [vmem:[#allocation2 + $0xe8] sm:$0xff]
        %v4434 = vld [vmem:[#allocation2 + $0xf0] sm:$0xff]
        %v4435 = vld [vmem:[#allocation2 + $0xf8] sm:$0xff]
        %v4436 = vld [vmem:[#allocation2 + $0x100] sm:$0xff]
        %v4437 = vld [vmem:[#allocation2 + $0x108] sm:$0xff]
        %v4438 = vld [vmem:[#allocation2 + $0x110] sm:$0xff]
        %v4439 = vld [vmem:[#allocation2 + $0x118] sm:$0xff]
        %v4440 = vld [vmem:[#allocation2 + $0x120] sm:$0xff]
        %v4441 = vld [vmem:[#allocation2 + $0x128] sm:$0xff]
        %v4442 = vld [vmem:[#allocation2 + $0x130] sm:$0xff]
        %v4443 = vld [vmem:[#allocation2 + $0x138] sm:$0xff]
        %v4444 = vld [vmem:[#allocation2 + $0x140] sm:$0xff]
        %v4445 = vld [vmem:[#allocation2 + $0x148] sm:$0xff]
        %v4446 = vld [vmem:[#allocation2 + $0x150] sm:$0xff]
        %v4447 = vld [vmem:[#allocation2 + $0x158] sm:$0xff]
        %v4448 = vld [vmem:[#allocation2 + $0x160] sm:$0xff]
        %v4449 = vld [vmem:[#allocation2 + $0x168] sm:$0xff]
        %v4450 = vld [vmem:[#allocation2 + $0x170] sm:$0xff]
        %v4451 = vld [vmem:[#allocation2 + $0x178] sm:$0xff]
        %v4452 = vld [vmem:[#allocation2 + $0x180] sm:$0xff]
        %v4453 = vld [vmem:[#allocation2 + $0x188] sm:$0xff]
        %v4454 = vld [vmem:[#allocation2 + $0x190] sm:$0xff]
        %v4455 = vld [vmem:[#allocation2 + $0x198] sm:$0xff]
        %v4456 = vpack.c.bf16 %v4409, %v4408
        %v4457 = vpack.c.bf16 %v4411, %v4410
        %v4458 = vpack.c.bf16 %v4413, %v4412
        %v4459 = vpack.c.bf16 %v4415, %v4414
        %v4460 = vpack.c.bf16 %v4417, %v4416
        %v4461 = vpack.c.bf16 %v4419, %v4418
        %v4462 = vpack.c.bf16 %v4421, %v4420
        %v4463 = vpack.c.bf16 %v4423, %v4422
        %v4464 = vpack.c.bf16 %v4425, %v4424
        %v4465 = vpack.c.bf16 %v4427, %v4426
        %v4466 = vpack.c.bf16 %v4429, %v4428
        %v4467 = vpack.c.bf16 %v4431, %v4430
        %v4468 = vpack.c.bf16 %v4433, %v4432
        %v4469 = vpack.c.bf16 %v4435, %v4434
        %v4470 = vpack.c.bf16 %v4437, %v4436
        %v4471 = vpack.c.bf16 %v4439, %v4438
        %v4472 = vpack.c.bf16 %v4441, %v4440
        %v4473 = vpack.c.bf16 %v4443, %v4442
        %v4474 = vpack.c.bf16 %v4445, %v4444
        %v4475 = vpack.c.bf16 %v4447, %v4446
        %v4476 = vpack.c.bf16 %v4449, %v4448
        %v4477 = vpack.c.bf16 %v4451, %v4450
        %v4478 = vpack.c.bf16 %v4453, %v4452
        %v4479 = vpack.c.bf16 %v4455, %v4454
        %4480 = vst.msk [vmem:[#allocation3 + $0x8] sm:$0xff] %vm386, %v4456
        %4481 = vst.msk [vmem:[#allocation3 + $0x20] sm:$0xff] %vm386, %v4457
        %4482 = vst.msk [vmem:[#allocation3 + $0x38] sm:$0xff] %vm386, %v4458
        %4483 = vst.msk [vmem:[#allocation3 + $0x50] sm:$0xff] %vm386, %v4459
        %4484 = vst.msk [vmem:[#allocation3 + $0x68] sm:$0xff] %vm386, %v4460
        %4485 = vst.msk [vmem:[#allocation3 + $0x80] sm:$0xff] %vm386, %v4461
        %4486 = vst.msk [vmem:[#allocation3 + $0x98] sm:$0xff] %vm386, %v4462
        %4487 = vst.msk [vmem:[#allocation3 + $0xb0] sm:$0xff] %vm386, %v4463
        %4488 = vst.msk [vmem:[#allocation3 + $0xc8] sm:$0xff] %vm386, %v4464
        %4489 = vst.msk [vmem:[#allocation3 + $0xe0] sm:$0xff] %vm386, %v4465
        %4490 = vst.msk [vmem:[#allocation3 + $0xf8] sm:$0xff] %vm386, %v4466
        %4491 = vst.msk [vmem:[#allocation3 + $0x110] sm:$0xff] %vm386, %v4467
        %4492 = vst.msk [vmem:[#allocation3 + $0x128] sm:$0xff] %vm386, %v4468
        %4493 = vst.msk [vmem:[#allocation3 + $0x140] sm:$0xff] %vm386, %v4469
        %4494 = vst.msk [vmem:[#allocation3 + $0x158] sm:$0xff] %vm386, %v4470
        %4495 = vst.msk [vmem:[#allocation3 + $0x170] sm:$0xff] %vm386, %v4471
        %4496 = vst.msk [vmem:[#allocation3 + $0x188] sm:$0xff] %vm386, %v4472
        %4497 = vst.msk [vmem:[#allocation3 + $0x1a0] sm:$0xff] %vm386, %v4473
        %4498 = vst.msk [vmem:[#allocation3 + $0x1b8] sm:$0xff] %vm386, %v4474
        %4499 = vst.msk [vmem:[#allocation3 + $0x1d0] sm:$0xff] %vm386, %v4475
        %4500 = vst.msk [vmem:[#allocation3 + $0x1e8] sm:$0xff] %vm386, %v4476
        %4501 = vst.msk [vmem:[#allocation3 + $0x200] sm:$0xff] %vm386, %v4477
        %4502 = vst.msk [vmem:[#allocation3 + $0x218] sm:$0xff] %vm386, %v4478
        %4503 = vst.msk [vmem:[#allocation3 + $0x230] sm:$0xff] %vm386, %v4479
        %v4504 = vld [vmem:[#allocation2 + $0x21] sm:$0xff]
        %v4505 = vld [vmem:[#allocation2 + $0x29] sm:$0xff]
        %v4506 = vld [vmem:[#allocation2 + $0x31] sm:$0xff]
        %v4507 = vld [vmem:[#allocation2 + $0x39] sm:$0xff]
        %v4508 = vld [vmem:[#allocation2 + $0x41] sm:$0xff]
        %v4509 = vld [vmem:[#allocation2 + $0x49] sm:$0xff]
        %v4510 = vld [vmem:[#allocation2 + $0x51] sm:$0xff]
        %v4511 = vld [vmem:[#allocation2 + $0x59] sm:$0xff]
        %v4512 = vld [vmem:[#allocation2 + $0x61] sm:$0xff]
        %v4513 = vld [vmem:[#allocation2 + $0x69] sm:$0xff]
        %v4514 = vld [vmem:[#allocation2 + $0x71] sm:$0xff]
        %v4515 = vld [vmem:[#allocation2 + $0x79] sm:$0xff]
        %v4516 = vld [vmem:[#allocation2 + $0x81] sm:$0xff]
        %v4517 = vld [vmem:[#allocation2 + $0x89] sm:$0xff]
        %v4518 = vld [vmem:[#allocation2 + $0x91] sm:$0xff]
        %v4519 = vld [vmem:[#allocation2 + $0x99] sm:$0xff]
        %v4520 = vld [vmem:[#allocation2 + $0xa1] sm:$0xff]
        %v4521 = vld [vmem:[#allocation2 + $0xa9] sm:$0xff]
        %v4522 = vld [vmem:[#allocation2 + $0xb1] sm:$0xff]
        %v4523 = vld [vmem:[#allocation2 + $0xb9] sm:$0xff]
        %v4524 = vld [vmem:[#allocation2 + $0xc1] sm:$0xff]
        %v4525 = vld [vmem:[#allocation2 + $0xc9] sm:$0xff]
        %v4526 = vld [vmem:[#allocation2 + $0xd1] sm:$0xff]
        %v4527 = vld [vmem:[#allocation2 + $0xd9] sm:$0xff]
        %v4528 = vld [vmem:[#allocation2 + $0xe1] sm:$0xff]
        %v4529 = vld [vmem:[#allocation2 + $0xe9] sm:$0xff]
        %v4530 = vld [vmem:[#allocation2 + $0xf1] sm:$0xff]
        %v4531 = vld [vmem:[#allocation2 + $0xf9] sm:$0xff]
        %v4532 = vld [vmem:[#allocation2 + $0x101] sm:$0xff]
        %v4533 = vld [vmem:[#allocation2 + $0x109] sm:$0xff]
        %v4534 = vld [vmem:[#allocation2 + $0x111] sm:$0xff]
        %v4535 = vld [vmem:[#allocation2 + $0x119] sm:$0xff]
        %v4536 = vld [vmem:[#allocation2 + $0x121] sm:$0xff]
        %v4537 = vld [vmem:[#allocation2 + $0x129] sm:$0xff]
        %v4538 = vld [vmem:[#allocation2 + $0x131] sm:$0xff]
        %v4539 = vld [vmem:[#allocation2 + $0x139] sm:$0xff]
        %v4540 = vld [vmem:[#allocation2 + $0x141] sm:$0xff]
        %v4541 = vld [vmem:[#allocation2 + $0x149] sm:$0xff]
        %v4542 = vld [vmem:[#allocation2 + $0x151] sm:$0xff]
        %v4543 = vld [vmem:[#allocation2 + $0x159] sm:$0xff]
        %v4544 = vld [vmem:[#allocation2 + $0x161] sm:$0xff]
        %v4545 = vld [vmem:[#allocation2 + $0x169] sm:$0xff]
        %v4546 = vld [vmem:[#allocation2 + $0x171] sm:$0xff]
        %v4547 = vld [vmem:[#allocation2 + $0x179] sm:$0xff]
        %v4548 = vld [vmem:[#allocation2 + $0x181] sm:$0xff]
        %v4549 = vld [vmem:[#allocation2 + $0x189] sm:$0xff]
        %v4550 = vld [vmem:[#allocation2 + $0x191] sm:$0xff]
        %v4551 = vld [vmem:[#allocation2 + $0x199] sm:$0xff]
        %v4552 = vpack.c.bf16 %v4505, %v4504
        %v4553 = vpack.c.bf16 %v4507, %v4506
        %v4554 = vpack.c.bf16 %v4509, %v4508
        %v4555 = vpack.c.bf16 %v4511, %v4510
        %v4556 = vpack.c.bf16 %v4513, %v4512
        %v4557 = vpack.c.bf16 %v4515, %v4514
        %v4558 = vpack.c.bf16 %v4517, %v4516
        %v4559 = vpack.c.bf16 %v4519, %v4518
        %v4560 = vpack.c.bf16 %v4521, %v4520
        %v4561 = vpack.c.bf16 %v4523, %v4522
        %v4562 = vpack.c.bf16 %v4525, %v4524
        %v4563 = vpack.c.bf16 %v4527, %v4526
        %v4564 = vpack.c.bf16 %v4529, %v4528
        %v4565 = vpack.c.bf16 %v4531, %v4530
        %v4566 = vpack.c.bf16 %v4533, %v4532
        %v4567 = vpack.c.bf16 %v4535, %v4534
        %v4568 = vpack.c.bf16 %v4537, %v4536
        %v4569 = vpack.c.bf16 %v4539, %v4538
        %v4570 = vpack.c.bf16 %v4541, %v4540
        %v4571 = vpack.c.bf16 %v4543, %v4542
        %v4572 = vpack.c.bf16 %v4545, %v4544
        %v4573 = vpack.c.bf16 %v4547, %v4546
        %v4574 = vpack.c.bf16 %v4549, %v4548
        %v4575 = vpack.c.bf16 %v4551, %v4550
        %4600 = vrot.lane.b32.xlu0 %v4552, 32
        %v4601 = vpop.permute.xlu0 %4600
        %4602 = vrot.lane.b32.xlu0 %v4553, 32
        %v4603 = vpop.permute.xlu0 %4602
        %4604 = vrot.lane.b32.xlu0 %v4554, 32
        %v4605 = vpop.permute.xlu0 %4604
        %4606 = vrot.lane.b32.xlu0 %v4555, 32
        %v4607 = vpop.permute.xlu0 %4606
        %4608 = vrot.lane.b32.xlu0 %v4556, 32
        %v4609 = vpop.permute.xlu0 %4608
        %4610 = vrot.lane.b32.xlu0 %v4557, 32
        %v4611 = vpop.permute.xlu0 %4610
        %4612 = vrot.lane.b32.xlu0 %v4558, 32
        %v4613 = vpop.permute.xlu0 %4612
        %4614 = vrot.lane.b32.xlu0 %v4559, 32
        %v4615 = vpop.permute.xlu0 %4614
        %4616 = vrot.lane.b32.xlu0 %v4560, 32
        %v4617 = vpop.permute.xlu0 %4616
        %4618 = vrot.lane.b32.xlu0 %v4561, 32
        %v4619 = vpop.permute.xlu0 %4618
        %4620 = vrot.lane.b32.xlu0 %v4562, 32
        %v4621 = vpop.permute.xlu0 %4620
        %4622 = vrot.lane.b32.xlu0 %v4563, 32
        %v4623 = vpop.permute.xlu0 %4622
        %4624 = vrot.lane.b32.xlu0 %v4564, 32
        %v4625 = vpop.permute.xlu0 %4624
        %4626 = vrot.lane.b32.xlu0 %v4565, 32
        %v4627 = vpop.permute.xlu0 %4626
        %4628 = vrot.lane.b32.xlu0 %v4566, 32
        %v4629 = vpop.permute.xlu0 %4628
        %4630 = vrot.lane.b32.xlu0 %v4567, 32
        %v4631 = vpop.permute.xlu0 %4630
        %4632 = vrot.lane.b32.xlu0 %v4568, 32
        %v4633 = vpop.permute.xlu0 %4632
        %4634 = vrot.lane.b32.xlu0 %v4569, 32
        %v4635 = vpop.permute.xlu0 %4634
        %4636 = vrot.lane.b32.xlu0 %v4570, 32
        %v4637 = vpop.permute.xlu0 %4636
        %4638 = vrot.lane.b32.xlu0 %v4571, 32
        %v4639 = vpop.permute.xlu0 %4638
        %4640 = vrot.lane.b32.xlu0 %v4572, 32
        %v4641 = vpop.permute.xlu0 %4640
        %4642 = vrot.lane.b32.xlu0 %v4573, 32
        %v4643 = vpop.permute.xlu0 %4642
        %4644 = vrot.lane.b32.xlu0 %v4574, 32
        %v4645 = vpop.permute.xlu0 %4644
        %4646 = vrot.lane.b32.xlu0 %v4575, 32
        %v4647 = vpop.permute.xlu0 %4646
        %4672 = vst.msk [vmem:[#allocation3 + $0x8] sm:$0xff] %vm834, %v4601
        %4673 = vst.msk [vmem:[#allocation3 + $0x20] sm:$0xff] %vm834, %v4603
        %4674 = vst.msk [vmem:[#allocation3 + $0x38] sm:$0xff] %vm834, %v4605
        %4675 = vst.msk [vmem:[#allocation3 + $0x50] sm:$0xff] %vm834, %v4607
        %4676 = vst.msk [vmem:[#allocation3 + $0x68] sm:$0xff] %vm834, %v4609
        %4677 = vst.msk [vmem:[#allocation3 + $0x80] sm:$0xff] %vm834, %v4611
        %4678 = vst.msk [vmem:[#allocation3 + $0x98] sm:$0xff] %vm834, %v4613
        %4679 = vst.msk [vmem:[#allocation3 + $0xb0] sm:$0xff] %vm834, %v4615
        %4680 = vst.msk [vmem:[#allocation3 + $0xc8] sm:$0xff] %vm834, %v4617
        %4681 = vst.msk [vmem:[#allocation3 + $0xe0] sm:$0xff] %vm834, %v4619
        %4682 = vst.msk [vmem:[#allocation3 + $0xf8] sm:$0xff] %vm834, %v4621
        %4683 = vst.msk [vmem:[#allocation3 + $0x110] sm:$0xff] %vm834, %v4623
        %4684 = vst.msk [vmem:[#allocation3 + $0x128] sm:$0xff] %vm834, %v4625
        %4685 = vst.msk [vmem:[#allocation3 + $0x140] sm:$0xff] %vm834, %v4627
        %4686 = vst.msk [vmem:[#allocation3 + $0x158] sm:$0xff] %vm834, %v4629
        %4687 = vst.msk [vmem:[#allocation3 + $0x170] sm:$0xff] %vm834, %v4631
        %4688 = vst.msk [vmem:[#allocation3 + $0x188] sm:$0xff] %vm834, %v4633
        %4689 = vst.msk [vmem:[#allocation3 + $0x1a0] sm:$0xff] %vm834, %v4635
        %4690 = vst.msk [vmem:[#allocation3 + $0x1b8] sm:$0xff] %vm834, %v4637
        %4691 = vst.msk [vmem:[#allocation3 + $0x1d0] sm:$0xff] %vm834, %v4639
        %4692 = vst.msk [vmem:[#allocation3 + $0x1e8] sm:$0xff] %vm834, %v4641
        %4693 = vst.msk [vmem:[#allocation3 + $0x200] sm:$0xff] %vm834, %v4643
        %4694 = vst.msk [vmem:[#allocation3 + $0x218] sm:$0xff] %vm834, %v4645
        %4695 = vst.msk [vmem:[#allocation3 + $0x230] sm:$0xff] %vm834, %v4647
        %v4696 = vld [vmem:[#allocation2 + $0x37] sm:$0xff]
        %v4697 = vld [vmem:[#allocation2 + $0x3f] sm:$0xff]
        %v4698 = vld [vmem:[#allocation2 + $0x47] sm:$0xff]
        %v4699 = vld [vmem:[#allocation2 + $0x4f] sm:$0xff]
        %v4700 = vld [vmem:[#allocation2 + $0x57] sm:$0xff]
        %v4701 = vld [vmem:[#allocation2 + $0x5f] sm:$0xff]
        %v4702 = vld [vmem:[#allocation2 + $0x67] sm:$0xff]
        %v4703 = vld [vmem:[#allocation2 + $0x6f] sm:$0xff]
        %v4704 = vld [vmem:[#allocation2 + $0x77] sm:$0xff]
        %v4705 = vld [vmem:[#allocation2 + $0x7f] sm:$0xff]
        %v4706 = vld [vmem:[#allocation2 + $0x87] sm:$0xff]
        %v4707 = vld [vmem:[#allocation2 + $0x8f] sm:$0xff]
        %v4708 = vld [vmem:[#allocation2 + $0x97] sm:$0xff]
        %v4709 = vld [vmem:[#allocation2 + $0x9f] sm:$0xff]
        %v4710 = vld [vmem:[#allocation2 + $0xa7] sm:$0xff]
        %v4711 = vld [vmem:[#allocation2 + $0xaf] sm:$0xff]
        %v4712 = vld [vmem:[#allocation2 + $0xb7] sm:$0xff]
        %v4713 = vld [vmem:[#allocation2 + $0xbf] sm:$0xff]
        %v4714 = vld [vmem:[#allocation2 + $0xc7] sm:$0xff]
        %v4715 = vld [vmem:[#allocation2 + $0xcf] sm:$0xff]
        %v4716 = vld [vmem:[#allocation2 + $0xd7] sm:$0xff]
        %v4717 = vld [vmem:[#allocation2 + $0xdf] sm:$0xff]
        %v4718 = vld [vmem:[#allocation2 + $0xe7] sm:$0xff]
        %v4719 = vld [vmem:[#allocation2 + $0xef] sm:$0xff]
        %v4720 = vld [vmem:[#allocation2 + $0xf7] sm:$0xff]
        %v4721 = vld [vmem:[#allocation2 + $0xff] sm:$0xff]
        %v4722 = vld [vmem:[#allocation2 + $0x107] sm:$0xff]
        %v4723 = vld [vmem:[#allocation2 + $0x10f] sm:$0xff]
        %v4724 = vld [vmem:[#allocation2 + $0x117] sm:$0xff]
        %v4725 = vld [vmem:[#allocation2 + $0x11f] sm:$0xff]
        %v4726 = vld [vmem:[#allocation2 + $0x127] sm:$0xff]
        %v4727 = vld [vmem:[#allocation2 + $0x12f] sm:$0xff]
        %v4728 = vld [vmem:[#allocation2 + $0x137] sm:$0xff]
        %v4729 = vld [vmem:[#allocation2 + $0x13f] sm:$0xff]
        %v4730 = vld [vmem:[#allocation2 + $0x147] sm:$0xff]
        %v4731 = vld [vmem:[#allocation2 + $0x14f] sm:$0xff]
        %v4732 = vld [vmem:[#allocation2 + $0x157] sm:$0xff]
        %v4733 = vld [vmem:[#allocation2 + $0x15f] sm:$0xff]
        %v4734 = vld [vmem:[#allocation2 + $0x167] sm:$0xff]
        %v4735 = vld [vmem:[#allocation2 + $0x16f] sm:$0xff]
        %v4736 = vld [vmem:[#allocation2 + $0x177] sm:$0xff]
        %v4737 = vld [vmem:[#allocation2 + $0x17f] sm:$0xff]
        %v4738 = vld [vmem:[#allocation2 + $0x187] sm:$0xff]
        %v4739 = vld [vmem:[#allocation2 + $0x18f] sm:$0xff]
        %v4740 = vld [vmem:[#allocation2 + $0x197] sm:$0xff]
        %v4741 = vld [vmem:[#allocation2 + $0x19f] sm:$0xff]
        %v4742 = vld [vmem:[#allocation2 + $0x1a7] sm:$0xff]
        %v4743 = vld [vmem:[#allocation2 + $0x1af] sm:$0xff]
        %v4744 = vpack.c.bf16 %v4697, %v4696
        %v4745 = vpack.c.bf16 %v4699, %v4698
        %v4746 = vpack.c.bf16 %v4701, %v4700
        %v4747 = vpack.c.bf16 %v4703, %v4702
        %v4748 = vpack.c.bf16 %v4705, %v4704
        %v4749 = vpack.c.bf16 %v4707, %v4706
        %v4750 = vpack.c.bf16 %v4709, %v4708
        %v4751 = vpack.c.bf16 %v4711, %v4710
        %v4752 = vpack.c.bf16 %v4713, %v4712
        %v4753 = vpack.c.bf16 %v4715, %v4714
        %v4754 = vpack.c.bf16 %v4717, %v4716
        %v4755 = vpack.c.bf16 %v4719, %v4718
        %v4756 = vpack.c.bf16 %v4721, %v4720
        %v4757 = vpack.c.bf16 %v4723, %v4722
        %v4758 = vpack.c.bf16 %v4725, %v4724
        %v4759 = vpack.c.bf16 %v4727, %v4726
        %v4760 = vpack.c.bf16 %v4729, %v4728
        %v4761 = vpack.c.bf16 %v4731, %v4730
        %v4762 = vpack.c.bf16 %v4733, %v4732
        %v4763 = vpack.c.bf16 %v4735, %v4734
        %v4764 = vpack.c.bf16 %v4737, %v4736
        %v4765 = vpack.c.bf16 %v4739, %v4738
        %v4766 = vpack.c.bf16 %v4741, %v4740
        %v4767 = vpack.c.bf16 %v4743, %v4742
        %4792 = vrot.lane.b32.xlu0 %v4744, 64
        %v4793 = vpop.permute.xlu0 %4792
        %4794 = vrot.lane.b32.xlu0 %v4745, 64
        %v4795 = vpop.permute.xlu0 %4794
        %4796 = vrot.lane.b32.xlu0 %v4746, 64
        %v4797 = vpop.permute.xlu0 %4796
        %4798 = vrot.lane.b32.xlu0 %v4747, 64
        %v4799 = vpop.permute.xlu0 %4798
        %4800 = vrot.lane.b32.xlu0 %v4748, 64
        %v4801 = vpop.permute.xlu0 %4800
        %4802 = vrot.lane.b32.xlu0 %v4749, 64
        %v4803 = vpop.permute.xlu0 %4802
        %4804 = vrot.lane.b32.xlu0 %v4750, 64
        %v4805 = vpop.permute.xlu0 %4804
        %4806 = vrot.lane.b32.xlu0 %v4751, 64
        %v4807 = vpop.permute.xlu0 %4806
        %4808 = vrot.lane.b32.xlu0 %v4752, 64
        %v4809 = vpop.permute.xlu0 %4808
        %4810 = vrot.lane.b32.xlu0 %v4753, 64
        %v4811 = vpop.permute.xlu0 %4810
        %4812 = vrot.lane.b32.xlu0 %v4754, 64
        %v4813 = vpop.permute.xlu0 %4812
        %4814 = vrot.lane.b32.xlu0 %v4755, 64
        %v4815 = vpop.permute.xlu0 %4814
        %4816 = vrot.lane.b32.xlu0 %v4756, 64
        %v4817 = vpop.permute.xlu0 %4816
        %4818 = vrot.lane.b32.xlu0 %v4757, 64
        %v4819 = vpop.permute.xlu0 %4818
        %4820 = vrot.lane.b32.xlu0 %v4758, 64
        %v4821 = vpop.permute.xlu0 %4820
        %4822 = vrot.lane.b32.xlu0 %v4759, 64
        %v4823 = vpop.permute.xlu0 %4822
        %4824 = vrot.lane.b32.xlu0 %v4760, 64
        %v4825 = vpop.permute.xlu0 %4824
        %4826 = vrot.lane.b32.xlu0 %v4761, 64
        %v4827 = vpop.permute.xlu0 %4826
        %4828 = vrot.lane.b32.xlu0 %v4762, 64
        %v4829 = vpop.permute.xlu0 %4828
        %4830 = vrot.lane.b32.xlu0 %v4763, 64
        %v4831 = vpop.permute.xlu0 %4830
        %4832 = vrot.lane.b32.xlu0 %v4764, 64
        %v4833 = vpop.permute.xlu0 %4832
        %4834 = vrot.lane.b32.xlu0 %v4765, 64
        %v4835 = vpop.permute.xlu0 %4834
        %4836 = vrot.lane.b32.xlu0 %v4766, 64
        %v4837 = vpop.permute.xlu0 %4836
        %4838 = vrot.lane.b32.xlu0 %v4767, 64
        %v4839 = vpop.permute.xlu0 %4838
        %4864 = vst.msk [vmem:[#allocation3 + $0x8] sm:$0xff] %vm1027, %v4793
        %4865 = vst.msk [vmem:[#allocation3 + $0x20] sm:$0xff] %vm1027, %v4795
        %4866 = vst.msk [vmem:[#allocation3 + $0x38] sm:$0xff] %vm1027, %v4797
        %4867 = vst.msk [vmem:[#allocation3 + $0x50] sm:$0xff] %vm1027, %v4799
        %4868 = vst.msk [vmem:[#allocation3 + $0x68] sm:$0xff] %vm1027, %v4801
        %4869 = vst.msk [vmem:[#allocation3 + $0x80] sm:$0xff] %vm1027, %v4803
        %4870 = vst.msk [vmem:[#allocation3 + $0x98] sm:$0xff] %vm1027, %v4805
        %4871 = vst.msk [vmem:[#allocation3 + $0xb0] sm:$0xff] %vm1027, %v4807
        %4872 = vst.msk [vmem:[#allocation3 + $0xc8] sm:$0xff] %vm1027, %v4809
        %4873 = vst.msk [vmem:[#allocation3 + $0xe0] sm:$0xff] %vm1027, %v4811
        %4874 = vst.msk [vmem:[#allocation3 + $0xf8] sm:$0xff] %vm1027, %v4813
        %4875 = vst.msk [vmem:[#allocation3 + $0x110] sm:$0xff] %vm1027, %v4815
        %4876 = vst.msk [vmem:[#allocation3 + $0x128] sm:$0xff] %vm1027, %v4817
        %4877 = vst.msk [vmem:[#allocation3 + $0x140] sm:$0xff] %vm1027, %v4819
        %4878 = vst.msk [vmem:[#allocation3 + $0x158] sm:$0xff] %vm1027, %v4821
        %4879 = vst.msk [vmem:[#allocation3 + $0x170] sm:$0xff] %vm1027, %v4823
        %4880 = vst.msk [vmem:[#allocation3 + $0x188] sm:$0xff] %vm1027, %v4825
        %4881 = vst.msk [vmem:[#allocation3 + $0x1a0] sm:$0xff] %vm1027, %v4827
        %4882 = vst.msk [vmem:[#allocation3 + $0x1b8] sm:$0xff] %vm1027, %v4829
        %4883 = vst.msk [vmem:[#allocation3 + $0x1d0] sm:$0xff] %vm1027, %v4831
        %4884 = vst.msk [vmem:[#allocation3 + $0x1e8] sm:$0xff] %vm1027, %v4833
        %4885 = vst.msk [vmem:[#allocation3 + $0x200] sm:$0xff] %vm1027, %v4835
        %4886 = vst.msk [vmem:[#allocation3 + $0x218] sm:$0xff] %vm1027, %v4837
        %4887 = vst.msk [vmem:[#allocation3 + $0x230] sm:$0xff] %vm1027, %v4839
        %v4888 = vld [vmem:[#allocation2 + $0x38] sm:$0xff]
        %v4889 = vld [vmem:[#allocation2 + $0x40] sm:$0xff]
        %v4890 = vld [vmem:[#allocation2 + $0x48] sm:$0xff]
        %v4891 = vld [vmem:[#allocation2 + $0x50] sm:$0xff]
        %v4892 = vld [vmem:[#allocation2 + $0x58] sm:$0xff]
        %v4893 = vld [vmem:[#allocation2 + $0x60] sm:$0xff]
        %v4894 = vld [vmem:[#allocation2 + $0x68] sm:$0xff]
        %v4895 = vld [vmem:[#allocation2 + $0x70] sm:$0xff]
        %v4896 = vld [vmem:[#allocation2 + $0x78] sm:$0xff]
        %v4897 = vld [vmem:[#allocation2 + $0x80] sm:$0xff]
        %v4898 = vld [vmem:[#allocation2 + $0x88] sm:$0xff]
        %v4899 = vld [vmem:[#allocation2 + $0x90] sm:$0xff]
        %v4900 = vld [vmem:[#allocation2 + $0x98] sm:$0xff]
        %v4901 = vld [vmem:[#allocation2 + $0xa0] sm:$0xff]
        %v4902 = vld [vmem:[#allocation2 + $0xa8] sm:$0xff]
        %v4903 = vld [vmem:[#allocation2 + $0xb0] sm:$0xff]
        %v4904 = vld [vmem:[#allocation2 + $0xb8] sm:$0xff]
        %v4905 = vld [vmem:[#allocation2 + $0xc0] sm:$0xff]
        %v4906 = vld [vmem:[#allocation2 + $0xc8] sm:$0xff]
        %v4907 = vld [vmem:[#allocation2 + $0xd0] sm:$0xff]
        %v4908 = vld [vmem:[#allocation2 + $0xd8] sm:$0xff]
        %v4909 = vld [vmem:[#allocation2 + $0xe0] sm:$0xff]
        %v4910 = vld [vmem:[#allocation2 + $0xe8] sm:$0xff]
        %v4911 = vld [vmem:[#allocation2 + $0xf0] sm:$0xff]
        %v4912 = vld [vmem:[#allocation2 + $0xf8] sm:$0xff]
        %v4913 = vld [vmem:[#allocation2 + $0x100] sm:$0xff]
        %v4914 = vld [vmem:[#allocation2 + $0x108] sm:$0xff]
        %v4915 = vld [vmem:[#allocation2 + $0x110] sm:$0xff]
        %v4916 = vld [vmem:[#allocation2 + $0x118] sm:$0xff]
        %v4917 = vld [vmem:[#allocation2 + $0x120] sm:$0xff]
        %v4918 = vld [vmem:[#allocation2 + $0x128] sm:$0xff]
        %v4919 = vld [vmem:[#allocation2 + $0x130] sm:$0xff]
        %v4920 = vld [vmem:[#allocation2 + $0x138] sm:$0xff]
        %v4921 = vld [vmem:[#allocation2 + $0x140] sm:$0xff]
        %v4922 = vld [vmem:[#allocation2 + $0x148] sm:$0xff]
        %v4923 = vld [vmem:[#allocation2 + $0x150] sm:$0xff]
        %v4924 = vld [vmem:[#allocation2 + $0x158] sm:$0xff]
        %v4925 = vld [vmem:[#allocation2 + $0x160] sm:$0xff]
        %v4926 = vld [vmem:[#allocation2 + $0x168] sm:$0xff]
        %v4927 = vld [vmem:[#allocation2 + $0x170] sm:$0xff]
        %v4928 = vld [vmem:[#allocation2 + $0x178] sm:$0xff]
        %v4929 = vld [vmem:[#allocation2 + $0x180] sm:$0xff]
        %v4930 = vld [vmem:[#allocation2 + $0x188] sm:$0xff]
        %v4931 = vld [vmem:[#allocation2 + $0x190] sm:$0xff]
        %v4932 = vld [vmem:[#allocation2 + $0x198] sm:$0xff]
        %v4933 = vld [vmem:[#allocation2 + $0x1a0] sm:$0xff]
        %v4934 = vld [vmem:[#allocation2 + $0x1a8] sm:$0xff]
        %v4935 = vld [vmem:[#allocation2 + $0x1b0] sm:$0xff]
        %v4936 = vpack.c.bf16 %v4889, %v4888
        %v4937 = vpack.c.bf16 %v4891, %v4890
        %v4938 = vpack.c.bf16 %v4893, %v4892
        %v4939 = vpack.c.bf16 %v4895, %v4894
        %v4940 = vpack.c.bf16 %v4897, %v4896
        %v4941 = vpack.c.bf16 %v4899, %v4898
        %v4942 = vpack.c.bf16 %v4901, %v4900
        %v4943 = vpack.c.bf16 %v4903, %v4902
        %v4944 = vpack.c.bf16 %v4905, %v4904
        %v4945 = vpack.c.bf16 %v4907, %v4906
        %v4946 = vpack.c.bf16 %v4909, %v4908
        %v4947 = vpack.c.bf16 %v4911, %v4910
        %v4948 = vpack.c.bf16 %v4913, %v4912
        %v4949 = vpack.c.bf16 %v4915, %v4914
        %v4950 = vpack.c.bf16 %v4917, %v4916
        %v4951 = vpack.c.bf16 %v4919, %v4918
        %v4952 = vpack.c.bf16 %v4921, %v4920
        %v4953 = vpack.c.bf16 %v4923, %v4922
        %v4954 = vpack.c.bf16 %v4925, %v4924
        %v4955 = vpack.c.bf16 %v4927, %v4926
        %v4956 = vpack.c.bf16 %v4929, %v4928
        %v4957 = vpack.c.bf16 %v4931, %v4930
        %v4958 = vpack.c.bf16 %v4933, %v4932
        %v4959 = vpack.c.bf16 %v4935, %v4934
        %4984 = vrot.lane.b32.xlu0 %v4936, 96
        %v4985 = vpop.permute.xlu0 %4984
        %4986 = vrot.lane.b32.xlu0 %v4937, 96
        %v4987 = vpop.permute.xlu0 %4986
        %4988 = vrot.lane.b32.xlu0 %v4938, 96
        %v4989 = vpop.permute.xlu0 %4988
        %4990 = vrot.lane.b32.xlu0 %v4939, 96
        %v4991 = vpop.permute.xlu0 %4990
        %4992 = vrot.lane.b32.xlu0 %v4940, 96
        %v4993 = vpop.permute.xlu0 %4992
        %4994 = vrot.lane.b32.xlu0 %v4941, 96
        %v4995 = vpop.permute.xlu0 %4994
        %4996 = vrot.lane.b32.xlu0 %v4942, 96
        %v4997 = vpop.permute.xlu0 %4996
        %4998 = vrot.lane.b32.xlu0 %v4943, 96
        %v4999 = vpop.permute.xlu0 %4998
        %5000 = vrot.lane.b32.xlu0 %v4944, 96
        %v5001 = vpop.permute.xlu0 %5000
        %5002 = vrot.lane.b32.xlu0 %v4945, 96
        %v5003 = vpop.permute.xlu0 %5002
        %5004 = vrot.lane.b32.xlu0 %v4946, 96
        %v5005 = vpop.permute.xlu0 %5004
        %5006 = vrot.lane.b32.xlu0 %v4947, 96
        %v5007 = vpop.permute.xlu0 %5006
        %5008 = vrot.lane.b32.xlu0 %v4948, 96
        %v5009 = vpop.permute.xlu0 %5008
        %5010 = vrot.lane.b32.xlu0 %v4949, 96
        %v5011 = vpop.permute.xlu0 %5010
        %5012 = vrot.lane.b32.xlu0 %v4950, 96
        %v5013 = vpop.permute.xlu0 %5012
        %5014 = vrot.lane.b32.xlu0 %v4951, 96
        %v5015 = vpop.permute.xlu0 %5014
        %5016 = vrot.lane.b32.xlu0 %v4952, 96
        %v5017 = vpop.permute.xlu0 %5016
        %5018 = vrot.lane.b32.xlu0 %v4953, 96
        %v5019 = vpop.permute.xlu0 %5018
        %5020 = vrot.lane.b32.xlu0 %v4954, 96
        %v5021 = vpop.permute.xlu0 %5020
        %5022 = vrot.lane.b32.xlu0 %v4955, 96
        %v5023 = vpop.permute.xlu0 %5022
        %5024 = vrot.lane.b32.xlu0 %v4956, 96
        %v5025 = vpop.permute.xlu0 %5024
        %5026 = vrot.lane.b32.xlu0 %v4957, 96
        %v5027 = vpop.permute.xlu0 %5026
        %5028 = vrot.lane.b32.xlu0 %v4958, 96
        %v5029 = vpop.permute.xlu0 %5028
        %5030 = vrot.lane.b32.xlu0 %v4959, 96
        %v5031 = vpop.permute.xlu0 %5030
        %5056 = vst.msk [vmem:[#allocation3 + $0x8] sm:$0xff] %vm1220, %v4985
        %5057 = vst.msk [vmem:[#allocation3 + $0x20] sm:$0xff] %vm1220, %v4987
        %5058 = vst.msk [vmem:[#allocation3 + $0x38] sm:$0xff] %vm1220, %v4989
        %5059 = vst.msk [vmem:[#allocation3 + $0x50] sm:$0xff] %vm1220, %v4991
        %5060 = vst.msk [vmem:[#allocation3 + $0x68] sm:$0xff] %vm1220, %v4993
        %5061 = vst.msk [vmem:[#allocation3 + $0x80] sm:$0xff] %vm1220, %v4995
        %5062 = vst.msk [vmem:[#allocation3 + $0x98] sm:$0xff] %vm1220, %v4997
        %5063 = vst.msk [vmem:[#allocation3 + $0xb0] sm:$0xff] %vm1220, %v4999
        %5064 = vst.msk [vmem:[#allocation3 + $0xc8] sm:$0xff] %vm1220, %v5001
        %5065 = vst.msk [vmem:[#allocation3 + $0xe0] sm:$0xff] %vm1220, %v5003
        %5066 = vst.msk [vmem:[#allocation3 + $0xf8] sm:$0xff] %vm1220, %v5005
        %5067 = vst.msk [vmem:[#allocation3 + $0x110] sm:$0xff] %vm1220, %v5007
        %5068 = vst.msk [vmem:[#allocation3 + $0x128] sm:$0xff] %vm1220, %v5009
        %5069 = vst.msk [vmem:[#allocation3 + $0x140] sm:$0xff] %vm1220, %v5011
        %5070 = vst.msk [vmem:[#allocation3 + $0x158] sm:$0xff] %vm1220, %v5013
        %5071 = vst.msk [vmem:[#allocation3 + $0x170] sm:$0xff] %vm1220, %v5015
        %5072 = vst.msk [vmem:[#allocation3 + $0x188] sm:$0xff] %vm1220, %v5017
        %5073 = vst.msk [vmem:[#allocation3 + $0x1a0] sm:$0xff] %vm1220, %v5019
        %5074 = vst.msk [vmem:[#allocation3 + $0x1b8] sm:$0xff] %vm1220, %v5021
        %5075 = vst.msk [vmem:[#allocation3 + $0x1d0] sm:$0xff] %vm1220, %v5023
        %5076 = vst.msk [vmem:[#allocation3 + $0x1e8] sm:$0xff] %vm1220, %v5025
        %5077 = vst.msk [vmem:[#allocation3 + $0x200] sm:$0xff] %vm1220, %v5027
        %5078 = vst.msk [vmem:[#allocation3 + $0x218] sm:$0xff] %vm1220, %v5029
        %5079 = vst.msk [vmem:[#allocation3 + $0x230] sm:$0xff] %vm1220, %v5031
        %v5080 = vld [vmem:[#allocation2 + $0x39] sm:$0xff]
        %v5081 = vld [vmem:[#allocation2 + $0x41] sm:$0xff]
        %v5082 = vld [vmem:[#allocation2 + $0x49] sm:$0xff]
        %v5083 = vld [vmem:[#allocation2 + $0x51] sm:$0xff]
        %v5084 = vld [vmem:[#allocation2 + $0x59] sm:$0xff]
        %v5085 = vld [vmem:[#allocation2 + $0x61] sm:$0xff]
        %v5086 = vld [vmem:[#allocation2 + $0x69] sm:$0xff]
        %v5087 = vld [vmem:[#allocation2 + $0x71] sm:$0xff]
        %v5088 = vld [vmem:[#allocation2 + $0x79] sm:$0xff]
        %v5089 = vld [vmem:[#allocation2 + $0x81] sm:$0xff]
        %v5090 = vld [vmem:[#allocation2 + $0x89] sm:$0xff]
        %v5091 = vld [vmem:[#allocation2 + $0x91] sm:$0xff]
        %v5092 = vld [vmem:[#allocation2 + $0x99] sm:$0xff]
        %v5093 = vld [vmem:[#allocation2 + $0xa1] sm:$0xff]
        %v5094 = vld [vmem:[#allocation2 + $0xa9] sm:$0xff]
        %v5095 = vld [vmem:[#allocation2 + $0xb1] sm:$0xff]
        %v5096 = vld [vmem:[#allocation2 + $0xb9] sm:$0xff]
        %v5097 = vld [vmem:[#allocation2 + $0xc1] sm:$0xff]
        %v5098 = vld [vmem:[#allocation2 + $0xc9] sm:$0xff]
        %v5099 = vld [vmem:[#allocation2 + $0xd1] sm:$0xff]
        %v5100 = vld [vmem:[#allocation2 + $0xd9] sm:$0xff]
        %v5101 = vld [vmem:[#allocation2 + $0xe1] sm:$0xff]
        %v5102 = vld [vmem:[#allocation2 + $0xe9] sm:$0xff]
        %v5103 = vld [vmem:[#allocation2 + $0xf1] sm:$0xff]
        %v5104 = vld [vmem:[#allocation2 + $0xf9] sm:$0xff]
        %v5105 = vld [vmem:[#allocation2 + $0x101] sm:$0xff]
        %v5106 = vld [vmem:[#allocation2 + $0x109] sm:$0xff]
        %v5107 = vld [vmem:[#allocation2 + $0x111] sm:$0xff]
        %v5108 = vld [vmem:[#allocation2 + $0x119] sm:$0xff]
        %v5109 = vld [vmem:[#allocation2 + $0x121] sm:$0xff]
        %v5110 = vld [vmem:[#allocation2 + $0x129] sm:$0xff]
        %v5111 = vld [vmem:[#allocation2 + $0x131] sm:$0xff]
        %v5112 = vld [vmem:[#allocation2 + $0x139] sm:$0xff]
        %v5113 = vld [vmem:[#allocation2 + $0x141] sm:$0xff]
        %v5114 = vld [vmem:[#allocation2 + $0x149] sm:$0xff]
        %v5115 = vld [vmem:[#allocation2 + $0x151] sm:$0xff]
        %v5116 = vld [vmem:[#allocation2 + $0x159] sm:$0xff]
        %v5117 = vld [vmem:[#allocation2 + $0x161] sm:$0xff]
        %v5118 = vld [vmem:[#allocation2 + $0x169] sm:$0xff]
        %v5119 = vld [vmem:[#allocation2 + $0x171] sm:$0xff]
        %v5120 = vld [vmem:[#allocation2 + $0x179] sm:$0xff]
        %v5121 = vld [vmem:[#allocation2 + $0x181] sm:$0xff]
        %v5122 = vld [vmem:[#allocation2 + $0x189] sm:$0xff]
        %v5123 = vld [vmem:[#allocation2 + $0x191] sm:$0xff]
        %v5124 = vld [vmem:[#allocation2 + $0x199] sm:$0xff]
        %v5125 = vld [vmem:[#allocation2 + $0x1a1] sm:$0xff]
        %v5126 = vld [vmem:[#allocation2 + $0x1a9] sm:$0xff]
        %v5127 = vld [vmem:[#allocation2 + $0x1b1] sm:$0xff]
        %v5128 = vpack.c.bf16 %v5081, %v5080
        %v5129 = vpack.c.bf16 %v5083, %v5082
        %v5130 = vpack.c.bf16 %v5085, %v5084
        %v5131 = vpack.c.bf16 %v5087, %v5086
        %v5132 = vpack.c.bf16 %v5089, %v5088
        %v5133 = vpack.c.bf16 %v5091, %v5090
        %v5134 = vpack.c.bf16 %v5093, %v5092
        %v5135 = vpack.c.bf16 %v5095, %v5094
        %v5136 = vpack.c.bf16 %v5097, %v5096
        %v5137 = vpack.c.bf16 %v5099, %v5098
        %v5138 = vpack.c.bf16 %v5101, %v5100
        %v5139 = vpack.c.bf16 %v5103, %v5102
        %v5140 = vpack.c.bf16 %v5105, %v5104
        %v5141 = vpack.c.bf16 %v5107, %v5106
        %v5142 = vpack.c.bf16 %v5109, %v5108
        %v5143 = vpack.c.bf16 %v5111, %v5110
        %v5144 = vpack.c.bf16 %v5113, %v5112
        %v5145 = vpack.c.bf16 %v5115, %v5114
        %v5146 = vpack.c.bf16 %v5117, %v5116
        %v5147 = vpack.c.bf16 %v5119, %v5118
        %v5148 = vpack.c.bf16 %v5121, %v5120
        %v5149 = vpack.c.bf16 %v5123, %v5122
        %v5150 = vpack.c.bf16 %v5125, %v5124
        %v5151 = vpack.c.bf16 %v5127, %v5126
        %5152 = vst.msk [vmem:[#allocation3 + $0x10] sm:$0xff] %vm386, %v5128
        %5153 = vst.msk [vmem:[#allocation3 + $0x28] sm:$0xff] %vm386, %v5129
        %5154 = vst.msk [vmem:[#allocation3 + $0x40] sm:$0xff] %vm386, %v5130
        %5155 = vst.msk [vmem:[#allocation3 + $0x58] sm:$0xff] %vm386, %v5131
        %5156 = vst.msk [vmem:[#allocation3 + $0x70] sm:$0xff] %vm386, %v5132
        %5157 = vst.msk [vmem:[#allocation3 + $0x88] sm:$0xff] %vm386, %v5133
        %5158 = vst.msk [vmem:[#allocation3 + $0xa0] sm:$0xff] %vm386, %v5134
        %5159 = vst.msk [vmem:[#allocation3 + $0xb8] sm:$0xff] %vm386, %v5135
        %5160 = vst.msk [vmem:[#allocation3 + $0xd0] sm:$0xff] %vm386, %v5136
        %5161 = vst.msk [vmem:[#allocation3 + $0xe8] sm:$0xff] %vm386, %v5137
        %5162 = vst.msk [vmem:[#allocation3 + $0x100] sm:$0xff] %vm386, %v5138
        %5163 = vst.msk [vmem:[#allocation3 + $0x118] sm:$0xff] %vm386, %v5139
        %5164 = vst.msk [vmem:[#allocation3 + $0x130] sm:$0xff] %vm386, %v5140
        %5165 = vst.msk [vmem:[#allocation3 + $0x148] sm:$0xff] %vm386, %v5141
        %5166 = vst.msk [vmem:[#allocation3 + $0x160] sm:$0xff] %vm386, %v5142
        %5167 = vst.msk [vmem:[#allocation3 + $0x178] sm:$0xff] %vm386, %v5143
        %5168 = vst.msk [vmem:[#allocation3 + $0x190] sm:$0xff] %vm386, %v5144
        %5169 = vst.msk [vmem:[#allocation3 + $0x1a8] sm:$0xff] %vm386, %v5145
        %5170 = vst.msk [vmem:[#allocation3 + $0x1c0] sm:$0xff] %vm386, %v5146
        %5171 = vst.msk [vmem:[#allocation3 + $0x1d8] sm:$0xff] %vm386, %v5147
        %5172 = vst.msk [vmem:[#allocation3 + $0x1f0] sm:$0xff] %vm386, %v5148
        %5173 = vst.msk [vmem:[#allocation3 + $0x208] sm:$0xff] %vm386, %v5149
        %5174 = vst.msk [vmem:[#allocation3 + $0x220] sm:$0xff] %vm386, %v5150
        %5175 = vst.msk [vmem:[#allocation3 + $0x238] sm:$0xff] %vm386, %v5151
        %v5176 = vld [vmem:[#allocation3] sm:$0xff]
        %v5177 = vld [vmem:[#allocation3 + $0x8] sm:$0xff]
        %v5178 = vld [vmem:[#allocation3 + $0x10] sm:$0xff]
        %v5179 = vld [vmem:[#allocation3 + $0x18] sm:$0xff]
        %v5180 = vld [vmem:[#allocation3 + $0x20] sm:$0xff]
        %v5181 = vld [vmem:[#allocation3 + $0x28] sm:$0xff]
        %v5182 = vld [vmem:[#allocation3 + $0x30] sm:$0xff]
        %v5183 = vld [vmem:[#allocation3 + $0x38] sm:$0xff]
        %v5184 = vld [vmem:[#allocation3 + $0x40] sm:$0xff]
        %v5185 = vld [vmem:[#allocation3 + $0x48] sm:$0xff]
        %v5186 = vld [vmem:[#allocation3 + $0x50] sm:$0xff]
        %v5187 = vld [vmem:[#allocation3 + $0x58] sm:$0xff]
        %v5188 = vld [vmem:[#allocation3 + $0x60] sm:$0xff]
        %v5189 = vld [vmem:[#allocation3 + $0x68] sm:$0xff]
        %v5190 = vld [vmem:[#allocation3 + $0x70] sm:$0xff]
        %v5191 = vld [vmem:[#allocation3 + $0x78] sm:$0xff]
        %v5192 = vld [vmem:[#allocation3 + $0x80] sm:$0xff]
        %v5193 = vld [vmem:[#allocation3 + $0x88] sm:$0xff]
        %v5194 = vld [vmem:[#allocation3 + $0x90] sm:$0xff]
        %v5195 = vld [vmem:[#allocation3 + $0x98] sm:$0xff]
        %v5196 = vld [vmem:[#allocation3 + $0xa0] sm:$0xff]
        %v5197 = vld [vmem:[#allocation3 + $0xa8] sm:$0xff]
        %v5198 = vld [vmem:[#allocation3 + $0xb0] sm:$0xff]
        %v5199 = vld [vmem:[#allocation3 + $0xb8] sm:$0xff]
        %v5200 = vld [vmem:[#allocation3 + $0xc0] sm:$0xff]
        %v5201 = vld [vmem:[#allocation3 + $0xc8] sm:$0xff]
        %v5202 = vld [vmem:[#allocation3 + $0xd0] sm:$0xff]
        %v5203 = vld [vmem:[#allocation3 + $0xd8] sm:$0xff]
        %v5204 = vld [vmem:[#allocation3 + $0xe0] sm:$0xff]
        %v5205 = vld [vmem:[#allocation3 + $0xe8] sm:$0xff]
        %v5206 = vld [vmem:[#allocation3 + $0xf0] sm:$0xff]
        %v5207 = vld [vmem:[#allocation3 + $0xf8] sm:$0xff]
        %v5208 = vld [vmem:[#allocation3 + $0x100] sm:$0xff]
        %v5209 = vld [vmem:[#allocation3 + $0x108] sm:$0xff]
        %v5210 = vld [vmem:[#allocation3 + $0x110] sm:$0xff]
        %v5211 = vld [vmem:[#allocation3 + $0x118] sm:$0xff]
        %v5212 = vld [vmem:[#allocation3 + $0x120] sm:$0xff]
        %v5213 = vld [vmem:[#allocation3 + $0x128] sm:$0xff]
        %v5214 = vld [vmem:[#allocation3 + $0x130] sm:$0xff]
        %v5215 = vld [vmem:[#allocation3 + $0x138] sm:$0xff]
        %v5216 = vld [vmem:[#allocation3 + $0x140] sm:$0xff]
        %v5217 = vld [vmem:[#allocation3 + $0x148] sm:$0xff]
        %v5218 = vld [vmem:[#allocation3 + $0x150] sm:$0xff]
        %v5219 = vld [vmem:[#allocation3 + $0x158] sm:$0xff]
        %v5220 = vld [vmem:[#allocation3 + $0x160] sm:$0xff]
        %v5221 = vld [vmem:[#allocation3 + $0x168] sm:$0xff]
        %v5222 = vld [vmem:[#allocation3 + $0x170] sm:$0xff]
        %v5223 = vld [vmem:[#allocation3 + $0x178] sm:$0xff]
        %v5224 = vld [vmem:[#allocation3 + $0x180] sm:$0xff]
        %v5225 = vld [vmem:[#allocation3 + $0x188] sm:$0xff]
        %v5226 = vld [vmem:[#allocation3 + $0x190] sm:$0xff]
        %v5227 = vld [vmem:[#allocation3 + $0x198] sm:$0xff]
        %v5228 = vld [vmem:[#allocation3 + $0x1a0] sm:$0xff]
        %v5229 = vld [vmem:[#allocation3 + $0x1a8] sm:$0xff]
        %v5230 = vld [vmem:[#allocation3 + $0x1b0] sm:$0xff]
        %v5231 = vld [vmem:[#allocation3 + $0x1b8] sm:$0xff]
        %v5232 = vld [vmem:[#allocation3 + $0x1c0] sm:$0xff]
        %v5233 = vld [vmem:[#allocation3 + $0x1c8] sm:$0xff]
        %v5234 = vld [vmem:[#allocation3 + $0x1d0] sm:$0xff]
        %v5235 = vld [vmem:[#allocation3 + $0x1d8] sm:$0xff]
        %v5236 = vld [vmem:[#allocation3 + $0x1e0] sm:$0xff]
        %v5237 = vld [vmem:[#allocation3 + $0x1e8] sm:$0xff]
        %v5238 = vld [vmem:[#allocation3 + $0x1f0] sm:$0xff]
        %v5239 = vld [vmem:[#allocation3 + $0x1f8] sm:$0xff]
        %v5240 = vld [vmem:[#allocation3 + $0x200] sm:$0xff]
        %v5241 = vld [vmem:[#allocation3 + $0x208] sm:$0xff]
        %v5242 = vld [vmem:[#allocation3 + $0x210] sm:$0xff]
        %v5243 = vld [vmem:[#allocation3 + $0x218] sm:$0xff]
        %v5244 = vld [vmem:[#allocation3 + $0x220] sm:$0xff]
        %v5245 = vld [vmem:[#allocation3 + $0x228] sm:$0xff]
        %v5246 = vld [vmem:[#allocation3 + $0x230] sm:$0xff]
        %v5247 = vld [vmem:[#allocation3 + $0x238] sm:$0xff]
        %v5248 = vld [vmem:[%s6] sm:$0xf]
        %v5249 = vld [vmem:[%s6 + $0x4] sm:$0xf]
        %v5250 = vld [vmem:[%s6 + $0x8] sm:$0xf]
        %v5251 = vld [vmem:[%s6 + $0xc] sm:$0xf]
        %v5252 = vld [vmem:[%s6 + $0x10] sm:$0xf]
        %v5253 = vld [vmem:[%s6 + $0x14] sm:$0xf]
        %v5254 = vld [vmem:[%s6 + $0x18] sm:$0xf]
        %v5255 = vld [vmem:[%s6 + $0x1c] sm:$0xf]
        %v5256 = vld [vmem:[%s6 + $0x20] sm:$0xf]
        %v5257 = vld [vmem:[%s6 + $0x24] sm:$0xf]
        %v5258 = vld [vmem:[%s6 + $0x28] sm:$0xf]
        %v5259 = vld [vmem:[%s6 + $0x2c] sm:$0xf]
        %v5260 = vld [vmem:[%s6 + $0x30] sm:$0xf]
        %v5261 = vld [vmem:[%s6 + $0x34] sm:$0xf]
        %v5262 = vld [vmem:[%s6 + $0x38] sm:$0xf]
        %v5263 = vld [vmem:[%s6 + $0x3c] sm:$0xf]
        %v5264 = vld [vmem:[%s6 + $0x40] sm:$0xf]
        %v5265 = vld [vmem:[%s6 + $0x44] sm:$0xf]
        %v5266 = vld [vmem:[%s6 + $0x48] sm:$0xf]
        %v5267 = vld [vmem:[%s6 + $0x4c] sm:$0xf]
        %v5268 = vld [vmem:[%s6 + $0x50] sm:$0xf]
        %v5269 = vld [vmem:[%s6 + $0x54] sm:$0xf]
        %v5270 = vld [vmem:[%s6 + $0x58] sm:$0xf]
        %v5271 = vld [vmem:[%s6 + $0x5c] sm:$0xf]
        %v5272 = vld [vmem:[%s6 + $0x60] sm:$0xf]
        %v5273 = vld [vmem:[%s6 + $0x64] sm:$0xf]
        %v5274 = vld [vmem:[%s6 + $0x68] sm:$0xf]
        %v5275 = vld [vmem:[%s6 + $0x6c] sm:$0xf]
        %v5276 = vld [vmem:[%s6 + $0x70] sm:$0xf]
        %v5277 = vld [vmem:[%s6 + $0x74] sm:$0xf]
        %v5278 = vld [vmem:[%s6 + $0x78] sm:$0xf]
        %v5279 = vld [vmem:[%s6 + $0x7c] sm:$0xf]
        %v5280 = vld [vmem:[%s6 + $0x80] sm:$0xf]
        %v5281 = vld [vmem:[%s6 + $0x84] sm:$0xf]
        %v5282 = vld [vmem:[%s6 + $0x88] sm:$0xf]
        %v5283 = vld [vmem:[%s6 + $0x8c] sm:$0xf]
        %v5320 = vunpack.c.l.b16 %v5248
        %v5321 = vunpack.c.l.b16 %v5249
        %v5322 = vunpack.c.l.b16 %v5250
        %v5323 = vunpack.c.l.b16 %v5251
        %v5324 = vunpack.c.l.b16 %v5252
        %v5325 = vunpack.c.l.b16 %v5253
        %v5326 = vunpack.c.l.b16 %v5254
        %v5327 = vunpack.c.l.b16 %v5255
        %v5328 = vunpack.c.l.b16 %v5256
        %v5329 = vunpack.c.l.b16 %v5257
        %v5330 = vunpack.c.l.b16 %v5258
        %v5331 = vunpack.c.l.b16 %v5259
        %v5332 = vunpack.c.l.b16 %v5260
        %v5333 = vunpack.c.l.b16 %v5261
        %v5334 = vunpack.c.l.b16 %v5262
        %v5335 = vunpack.c.l.b16 %v5263
        %v5336 = vunpack.c.l.b16 %v5264
        %v5337 = vunpack.c.l.b16 %v5265
        %v5338 = vunpack.c.l.b16 %v5266
        %v5339 = vunpack.c.l.b16 %v5267
        %v5340 = vunpack.c.l.b16 %v5268
        %v5341 = vunpack.c.l.b16 %v5269
        %v5342 = vunpack.c.l.b16 %v5270
        %v5343 = vunpack.c.l.b16 %v5271
        %v5344 = vunpack.c.l.b16 %v5272
        %v5345 = vunpack.c.l.b16 %v5273
        %v5346 = vunpack.c.l.b16 %v5274
        %v5347 = vunpack.c.l.b16 %v5275
        %v5348 = vunpack.c.l.b16 %v5276
        %v5349 = vunpack.c.l.b16 %v5277
        %v5350 = vunpack.c.l.b16 %v5278
        %v5351 = vunpack.c.l.b16 %v5279
        %v5352 = vunpack.c.l.b16 %v5280
        %v5353 = vunpack.c.l.b16 %v5281
        %v5354 = vunpack.c.l.b16 %v5282
        %v5355 = vunpack.c.l.b16 %v5283
        %v5356 = vpack.c.b16 %v5321, %v5320
        %v5357 = vpack.c.b16 %v5323, %v5322
        %v5358 = vpack.c.b16 %v5325, %v5324
        %v5359 = vpack.c.b16 %v5327, %v5326
        %v5360 = vpack.c.b16 %v5329, %v5328
        %v5361 = vpack.c.b16 %v5331, %v5330
        %v5362 = vpack.c.b16 %v5333, %v5332
        %v5363 = vpack.c.b16 %v5335, %v5334
        %v5364 = vpack.c.b16 %v5337, %v5336
        %v5365 = vpack.c.b16 %v5339, %v5338
        %v5366 = vpack.c.b16 %v5341, %v5340
        %v5367 = vpack.c.b16 %v5343, %v5342
        %v5368 = vpack.c.b16 %v5345, %v5344
        %v5369 = vpack.c.b16 %v5347, %v5346
        %v5370 = vpack.c.b16 %v5349, %v5348
        %v5371 = vpack.c.b16 %v5351, %v5350
        %v5372 = vpack.c.b16 %v5353, %v5352
        %v5373 = vpack.c.b16 %v5355, %v5354
        %v5393 = vsel %vm386, %v5178, 0
        %v5396 = vsel %vm386, %v5181, 0
        %v5399 = vsel %vm386, %v5184, 0
        %v5402 = vsel %vm386, %v5187, 0
        %v5405 = vsel %vm386, %v5190, 0
        %v5408 = vsel %vm386, %v5193, 0
        %v5411 = vsel %vm386, %v5196, 0
        %v5414 = vsel %vm386, %v5199, 0
        %v5417 = vsel %vm386, %v5202, 0
        %v5420 = vsel %vm386, %v5205, 0
        %v5423 = vsel %vm386, %v5208, 0
        %v5426 = vsel %vm386, %v5211, 0
        %v5429 = vsel %vm386, %v5214, 0
        %v5432 = vsel %vm386, %v5217, 0
        %v5435 = vsel %vm386, %v5220, 0
        %v5438 = vsel %vm386, %v5223, 0
        %v5441 = vsel %vm386, %v5226, 0
        %v5444 = vsel %vm386, %v5229, 0
        %v5447 = vsel %vm386, %v5232, 0
        %v5450 = vsel %vm386, %v5235, 0
        %v5453 = vsel %vm386, %v5238, 0
        %v5456 = vsel %vm386, %v5241, 0
        %v5459 = vsel %vm386, %v5244, 0
        %v5462 = vsel %vm386, %v5247, 0
        %5464 = vmatprep.subr.bf16.mxu0 0
        %5465 = vmatpush1.bf16.msra.mxu0 %v5356
        %5466 = vmatprep.subr.bf16.mxu0 0
        %5467 = vmatpush1.bf16.msra.mxu0 %v5357
        %5468 = vmatprep.subr.bf16.mxu0 0
        %5469 = vmatpush1.bf16.msra.mxu0 %v5358
        %5470 = vmatprep.subr.bf16.mxu0 0
        %5471 = vmatpush1.bf16.msra.mxu0 %v5359
        %5472 = vmatprep.subr.bf16.mxu0 0
        %5473 = vmatpush1.bf16.msra.mxu0 %v5360
        %5474 = vmatprep.subr.bf16.mxu0 0
        %5475 = vmatpush1.bf16.msra.mxu0 %v5361
        %5476 = vmatprep.subr.bf16.mxu0 0
        %5477 = vmatpush1.bf16.msra.mxu0 %v5362
        %5478 = vmatprep.subr.bf16.mxu0 0
        %5479 = vmatpush1.bf16.msra.mxu0 %v5363
        %5480 = vmatprep.subr.bf16.mxu0 0
        %5481 = vmatpush1.bf16.msra.mxu0 %v5364
        %5482 = vmatprep.subr.bf16.mxu0 0
        %5483 = vmatpush1.bf16.msra.mxu0 %v5365
        %5484 = vmatprep.subr.bf16.mxu0 0
        %5485 = vmatpush1.bf16.msra.mxu0 %v5366
        %5486 = vmatprep.subr.bf16.mxu0 0
        %5487 = vmatpush1.bf16.msra.mxu0 %v5367
        %5488 = vmatprep.subr.bf16.mxu0 0
        %5489 = vmatpush1.bf16.msra.mxu0 %v5368
        %5490 = vmatprep.subr.bf16.mxu0 0
        %5491 = vmatpush1.bf16.msra.mxu0 %v5369
        %5492 = vmatprep.subr.bf16.mxu0 0
        %5493 = vmatpush1.bf16.msra.mxu0 %v5370
        %5494 = vmatprep.subr.bf16.mxu0 0
        %5495 = vmatpush1.bf16.msra.mxu0 %v5371
        %5496 = vmatprep.mubr.bf16.mxu0 %v5177
        %5497 = vmatmul.mubr.bf16.gmra.mrb[0].mxu0 %v5176
        %v5498 = vpop.f32.mrb[0].mxu0
        %v5499 = vadd.f32 0.0, %v5498
        %v5500 = vpop.f32.mrb[0].mxu0
        %v5501 = vpop.f32.mrb[0].mxu0
        %v5502 = vadd.f32 0.0, %v5501
        %v5503 = vpop.f32.mrb[0].mxu0
        %5504 = vmatprep.mubr.bf16.mxu0 %v5180
        %5505 = vmatmul.mubr.bf16.gmra.mrb[0].mxu0 %v5179
        %v5506 = vpop.f32.mrb[0].mxu0
        %v5507 = vadd.f32 0.0, %v5506
        %v5508 = vpop.f32.mrb[0].mxu0
        %v5509 = vpop.f32.mrb[0].mxu0
        %v5510 = vadd.f32 0.0, %v5509
        %v5511 = vpop.f32.mrb[0].mxu0
        %5512 = vmatprep.mubr.bf16.mxu0 %v5183
        %5513 = vmatmul.mubr.bf16.gmra.mrb[0].mxu0 %v5182
        %v5514 = vpop.f32.mrb[0].mxu0
        %v5515 = vadd.f32 0.0, %v5514
        %v5516 = vpop.f32.mrb[0].mxu0
        %v5517 = vpop.f32.mrb[0].mxu0
        %v5518 = vadd.f32 0.0, %v5517
        %v5519 = vpop.f32.mrb[0].mxu0
        %5520 = vmatprep.mubr.bf16.mxu0 %v5186
        %5521 = vmatmul.mubr.bf16.gmra.mrb[0].mxu0 %v5185
        %v5522 = vpop.f32.mrb[0].mxu0
        %v5523 = vadd.f32 0.0, %v5522
        %v5524 = vpop.f32.mrb[0].mxu0
        %v5525 = vpop.f32.mrb[0].mxu0
        %v5526 = vadd.f32 0.0, %v5525
        %v5527 = vpop.f32.mrb[0].mxu0
        %5528 = vmatprep.mubr.bf16.mxu0 %v5189
        %5529 = vmatmul.mubr.bf16.gmra.mrb[0].mxu0 %v5188
        %v5530 = vpop.f32.mrb[0].mxu0
        %v5531 = vadd.f32 0.0, %v5530
        %v5532 = vpop.f32.mrb[0].mxu0
        %v5533 = vpop.f32.mrb[0].mxu0
        %v5534 = vadd.f32 0.0, %v5533
        %v5535 = vpop.f32.mrb[0].mxu0
        %5536 = vmatprep.mubr.bf16.mxu0 %v5192
        %5537 = vmatmul.mubr.bf16.gmra.mrb[0].mxu0 %v5191
        %v5538 = vpop.f32.mrb[0].mxu0
        %v5539 = vadd.f32 0.0, %v5538
        %v5540 = vpop.f32.mrb[0].mxu0
        %v5541 = vpop.f32.mrb[0].mxu0
        %v5542 = vadd.f32 0.0, %v5541
        %v5543 = vpop.f32.mrb[0].mxu0
        %5544 = vmatprep.mubr.bf16.mxu0 %v5195
        %5545 = vmatmul.mubr.bf16.gmra.mrb[0].mxu0 %v5194
        %v5546 = vpop.f32.mrb[0].mxu0
        %v5547 = vadd.f32 0.0, %v5546
        %v5548 = vpop.f32.mrb[0].mxu0
        %v5549 = vpop.f32.mrb[0].mxu0
        %v5550 = vadd.f32 0.0, %v5549
        %v5551 = vpop.f32.mrb[0].mxu0
        %5552 = vmatprep.mubr.bf16.mxu0 %v5198
        %5553 = vmatmul.mubr.bf16.gmra.mrb[0].mxu0 %v5197
        %v5554 = vpop.f32.mrb[0].mxu0
        %v5555 = vadd.f32 0.0, %v5554
        %v5556 = vpop.f32.mrb[0].mxu0
        %v5557 = vpop.f32.mrb[0].mxu0
        %v5558 = vadd.f32 0.0, %v5557
        %v5559 = vpop.f32.mrb[0].mxu0
        %5560 = vmatprep.mubr.bf16.mxu0 %v5201
        %5561 = vmatmul.mubr.bf16.gmra.mrb[0].mxu0 %v5200
        %v5562 = vpop.f32.mrb[0].mxu0
        %v5563 = vadd.f32 0.0, %v5562
        %v5564 = vpop.f32.mrb[0].mxu0
        %v5565 = vpop.f32.mrb[0].mxu0
        %v5566 = vadd.f32 0.0, %v5565
        %v5567 = vpop.f32.mrb[0].mxu0
        %5568 = vmatprep.mubr.bf16.mxu0 %v5204
        %5569 = vmatmul.mubr.bf16.gmra.mrb[0].mxu0 %v5203
        %v5570 = vpop.f32.mrb[0].mxu0
        %v5571 = vadd.f32 0.0, %v5570
        %v5572 = vpop.f32.mrb[0].mxu0
        %v5573 = vpop.f32.mrb[0].mxu0
        %v5574 = vadd.f32 0.0, %v5573
        %v5575 = vpop.f32.mrb[0].mxu0
        %5576 = vmatprep.mubr.bf16.mxu0 %v5207
        %5577 = vmatmul.mubr.bf16.gmra.mrb[0].mxu0 %v5206
        %v5578 = vpop.f32.mrb[0].mxu0
        %v5579 = vadd.f32 0.0, %v5578
        %v5580 = vpop.f32.mrb[0].mxu0
        %v5581 = vpop.f32.mrb[0].mxu0
        %v5582 = vadd.f32 0.0, %v5581
        %v5583 = vpop.f32.mrb[0].mxu0
        %5584 = vmatprep.mubr.bf16.mxu0 %v5210
        %5585 = vmatmul.mubr.bf16.gmra.mrb[0].mxu0 %v5209
        %v5586 = vpop.f32.mrb[0].mxu0
        %v5587 = vadd.f32 0.0, %v5586
        %v5588 = vpop.f32.mrb[0].mxu0
        %v5589 = vpop.f32.mrb[0].mxu0
        %v5590 = vadd.f32 0.0, %v5589
        %v5591 = vpop.f32.mrb[0].mxu0
        %5592 = vmatprep.mubr.bf16.mxu0 %v5213
        %5593 = vmatmul.mubr.bf16.gmra.mrb[0].mxu0 %v5212
        %v5594 = vpop.f32.mrb[0].mxu0
        %v5595 = vadd.f32 0.0, %v5594
        %v5596 = vpop.f32.mrb[0].mxu0
        %v5597 = vpop.f32.mrb[0].mxu0
        %v5598 = vadd.f32 0.0, %v5597
        %v5599 = vpop.f32.mrb[0].mxu0
        %5600 = vmatprep.mubr.bf16.mxu0 %v5216
        %5601 = vmatmul.mubr.bf16.gmra.mrb[0].mxu0 %v5215
        %v5602 = vpop.f32.mrb[0].mxu0
        %v5603 = vadd.f32 0.0, %v5602
        %v5604 = vpop.f32.mrb[0].mxu0
        %v5605 = vpop.f32.mrb[0].mxu0
        %v5606 = vadd.f32 0.0, %v5605
        %v5607 = vpop.f32.mrb[0].mxu0
        %5608 = vmatprep.mubr.bf16.mxu0 %v5219
        %5609 = vmatmul.mubr.bf16.gmra.mrb[0].mxu0 %v5218
        %v5610 = vpop.f32.mrb[0].mxu0
        %v5611 = vadd.f32 0.0, %v5610
        %v5612 = vpop.f32.mrb[0].mxu0
        %v5613 = vpop.f32.mrb[0].mxu0
        %v5614 = vadd.f32 0.0, %v5613
        %v5615 = vpop.f32.mrb[0].mxu0
        %5616 = vmatprep.mubr.bf16.mxu0 %v5222
        %5617 = vmatmul.mubr.bf16.gmra.mrb[0].mxu0 %v5221
        %v5618 = vpop.f32.mrb[0].mxu0
        %v5619 = vadd.f32 0.0, %v5618
        %v5620 = vpop.f32.mrb[0].mxu0
        %v5621 = vpop.f32.mrb[0].mxu0
        %v5622 = vadd.f32 0.0, %v5621
        %v5623 = vpop.f32.mrb[0].mxu0
        %5624 = vmatprep.mubr.bf16.mxu0 %v5225
        %5625 = vmatmul.mubr.bf16.gmra.mrb[0].mxu0 %v5224
        %v5626 = vpop.f32.mrb[0].mxu0
        %v5627 = vadd.f32 0.0, %v5626
        %v5628 = vpop.f32.mrb[0].mxu0
        %v5629 = vpop.f32.mrb[0].mxu0
        %v5630 = vadd.f32 0.0, %v5629
        %v5631 = vpop.f32.mrb[0].mxu0
        %5632 = vmatprep.mubr.bf16.mxu0 %v5228
        %5633 = vmatmul.mubr.bf16.gmra.mrb[0].mxu0 %v5227
        %v5634 = vpop.f32.mrb[0].mxu0
        %v5635 = vadd.f32 0.0, %v5634
        %v5636 = vpop.f32.mrb[0].mxu0
        %v5637 = vpop.f32.mrb[0].mxu0
        %v5638 = vadd.f32 0.0, %v5637
        %v5639 = vpop.f32.mrb[0].mxu0
        %5640 = vmatprep.mubr.bf16.mxu0 %v5231
        %5641 = vmatmul.mubr.bf16.gmra.mrb[0].mxu0 %v5230
        %v5642 = vpop.f32.mrb[0].mxu0
        %v5643 = vadd.f32 0.0, %v5642
        %v5644 = vpop.f32.mrb[0].mxu0
        %v5645 = vpop.f32.mrb[0].mxu0
        %v5646 = vadd.f32 0.0, %v5645
        %v5647 = vpop.f32.mrb[0].mxu0
        %5648 = vmatprep.mubr.bf16.mxu0 %v5234
        %5649 = vmatmul.mubr.bf16.gmra.mrb[0].mxu0 %v5233
        %v5650 = vpop.f32.mrb[0].mxu0
        %v5651 = vadd.f32 0.0, %v5650
        %v5652 = vpop.f32.mrb[0].mxu0
        %v5653 = vpop.f32.mrb[0].mxu0
        %v5654 = vadd.f32 0.0, %v5653
        %v5655 = vpop.f32.mrb[0].mxu0
        %5656 = vmatprep.mubr.bf16.mxu0 %v5237
        %5657 = vmatmul.mubr.bf16.gmra.mrb[0].mxu0 %v5236
        %v5658 = vpop.f32.mrb[0].mxu0
        %v5659 = vadd.f32 0.0, %v5658
        %v5660 = vpop.f32.mrb[0].mxu0
        %v5661 = vpop.f32.mrb[0].mxu0
        %v5662 = vadd.f32 0.0, %v5661
        %v5663 = vpop.f32.mrb[0].mxu0
        %5664 = vmatprep.mubr.bf16.mxu0 %v5240
        %5665 = vmatmul.mubr.bf16.gmra.mrb[0].mxu0 %v5239
        %v5666 = vpop.f32.mrb[0].mxu0
        %v5667 = vadd.f32 0.0, %v5666
        %v5668 = vpop.f32.mrb[0].mxu0
        %v5669 = vpop.f32.mrb[0].mxu0
        %v5670 = vadd.f32 0.0, %v5669
        %v5671 = vpop.f32.mrb[0].mxu0
        %5672 = vmatprep.mubr.bf16.mxu0 %v5243
        %5673 = vmatmul.mubr.bf16.gmra.mrb[0].mxu0 %v5242
        %v5674 = vpop.f32.mrb[0].mxu0
        %v5675 = vadd.f32 0.0, %v5674
        %v5676 = vpop.f32.mrb[0].mxu0
        %v5677 = vpop.f32.mrb[0].mxu0
        %v5678 = vadd.f32 0.0, %v5677
        %v5679 = vpop.f32.mrb[0].mxu0
        %5680 = vmatprep.mubr.bf16.mxu0 %v5246
        %5681 = vmatmul.mubr.bf16.gmra.mrb[0].mxu0 %v5245
        %v5682 = vpop.f32.mrb[0].mxu0
        %v5683 = vadd.f32 0.0, %v5682
        %v5684 = vpop.f32.mrb[0].mxu0
        %v5685 = vpop.f32.mrb[0].mxu0
        %v5686 = vadd.f32 0.0, %v5685
        %v5687 = vpop.f32.mrb[0].mxu0
        %5688 = vdwg.mxu0
        %5689 = vmatprep.subr.bf16.mxu0 0
        %5690 = vmatpush1.bf16.msra.mxu0 %v5372
        %5691 = vmatprep.subr.bf16.mxu0 0
        %5692 = vmatpush1.bf16.msra.mxu0 %v5373
        %5693 = vmatprep.subr.bf16.mxu0 0
        %5694 = vmatpush1.bf16.msra.mxu0 0
        %5695 = vmatprep.subr.bf16.mxu0 0
        %5696 = vmatpush1.bf16.msra.mxu0 0
        %5697 = vmatprep.subr.bf16.mxu0 0
        %5698 = vmatpush1.bf16.msra.mxu0 0
        %5699 = vmatprep.subr.bf16.mxu0 0
        %5700 = vmatpush1.bf16.msra.mxu0 0
        %5701 = vmatprep.subr.bf16.mxu0 0
        %5702 = vmatpush1.bf16.msra.mxu0 0
        %5703 = vmatprep.subr.bf16.mxu0 0
        %5704 = vmatpush1.bf16.msra.mxu0 0
        %5705 = vmatprep.subr.bf16.mxu0 0
        %5706 = vmatpush1.bf16.msra.mxu0 0
        %5707 = vmatprep.subr.bf16.mxu0 0
        %5708 = vmatpush1.bf16.msra.mxu0 0
        %5709 = vmatprep.subr.bf16.mxu0 0
        %5710 = vmatpush1.bf16.msra.mxu0 0
        %5711 = vmatprep.subr.bf16.mxu0 0
        %5712 = vmatpush1.bf16.msra.mxu0 0
        %5713 = vmatprep.subr.bf16.mxu0 0
        %5714 = vmatpush1.bf16.msra.mxu0 0
        %5715 = vmatprep.subr.bf16.mxu0 0
        %5716 = vmatpush1.bf16.msra.mxu0 0
        %5717 = vmatprep.subr.bf16.mxu0 0
        %5718 = vmatpush1.bf16.msra.mxu0 0
        %5719 = vmatprep.subr.bf16.mxu0 0
        %5720 = vmatpush1.bf16.msra.mxu0 0
        %5721 = vmatprep.mubr.bf16.mxu0 0
        %5722 = vmatmul.mubr.bf16.gmra.mrb[0].mxu0 %v5393
        %v5723 = vpop.f32.mrb[0].mxu0
        %v5724 = vadd.f32 %v5499, %v5723
        %v5725 = vpop.f32.mrb[0].mxu0
        %v5726 = vpop.f32.mrb[0].mxu0
        %v5727 = vadd.f32 %v5502, %v5726
        %v5728 = vpop.f32.mrb[0].mxu0
        %5729 = vmatprep.mubr.bf16.mxu0 0
        %5730 = vmatmul.mubr.bf16.gmra.mrb[0].mxu0 %v5396
        %v5731 = vpop.f32.mrb[0].mxu0
        %v5732 = vadd.f32 %v5507, %v5731
        %v5733 = vpop.f32.mrb[0].mxu0
        %v5734 = vpop.f32.mrb[0].mxu0
        %v5735 = vadd.f32 %v5510, %v5734
        %v5736 = vpop.f32.mrb[0].mxu0
        %5737 = vmatprep.mubr.bf16.mxu0 0
        %5738 = vmatmul.mubr.bf16.gmra.mrb[0].mxu0 %v5399
        %v5739 = vpop.f32.mrb[0].mxu0
        %v5740 = vadd.f32 %v5515, %v5739
        %v5741 = vpop.f32.mrb[0].mxu0
        %v5742 = vpop.f32.mrb[0].mxu0
        %v5743 = vadd.f32 %v5518, %v5742
        %v5744 = vpop.f32.mrb[0].mxu0
        %5745 = vmatprep.mubr.bf16.mxu0 0
        %5746 = vmatmul.mubr.bf16.gmra.mrb[0].mxu0 %v5402
        %v5747 = vpop.f32.mrb[0].mxu0
        %v5748 = vadd.f32 %v5523, %v5747
        %v5749 = vpop.f32.mrb[0].mxu0
        %v5750 = vpop.f32.mrb[0].mxu0
        %v5751 = vadd.f32 %v5526, %v5750
        %v5752 = vpop.f32.mrb[0].mxu0
        %5753 = vmatprep.mubr.bf16.mxu0 0
        %5754 = vmatmul.mubr.bf16.gmra.mrb[0].mxu0 %v5405
        %v5755 = vpop.f32.mrb[0].mxu0
        %v5756 = vadd.f32 %v5531, %v5755
        %v5757 = vpop.f32.mrb[0].mxu0
        %v5758 = vpop.f32.mrb[0].mxu0
        %v5759 = vadd.f32 %v5534, %v5758
        %v5760 = vpop.f32.mrb[0].mxu0
        %5761 = vmatprep.mubr.bf16.mxu0 0
        %5762 = vmatmul.mubr.bf16.gmra.mrb[0].mxu0 %v5408
        %v5763 = vpop.f32.mrb[0].mxu0
        %v5764 = vadd.f32 %v5539, %v5763
        %v5765 = vpop.f32.mrb[0].mxu0
        %v5766 = vpop.f32.mrb[0].mxu0
        %v5767 = vadd.f32 %v5542, %v5766
        %v5768 = vpop.f32.mrb[0].mxu0
        %5769 = vmatprep.mubr.bf16.mxu0 0
        %5770 = vmatmul.mubr.bf16.gmra.mrb[0].mxu0 %v5411
        %v5771 = vpop.f32.mrb[0].mxu0
        %v5772 = vadd.f32 %v5547, %v5771
        %v5773 = vpop.f32.mrb[0].mxu0
        %v5774 = vpop.f32.mrb[0].mxu0
        %v5775 = vadd.f32 %v5550, %v5774
        %v5776 = vpop.f32.mrb[0].mxu0
        %5777 = vmatprep.mubr.bf16.mxu0 0
        %5778 = vmatmul.mubr.bf16.gmra.mrb[0].mxu0 %v5414
        %v5779 = vpop.f32.mrb[0].mxu0
        %v5780 = vadd.f32 %v5555, %v5779
        %v5781 = vpop.f32.mrb[0].mxu0
        %v5782 = vpop.f32.mrb[0].mxu0
        %v5783 = vadd.f32 %v5558, %v5782
        %v5784 = vpop.f32.mrb[0].mxu0
        %5785 = vmatprep.mubr.bf16.mxu0 0
        %5786 = vmatmul.mubr.bf16.gmra.mrb[0].mxu0 %v5417
        %v5787 = vpop.f32.mrb[0].mxu0
        %v5788 = vadd.f32 %v5563, %v5787
        %v5789 = vpop.f32.mrb[0].mxu0
        %v5790 = vpop.f32.mrb[0].mxu0
        %v5791 = vadd.f32 %v5566, %v5790
        %v5792 = vpop.f32.mrb[0].mxu0
        %5793 = vmatprep.mubr.bf16.mxu0 0
        %5794 = vmatmul.mubr.bf16.gmra.mrb[0].mxu0 %v5420
        %v5795 = vpop.f32.mrb[0].mxu0
        %v5796 = vadd.f32 %v5571, %v5795
        %v5797 = vpop.f32.mrb[0].mxu0
        %v5798 = vpop.f32.mrb[0].mxu0
        %v5799 = vadd.f32 %v5574, %v5798
        %v5800 = vpop.f32.mrb[0].mxu0
        %5801 = vmatprep.mubr.bf16.mxu0 0
        %5802 = vmatmul.mubr.bf16.gmra.mrb[0].mxu0 %v5423
        %v5803 = vpop.f32.mrb[0].mxu0
        %v5804 = vadd.f32 %v5579, %v5803
        %v5805 = vpop.f32.mrb[0].mxu0
        %v5806 = vpop.f32.mrb[0].mxu0
        %v5807 = vadd.f32 %v5582, %v5806
        %v5808 = vpop.f32.mrb[0].mxu0
        %5809 = vmatprep.mubr.bf16.mxu0 0
        %5810 = vmatmul.mubr.bf16.gmra.mrb[0].mxu0 %v5426
        %v5811 = vpop.f32.mrb[0].mxu0
        %v5812 = vadd.f32 %v5587, %v5811
        %v5813 = vpop.f32.mrb[0].mxu0
        %v5814 = vpop.f32.mrb[0].mxu0
        %v5815 = vadd.f32 %v5590, %v5814
        %v5816 = vpop.f32.mrb[0].mxu0
        %5817 = vmatprep.mubr.bf16.mxu0 0
        %5818 = vmatmul.mubr.bf16.gmra.mrb[0].mxu0 %v5429
        %v5819 = vpop.f32.mrb[0].mxu0
        %v5820 = vadd.f32 %v5595, %v5819
        %v5821 = vpop.f32.mrb[0].mxu0
        %v5822 = vpop.f32.mrb[0].mxu0
        %v5823 = vadd.f32 %v5598, %v5822
        %v5824 = vpop.f32.mrb[0].mxu0
        %5825 = vmatprep.mubr.bf16.mxu0 0
        %5826 = vmatmul.mubr.bf16.gmra.mrb[0].mxu0 %v5432
        %v5827 = vpop.f32.mrb[0].mxu0
        %v5828 = vadd.f32 %v5603, %v5827
        %v5829 = vpop.f32.mrb[0].mxu0
        %v5830 = vpop.f32.mrb[0].mxu0
        %v5831 = vadd.f32 %v5606, %v5830
        %v5832 = vpop.f32.mrb[0].mxu0
        %5833 = vmatprep.mubr.bf16.mxu0 0
        %5834 = vmatmul.mubr.bf16.gmra.mrb[0].mxu0 %v5435
        %v5835 = vpop.f32.mrb[0].mxu0
        %v5836 = vadd.f32 %v5611, %v5835
        %v5837 = vpop.f32.mrb[0].mxu0
        %v5838 = vpop.f32.mrb[0].mxu0
        %v5839 = vadd.f32 %v5614, %v5838
        %v5840 = vpop.f32.mrb[0].mxu0
        %5841 = vmatprep.mubr.bf16.mxu0 0
        %5842 = vmatmul.mubr.bf16.gmra.mrb[0].mxu0 %v5438
        %v5843 = vpop.f32.mrb[0].mxu0
        %v5844 = vadd.f32 %v5619, %v5843
        %v5845 = vpop.f32.mrb[0].mxu0
        %v5846 = vpop.f32.mrb[0].mxu0
        %v5847 = vadd.f32 %v5622, %v5846
        %v5848 = vpop.f32.mrb[0].mxu0
        %5849 = vmatprep.mubr.bf16.mxu0 0
        %5850 = vmatmul.mubr.bf16.gmra.mrb[0].mxu0 %v5441
        %v5851 = vpop.f32.mrb[0].mxu0
        %v5852 = vadd.f32 %v5627, %v5851
        %v5853 = vpop.f32.mrb[0].mxu0
        %v5854 = vpop.f32.mrb[0].mxu0
        %v5855 = vadd.f32 %v5630, %v5854
        %v5856 = vpop.f32.mrb[0].mxu0
        %5857 = vmatprep.mubr.bf16.mxu0 0
        %5858 = vmatmul.mubr.bf16.gmra.mrb[0].mxu0 %v5444
        %v5859 = vpop.f32.mrb[0].mxu0
        %v5860 = vadd.f32 %v5635, %v5859
        %v5861 = vpop.f32.mrb[0].mxu0
        %v5862 = vpop.f32.mrb[0].mxu0
        %v5863 = vadd.f32 %v5638, %v5862
        %v5864 = vpop.f32.mrb[0].mxu0
        %5865 = vmatprep.mubr.bf16.mxu0 0
        %5866 = vmatmul.mubr.bf16.gmra.mrb[0].mxu0 %v5447
        %v5867 = vpop.f32.mrb[0].mxu0
        %v5868 = vadd.f32 %v5643, %v5867
        %v5869 = vpop.f32.mrb[0].mxu0
        %v5870 = vpop.f32.mrb[0].mxu0
        %v5871 = vadd.f32 %v5646, %v5870
        %v5872 = vpop.f32.mrb[0].mxu0
        %5873 = vmatprep.mubr.bf16.mxu0 0
        %5874 = vmatmul.mubr.bf16.gmra.mrb[0].mxu0 %v5450
        %v5875 = vpop.f32.mrb[0].mxu0
        %v5876 = vadd.f32 %v5651, %v5875
        %v5877 = vpop.f32.mrb[0].mxu0
        %v5878 = vpop.f32.mrb[0].mxu0
        %v5879 = vadd.f32 %v5654, %v5878
        %v5880 = vpop.f32.mrb[0].mxu0
        %5881 = vmatprep.mubr.bf16.mxu0 0
        %5882 = vmatmul.mubr.bf16.gmra.mrb[0].mxu0 %v5453
        %v5883 = vpop.f32.mrb[0].mxu0
        %v5884 = vadd.f32 %v5659, %v5883
        %v5885 = vpop.f32.mrb[0].mxu0
        %v5886 = vpop.f32.mrb[0].mxu0
        %v5887 = vadd.f32 %v5662, %v5886
        %v5888 = vpop.f32.mrb[0].mxu0
        %5889 = vmatprep.mubr.bf16.mxu0 0
        %5890 = vmatmul.mubr.bf16.gmra.mrb[0].mxu0 %v5456
        %v5891 = vpop.f32.mrb[0].mxu0
        %v5892 = vadd.f32 %v5667, %v5891
        %v5893 = vpop.f32.mrb[0].mxu0
        %v5894 = vpop.f32.mrb[0].mxu0
        %v5895 = vadd.f32 %v5670, %v5894
        %v5896 = vpop.f32.mrb[0].mxu0
        %5897 = vmatprep.mubr.bf16.mxu0 0
        %5898 = vmatmul.mubr.bf16.gmra.mrb[0].mxu0 %v5459
        %v5899 = vpop.f32.mrb[0].mxu0
        %v5900 = vadd.f32 %v5675, %v5899
        %v5901 = vpop.f32.mrb[0].mxu0
        %v5902 = vpop.f32.mrb[0].mxu0
        %v5903 = vadd.f32 %v5678, %v5902
        %v5904 = vpop.f32.mrb[0].mxu0
        %5905 = vmatprep.mubr.bf16.mxu0 0
        %5906 = vmatmul.mubr.bf16.gmra.mrb[0].mxu0 %v5462
        %v5907 = vpop.f32.mrb[0].mxu0
        %v5908 = vadd.f32 %v5683, %v5907
        %v5909 = vpop.f32.mrb[0].mxu0
        %v5910 = vpop.f32.mrb[0].mxu0
        %v5911 = vadd.f32 %v5686, %v5910
        %v5912 = vpop.f32.mrb[0].mxu0
        %5913 = vdwg.mxu0
        %v5914 = vmul.f32 %v5724, %v2754
        %v5915 = vmul.f32 %v5727, %v2759
        %v5916 = vmul.f32 %v5732, %v2764
        %v5917 = vmul.f32 %v5735, %v2769
        %v5918 = vmul.f32 %v5740, %v2774
        %v5919 = vmul.f32 %v5743, %v2779
        %v5920 = vmul.f32 %v5748, %v2784
        %v5921 = vmul.f32 %v5751, %v2789
        %v5922 = vmul.f32 %v5756, %v2794
        %v5923 = vmul.f32 %v5759, %v2799
        %v5924 = vmul.f32 %v5764, %v2804
        %v5925 = vmul.f32 %v5767, %v2809
        %v5926 = vmul.f32 %v5772, %v2814
        %v5927 = vmul.f32 %v5775, %v2819
        %v5928 = vmul.f32 %v5780, %v2824
        %v5929 = vmul.f32 %v5783, %v2829
        %v5930 = vmul.f32 %v5788, %v2834
        %v5931 = vmul.f32 %v5791, %v2839
        %v5932 = vmul.f32 %v5796, %v2844
        %v5933 = vmul.f32 %v5799, %v2849
        %v5934 = vmul.f32 %v5804, %v2854
        %v5935 = vmul.f32 %v5807, %v2859
        %v5936 = vmul.f32 %v5812, %v2864
        %v5937 = vmul.f32 %v5815, %v2869
        %v5938 = vmul.f32 %v5820, %v2874
        %v5939 = vmul.f32 %v5823, %v2879
        %v5940 = vmul.f32 %v5828, %v2884
        %v5941 = vmul.f32 %v5831, %v2889
        %v5942 = vmul.f32 %v5836, %v2894
        %v5943 = vmul.f32 %v5839, %v2899
        %v5944 = vmul.f32 %v5844, %v2904
        %v5945 = vmul.f32 %v5847, %v2909
        %v5946 = vmul.f32 %v5852, %v2914
        %v5947 = vmul.f32 %v5855, %v2919
        %v5948 = vmul.f32 %v5860, %v2924
        %v5949 = vmul.f32 %v5863, %v2929
        %v5950 = vmul.f32 %v5868, %v2934
        %v5951 = vmul.f32 %v5871, %v2939
        %v5952 = vmul.f32 %v5876, %v2944
        %v5953 = vmul.f32 %v5879, %v2949
        %v5954 = vmul.f32 %v5884, %v2954
        %v5955 = vmul.f32 %v5887, %v2959
        %v5956 = vmul.f32 %v5892, %v2964
        %v5957 = vmul.f32 %v5895, %v2969
        %v5958 = vmul.f32 %v5900, %v2974
        %v5959 = vmul.f32 %v5903, %v2979
        %v5960 = vmul.f32 %v5908, %v2984
        %v5961 = vmul.f32 %v5911, %v2989
        %v5962 = vsel %vm386, %v5914, 0.0
        %v5963 = vsel %vm386, %v5915, 0.0
        %v5964 = vadd.f32 %v5962, %v5963
        %v5965 = vsel %vm386, %v5916, 0.0
        %v5966 = vadd.f32 %v5964, %v5965
        %v5967 = vsel %vm386, %v5917, 0.0
        %v5968 = vadd.f32 %v5966, %v5967
        %v5969 = vsel %vm386, %v5918, 0.0
        %v5970 = vadd.f32 %v5968, %v5969
        %v5971 = vsel %vm386, %v5919, 0.0
        %v5972 = vadd.f32 %v5970, %v5971
        %v5973 = vsel %vm386, %v5920, 0.0
        %v5974 = vadd.f32 %v5972, %v5973
        %v5975 = vsel %vm386, %v5921, 0.0
        %v5976 = vadd.f32 %v5974, %v5975
        %v5977 = vsel %vm386, %v5922, 0.0
        %v5978 = vadd.f32 %v5976, %v5977
        %v5979 = vsel %vm386, %v5923, 0.0
        %v5980 = vadd.f32 %v5978, %v5979
        %v5981 = vsel %vm386, %v5924, 0.0
        %v5982 = vadd.f32 %v5980, %v5981
        %v5983 = vsel %vm386, %v5925, 0.0
        %v5984 = vadd.f32 %v5982, %v5983
        %v5985 = vsel %vm386, %v5926, 0.0
        %v5986 = vadd.f32 %v5984, %v5985
        %v5987 = vsel %vm386, %v5927, 0.0
        %v5988 = vadd.f32 %v5986, %v5987
        %v5989 = vsel %vm386, %v5928, 0.0
        %v5990 = vadd.f32 %v5988, %v5989
        %v5991 = vsel %vm386, %v5929, 0.0
        %v5992 = vadd.f32 %v5990, %v5991
        %v5993 = vsel %vm386, %v5930, 0.0
        %v5994 = vadd.f32 %v5992, %v5993
        %v5995 = vsel %vm386, %v5931, 0.0
        %v5996 = vadd.f32 %v5994, %v5995
        %v5997 = vsel %vm386, %v5932, 0.0
        %v5998 = vadd.f32 %v5996, %v5997
        %v5999 = vsel %vm386, %v5933, 0.0
        %v6000 = vadd.f32 %v5998, %v5999
        %v6001 = vsel %vm386, %v5934, 0.0
        %v6002 = vadd.f32 %v6000, %v6001
        %v6003 = vsel %vm386, %v5935, 0.0
        %v6004 = vadd.f32 %v6002, %v6003
        %v6005 = vsel %vm386, %v5936, 0.0
        %v6006 = vadd.f32 %v6004, %v6005
        %v6007 = vsel %vm386, %v5937, 0.0
        %v6008 = vadd.f32 %v6006, %v6007
        %v6009 = vsel %vm386, %v5938, 0.0
        %v6010 = vadd.f32 %v6008, %v6009
        %v6011 = vsel %vm386, %v5939, 0.0
        %v6012 = vadd.f32 %v6010, %v6011
        %v6013 = vsel %vm386, %v5940, 0.0
        %v6014 = vadd.f32 %v6012, %v6013
        %v6015 = vsel %vm386, %v5941, 0.0
        %v6016 = vadd.f32 %v6014, %v6015
        %v6017 = vsel %vm386, %v5942, 0.0
        %v6018 = vadd.f32 %v6016, %v6017
        %v6019 = vsel %vm386, %v5943, 0.0
        %v6020 = vadd.f32 %v6018, %v6019
        %v6021 = vsel %vm386, %v5944, 0.0
        %v6022 = vadd.f32 %v6020, %v6021
        %v6023 = vsel %vm386, %v5945, 0.0
        %v6024 = vadd.f32 %v6022, %v6023
        %v6025 = vsel %vm386, %v5946, 0.0
        %v6026 = vadd.f32 %v6024, %v6025
        %v6027 = vsel %vm386, %v5947, 0.0
        %v6028 = vadd.f32 %v6026, %v6027
        %v6029 = vsel %vm386, %v5948, 0.0
        %v6030 = vadd.f32 %v6028, %v6029
        %v6031 = vsel %vm386, %v5949, 0.0
        %v6032 = vadd.f32 %v6030, %v6031
        %v6033 = vsel %vm386, %v5950, 0.0
        %v6034 = vadd.f32 %v6032, %v6033
        %v6035 = vsel %vm386, %v5951, 0.0
        %v6036 = vadd.f32 %v6034, %v6035
        %v6037 = vsel %vm386, %v5952, 0.0
        %v6038 = vadd.f32 %v6036, %v6037
        %v6039 = vsel %vm386, %v5953, 0.0
        %v6040 = vadd.f32 %v6038, %v6039
        %v6041 = vsel %vm386, %v5954, 0.0
        %v6042 = vadd.f32 %v6040, %v6041
        %v6043 = vsel %vm386, %v5955, 0.0
        %v6044 = vadd.f32 %v6042, %v6043
        %v6045 = vsel %vm386, %v5956, 0.0
        %v6046 = vadd.f32 %v6044, %v6045
        %v6047 = vsel %vm386, %v5957, 0.0
        %v6048 = vadd.f32 %v6046, %v6047
        %v6049 = vsel %vm386, %v5958, 0.0
        %v6050 = vadd.f32 %v6048, %v6049
        %v6051 = vsel %vm386, %v5959, 0.0
        %v6052 = vadd.f32 %v6050, %v6051
        %v6053 = vsel %vm386, %v5960, 0.0
        %v6054 = vadd.f32 %v6052, %v6053
        %v6055 = vsel %vm386, %v5961, 0.0
        %v6056 = vadd.f32 %v6054, %v6055
        %v6057 = vrot.slane %v6056, 4
        %v6058 = vadd.f32 %v6056, %v6057
        %v6059 = vrot.slane %v6058, 2
        %v6060 = vadd.f32 %v6058, %v6059
        %v6061 = vrot.slane %v6060, 1
        %v6062 = vadd.f32 %v6060, %v6061
        %v6063 = vmul.f32 %v6062, 0.00390625
        %v6064 = vmul.f32 %v5914, %v5914
        %v6065 = vmul.f32 %v5915, %v5915
        %v6066 = vmul.f32 %v5916, %v5916
        %v6067 = vmul.f32 %v5917, %v5917
        %v6068 = vmul.f32 %v5918, %v5918
        %v6069 = vmul.f32 %v5919, %v5919
        %v6070 = vmul.f32 %v5920, %v5920
        %v6071 = vmul.f32 %v5921, %v5921
        %v6072 = vmul.f32 %v5922, %v5922
        %v6073 = vmul.f32 %v5923, %v5923
        %v6074 = vmul.f32 %v5924, %v5924
        %v6075 = vmul.f32 %v5925, %v5925
        %v6076 = vmul.f32 %v5926, %v5926
        %v6077 = vmul.f32 %v5927, %v5927
        %v6078 = vmul.f32 %v5928, %v5928
        %v6079 = vmul.f32 %v5929, %v5929
        %v6080 = vmul.f32 %v5930, %v5930
        %v6081 = vmul.f32 %v5931, %v5931
        %v6082 = vmul.f32 %v5932, %v5932
        %v6083 = vmul.f32 %v5933, %v5933
        %v6084 = vmul.f32 %v5934, %v5934
        %v6085 = vmul.f32 %v5935, %v5935
        %v6086 = vmul.f32 %v5936, %v5936
        %v6087 = vmul.f32 %v5937, %v5937
        %v6088 = vmul.f32 %v5938, %v5938
        %v6089 = vmul.f32 %v5939, %v5939
        %v6090 = vmul.f32 %v5940, %v5940
        %v6091 = vmul.f32 %v5941, %v5941
        %v6092 = vmul.f32 %v5942, %v5942
        %v6093 = vmul.f32 %v5943, %v5943
        %v6094 = vmul.f32 %v5944, %v5944
        %v6095 = vmul.f32 %v5945, %v5945
        %v6096 = vmul.f32 %v5946, %v5946
        %v6097 = vmul.f32 %v5947, %v5947
        %v6098 = vmul.f32 %v5948, %v5948
        %v6099 = vmul.f32 %v5949, %v5949
        %v6100 = vmul.f32 %v5950, %v5950
        %v6101 = vmul.f32 %v5951, %v5951
        %v6102 = vmul.f32 %v5952, %v5952
        %v6103 = vmul.f32 %v5953, %v5953
        %v6104 = vmul.f32 %v5954, %v5954
        %v6105 = vmul.f32 %v5955, %v5955
        %v6106 = vmul.f32 %v5956, %v5956
        %v6107 = vmul.f32 %v5957, %v5957
        %v6108 = vmul.f32 %v5958, %v5958
        %v6109 = vmul.f32 %v5959, %v5959
        %v6110 = vmul.f32 %v5960, %v5960
        %v6111 = vmul.f32 %v5961, %v5961
        %v6112 = vsel %vm386, %v6064, 0.0
        %v6113 = vsel %vm386, %v6065, 0.0
        %v6114 = vadd.f32 %v6112, %v6113
        %v6115 = vsel %vm386, %v6066, 0.0
        %v6116 = vadd.f32 %v6114, %v6115
        %v6117 = vsel %vm386, %v6067, 0.0
        %v6118 = vadd.f32 %v6116, %v6117
        %v6119 = vsel %vm386, %v6068, 0.0
        %v6120 = vadd.f32 %v6118, %v6119
        %v6121 = vsel %vm386, %v6069, 0.0
        %v6122 = vadd.f32 %v6120, %v6121
        %v6123 = vsel %vm386, %v6070, 0.0
        %v6124 = vadd.f32 %v6122, %v6123
        %v6125 = vsel %vm386, %v6071, 0.0
        %v6126 = vadd.f32 %v6124, %v6125
        %v6127 = vsel %vm386, %v6072, 0.0
        %v6128 = vadd.f32 %v6126, %v6127
        %v6129 = vsel %vm386, %v6073, 0.0
        %v6130 = vadd.f32 %v6128, %v6129
        %v6131 = vsel %vm386, %v6074, 0.0
        %v6132 = vadd.f32 %v6130, %v6131
        %v6133 = vsel %vm386, %v6075, 0.0
        %v6134 = vadd.f32 %v6132, %v6133
        %v6135 = vsel %vm386, %v6076, 0.0
        %v6136 = vadd.f32 %v6134, %v6135
        %v6137 = vsel %vm386, %v6077, 0.0
        %v6138 = vadd.f32 %v6136, %v6137
        %v6139 = vsel %vm386, %v6078, 0.0
        %v6140 = vadd.f32 %v6138, %v6139
        %v6141 = vsel %vm386, %v6079, 0.0
        %v6142 = vadd.f32 %v6140, %v6141
        %v6143 = vsel %vm386, %v6080, 0.0
        %v6144 = vadd.f32 %v6142, %v6143
        %v6145 = vsel %vm386, %v6081, 0.0
        %v6146 = vadd.f32 %v6144, %v6145
        %v6147 = vsel %vm386, %v6082, 0.0
        %v6148 = vadd.f32 %v6146, %v6147
        %v6149 = vsel %vm386, %v6083, 0.0
        %v6150 = vadd.f32 %v6148, %v6149
        %v6151 = vsel %vm386, %v6084, 0.0
        %v6152 = vadd.f32 %v6150, %v6151
        %v6153 = vsel %vm386, %v6085, 0.0
        %v6154 = vadd.f32 %v6152, %v6153
        %v6155 = vsel %vm386, %v6086, 0.0
        %v6156 = vadd.f32 %v6154, %v6155
        %v6157 = vsel %vm386, %v6087, 0.0
        %v6158 = vadd.f32 %v6156, %v6157
        %v6159 = vsel %vm386, %v6088, 0.0
        %v6160 = vadd.f32 %v6158, %v6159
        %v6161 = vsel %vm386, %v6089, 0.0
        %v6162 = vadd.f32 %v6160, %v6161
        %v6163 = vsel %vm386, %v6090, 0.0
        %v6164 = vadd.f32 %v6162, %v6163
        %v6165 = vsel %vm386, %v6091, 0.0
        %v6166 = vadd.f32 %v6164, %v6165
        %v6167 = vsel %vm386, %v6092, 0.0
        %v6168 = vadd.f32 %v6166, %v6167
        %v6169 = vsel %vm386, %v6093, 0.0
        %v6170 = vadd.f32 %v6168, %v6169
        %v6171 = vsel %vm386, %v6094, 0.0
        %v6172 = vadd.f32 %v6170, %v6171
        %v6173 = vsel %vm386, %v6095, 0.0
        %v6174 = vadd.f32 %v6172, %v6173
        %v6175 = vsel %vm386, %v6096, 0.0
        %v6176 = vadd.f32 %v6174, %v6175
        %v6177 = vsel %vm386, %v6097, 0.0
        %v6178 = vadd.f32 %v6176, %v6177
        %v6179 = vsel %vm386, %v6098, 0.0
        %v6180 = vadd.f32 %v6178, %v6179
        %v6181 = vsel %vm386, %v6099, 0.0
        %v6182 = vadd.f32 %v6180, %v6181
        %v6183 = vsel %vm386, %v6100, 0.0
        %v6184 = vadd.f32 %v6182, %v6183
        %v6185 = vsel %vm386, %v6101, 0.0
        %v6186 = vadd.f32 %v6184, %v6185
        %v6187 = vsel %vm386, %v6102, 0.0
        %v6188 = vadd.f32 %v6186, %v6187
        %v6189 = vsel %vm386, %v6103, 0.0
        %v6190 = vadd.f32 %v6188, %v6189
        %v6191 = vsel %vm386, %v6104, 0.0
        %v6192 = vadd.f32 %v6190, %v6191
        %v6193 = vsel %vm386, %v6105, 0.0
        %v6194 = vadd.f32 %v6192, %v6193
        %v6195 = vsel %vm386, %v6106, 0.0
        %v6196 = vadd.f32 %v6194, %v6195
        %v6197 = vsel %vm386, %v6107, 0.0
        %v6198 = vadd.f32 %v6196, %v6197
        %v6199 = vsel %vm386, %v6108, 0.0
        %v6200 = vadd.f32 %v6198, %v6199
        %v6201 = vsel %vm386, %v6109, 0.0
        %v6202 = vadd.f32 %v6200, %v6201
        %v6203 = vsel %vm386, %v6110, 0.0
        %v6204 = vadd.f32 %v6202, %v6203
        %v6205 = vsel %vm386, %v6111, 0.0
        %v6206 = vadd.f32 %v6204, %v6205
        %v6207 = vrot.slane %v6206, 4
        %v6208 = vadd.f32 %v6206, %v6207
        %v6209 = vrot.slane %v6208, 2
        %v6210 = vadd.f32 %v6208, %v6209
        %v6211 = vrot.slane %v6210, 1
        %v6212 = vadd.f32 %v6210, %v6211
        %v6213 = vmul.f32 %v6212, 0.00390625
        %v6214 = vsel %vm3291, %v6063, %v6213
        %v6215 = vld [vmem:[%s2] sm:$0xff]
        %v6216 = vld [vmem:[%s2 + $0x8] sm:$0xff]
        %v6217 = vld [vmem:[%s2 + $0x10] sm:$0xff]
        %v6218 = vld [vmem:[%s2 + $0x18] sm:$0xff]
        %v6220 = vsel %vm386, %v6214, 0
        %6222 = vmatprep.subr.mxu0 0.0
        %6223 = vmatpush1.msra.mxu0 %v6215
        %6224 = vmatprep.subr.mxu0 0.0
        %6225 = vmatpush1.msra.mxu0 %v6216
        %6226 = vmatprep.subr.mxu0 0.0
        %6227 = vmatpush1.msra.mxu0 %v6217
        %6228 = vmatprep.subr.mxu0 0.0
        %6229 = vmatpush1.msra.mxu0 %v6218
        %6230 = vmatprep.subr.mxu0 0.0
        %6231 = vmatpush1.msra.mxu0 0.0
        %6232 = vmatprep.subr.mxu0 0.0
        %6233 = vmatpush1.msra.mxu0 0.0
        %6234 = vmatprep.subr.mxu0 0.0
        %6235 = vmatpush1.msra.mxu0 0.0
        %6236 = vmatprep.subr.mxu0 0.0
        %6237 = vmatpush1.msra.mxu0 0.0
        %6238 = vmatprep.subr.mxu0 0.0
        %6239 = vmatpush1.msra.mxu0 0.0
        %6240 = vmatprep.subr.mxu0 0.0
        %6241 = vmatpush1.msra.mxu0 0.0
        %6242 = vmatprep.subr.mxu0 0.0
        %6243 = vmatpush1.msra.mxu0 0.0
        %6244 = vmatprep.subr.mxu0 0.0
        %6245 = vmatpush1.msra.mxu0 0.0
        %6246 = vmatprep.subr.mxu0 0.0
        %6247 = vmatpush1.msra.mxu0 0.0
        %6248 = vmatprep.subr.mxu0 0.0
        %6249 = vmatpush1.msra.mxu0 0.0
        %6250 = vmatprep.subr.mxu0 0.0
        %6251 = vmatpush1.msra.mxu0 0.0
        %6252 = vmatprep.subr.mxu0 0.0
        %6253 = vmatpush1.msra.mxu0 0.0
        %6254 = vmatprep.subr.mxu0 0.0
        %6255 = vmatpush1.msra.mxu0 0.0
        %6256 = vmatprep.subr.mxu0 0.0
        %6257 = vmatpush1.msra.mxu0 0.0
        %6258 = vmatprep.subr.mxu0 0.0
        %6259 = vmatpush1.msra.mxu0 0.0
        %6260 = vmatprep.subr.mxu0 0.0
        %6261 = vmatpush1.msra.mxu0 0.0
        %6262 = vmatprep.subr.mxu0 0.0
        %6263 = vmatpush1.msra.mxu0 0.0
        %6264 = vmatprep.subr.mxu0 0.0
        %6265 = vmatpush1.msra.mxu0 0.0
        %6266 = vmatprep.subr.mxu0 0.0
        %6267 = vmatpush1.msra.mxu0 0.0
        %6268 = vmatprep.subr.mxu0 0.0
        %6269 = vmatpush1.msra.mxu0 0.0
        %6270 = vmatprep.subr.mxu0 0.0
        %6271 = vmatpush1.msra.mxu0 0.0
        %6272 = vmatprep.subr.mxu0 0.0
        %6273 = vmatpush1.msra.mxu0 0.0
        %6274 = vmatprep.subr.mxu0 0.0
        %6275 = vmatpush1.msra.mxu0 0.0
        %6276 = vmatprep.subr.mxu0 0.0
        %6277 = vmatpush1.msra.mxu0 0.0
        %6278 = vmatprep.subr.mxu0 0.0
        %6279 = vmatpush1.msra.mxu0 0.0
        %6280 = vmatprep.subr.mxu0 0.0
        %6281 = vmatpush1.msra.mxu0 0.0
        %6282 = vmatprep.subr.mxu0 0.0
        %6283 = vmatpush1.msra.mxu0 0.0
        %6284 = vmatprep.subr.mxu0 0.0
        %6285 = vmatpush1.msra.mxu0 0.0
        %6286 = vmatprep.mubr.f32.mxu0 0.0
        %6287 = vmatmul.mubr.f32.gmra.mrb[0].mxu0 %v6220
        %v6288 = vpop.f32.mrb[0].mxu0
        %v6289 = vadd.f32 0.0, %v6288
        %v6290 = vpop.f32.mrb[0].mxu0
        %6291 = vdwg.mxu0
        %v6292 = vmul.f32 %v6289, %v6289
        %v6294 = vrot.slane %v6292, 7
        %v6296 = vsub.f32 %v6289, %v6294
        %v6297 = vmax.f32 %v6296, 0.0
        %v6298 = vlaneseq
        %v6299 = vshrl.u32 %v6298, 7
        %v6300 = vsub.s32 0, %v6299
        %v6301 = vrot.slane %v6289, %v6300
        %v6302 = vsub.f32 %v5724, %v6301
        %v6303 = vsub.f32 %v5727, %v6301
        %v6304 = vsub.f32 %v5732, %v6301
        %v6305 = vsub.f32 %v5735, %v6301
        %v6306 = vsub.f32 %v5740, %v6301
        %v6307 = vsub.f32 %v5743, %v6301
        %v6308 = vsub.f32 %v5748, %v6301
        %v6309 = vsub.f32 %v5751, %v6301
        %v6310 = vsub.f32 %v5756, %v6301
        %v6311 = vsub.f32 %v5759, %v6301
        %v6312 = vsub.f32 %v5764, %v6301
        %v6313 = vsub.f32 %v5767, %v6301
        %v6314 = vsub.f32 %v5772, %v6301
        %v6315 = vsub.f32 %v5775, %v6301
        %v6316 = vsub.f32 %v5780, %v6301
        %v6317 = vsub.f32 %v5783, %v6301
        %v6318 = vsub.f32 %v5788, %v6301
        %v6319 = vsub.f32 %v5791, %v6301
        %v6320 = vsub.f32 %v5796, %v6301
        %v6321 = vsub.f32 %v5799, %v6301
        %v6322 = vsub.f32 %v5804, %v6301
        %v6323 = vsub.f32 %v5807, %v6301
        %v6324 = vsub.f32 %v5812, %v6301
        %v6325 = vsub.f32 %v5815, %v6301
        %v6326 = vsub.f32 %v5820, %v6301
        %v6327 = vsub.f32 %v5823, %v6301
        %v6328 = vsub.f32 %v5828, %v6301
        %v6329 = vsub.f32 %v5831, %v6301
        %v6330 = vsub.f32 %v5836, %v6301
        %v6331 = vsub.f32 %v5839, %v6301
        %v6332 = vsub.f32 %v5844, %v6301
        %v6333 = vsub.f32 %v5847, %v6301
        %v6334 = vsub.f32 %v5852, %v6301
        %v6335 = vsub.f32 %v5855, %v6301
        %v6336 = vsub.f32 %v5860, %v6301
        %v6337 = vsub.f32 %v5863, %v6301
        %v6338 = vsub.f32 %v5868, %v6301
        %v6339 = vsub.f32 %v5871, %v6301
        %v6340 = vsub.f32 %v5876, %v6301
        %v6341 = vsub.f32 %v5879, %v6301
        %v6342 = vsub.f32 %v5884, %v6301
        %v6343 = vsub.f32 %v5887, %v6301
        %v6344 = vsub.f32 %v5892, %v6301
        %v6345 = vsub.f32 %v5895, %v6301
        %v6346 = vsub.f32 %v5900, %v6301
        %v6347 = vsub.f32 %v5903, %v6301
        %v6348 = vsub.f32 %v5908, %v6301
        %v6349 = vsub.f32 %v5911, %v6301
        %v6350 = vadd.f32 %v6297, 1e-05
        %v6351 = vrsqrt.pop %v6350
        %v6352 = vlaneseq
        %v6353 = vshrl.u32 %v6352, 7
        %v6354 = vsub.s32 1, %v6353
        %v6355 = vrot.slane %v6351, %v6354
        %v6356 = vmul.f32 %v6302, %v6355
        %v6357 = vmul.f32 %v6303, %v6355
        %v6358 = vmul.f32 %v6304, %v6355
        %v6359 = vmul.f32 %v6305, %v6355
        %v6360 = vmul.f32 %v6306, %v6355
        %v6361 = vmul.f32 %v6307, %v6355
        %v6362 = vmul.f32 %v6308, %v6355
        %v6363 = vmul.f32 %v6309, %v6355
        %v6364 = vmul.f32 %v6310, %v6355
        %v6365 = vmul.f32 %v6311, %v6355
        %v6366 = vmul.f32 %v6312, %v6355
        %v6367 = vmul.f32 %v6313, %v6355
        %v6368 = vmul.f32 %v6314, %v6355
        %v6369 = vmul.f32 %v6315, %v6355
        %v6370 = vmul.f32 %v6316, %v6355
        %v6371 = vmul.f32 %v6317, %v6355
        %v6372 = vmul.f32 %v6318, %v6355
        %v6373 = vmul.f32 %v6319, %v6355
        %v6374 = vmul.f32 %v6320, %v6355
        %v6375 = vmul.f32 %v6321, %v6355
        %v6376 = vmul.f32 %v6322, %v6355
        %v6377 = vmul.f32 %v6323, %v6355
        %v6378 = vmul.f32 %v6324, %v6355
        %v6379 = vmul.f32 %v6325, %v6355
        %v6380 = vmul.f32 %v6326, %v6355
        %v6381 = vmul.f32 %v6327, %v6355
        %v6382 = vmul.f32 %v6328, %v6355
        %v6383 = vmul.f32 %v6329, %v6355
        %v6384 = vmul.f32 %v6330, %v6355
        %v6385 = vmul.f32 %v6331, %v6355
        %v6386 = vmul.f32 %v6332, %v6355
        %v6387 = vmul.f32 %v6333, %v6355
        %v6388 = vmul.f32 %v6334, %v6355
        %v6389 = vmul.f32 %v6335, %v6355
        %v6390 = vmul.f32 %v6336, %v6355
        %v6391 = vmul.f32 %v6337, %v6355
        %v6392 = vmul.f32 %v6338, %v6355
        %v6393 = vmul.f32 %v6339, %v6355
        %v6394 = vmul.f32 %v6340, %v6355
        %v6395 = vmul.f32 %v6341, %v6355
        %v6396 = vmul.f32 %v6342, %v6355
        %v6397 = vmul.f32 %v6343, %v6355
        %v6398 = vmul.f32 %v6344, %v6355
        %v6399 = vmul.f32 %v6345, %v6355
        %v6400 = vmul.f32 %v6346, %v6355
        %v6401 = vmul.f32 %v6347, %v6355
        %v6402 = vmul.f32 %v6348, %v6355
        %v6403 = vmul.f32 %v6349, %v6355
        %v6404 = vld [vmem:[%s7] sm:$0x1]
        %v6406 = vlaneseq
        %v6407 = vshrl.u32 %v6406, 7
        %v6408 = vsub.s32 0, %v6407
        %v6409 = vrot.slane %v6404, %v6408
        %v6411 = vmul.f32 %v6356, %v6409
        %v6412 = vmul.f32 %v6357, %v6409
        %v6413 = vmul.f32 %v6358, %v6409
        %v6414 = vmul.f32 %v6359, %v6409
        %v6415 = vmul.f32 %v6360, %v6409
        %v6416 = vmul.f32 %v6361, %v6409
        %v6417 = vmul.f32 %v6362, %v6409
        %v6418 = vmul.f32 %v6363, %v6409
        %v6419 = vmul.f32 %v6364, %v6409
        %v6420 = vmul.f32 %v6365, %v6409
        %v6421 = vmul.f32 %v6366, %v6409
        %v6422 = vmul.f32 %v6367, %v6409
        %v6423 = vmul.f32 %v6368, %v6409
        %v6424 = vmul.f32 %v6369, %v6409
        %v6425 = vmul.f32 %v6370, %v6409
        %v6426 = vmul.f32 %v6371, %v6409
        %v6427 = vmul.f32 %v6372, %v6409
        %v6428 = vmul.f32 %v6373, %v6409
        %v6429 = vmul.f32 %v6374, %v6409
        %v6430 = vmul.f32 %v6375, %v6409
        %v6431 = vmul.f32 %v6376, %v6409
        %v6432 = vmul.f32 %v6377, %v6409
        %v6433 = vmul.f32 %v6378, %v6409
        %v6434 = vmul.f32 %v6379, %v6409
        %v6435 = vmul.f32 %v6380, %v6409
        %v6436 = vmul.f32 %v6381, %v6409
        %v6437 = vmul.f32 %v6382, %v6409
        %v6438 = vmul.f32 %v6383, %v6409
        %v6439 = vmul.f32 %v6384, %v6409
        %v6440 = vmul.f32 %v6385, %v6409
        %v6441 = vmul.f32 %v6386, %v6409
        %v6442 = vmul.f32 %v6387, %v6409
        %v6443 = vmul.f32 %v6388, %v6409
        %v6444 = vmul.f32 %v6389, %v6409
        %v6445 = vmul.f32 %v6390, %v6409
        %v6446 = vmul.f32 %v6391, %v6409
        %v6447 = vmul.f32 %v6392, %v6409
        %v6448 = vmul.f32 %v6393, %v6409
        %v6449 = vmul.f32 %v6394, %v6409
        %v6450 = vmul.f32 %v6395, %v6409
        %v6451 = vmul.f32 %v6396, %v6409
        %v6452 = vmul.f32 %v6397, %v6409
        %v6453 = vmul.f32 %v6398, %v6409
        %v6454 = vmul.f32 %v6399, %v6409
        %v6455 = vmul.f32 %v6400, %v6409
        %v6456 = vmul.f32 %v6401, %v6409
        %v6457 = vmul.f32 %v6402, %v6409
        %v6458 = vmul.f32 %v6403, %v6409
        %v6459 = vld [vmem:[%s8] sm:$0x1]
        %v6461 = vlaneseq
        %v6462 = vshrl.u32 %v6461, 7
        %v6463 = vsub.s32 0, %v6462
        %v6464 = vrot.slane %v6459, %v6463
        %v6466 = vadd.f32 %v6411, %v6464
        %v6467 = vadd.f32 %v6412, %v6464
        %v6468 = vadd.f32 %v6413, %v6464
        %v6469 = vadd.f32 %v6414, %v6464
        %v6470 = vadd.f32 %v6415, %v6464
        %v6471 = vadd.f32 %v6416, %v6464
        %v6472 = vadd.f32 %v6417, %v6464
        %v6473 = vadd.f32 %v6418, %v6464
        %v6474 = vadd.f32 %v6419, %v6464
        %v6475 = vadd.f32 %v6420, %v6464
        %v6476 = vadd.f32 %v6421, %v6464
        %v6477 = vadd.f32 %v6422, %v6464
        %v6478 = vadd.f32 %v6423, %v6464
        %v6479 = vadd.f32 %v6424, %v6464
        %v6480 = vadd.f32 %v6425, %v6464
        %v6481 = vadd.f32 %v6426, %v6464
        %v6482 = vadd.f32 %v6427, %v6464
        %v6483 = vadd.f32 %v6428, %v6464
        %v6484 = vadd.f32 %v6429, %v6464
        %v6485 = vadd.f32 %v6430, %v6464
        %v6486 = vadd.f32 %v6431, %v6464
        %v6487 = vadd.f32 %v6432, %v6464
        %v6488 = vadd.f32 %v6433, %v6464
        %v6489 = vadd.f32 %v6434, %v6464
        %v6490 = vadd.f32 %v6435, %v6464
        %v6491 = vadd.f32 %v6436, %v6464
        %v6492 = vadd.f32 %v6437, %v6464
        %v6493 = vadd.f32 %v6438, %v6464
        %v6494 = vadd.f32 %v6439, %v6464
        %v6495 = vadd.f32 %v6440, %v6464
        %v6496 = vadd.f32 %v6441, %v6464
        %v6497 = vadd.f32 %v6442, %v6464
        %v6498 = vadd.f32 %v6443, %v6464
        %v6499 = vadd.f32 %v6444, %v6464
        %v6500 = vadd.f32 %v6445, %v6464
        %v6501 = vadd.f32 %v6446, %v6464
        %v6502 = vadd.f32 %v6447, %v6464
        %v6503 = vadd.f32 %v6448, %v6464
        %v6504 = vadd.f32 %v6449, %v6464
        %v6505 = vadd.f32 %v6450, %v6464
        %v6506 = vadd.f32 %v6451, %v6464
        %v6507 = vadd.f32 %v6452, %v6464
        %v6508 = vadd.f32 %v6453, %v6464
        %v6509 = vadd.f32 %v6454, %v6464
        %v6510 = vadd.f32 %v6455, %v6464
        %v6511 = vadd.f32 %v6456, %v6464
        %v6512 = vadd.f32 %v6457, %v6464
        %v6513 = vadd.f32 %v6458, %v6464
        %v6514 = vmax.f32 %v6466, 0.0
        %v6515 = vmax.f32 %v6467, 0.0
        %v6516 = vmax.f32 %v6468, 0.0
        %v6517 = vmax.f32 %v6469, 0.0
        %v6518 = vmax.f32 %v6470, 0.0
        %v6519 = vmax.f32 %v6471, 0.0
        %v6520 = vmax.f32 %v6472, 0.0
        %v6521 = vmax.f32 %v6473, 0.0
        %v6522 = vmax.f32 %v6474, 0.0
        %v6523 = vmax.f32 %v6475, 0.0
        %v6524 = vmax.f32 %v6476, 0.0
        %v6525 = vmax.f32 %v6477, 0.0
        %v6526 = vmax.f32 %v6478, 0.0
        %v6527 = vmax.f32 %v6479, 0.0
        %v6528 = vmax.f32 %v6480, 0.0
        %v6529 = vmax.f32 %v6481, 0.0
        %v6530 = vmax.f32 %v6482, 0.0
        %v6531 = vmax.f32 %v6483, 0.0
        %v6532 = vmax.f32 %v6484, 0.0
        %v6533 = vmax.f32 %v6485, 0.0
        %v6534 = vmax.f32 %v6486, 0.0
        %v6535 = vmax.f32 %v6487, 0.0
        %v6536 = vmax.f32 %v6488, 0.0
        %v6537 = vmax.f32 %v6489, 0.0
        %v6538 = vmax.f32 %v6490, 0.0
        %v6539 = vmax.f32 %v6491, 0.0
        %v6540 = vmax.f32 %v6492, 0.0
        %v6541 = vmax.f32 %v6493, 0.0
        %v6542 = vmax.f32 %v6494, 0.0
        %v6543 = vmax.f32 %v6495, 0.0
        %v6544 = vmax.f32 %v6496, 0.0
        %v6545 = vmax.f32 %v6497, 0.0
        %v6546 = vmax.f32 %v6498, 0.0
        %v6547 = vmax.f32 %v6499, 0.0
        %v6548 = vmax.f32 %v6500, 0.0
        %v6549 = vmax.f32 %v6501, 0.0
        %v6550 = vmax.f32 %v6502, 0.0
        %v6551 = vmax.f32 %v6503, 0.0
        %v6552 = vmax.f32 %v6504, 0.0
        %v6553 = vmax.f32 %v6505, 0.0
        %v6554 = vmax.f32 %v6506, 0.0
        %v6555 = vmax.f32 %v6507, 0.0
        %v6556 = vmax.f32 %v6508, 0.0
        %v6557 = vmax.f32 %v6509, 0.0
        %v6558 = vmax.f32 %v6510, 0.0
        %v6559 = vmax.f32 %v6511, 0.0
        %v6560 = vmax.f32 %v6512, 0.0
        %v6561 = vmax.f32 %v6513, 0.0
        %v6562 = vmul.f32 %v6514, %v2754
        %v6563 = vmul.f32 %v6515, %v2759
        %v6564 = vmul.f32 %v6516, %v2764
        %v6565 = vmul.f32 %v6517, %v2769
        %v6566 = vmul.f32 %v6518, %v2774
        %v6567 = vmul.f32 %v6519, %v2779
        %v6568 = vmul.f32 %v6520, %v2784
        %v6569 = vmul.f32 %v6521, %v2789
        %v6570 = vmul.f32 %v6522, %v2794
        %v6571 = vmul.f32 %v6523, %v2799
        %v6572 = vmul.f32 %v6524, %v2804
        %v6573 = vmul.f32 %v6525, %v2809
        %v6574 = vmul.f32 %v6526, %v2814
        %v6575 = vmul.f32 %v6527, %v2819
        %v6576 = vmul.f32 %v6528, %v2824
        %v6577 = vmul.f32 %v6529, %v2829
        %v6578 = vmul.f32 %v6530, %v2834
        %v6579 = vmul.f32 %v6531, %v2839
        %v6580 = vmul.f32 %v6532, %v2844
        %v6581 = vmul.f32 %v6533, %v2849
        %v6582 = vmul.f32 %v6534, %v2854
        %v6583 = vmul.f32 %v6535, %v2859
        %v6584 = vmul.f32 %v6536, %v2864
        %v6585 = vmul.f32 %v6537, %v2869
        %v6586 = vmul.f32 %v6538, %v2874
        %v6587 = vmul.f32 %v6539, %v2879
        %v6588 = vmul.f32 %v6540, %v2884
        %v6589 = vmul.f32 %v6541, %v2889
        %v6590 = vmul.f32 %v6542, %v2894
        %v6591 = vmul.f32 %v6543, %v2899
        %v6592 = vmul.f32 %v6544, %v2904
        %v6593 = vmul.f32 %v6545, %v2909
        %v6594 = vmul.f32 %v6546, %v2914
        %v6595 = vmul.f32 %v6547, %v2919
        %v6596 = vmul.f32 %v6548, %v2924
        %v6597 = vmul.f32 %v6549, %v2929
        %v6598 = vmul.f32 %v6550, %v2934
        %v6599 = vmul.f32 %v6551, %v2939
        %v6600 = vmul.f32 %v6552, %v2944
        %v6601 = vmul.f32 %v6553, %v2949
        %v6602 = vmul.f32 %v6554, %v2954
        %v6603 = vmul.f32 %v6555, %v2959
        %v6604 = vmul.f32 %v6556, %v2964
        %v6605 = vmul.f32 %v6557, %v2969
        %v6606 = vmul.f32 %v6558, %v2974
        %v6607 = vmul.f32 %v6559, %v2979
        %v6608 = vmul.f32 %v6560, %v2984
        %v6609 = vmul.f32 %v6561, %v2989
        %6610 = vst.msk [vmem:[#allocation2 + $0x20] sm:$0xff] %vm386, %v6562
        %6611 = vst.msk [vmem:[#allocation2 + $0x28] sm:$0xff] %vm386, %v6563
        %6612 = vst.msk [vmem:[#allocation2 + $0x30] sm:$0xff] %vm386, %v6564
        %6613 = vst.msk [vmem:[#allocation2 + $0x38] sm:$0xff] %vm386, %v6565
        %6614 = vst.msk [vmem:[#allocation2 + $0x40] sm:$0xff] %vm386, %v6566
        %6615 = vst.msk [vmem:[#allocation2 + $0x48] sm:$0xff] %vm386, %v6567
        %6616 = vst.msk [vmem:[#allocation2 + $0x50] sm:$0xff] %vm386, %v6568
        %6617 = vst.msk [vmem:[#allocation2 + $0x58] sm:$0xff] %vm386, %v6569
        %6618 = vst.msk [vmem:[#allocation2 + $0x60] sm:$0xff] %vm386, %v6570
        %6619 = vst.msk [vmem:[#allocation2 + $0x68] sm:$0xff] %vm386, %v6571
        %6620 = vst.msk [vmem:[#allocation2 + $0x70] sm:$0xff] %vm386, %v6572
        %6621 = vst.msk [vmem:[#allocation2 + $0x78] sm:$0xff] %vm386, %v6573
        %6622 = vst.msk [vmem:[#allocation2 + $0x80] sm:$0xff] %vm386, %v6574
        %6623 = vst.msk [vmem:[#allocation2 + $0x88] sm:$0xff] %vm386, %v6575
        %6624 = vst.msk [vmem:[#allocation2 + $0x90] sm:$0xff] %vm386, %v6576
        %6625 = vst.msk [vmem:[#allocation2 + $0x98] sm:$0xff] %vm386, %v6577
        %6626 = vst.msk [vmem:[#allocation2 + $0xa0] sm:$0xff] %vm386, %v6578
        %6627 = vst.msk [vmem:[#allocation2 + $0xa8] sm:$0xff] %vm386, %v6579
        %6628 = vst.msk [vmem:[#allocation2 + $0xb0] sm:$0xff] %vm386, %v6580
        %6629 = vst.msk [vmem:[#allocation2 + $0xb8] sm:$0xff] %vm386, %v6581
        %6630 = vst.msk [vmem:[#allocation2 + $0xc0] sm:$0xff] %vm386, %v6582
        %6631 = vst.msk [vmem:[#allocation2 + $0xc8] sm:$0xff] %vm386, %v6583
        %6632 = vst.msk [vmem:[#allocation2 + $0xd0] sm:$0xff] %vm386, %v6584
        %6633 = vst.msk [vmem:[#allocation2 + $0xd8] sm:$0xff] %vm386, %v6585
        %6634 = vst.msk [vmem:[#allocation2 + $0xe0] sm:$0xff] %vm386, %v6586
        %6635 = vst.msk [vmem:[#allocation2 + $0xe8] sm:$0xff] %vm386, %v6587
        %6636 = vst.msk [vmem:[#allocation2 + $0xf0] sm:$0xff] %vm386, %v6588
        %6637 = vst.msk [vmem:[#allocation2 + $0xf8] sm:$0xff] %vm386, %v6589
        %6638 = vst.msk [vmem:[#allocation2 + $0x100] sm:$0xff] %vm386, %v6590
        %6639 = vst.msk [vmem:[#allocation2 + $0x108] sm:$0xff] %vm386, %v6591
        %6640 = vst.msk [vmem:[#allocation2 + $0x110] sm:$0xff] %vm386, %v6592
        %6641 = vst.msk [vmem:[#allocation2 + $0x118] sm:$0xff] %vm386, %v6593
        %6642 = vst.msk [vmem:[#allocation2 + $0x120] sm:$0xff] %vm386, %v6594
        %6643 = vst.msk [vmem:[#allocation2 + $0x128] sm:$0xff] %vm386, %v6595
        %6644 = vst.msk [vmem:[#allocation2 + $0x130] sm:$0xff] %vm386, %v6596
        %6645 = vst.msk [vmem:[#allocation2 + $0x138] sm:$0xff] %vm386, %v6597
        %6646 = vst.msk [vmem:[#allocation2 + $0x140] sm:$0xff] %vm386, %v6598
        %6647 = vst.msk [vmem:[#allocation2 + $0x148] sm:$0xff] %vm386, %v6599
        %6648 = vst.msk [vmem:[#allocation2 + $0x150] sm:$0xff] %vm386, %v6600
        %6649 = vst.msk [vmem:[#allocation2 + $0x158] sm:$0xff] %vm386, %v6601
        %6650 = vst.msk [vmem:[#allocation2 + $0x160] sm:$0xff] %vm386, %v6602
        %6651 = vst.msk [vmem:[#allocation2 + $0x168] sm:$0xff] %vm386, %v6603
        %6652 = vst.msk [vmem:[#allocation2 + $0x170] sm:$0xff] %vm386, %v6604
        %6653 = vst.msk [vmem:[#allocation2 + $0x178] sm:$0xff] %vm386, %v6605
        %6654 = vst.msk [vmem:[#allocation2 + $0x180] sm:$0xff] %vm386, %v6606
        %6655 = vst.msk [vmem:[#allocation2 + $0x188] sm:$0xff] %vm386, %v6607
        %6656 = vst.msk [vmem:[#allocation2 + $0x190] sm:$0xff] %vm386, %v6608
        %6657 = vst.msk [vmem:[#allocation2 + $0x198] sm:$0xff] %vm386, %v6609
        %v6658 = vld [vmem:[#allocation2 + $0x7] sm:$0xff]
        %v6659 = vld [vmem:[#allocation2 + $0xf] sm:$0xff]
        %v6660 = vld [vmem:[#allocation2 + $0x17] sm:$0xff]
        %v6661 = vld [vmem:[#allocation2 + $0x1f] sm:$0xff]
        %v6662 = vld [vmem:[#allocation2 + $0x27] sm:$0xff]
        %v6663 = vld [vmem:[#allocation2 + $0x2f] sm:$0xff]
        %v6664 = vld [vmem:[#allocation2 + $0x37] sm:$0xff]
        %v6665 = vld [vmem:[#allocation2 + $0x3f] sm:$0xff]
        %v6666 = vld [vmem:[#allocation2 + $0x47] sm:$0xff]
        %v6667 = vld [vmem:[#allocation2 + $0x4f] sm:$0xff]
        %v6668 = vld [vmem:[#allocation2 + $0x57] sm:$0xff]
        %v6669 = vld [vmem:[#allocation2 + $0x5f] sm:$0xff]
        %v6670 = vld [vmem:[#allocation2 + $0x67] sm:$0xff]
        %v6671 = vld [vmem:[#allocation2 + $0x6f] sm:$0xff]
        %v6672 = vld [vmem:[#allocation2 + $0x77] sm:$0xff]
        %v6673 = vld [vmem:[#allocation2 + $0x7f] sm:$0xff]
        %v6674 = vld [vmem:[#allocation2 + $0x87] sm:$0xff]
        %v6675 = vld [vmem:[#allocation2 + $0x8f] sm:$0xff]
        %v6676 = vld [vmem:[#allocation2 + $0x97] sm:$0xff]
        %v6677 = vld [vmem:[#allocation2 + $0x9f] sm:$0xff]
        %v6678 = vld [vmem:[#allocation2 + $0xa7] sm:$0xff]
        %v6679 = vld [vmem:[#allocation2 + $0xaf] sm:$0xff]
        %v6680 = vld [vmem:[#allocation2 + $0xb7] sm:$0xff]
        %v6681 = vld [vmem:[#allocation2 + $0xbf] sm:$0xff]
        %v6682 = vld [vmem:[#allocation2 + $0xc7] sm:$0xff]
        %v6683 = vld [vmem:[#allocation2 + $0xcf] sm:$0xff]
        %v6684 = vld [vmem:[#allocation2 + $0xd7] sm:$0xff]
        %v6685 = vld [vmem:[#allocation2 + $0xdf] sm:$0xff]
        %v6686 = vld [vmem:[#allocation2 + $0xe7] sm:$0xff]
        %v6687 = vld [vmem:[#allocation2 + $0xef] sm:$0xff]
        %v6688 = vld [vmem:[#allocation2 + $0xf7] sm:$0xff]
        %v6689 = vld [vmem:[#allocation2 + $0xff] sm:$0xff]
        %v6690 = vld [vmem:[#allocation2 + $0x107] sm:$0xff]
        %v6691 = vld [vmem:[#allocation2 + $0x10f] sm:$0xff]
        %v6692 = vld [vmem:[#allocation2 + $0x117] sm:$0xff]
        %v6693 = vld [vmem:[#allocation2 + $0x11f] sm:$0xff]
        %v6694 = vld [vmem:[#allocation2 + $0x127] sm:$0xff]
        %v6695 = vld [vmem:[#allocation2 + $0x12f] sm:$0xff]
        %v6696 = vld [vmem:[#allocation2 + $0x137] sm:$0xff]
        %v6697 = vld [vmem:[#allocation2 + $0x13f] sm:$0xff]
        %v6698 = vld [vmem:[#allocation2 + $0x147] sm:$0xff]
        %v6699 = vld [vmem:[#allocation2 + $0x14f] sm:$0xff]
        %v6700 = vld [vmem:[#allocation2 + $0x157] sm:$0xff]
        %v6701 = vld [vmem:[#allocation2 + $0x15f] sm:$0xff]
        %v6702 = vld [vmem:[#allocation2 + $0x167] sm:$0xff]
        %v6703 = vld [vmem:[#allocation2 + $0x16f] sm:$0xff]
        %v6704 = vld [vmem:[#allocation2 + $0x177] sm:$0xff]
        %v6705 = vld [vmem:[#allocation2 + $0x17f] sm:$0xff]
        %v6706 = vpack.c.bf16 %v6659, %v6658
        %v6707 = vpack.c.bf16 %v6661, %v6660
        %v6708 = vpack.c.bf16 %v6663, %v6662
        %v6709 = vpack.c.bf16 %v6665, %v6664
        %v6710 = vpack.c.bf16 %v6667, %v6666
        %v6711 = vpack.c.bf16 %v6669, %v6668
        %v6712 = vpack.c.bf16 %v6671, %v6670
        %v6713 = vpack.c.bf16 %v6673, %v6672
        %v6714 = vpack.c.bf16 %v6675, %v6674
        %v6715 = vpack.c.bf16 %v6677, %v6676
        %v6716 = vpack.c.bf16 %v6679, %v6678
        %v6717 = vpack.c.bf16 %v6681, %v6680
        %v6718 = vpack.c.bf16 %v6683, %v6682
        %v6719 = vpack.c.bf16 %v6685, %v6684
        %v6720 = vpack.c.bf16 %v6687, %v6686
        %v6721 = vpack.c.bf16 %v6689, %v6688
        %v6722 = vpack.c.bf16 %v6691, %v6690
        %v6723 = vpack.c.bf16 %v6693, %v6692
        %v6724 = vpack.c.bf16 %v6695, %v6694
        %v6725 = vpack.c.bf16 %v6697, %v6696
        %v6726 = vpack.c.bf16 %v6699, %v6698
        %v6727 = vpack.c.bf16 %v6701, %v6700
        %v6728 = vpack.c.bf16 %v6703, %v6702
        %v6729 = vpack.c.bf16 %v6705, %v6704
        %6730 = vst.msk [vmem:[#allocation3] sm:$0xff] %vm386, %v6706
        %6731 = vst.msk [vmem:[#allocation3 + $0x18] sm:$0xff] %vm386, %v6707
        %6732 = vst.msk [vmem:[#allocation3 + $0x30] sm:$0xff] %vm386, %v6708
        %6733 = vst.msk [vmem:[#allocation3 + $0x48] sm:$0xff] %vm386, %v6709
        %6734 = vst.msk [vmem:[#allocation3 + $0x60] sm:$0xff] %vm386, %v6710
        %6735 = vst.msk [vmem:[#allocation3 + $0x78] sm:$0xff] %vm386, %v6711
        %6736 = vst.msk [vmem:[#allocation3 + $0x90] sm:$0xff] %vm386, %v6712
        %6737 = vst.msk [vmem:[#allocation3 + $0xa8] sm:$0xff] %vm386, %v6713
        %6738 = vst.msk [vmem:[#allocation3 + $0xc0] sm:$0xff] %vm386, %v6714
        %6739 = vst.msk [vmem:[#allocation3 + $0xd8] sm:$0xff] %vm386, %v6715
        %6740 = vst.msk [vmem:[#allocation3 + $0xf0] sm:$0xff] %vm386, %v6716
        %6741 = vst.msk [vmem:[#allocation3 + $0x108] sm:$0xff] %vm386, %v6717
        %6742 = vst.msk [vmem:[#allocation3 + $0x120] sm:$0xff] %vm386, %v6718
        %6743 = vst.msk [vmem:[#allocation3 + $0x138] sm:$0xff] %vm386, %v6719
        %6744 = vst.msk [vmem:[#allocation3 + $0x150] sm:$0xff] %vm386, %v6720
        %6745 = vst.msk [vmem:[#allocation3 + $0x168] sm:$0xff] %vm386, %v6721
        %6746 = vst.msk [vmem:[#allocation3 + $0x180] sm:$0xff] %vm386, %v6722
        %6747 = vst.msk [vmem:[#allocation3 + $0x198] sm:$0xff] %vm386, %v6723
        %6748 = vst.msk [vmem:[#allocation3 + $0x1b0] sm:$0xff] %vm386, %v6724
        %6749 = vst.msk [vmem:[#allocation3 + $0x1c8] sm:$0xff] %vm386, %v6725
        %6750 = vst.msk [vmem:[#allocation3 + $0x1e0] sm:$0xff] %vm386, %v6726
        %6751 = vst.msk [vmem:[#allocation3 + $0x1f8] sm:$0xff] %vm386, %v6727
        %6752 = vst.msk [vmem:[#allocation3 + $0x210] sm:$0xff] %vm386, %v6728
        %6753 = vst.msk [vmem:[#allocation3 + $0x228] sm:$0xff] %vm386, %v6729
        %v6754 = vld [vmem:[#allocation2 + $0x8] sm:$0xff]
        %v6755 = vld [vmem:[#allocation2 + $0x10] sm:$0xff]
        %v6756 = vld [vmem:[#allocation2 + $0x18] sm:$0xff]
        %v6757 = vld [vmem:[#allocation2 + $0x20] sm:$0xff]
        %v6758 = vld [vmem:[#allocation2 + $0x28] sm:$0xff]
        %v6759 = vld [vmem:[#allocation2 + $0x30] sm:$0xff]
        %v6760 = vld [vmem:[#allocation2 + $0x38] sm:$0xff]
        %v6761 = vld [vmem:[#allocation2 + $0x40] sm:$0xff]
        %v6762 = vld [vmem:[#allocation2 + $0x48] sm:$0xff]
        %v6763 = vld [vmem:[#allocation2 + $0x50] sm:$0xff]
        %v6764 = vld [vmem:[#allocation2 + $0x58] sm:$0xff]
        %v6765 = vld [vmem:[#allocation2 + $0x60] sm:$0xff]
        %v6766 = vld [vmem:[#allocation2 + $0x68] sm:$0xff]
        %v6767 = vld [vmem:[#allocation2 + $0x70] sm:$0xff]
        %v6768 = vld [vmem:[#allocation2 + $0x78] sm:$0xff]
        %v6769 = vld [vmem:[#allocation2 + $0x80] sm:$0xff]
        %v6770 = vld [vmem:[#allocation2 + $0x88] sm:$0xff]
        %v6771 = vld [vmem:[#allocation2 + $0x90] sm:$0xff]
        %v6772 = vld [vmem:[#allocation2 + $0x98] sm:$0xff]
        %v6773 = vld [vmem:[#allocation2 + $0xa0] sm:$0xff]
        %v6774 = vld [vmem:[#allocation2 + $0xa8] sm:$0xff]
        %v6775 = vld [vmem:[#allocation2 + $0xb0] sm:$0xff]
        %v6776 = vld [vmem:[#allocation2 + $0xb8] sm:$0xff]
        %v6777 = vld [vmem:[#allocation2 + $0xc0] sm:$0xff]
        %v6778 = vld [vmem:[#allocation2 + $0xc8] sm:$0xff]
        %v6779 = vld [vmem:[#allocation2 + $0xd0] sm:$0xff]
        %v6780 = vld [vmem:[#allocation2 + $0xd8] sm:$0xff]
        %v6781 = vld [vmem:[#allocation2 + $0xe0] sm:$0xff]
        %v6782 = vld [vmem:[#allocation2 + $0xe8] sm:$0xff]
        %v6783 = vld [vmem:[#allocation2 + $0xf0] sm:$0xff]
        %v6784 = vld [vmem:[#allocation2 + $0xf8] sm:$0xff]
        %v6785 = vld [vmem:[#allocation2 + $0x100] sm:$0xff]
        %v6786 = vld [vmem:[#allocation2 + $0x108] sm:$0xff]
        %v6787 = vld [vmem:[#allocation2 + $0x110] sm:$0xff]
        %v6788 = vld [vmem:[#allocation2 + $0x118] sm:$0xff]
        %v6789 = vld [vmem:[#allocation2 + $0x120] sm:$0xff]
        %v6790 = vld [vmem:[#allocation2 + $0x128] sm:$0xff]
        %v6791 = vld [vmem:[#allocation2 + $0x130] sm:$0xff]
        %v6792 = vld [vmem:[#allocation2 + $0x138] sm:$0xff]
        %v6793 = vld [vmem:[#allocation2 + $0x140] sm:$0xff]
        %v6794 = vld [vmem:[#allocation2 + $0x148] sm:$0xff]
        %v6795 = vld [vmem:[#allocation2 + $0x150] sm:$0xff]
        %v6796 = vld [vmem:[#allocation2 + $0x158] sm:$0xff]
        %v6797 = vld [vmem:[#allocation2 + $0x160] sm:$0xff]
        %v6798 = vld [vmem:[#allocation2 + $0x168] sm:$0xff]
        %v6799 = vld [vmem:[#allocation2 + $0x170] sm:$0xff]
        %v6800 = vld [vmem:[#allocation2 + $0x178] sm:$0xff]
        %v6801 = vld [vmem:[#allocation2 + $0x180] sm:$0xff]
        %v6802 = vpack.c.bf16 %v6755, %v6754
        %v6803 = vpack.c.bf16 %v6757, %v6756
        %v6804 = vpack.c.bf16 %v6759, %v6758
        %v6805 = vpack.c.bf16 %v6761, %v6760
        %v6806 = vpack.c.bf16 %v6763, %v6762
        %v6807 = vpack.c.bf16 %v6765, %v6764
        %v6808 = vpack.c.bf16 %v6767, %v6766
        %v6809 = vpack.c.bf16 %v6769, %v6768
        %v6810 = vpack.c.bf16 %v6771, %v6770
        %v6811 = vpack.c.bf16 %v6773, %v6772
        %v6812 = vpack.c.bf16 %v6775, %v6774
        %v6813 = vpack.c.bf16 %v6777, %v6776
        %v6814 = vpack.c.bf16 %v6779, %v6778
        %v6815 = vpack.c.bf16 %v6781, %v6780
        %v6816 = vpack.c.bf16 %v6783, %v6782
        %v6817 = vpack.c.bf16 %v6785, %v6784
        %v6818 = vpack.c.bf16 %v6787, %v6786
        %v6819 = vpack.c.bf16 %v6789, %v6788
        %v6820 = vpack.c.bf16 %v6791, %v6790
        %v6821 = vpack.c.bf16 %v6793, %v6792
        %v6822 = vpack.c.bf16 %v6795, %v6794
        %v6823 = vpack.c.bf16 %v6797, %v6796
        %v6824 = vpack.c.bf16 %v6799, %v6798
        %v6825 = vpack.c.bf16 %v6801, %v6800
        %6850 = vrot.lane.b32.xlu0 %v6802, 32
        %v6851 = vpop.permute.xlu0 %6850
        %6852 = vrot.lane.b32.xlu0 %v6803, 32
        %v6853 = vpop.permute.xlu0 %6852
        %6854 = vrot.lane.b32.xlu0 %v6804, 32
        %v6855 = vpop.permute.xlu0 %6854
        %6856 = vrot.lane.b32.xlu0 %v6805, 32
        %v6857 = vpop.permute.xlu0 %6856
        %6858 = vrot.lane.b32.xlu0 %v6806, 32
        %v6859 = vpop.permute.xlu0 %6858
        %6860 = vrot.lane.b32.xlu0 %v6807, 32
        %v6861 = vpop.permute.xlu0 %6860
        %6862 = vrot.lane.b32.xlu0 %v6808, 32
        %v6863 = vpop.permute.xlu0 %6862
        %6864 = vrot.lane.b32.xlu0 %v6809, 32
        %v6865 = vpop.permute.xlu0 %6864
        %6866 = vrot.lane.b32.xlu0 %v6810, 32
        %v6867 = vpop.permute.xlu0 %6866
        %6868 = vrot.lane.b32.xlu0 %v6811, 32
        %v6869 = vpop.permute.xlu0 %6868
        %6870 = vrot.lane.b32.xlu0 %v6812, 32
        %v6871 = vpop.permute.xlu0 %6870
        %6872 = vrot.lane.b32.xlu0 %v6813, 32
        %v6873 = vpop.permute.xlu0 %6872
        %6874 = vrot.lane.b32.xlu0 %v6814, 32
        %v6875 = vpop.permute.xlu0 %6874
        %6876 = vrot.lane.b32.xlu0 %v6815, 32
        %v6877 = vpop.permute.xlu0 %6876
        %6878 = vrot.lane.b32.xlu0 %v6816, 32
        %v6879 = vpop.permute.xlu0 %6878
        %6880 = vrot.lane.b32.xlu0 %v6817, 32
        %v6881 = vpop.permute.xlu0 %6880
        %6882 = vrot.lane.b32.xlu0 %v6818, 32
        %v6883 = vpop.permute.xlu0 %6882
        %6884 = vrot.lane.b32.xlu0 %v6819, 32
        %v6885 = vpop.permute.xlu0 %6884
        %6886 = vrot.lane.b32.xlu0 %v6820, 32
        %v6887 = vpop.permute.xlu0 %6886
        %6888 = vrot.lane.b32.xlu0 %v6821, 32
        %v6889 = vpop.permute.xlu0 %6888
        %6890 = vrot.lane.b32.xlu0 %v6822, 32
        %v6891 = vpop.permute.xlu0 %6890
        %6892 = vrot.lane.b32.xlu0 %v6823, 32
        %v6893 = vpop.permute.xlu0 %6892
        %6894 = vrot.lane.b32.xlu0 %v6824, 32
        %v6895 = vpop.permute.xlu0 %6894
        %6896 = vrot.lane.b32.xlu0 %v6825, 32
        %v6897 = vpop.permute.xlu0 %6896
        %6922 = vst.msk [vmem:[#allocation3] sm:$0xff] %vm834, %v6851
        %6923 = vst.msk [vmem:[#allocation3 + $0x18] sm:$0xff] %vm834, %v6853
        %6924 = vst.msk [vmem:[#allocation3 + $0x30] sm:$0xff] %vm834, %v6855
        %6925 = vst.msk [vmem:[#allocation3 + $0x48] sm:$0xff] %vm834, %v6857
        %6926 = vst.msk [vmem:[#allocation3 + $0x60] sm:$0xff] %vm834, %v6859
        %6927 = vst.msk [vmem:[#allocation3 + $0x78] sm:$0xff] %vm834, %v6861
        %6928 = vst.msk [vmem:[#allocation3 + $0x90] sm:$0xff] %vm834, %v6863
        %6929 = vst.msk [vmem:[#allocation3 + $0xa8] sm:$0xff] %vm834, %v6865
        %6930 = vst.msk [vmem:[#allocation3 + $0xc0] sm:$0xff] %vm834, %v6867
        %6931 = vst.msk [vmem:[#allocation3 + $0xd8] sm:$0xff] %vm834, %v6869
        %6932 = vst.msk [vmem:[#allocation3 + $0xf0] sm:$0xff] %vm834, %v6871
        %6933 = vst.msk [vmem:[#allocation3 + $0x108] sm:$0xff] %vm834, %v6873
        %6934 = vst.msk [vmem:[#allocation3 + $0x120] sm:$0xff] %vm834, %v6875
        %6935 = vst.msk [vmem:[#allocation3 + $0x138] sm:$0xff] %vm834, %v6877
        %6936 = vst.msk [vmem:[#allocation3 + $0x150] sm:$0xff] %vm834, %v6879
        %6937 = vst.msk [vmem:[#allocation3 + $0x168] sm:$0xff] %vm834, %v6881
        %6938 = vst.msk [vmem:[#allocation3 + $0x180] sm:$0xff] %vm834, %v6883
        %6939 = vst.msk [vmem:[#allocation3 + $0x198] sm:$0xff] %vm834, %v6885
        %6940 = vst.msk [vmem:[#allocation3 + $0x1b0] sm:$0xff] %vm834, %v6887
        %6941 = vst.msk [vmem:[#allocation3 + $0x1c8] sm:$0xff] %vm834, %v6889
        %6942 = vst.msk [vmem:[#allocation3 + $0x1e0] sm:$0xff] %vm834, %v6891
        %6943 = vst.msk [vmem:[#allocation3 + $0x1f8] sm:$0xff] %vm834, %v6893
        %6944 = vst.msk [vmem:[#allocation3 + $0x210] sm:$0xff] %vm834, %v6895
        %6945 = vst.msk [vmem:[#allocation3 + $0x228] sm:$0xff] %vm834, %v6897
        %v6946 = vld [vmem:[#allocation2 + $0x9] sm:$0xff]
        %v6947 = vld [vmem:[#allocation2 + $0x11] sm:$0xff]
        %v6948 = vld [vmem:[#allocation2 + $0x19] sm:$0xff]
        %v6949 = vld [vmem:[#allocation2 + $0x21] sm:$0xff]
        %v6950 = vld [vmem:[#allocation2 + $0x29] sm:$0xff]
        %v6951 = vld [vmem:[#allocation2 + $0x31] sm:$0xff]
        %v6952 = vld [vmem:[#allocation2 + $0x39] sm:$0xff]
        %v6953 = vld [vmem:[#allocation2 + $0x41] sm:$0xff]
        %v6954 = vld [vmem:[#allocation2 + $0x49] sm:$0xff]
        %v6955 = vld [vmem:[#allocation2 + $0x51] sm:$0xff]
        %v6956 = vld [vmem:[#allocation2 + $0x59] sm:$0xff]
        %v6957 = vld [vmem:[#allocation2 + $0x61] sm:$0xff]
        %v6958 = vld [vmem:[#allocation2 + $0x69] sm:$0xff]
        %v6959 = vld [vmem:[#allocation2 + $0x71] sm:$0xff]
        %v6960 = vld [vmem:[#allocation2 + $0x79] sm:$0xff]
        %v6961 = vld [vmem:[#allocation2 + $0x81] sm:$0xff]
        %v6962 = vld [vmem:[#allocation2 + $0x89] sm:$0xff]
        %v6963 = vld [vmem:[#allocation2 + $0x91] sm:$0xff]
        %v6964 = vld [vmem:[#allocation2 + $0x99] sm:$0xff]
        %v6965 = vld [vmem:[#allocation2 + $0xa1] sm:$0xff]
        %v6966 = vld [vmem:[#allocation2 + $0xa9] sm:$0xff]
        %v6967 = vld [vmem:[#allocation2 + $0xb1] sm:$0xff]
        %v6968 = vld [vmem:[#allocation2 + $0xb9] sm:$0xff]
        %v6969 = vld [vmem:[#allocation2 + $0xc1] sm:$0xff]
        %v6970 = vld [vmem:[#allocation2 + $0xc9] sm:$0xff]
        %v6971 = vld [vmem:[#allocation2 + $0xd1] sm:$0xff]
        %v6972 = vld [vmem:[#allocation2 + $0xd9] sm:$0xff]
        %v6973 = vld [vmem:[#allocation2 + $0xe1] sm:$0xff]
        %v6974 = vld [vmem:[#allocation2 + $0xe9] sm:$0xff]
        %v6975 = vld [vmem:[#allocation2 + $0xf1] sm:$0xff]
        %v6976 = vld [vmem:[#allocation2 + $0xf9] sm:$0xff]
        %v6977 = vld [vmem:[#allocation2 + $0x101] sm:$0xff]
        %v6978 = vld [vmem:[#allocation2 + $0x109] sm:$0xff]
        %v6979 = vld [vmem:[#allocation2 + $0x111] sm:$0xff]
        %v6980 = vld [vmem:[#allocation2 + $0x119] sm:$0xff]
        %v6981 = vld [vmem:[#allocation2 + $0x121] sm:$0xff]
        %v6982 = vld [vmem:[#allocation2 + $0x129] sm:$0xff]
        %v6983 = vld [vmem:[#allocation2 + $0x131] sm:$0xff]
        %v6984 = vld [vmem:[#allocation2 + $0x139] sm:$0xff]
        %v6985 = vld [vmem:[#allocation2 + $0x141] sm:$0xff]
        %v6986 = vld [vmem:[#allocation2 + $0x149] sm:$0xff]
        %v6987 = vld [vmem:[#allocation2 + $0x151] sm:$0xff]
        %v6988 = vld [vmem:[#allocation2 + $0x159] sm:$0xff]
        %v6989 = vld [vmem:[#allocation2 + $0x161] sm:$0xff]
        %v6990 = vld [vmem:[#allocation2 + $0x169] sm:$0xff]
        %v6991 = vld [vmem:[#allocation2 + $0x171] sm:$0xff]
        %v6992 = vld [vmem:[#allocation2 + $0x179] sm:$0xff]
        %v6993 = vld [vmem:[#allocation2 + $0x181] sm:$0xff]
        %v6994 = vpack.c.bf16 %v6947, %v6946
        %v6995 = vpack.c.bf16 %v6949, %v6948
        %v6996 = vpack.c.bf16 %v6951, %v6950
        %v6997 = vpack.c.bf16 %v6953, %v6952
        %v6998 = vpack.c.bf16 %v6955, %v6954
        %v6999 = vpack.c.bf16 %v6957, %v6956
        %v7000 = vpack.c.bf16 %v6959, %v6958
        %v7001 = vpack.c.bf16 %v6961, %v6960
        %v7002 = vpack.c.bf16 %v6963, %v6962
        %v7003 = vpack.c.bf16 %v6965, %v6964
        %v7004 = vpack.c.bf16 %v6967, %v6966
        %v7005 = vpack.c.bf16 %v6969, %v6968
        %v7006 = vpack.c.bf16 %v6971, %v6970
        %v7007 = vpack.c.bf16 %v6973, %v6972
        %v7008 = vpack.c.bf16 %v6975, %v6974
        %v7009 = vpack.c.bf16 %v6977, %v6976
        %v7010 = vpack.c.bf16 %v6979, %v6978
        %v7011 = vpack.c.bf16 %v6981, %v6980
        %v7012 = vpack.c.bf16 %v6983, %v6982
        %v7013 = vpack.c.bf16 %v6985, %v6984
        %v7014 = vpack.c.bf16 %v6987, %v6986
        %v7015 = vpack.c.bf16 %v6989, %v6988
        %v7016 = vpack.c.bf16 %v6991, %v6990
        %v7017 = vpack.c.bf16 %v6993, %v6992
        %7042 = vrot.lane.b32.xlu0 %v6994, 64
        %v7043 = vpop.permute.xlu0 %7042
        %7044 = vrot.lane.b32.xlu0 %v6995, 64
        %v7045 = vpop.permute.xlu0 %7044
        %7046 = vrot.lane.b32.xlu0 %v6996, 64
        %v7047 = vpop.permute.xlu0 %7046
        %7048 = vrot.lane.b32.xlu0 %v6997, 64
        %v7049 = vpop.permute.xlu0 %7048
        %7050 = vrot.lane.b32.xlu0 %v6998, 64
        %v7051 = vpop.permute.xlu0 %7050
        %7052 = vrot.lane.b32.xlu0 %v6999, 64
        %v7053 = vpop.permute.xlu0 %7052
        %7054 = vrot.lane.b32.xlu0 %v7000, 64
        %v7055 = vpop.permute.xlu0 %7054
        %7056 = vrot.lane.b32.xlu0 %v7001, 64
        %v7057 = vpop.permute.xlu0 %7056
        %7058 = vrot.lane.b32.xlu0 %v7002, 64
        %v7059 = vpop.permute.xlu0 %7058
        %7060 = vrot.lane.b32.xlu0 %v7003, 64
        %v7061 = vpop.permute.xlu0 %7060
        %7062 = vrot.lane.b32.xlu0 %v7004, 64
        %v7063 = vpop.permute.xlu0 %7062
        %7064 = vrot.lane.b32.xlu0 %v7005, 64
        %v7065 = vpop.permute.xlu0 %7064
        %7066 = vrot.lane.b32.xlu0 %v7006, 64
        %v7067 = vpop.permute.xlu0 %7066
        %7068 = vrot.lane.b32.xlu0 %v7007, 64
        %v7069 = vpop.permute.xlu0 %7068
        %7070 = vrot.lane.b32.xlu0 %v7008, 64
        %v7071 = vpop.permute.xlu0 %7070
        %7072 = vrot.lane.b32.xlu0 %v7009, 64
        %v7073 = vpop.permute.xlu0 %7072
        %7074 = vrot.lane.b32.xlu0 %v7010, 64
        %v7075 = vpop.permute.xlu0 %7074
        %7076 = vrot.lane.b32.xlu0 %v7011, 64
        %v7077 = vpop.permute.xlu0 %7076
        %7078 = vrot.lane.b32.xlu0 %v7012, 64
        %v7079 = vpop.permute.xlu0 %7078
        %7080 = vrot.lane.b32.xlu0 %v7013, 64
        %v7081 = vpop.permute.xlu0 %7080
        %7082 = vrot.lane.b32.xlu0 %v7014, 64
        %v7083 = vpop.permute.xlu0 %7082
        %7084 = vrot.lane.b32.xlu0 %v7015, 64
        %v7085 = vpop.permute.xlu0 %7084
        %7086 = vrot.lane.b32.xlu0 %v7016, 64
        %v7087 = vpop.permute.xlu0 %7086
        %7088 = vrot.lane.b32.xlu0 %v7017, 64
        %v7089 = vpop.permute.xlu0 %7088
        %7114 = vst.msk [vmem:[#allocation3] sm:$0xff] %vm1027, %v7043
        %7115 = vst.msk [vmem:[#allocation3 + $0x18] sm:$0xff] %vm1027, %v7045
        %7116 = vst.msk [vmem:[#allocation3 + $0x30] sm:$0xff] %vm1027, %v7047
        %7117 = vst.msk [vmem:[#allocation3 + $0x48] sm:$0xff] %vm1027, %v7049
        %7118 = vst.msk [vmem:[#allocation3 + $0x60] sm:$0xff] %vm1027, %v7051
        %7119 = vst.msk [vmem:[#allocation3 + $0x78] sm:$0xff] %vm1027, %v7053
        %7120 = vst.msk [vmem:[#allocation3 + $0x90] sm:$0xff] %vm1027, %v7055
        %7121 = vst.msk [vmem:[#allocation3 + $0xa8] sm:$0xff] %vm1027, %v7057
        %7122 = vst.msk [vmem:[#allocation3 + $0xc0] sm:$0xff] %vm1027, %v7059
        %7123 = vst.msk [vmem:[#allocation3 + $0xd8] sm:$0xff] %vm1027, %v7061
        %7124 = vst.msk [vmem:[#allocation3 + $0xf0] sm:$0xff] %vm1027, %v7063
        %7125 = vst.msk [vmem:[#allocation3 + $0x108] sm:$0xff] %vm1027, %v7065
        %7126 = vst.msk [vmem:[#allocation3 + $0x120] sm:$0xff] %vm1027, %v7067
        %7127 = vst.msk [vmem:[#allocation3 + $0x138] sm:$0xff] %vm1027, %v7069
        %7128 = vst.msk [vmem:[#allocation3 + $0x150] sm:$0xff] %vm1027, %v7071
        %7129 = vst.msk [vmem:[#allocation3 + $0x168] sm:$0xff] %vm1027, %v7073
        %7130 = vst.msk [vmem:[#allocation3 + $0x180] sm:$0xff] %vm1027, %v7075
        %7131 = vst.msk [vmem:[#allocation3 + $0x198] sm:$0xff] %vm1027, %v7077
        %7132 = vst.msk [vmem:[#allocation3 + $0x1b0] sm:$0xff] %vm1027, %v7079
        %7133 = vst.msk [vmem:[#allocation3 + $0x1c8] sm:$0xff] %vm1027, %v7081
        %7134 = vst.msk [vmem:[#allocation3 + $0x1e0] sm:$0xff] %vm1027, %v7083
        %7135 = vst.msk [vmem:[#allocation3 + $0x1f8] sm:$0xff] %vm1027, %v7085
        %7136 = vst.msk [vmem:[#allocation3 + $0x210] sm:$0xff] %vm1027, %v7087
        %7137 = vst.msk [vmem:[#allocation3 + $0x228] sm:$0xff] %vm1027, %v7089
        %v7138 = vld [vmem:[#allocation2 + $0x1f] sm:$0xff]
        %v7139 = vld [vmem:[#allocation2 + $0x27] sm:$0xff]
        %v7140 = vld [vmem:[#allocation2 + $0x2f] sm:$0xff]
        %v7141 = vld [vmem:[#allocation2 + $0x37] sm:$0xff]
        %v7142 = vld [vmem:[#allocation2 + $0x3f] sm:$0xff]
        %v7143 = vld [vmem:[#allocation2 + $0x47] sm:$0xff]
        %v7144 = vld [vmem:[#allocation2 + $0x4f] sm:$0xff]
        %v7145 = vld [vmem:[#allocation2 + $0x57] sm:$0xff]
        %v7146 = vld [vmem:[#allocation2 + $0x5f] sm:$0xff]
        %v7147 = vld [vmem:[#allocation2 + $0x67] sm:$0xff]
        %v7148 = vld [vmem:[#allocation2 + $0x6f] sm:$0xff]
        %v7149 = vld [vmem:[#allocation2 + $0x77] sm:$0xff]
        %v7150 = vld [vmem:[#allocation2 + $0x7f] sm:$0xff]
        %v7151 = vld [vmem:[#allocation2 + $0x87] sm:$0xff]
        %v7152 = vld [vmem:[#allocation2 + $0x8f] sm:$0xff]
        %v7153 = vld [vmem:[#allocation2 + $0x97] sm:$0xff]
        %v7154 = vld [vmem:[#allocation2 + $0x9f] sm:$0xff]
        %v7155 = vld [vmem:[#allocation2 + $0xa7] sm:$0xff]
        %v7156 = vld [vmem:[#allocation2 + $0xaf] sm:$0xff]
        %v7157 = vld [vmem:[#allocation2 + $0xb7] sm:$0xff]
        %v7158 = vld [vmem:[#allocation2 + $0xbf] sm:$0xff]
        %v7159 = vld [vmem:[#allocation2 + $0xc7] sm:$0xff]
        %v7160 = vld [vmem:[#allocation2 + $0xcf] sm:$0xff]
        %v7161 = vld [vmem:[#allocation2 + $0xd7] sm:$0xff]
        %v7162 = vld [vmem:[#allocation2 + $0xdf] sm:$0xff]
        %v7163 = vld [vmem:[#allocation2 + $0xe7] sm:$0xff]
        %v7164 = vld [vmem:[#allocation2 + $0xef] sm:$0xff]
        %v7165 = vld [vmem:[#allocation2 + $0xf7] sm:$0xff]
        %v7166 = vld [vmem:[#allocation2 + $0xff] sm:$0xff]
        %v7167 = vld [vmem:[#allocation2 + $0x107] sm:$0xff]
        %v7168 = vld [vmem:[#allocation2 + $0x10f] sm:$0xff]
        %v7169 = vld [vmem:[#allocation2 + $0x117] sm:$0xff]
        %v7170 = vld [vmem:[#allocation2 + $0x11f] sm:$0xff]
        %v7171 = vld [vmem:[#allocation2 + $0x127] sm:$0xff]
        %v7172 = vld [vmem:[#allocation2 + $0x12f] sm:$0xff]
        %v7173 = vld [vmem:[#allocation2 + $0x137] sm:$0xff]
        %v7174 = vld [vmem:[#allocation2 + $0x13f] sm:$0xff]
        %v7175 = vld [vmem:[#allocation2 + $0x147] sm:$0xff]
        %v7176 = vld [vmem:[#allocation2 + $0x14f] sm:$0xff]
        %v7177 = vld [vmem:[#allocation2 + $0x157] sm:$0xff]
        %v7178 = vld [vmem:[#allocation2 + $0x15f] sm:$0xff]
        %v7179 = vld [vmem:[#allocation2 + $0x167] sm:$0xff]
        %v7180 = vld [vmem:[#allocation2 + $0x16f] sm:$0xff]
        %v7181 = vld [vmem:[#allocation2 + $0x177] sm:$0xff]
        %v7182 = vld [vmem:[#allocation2 + $0x17f] sm:$0xff]
        %v7183 = vld [vmem:[#allocation2 + $0x187] sm:$0xff]
        %v7184 = vld [vmem:[#allocation2 + $0x18f] sm:$0xff]
        %v7185 = vld [vmem:[#allocation2 + $0x197] sm:$0xff]
        %v7186 = vpack.c.bf16 %v7139, %v7138
        %v7187 = vpack.c.bf16 %v7141, %v7140
        %v7188 = vpack.c.bf16 %v7143, %v7142
        %v7189 = vpack.c.bf16 %v7145, %v7144
        %v7190 = vpack.c.bf16 %v7147, %v7146
        %v7191 = vpack.c.bf16 %v7149, %v7148
        %v7192 = vpack.c.bf16 %v7151, %v7150
        %v7193 = vpack.c.bf16 %v7153, %v7152
        %v7194 = vpack.c.bf16 %v7155, %v7154
        %v7195 = vpack.c.bf16 %v7157, %v7156
        %v7196 = vpack.c.bf16 %v7159, %v7158
        %v7197 = vpack.c.bf16 %v7161, %v7160
        %v7198 = vpack.c.bf16 %v7163, %v7162
        %v7199 = vpack.c.bf16 %v7165, %v7164
        %v7200 = vpack.c.bf16 %v7167, %v7166
        %v7201 = vpack.c.bf16 %v7169, %v7168
        %v7202 = vpack.c.bf16 %v7171, %v7170
        %v7203 = vpack.c.bf16 %v7173, %v7172
        %v7204 = vpack.c.bf16 %v7175, %v7174
        %v7205 = vpack.c.bf16 %v7177, %v7176
        %v7206 = vpack.c.bf16 %v7179, %v7178
        %v7207 = vpack.c.bf16 %v7181, %v7180
        %v7208 = vpack.c.bf16 %v7183, %v7182
        %v7209 = vpack.c.bf16 %v7185, %v7184
        %7234 = vrot.lane.b32.xlu0 %v7186, 96
        %v7235 = vpop.permute.xlu0 %7234
        %7236 = vrot.lane.b32.xlu0 %v7187, 96
        %v7237 = vpop.permute.xlu0 %7236
        %7238 = vrot.lane.b32.xlu0 %v7188, 96
        %v7239 = vpop.permute.xlu0 %7238
        %7240 = vrot.lane.b32.xlu0 %v7189, 96
        %v7241 = vpop.permute.xlu0 %7240
        %7242 = vrot.lane.b32.xlu0 %v7190, 96
        %v7243 = vpop.permute.xlu0 %7242
        %7244 = vrot.lane.b32.xlu0 %v7191, 96
        %v7245 = vpop.permute.xlu0 %7244
        %7246 = vrot.lane.b32.xlu0 %v7192, 96
        %v7247 = vpop.permute.xlu0 %7246
        %7248 = vrot.lane.b32.xlu0 %v7193, 96
        %v7249 = vpop.permute.xlu0 %7248
        %7250 = vrot.lane.b32.xlu0 %v7194, 96
        %v7251 = vpop.permute.xlu0 %7250
        %7252 = vrot.lane.b32.xlu0 %v7195, 96
        %v7253 = vpop.permute.xlu0 %7252
        %7254 = vrot.lane.b32.xlu0 %v7196, 96
        %v7255 = vpop.permute.xlu0 %7254
        %7256 = vrot.lane.b32.xlu0 %v7197, 96
        %v7257 = vpop.permute.xlu0 %7256
        %7258 = vrot.lane.b32.xlu0 %v7198, 96
        %v7259 = vpop.permute.xlu0 %7258
        %7260 = vrot.lane.b32.xlu0 %v7199, 96
        %v7261 = vpop.permute.xlu0 %7260
        %7262 = vrot.lane.b32.xlu0 %v7200, 96
        %v7263 = vpop.permute.xlu0 %7262
        %7264 = vrot.lane.b32.xlu0 %v7201, 96
        %v7265 = vpop.permute.xlu0 %7264
        %7266 = vrot.lane.b32.xlu0 %v7202, 96
        %v7267 = vpop.permute.xlu0 %7266
        %7268 = vrot.lane.b32.xlu0 %v7203, 96
        %v7269 = vpop.permute.xlu0 %7268
        %7270 = vrot.lane.b32.xlu0 %v7204, 96
        %v7271 = vpop.permute.xlu0 %7270
        %7272 = vrot.lane.b32.xlu0 %v7205, 96
        %v7273 = vpop.permute.xlu0 %7272
        %7274 = vrot.lane.b32.xlu0 %v7206, 96
        %v7275 = vpop.permute.xlu0 %7274
        %7276 = vrot.lane.b32.xlu0 %v7207, 96
        %v7277 = vpop.permute.xlu0 %7276
        %7278 = vrot.lane.b32.xlu0 %v7208, 96
        %v7279 = vpop.permute.xlu0 %7278
        %7280 = vrot.lane.b32.xlu0 %v7209, 96
        %v7281 = vpop.permute.xlu0 %7280
        %7306 = vst.msk [vmem:[#allocation3] sm:$0xff] %vm1220, %v7235
        %7307 = vst.msk [vmem:[#allocation3 + $0x18] sm:$0xff] %vm1220, %v7237
        %7308 = vst.msk [vmem:[#allocation3 + $0x30] sm:$0xff] %vm1220, %v7239
        %7309 = vst.msk [vmem:[#allocation3 + $0x48] sm:$0xff] %vm1220, %v7241
        %7310 = vst.msk [vmem:[#allocation3 + $0x60] sm:$0xff] %vm1220, %v7243
        %7311 = vst.msk [vmem:[#allocation3 + $0x78] sm:$0xff] %vm1220, %v7245
        %7312 = vst.msk [vmem:[#allocation3 + $0x90] sm:$0xff] %vm1220, %v7247
        %7313 = vst.msk [vmem:[#allocation3 + $0xa8] sm:$0xff] %vm1220, %v7249
        %7314 = vst.msk [vmem:[#allocation3 + $0xc0] sm:$0xff] %vm1220, %v7251
        %7315 = vst.msk [vmem:[#allocation3 + $0xd8] sm:$0xff] %vm1220, %v7253
        %7316 = vst.msk [vmem:[#allocation3 + $0xf0] sm:$0xff] %vm1220, %v7255
        %7317 = vst.msk [vmem:[#allocation3 + $0x108] sm:$0xff] %vm1220, %v7257
        %7318 = vst.msk [vmem:[#allocation3 + $0x120] sm:$0xff] %vm1220, %v7259
        %7319 = vst.msk [vmem:[#allocation3 + $0x138] sm:$0xff] %vm1220, %v7261
        %7320 = vst.msk [vmem:[#allocation3 + $0x150] sm:$0xff] %vm1220, %v7263
        %7321 = vst.msk [vmem:[#allocation3 + $0x168] sm:$0xff] %vm1220, %v7265
        %7322 = vst.msk [vmem:[#allocation3 + $0x180] sm:$0xff] %vm1220, %v7267
        %7323 = vst.msk [vmem:[#allocation3 + $0x198] sm:$0xff] %vm1220, %v7269
        %7324 = vst.msk [vmem:[#allocation3 + $0x1b0] sm:$0xff] %vm1220, %v7271
        %7325 = vst.msk [vmem:[#allocation3 + $0x1c8] sm:$0xff] %vm1220, %v7273
        %7326 = vst.msk [vmem:[#allocation3 + $0x1e0] sm:$0xff] %vm1220, %v7275
        %7327 = vst.msk [vmem:[#allocation3 + $0x1f8] sm:$0xff] %vm1220, %v7277
        %7328 = vst.msk [vmem:[#allocation3 + $0x210] sm:$0xff] %vm1220, %v7279
        %7329 = vst.msk [vmem:[#allocation3 + $0x228] sm:$0xff] %vm1220, %v7281
        %v7330 = vld [vmem:[#allocation2 + $0x20] sm:$0xff]
        %v7331 = vld [vmem:[#allocation2 + $0x28] sm:$0xff]
        %v7332 = vld [vmem:[#allocation2 + $0x30] sm:$0xff]
        %v7333 = vld [vmem:[#allocation2 + $0x38] sm:$0xff]
        %v7334 = vld [vmem:[#allocation2 + $0x40] sm:$0xff]
        %v7335 = vld [vmem:[#allocation2 + $0x48] sm:$0xff]
        %v7336 = vld [vmem:[#allocation2 + $0x50] sm:$0xff]
        %v7337 = vld [vmem:[#allocation2 + $0x58] sm:$0xff]
        %v7338 = vld [vmem:[#allocation2 + $0x60] sm:$0xff]
        %v7339 = vld [vmem:[#allocation2 + $0x68] sm:$0xff]
        %v7340 = vld [vmem:[#allocation2 + $0x70] sm:$0xff]
        %v7341 = vld [vmem:[#allocation2 + $0x78] sm:$0xff]
        %v7342 = vld [vmem:[#allocation2 + $0x80] sm:$0xff]
        %v7343 = vld [vmem:[#allocation2 + $0x88] sm:$0xff]
        %v7344 = vld [vmem:[#allocation2 + $0x90] sm:$0xff]
        %v7345 = vld [vmem:[#allocation2 + $0x98] sm:$0xff]
        %v7346 = vld [vmem:[#allocation2 + $0xa0] sm:$0xff]
        %v7347 = vld [vmem:[#allocation2 + $0xa8] sm:$0xff]
        %v7348 = vld [vmem:[#allocation2 + $0xb0] sm:$0xff]
        %v7349 = vld [vmem:[#allocation2 + $0xb8] sm:$0xff]
        %v7350 = vld [vmem:[#allocation2 + $0xc0] sm:$0xff]
        %v7351 = vld [vmem:[#allocation2 + $0xc8] sm:$0xff]
        %v7352 = vld [vmem:[#allocation2 + $0xd0] sm:$0xff]
        %v7353 = vld [vmem:[#allocation2 + $0xd8] sm:$0xff]
        %v7354 = vld [vmem:[#allocation2 + $0xe0] sm:$0xff]
        %v7355 = vld [vmem:[#allocation2 + $0xe8] sm:$0xff]
        %v7356 = vld [vmem:[#allocation2 + $0xf0] sm:$0xff]
        %v7357 = vld [vmem:[#allocation2 + $0xf8] sm:$0xff]
        %v7358 = vld [vmem:[#allocation2 + $0x100] sm:$0xff]
        %v7359 = vld [vmem:[#allocation2 + $0x108] sm:$0xff]
        %v7360 = vld [vmem:[#allocation2 + $0x110] sm:$0xff]
        %v7361 = vld [vmem:[#allocation2 + $0x118] sm:$0xff]
        %v7362 = vld [vmem:[#allocation2 + $0x120] sm:$0xff]
        %v7363 = vld [vmem:[#allocation2 + $0x128] sm:$0xff]
        %v7364 = vld [vmem:[#allocation2 + $0x130] sm:$0xff]
        %v7365 = vld [vmem:[#allocation2 + $0x138] sm:$0xff]
        %v7366 = vld [vmem:[#allocation2 + $0x140] sm:$0xff]
        %v7367 = vld [vmem:[#allocation2 + $0x148] sm:$0xff]
        %v7368 = vld [vmem:[#allocation2 + $0x150] sm:$0xff]
        %v7369 = vld [vmem:[#allocation2 + $0x158] sm:$0xff]
        %v7370 = vld [vmem:[#allocation2 + $0x160] sm:$0xff]
        %v7371 = vld [vmem:[#allocation2 + $0x168] sm:$0xff]
        %v7372 = vld [vmem:[#allocation2 + $0x170] sm:$0xff]
        %v7373 = vld [vmem:[#allocation2 + $0x178] sm:$0xff]
        %v7374 = vld [vmem:[#allocation2 + $0x180] sm:$0xff]
        %v7375 = vld [vmem:[#allocation2 + $0x188] sm:$0xff]
        %v7376 = vld [vmem:[#allocation2 + $0x190] sm:$0xff]
        %v7377 = vld [vmem:[#allocation2 + $0x198] sm:$0xff]
        %v7378 = vpack.c.bf16 %v7331, %v7330
        %v7379 = vpack.c.bf16 %v7333, %v7332
        %v7380 = vpack.c.bf16 %v7335, %v7334
        %v7381 = vpack.c.bf16 %v7337, %v7336
        %v7382 = vpack.c.bf16 %v7339, %v7338
        %v7383 = vpack.c.bf16 %v7341, %v7340
        %v7384 = vpack.c.bf16 %v7343, %v7342
        %v7385 = vpack.c.bf16 %v7345, %v7344
        %v7386 = vpack.c.bf16 %v7347, %v7346
        %v7387 = vpack.c.bf16 %v7349, %v7348
        %v7388 = vpack.c.bf16 %v7351, %v7350
        %v7389 = vpack.c.bf16 %v7353, %v7352
        %v7390 = vpack.c.bf16 %v7355, %v7354
        %v7391 = vpack.c.bf16 %v7357, %v7356
        %v7392 = vpack.c.bf16 %v7359, %v7358
        %v7393 = vpack.c.bf16 %v7361, %v7360
        %v7394 = vpack.c.bf16 %v7363, %v7362
        %v7395 = vpack.c.bf16 %v7365, %v7364
        %v7396 = vpack.c.bf16 %v7367, %v7366
        %v7397 = vpack.c.bf16 %v7369, %v7368
        %v7398 = vpack.c.bf16 %v7371, %v7370
        %v7399 = vpack.c.bf16 %v7373, %v7372
        %v7400 = vpack.c.bf16 %v7375, %v7374
        %v7401 = vpack.c.bf16 %v7377, %v7376
        %7402 = vst.msk [vmem:[#allocation3 + $0x8] sm:$0xff] %vm386, %v7378
        %7403 = vst.msk [vmem:[#allocation3 + $0x20] sm:$0xff] %vm386, %v7379
        %7404 = vst.msk [vmem:[#allocation3 + $0x38] sm:$0xff] %vm386, %v7380
        %7405 = vst.msk [vmem:[#allocation3 + $0x50] sm:$0xff] %vm386, %v7381
        %7406 = vst.msk [vmem:[#allocation3 + $0x68] sm:$0xff] %vm386, %v7382
        %7407 = vst.msk [vmem:[#allocation3 + $0x80] sm:$0xff] %vm386, %v7383
        %7408 = vst.msk [vmem:[#allocation3 + $0x98] sm:$0xff] %vm386, %v7384
        %7409 = vst.msk [vmem:[#allocation3 + $0xb0] sm:$0xff] %vm386, %v7385
        %7410 = vst.msk [vmem:[#allocation3 + $0xc8] sm:$0xff] %vm386, %v7386
        %7411 = vst.msk [vmem:[#allocation3 + $0xe0] sm:$0xff] %vm386, %v7387
        %7412 = vst.msk [vmem:[#allocation3 + $0xf8] sm:$0xff] %vm386, %v7388
        %7413 = vst.msk [vmem:[#allocation3 + $0x110] sm:$0xff] %vm386, %v7389
        %7414 = vst.msk [vmem:[#allocation3 + $0x128] sm:$0xff] %vm386, %v7390
        %7415 = vst.msk [vmem:[#allocation3 + $0x140] sm:$0xff] %vm386, %v7391
        %7416 = vst.msk [vmem:[#allocation3 + $0x158] sm:$0xff] %vm386, %v7392
        %7417 = vst.msk [vmem:[#allocation3 + $0x170] sm:$0xff] %vm386, %v7393
        %7418 = vst.msk [vmem:[#allocation3 + $0x188] sm:$0xff] %vm386, %v7394
        %7419 = vst.msk [vmem:[#allocation3 + $0x1a0] sm:$0xff] %vm386, %v7395
        %7420 = vst.msk [vmem:[#allocation3 + $0x1b8] sm:$0xff] %vm386, %v7396
        %7421 = vst.msk [vmem:[#allocation3 + $0x1d0] sm:$0xff] %vm386, %v7397
        %7422 = vst.msk [vmem:[#allocation3 + $0x1e8] sm:$0xff] %vm386, %v7398
        %7423 = vst.msk [vmem:[#allocation3 + $0x200] sm:$0xff] %vm386, %v7399
        %7424 = vst.msk [vmem:[#allocation3 + $0x218] sm:$0xff] %vm386, %v7400
        %7425 = vst.msk [vmem:[#allocation3 + $0x230] sm:$0xff] %vm386, %v7401
        %v7426 = vld [vmem:[#allocation2 + $0x21] sm:$0xff]
        %v7427 = vld [vmem:[#allocation2 + $0x29] sm:$0xff]
        %v7428 = vld [vmem:[#allocation2 + $0x31] sm:$0xff]
        %v7429 = vld [vmem:[#allocation2 + $0x39] sm:$0xff]
        %v7430 = vld [vmem:[#allocation2 + $0x41] sm:$0xff]
        %v7431 = vld [vmem:[#allocation2 + $0x49] sm:$0xff]
        %v7432 = vld [vmem:[#allocation2 + $0x51] sm:$0xff]
        %v7433 = vld [vmem:[#allocation2 + $0x59] sm:$0xff]
        %v7434 = vld [vmem:[#allocation2 + $0x61] sm:$0xff]
        %v7435 = vld [vmem:[#allocation2 + $0x69] sm:$0xff]
        %v7436 = vld [vmem:[#allocation2 + $0x71] sm:$0xff]
        %v7437 = vld [vmem:[#allocation2 + $0x79] sm:$0xff]
        %v7438 = vld [vmem:[#allocation2 + $0x81] sm:$0xff]
        %v7439 = vld [vmem:[#allocation2 + $0x89] sm:$0xff]
        %v7440 = vld [vmem:[#allocation2 + $0x91] sm:$0xff]
        %v7441 = vld [vmem:[#allocation2 + $0x99] sm:$0xff]
        %v7442 = vld [vmem:[#allocation2 + $0xa1] sm:$0xff]
        %v7443 = vld [vmem:[#allocation2 + $0xa9] sm:$0xff]
        %v7444 = vld [vmem:[#allocation2 + $0xb1] sm:$0xff]
        %v7445 = vld [vmem:[#allocation2 + $0xb9] sm:$0xff]
        %v7446 = vld [vmem:[#allocation2 + $0xc1] sm:$0xff]
        %v7447 = vld [vmem:[#allocation2 + $0xc9] sm:$0xff]
        %v7448 = vld [vmem:[#allocation2 + $0xd1] sm:$0xff]
        %v7449 = vld [vmem:[#allocation2 + $0xd9] sm:$0xff]
        %v7450 = vld [vmem:[#allocation2 + $0xe1] sm:$0xff]
        %v7451 = vld [vmem:[#allocation2 + $0xe9] sm:$0xff]
        %v7452 = vld [vmem:[#allocation2 + $0xf1] sm:$0xff]
        %v7453 = vld [vmem:[#allocation2 + $0xf9] sm:$0xff]
        %v7454 = vld [vmem:[#allocation2 + $0x101] sm:$0xff]
        %v7455 = vld [vmem:[#allocation2 + $0x109] sm:$0xff]
        %v7456 = vld [vmem:[#allocation2 + $0x111] sm:$0xff]
        %v7457 = vld [vmem:[#allocation2 + $0x119] sm:$0xff]
        %v7458 = vld [vmem:[#allocation2 + $0x121] sm:$0xff]
        %v7459 = vld [vmem:[#allocation2 + $0x129] sm:$0xff]
        %v7460 = vld [vmem:[#allocation2 + $0x131] sm:$0xff]
        %v7461 = vld [vmem:[#allocation2 + $0x139] sm:$0xff]
        %v7462 = vld [vmem:[#allocation2 + $0x141] sm:$0xff]
        %v7463 = vld [vmem:[#allocation2 + $0x149] sm:$0xff]
        %v7464 = vld [vmem:[#allocation2 + $0x151] sm:$0xff]
        %v7465 = vld [vmem:[#allocation2 + $0x159] sm:$0xff]
        %v7466 = vld [vmem:[#allocation2 + $0x161] sm:$0xff]
        %v7467 = vld [vmem:[#allocation2 + $0x169] sm:$0xff]
        %v7468 = vld [vmem:[#allocation2 + $0x171] sm:$0xff]
        %v7469 = vld [vmem:[#allocation2 + $0x179] sm:$0xff]
        %v7470 = vld [vmem:[#allocation2 + $0x181] sm:$0xff]
        %v7471 = vld [vmem:[#allocation2 + $0x189] sm:$0xff]
        %v7472 = vld [vmem:[#allocation2 + $0x191] sm:$0xff]
        %v7473 = vld [vmem:[#allocation2 + $0x199] sm:$0xff]
        %v7474 = vpack.c.bf16 %v7427, %v7426
        %v7475 = vpack.c.bf16 %v7429, %v7428
        %v7476 = vpack.c.bf16 %v7431, %v7430
        %v7477 = vpack.c.bf16 %v7433, %v7432
        %v7478 = vpack.c.bf16 %v7435, %v7434
        %v7479 = vpack.c.bf16 %v7437, %v7436
        %v7480 = vpack.c.bf16 %v7439, %v7438
        %v7481 = vpack.c.bf16 %v7441, %v7440
        %v7482 = vpack.c.bf16 %v7443, %v7442
        %v7483 = vpack.c.bf16 %v7445, %v7444
        %v7484 = vpack.c.bf16 %v7447, %v7446
        %v7485 = vpack.c.bf16 %v7449, %v7448
        %v7486 = vpack.c.bf16 %v7451, %v7450
        %v7487 = vpack.c.bf16 %v7453, %v7452
        %v7488 = vpack.c.bf16 %v7455, %v7454
        %v7489 = vpack.c.bf16 %v7457, %v7456
        %v7490 = vpack.c.bf16 %v7459, %v7458
        %v7491 = vpack.c.bf16 %v7461, %v7460
        %v7492 = vpack.c.bf16 %v7463, %v7462
        %v7493 = vpack.c.bf16 %v7465, %v7464
        %v7494 = vpack.c.bf16 %v7467, %v7466
        %v7495 = vpack.c.bf16 %v7469, %v7468
        %v7496 = vpack.c.bf16 %v7471, %v7470
        %v7497 = vpack.c.bf16 %v7473, %v7472
        %7522 = vrot.lane.b32.xlu0 %v7474, 32
        %v7523 = vpop.permute.xlu0 %7522
        %7524 = vrot.lane.b32.xlu0 %v7475, 32
        %v7525 = vpop.permute.xlu0 %7524
        %7526 = vrot.lane.b32.xlu0 %v7476, 32
        %v7527 = vpop.permute.xlu0 %7526
        %7528 = vrot.lane.b32.xlu0 %v7477, 32
        %v7529 = vpop.permute.xlu0 %7528
        %7530 = vrot.lane.b32.xlu0 %v7478, 32
        %v7531 = vpop.permute.xlu0 %7530
        %7532 = vrot.lane.b32.xlu0 %v7479, 32
        %v7533 = vpop.permute.xlu0 %7532
        %7534 = vrot.lane.b32.xlu0 %v7480, 32
        %v7535 = vpop.permute.xlu0 %7534
        %7536 = vrot.lane.b32.xlu0 %v7481, 32
        %v7537 = vpop.permute.xlu0 %7536
        %7538 = vrot.lane.b32.xlu0 %v7482, 32
        %v7539 = vpop.permute.xlu0 %7538
        %7540 = vrot.lane.b32.xlu0 %v7483, 32
        %v7541 = vpop.permute.xlu0 %7540
        %7542 = vrot.lane.b32.xlu0 %v7484, 32
        %v7543 = vpop.permute.xlu0 %7542
        %7544 = vrot.lane.b32.xlu0 %v7485, 32
        %v7545 = vpop.permute.xlu0 %7544
        %7546 = vrot.lane.b32.xlu0 %v7486, 32
        %v7547 = vpop.permute.xlu0 %7546
        %7548 = vrot.lane.b32.xlu0 %v7487, 32
        %v7549 = vpop.permute.xlu0 %7548
        %7550 = vrot.lane.b32.xlu0 %v7488, 32
        %v7551 = vpop.permute.xlu0 %7550
        %7552 = vrot.lane.b32.xlu0 %v7489, 32
        %v7553 = vpop.permute.xlu0 %7552
        %7554 = vrot.lane.b32.xlu0 %v7490, 32
        %v7555 = vpop.permute.xlu0 %7554
        %7556 = vrot.lane.b32.xlu0 %v7491, 32
        %v7557 = vpop.permute.xlu0 %7556
        %7558 = vrot.lane.b32.xlu0 %v7492, 32
        %v7559 = vpop.permute.xlu0 %7558
        %7560 = vrot.lane.b32.xlu0 %v7493, 32
        %v7561 = vpop.permute.xlu0 %7560
        %7562 = vrot.lane.b32.xlu0 %v7494, 32
        %v7563 = vpop.permute.xlu0 %7562
        %7564 = vrot.lane.b32.xlu0 %v7495, 32
        %v7565 = vpop.permute.xlu0 %7564
        %7566 = vrot.lane.b32.xlu0 %v7496, 32
        %v7567 = vpop.permute.xlu0 %7566
        %7568 = vrot.lane.b32.xlu0 %v7497, 32
        %v7569 = vpop.permute.xlu0 %7568
        %7594 = vst.msk [vmem:[#allocation3 + $0x8] sm:$0xff] %vm834, %v7523
        %7595 = vst.msk [vmem:[#allocation3 + $0x20] sm:$0xff] %vm834, %v7525
        %7596 = vst.msk [vmem:[#allocation3 + $0x38] sm:$0xff] %vm834, %v7527
        %7597 = vst.msk [vmem:[#allocation3 + $0x50] sm:$0xff] %vm834, %v7529
        %7598 = vst.msk [vmem:[#allocation3 + $0x68] sm:$0xff] %vm834, %v7531
        %7599 = vst.msk [vmem:[#allocation3 + $0x80] sm:$0xff] %vm834, %v7533
        %7600 = vst.msk [vmem:[#allocation3 + $0x98] sm:$0xff] %vm834, %v7535
        %7601 = vst.msk [vmem:[#allocation3 + $0xb0] sm:$0xff] %vm834, %v7537
        %7602 = vst.msk [vmem:[#allocation3 + $0xc8] sm:$0xff] %vm834, %v7539
        %7603 = vst.msk [vmem:[#allocation3 + $0xe0] sm:$0xff] %vm834, %v7541
        %7604 = vst.msk [vmem:[#allocation3 + $0xf8] sm:$0xff] %vm834, %v7543
        %7605 = vst.msk [vmem:[#allocation3 + $0x110] sm:$0xff] %vm834, %v7545
        %7606 = vst.msk [vmem:[#allocation3 + $0x128] sm:$0xff] %vm834, %v7547
        %7607 = vst.msk [vmem:[#allocation3 + $0x140] sm:$0xff] %vm834, %v7549
        %7608 = vst.msk [vmem:[#allocation3 + $0x158] sm:$0xff] %vm834, %v7551
        %7609 = vst.msk [vmem:[#allocation3 + $0x170] sm:$0xff] %vm834, %v7553
        %7610 = vst.msk [vmem:[#allocation3 + $0x188] sm:$0xff] %vm834, %v7555
        %7611 = vst.msk [vmem:[#allocation3 + $0x1a0] sm:$0xff] %vm834, %v7557
        %7612 = vst.msk [vmem:[#allocation3 + $0x1b8] sm:$0xff] %vm834, %v7559
        %7613 = vst.msk [vmem:[#allocation3 + $0x1d0] sm:$0xff] %vm834, %v7561
        %7614 = vst.msk [vmem:[#allocation3 + $0x1e8] sm:$0xff] %vm834, %v7563
        %7615 = vst.msk [vmem:[#allocation3 + $0x200] sm:$0xff] %vm834, %v7565
        %7616 = vst.msk [vmem:[#allocation3 + $0x218] sm:$0xff] %vm834, %v7567
        %7617 = vst.msk [vmem:[#allocation3 + $0x230] sm:$0xff] %vm834, %v7569
        %v7618 = vld [vmem:[#allocation2 + $0x37] sm:$0xff]
        %v7619 = vld [vmem:[#allocation2 + $0x3f] sm:$0xff]
        %v7620 = vld [vmem:[#allocation2 + $0x47] sm:$0xff]
        %v7621 = vld [vmem:[#allocation2 + $0x4f] sm:$0xff]
        %v7622 = vld [vmem:[#allocation2 + $0x57] sm:$0xff]
        %v7623 = vld [vmem:[#allocation2 + $0x5f] sm:$0xff]
        %v7624 = vld [vmem:[#allocation2 + $0x67] sm:$0xff]
        %v7625 = vld [vmem:[#allocation2 + $0x6f] sm:$0xff]
        %v7626 = vld [vmem:[#allocation2 + $0x77] sm:$0xff]
        %v7627 = vld [vmem:[#allocation2 + $0x7f] sm:$0xff]
        %v7628 = vld [vmem:[#allocation2 + $0x87] sm:$0xff]
        %v7629 = vld [vmem:[#allocation2 + $0x8f] sm:$0xff]
        %v7630 = vld [vmem:[#allocation2 + $0x97] sm:$0xff]
        %v7631 = vld [vmem:[#allocation2 + $0x9f] sm:$0xff]
        %v7632 = vld [vmem:[#allocation2 + $0xa7] sm:$0xff]
        %v7633 = vld [vmem:[#allocation2 + $0xaf] sm:$0xff]
        %v7634 = vld [vmem:[#allocation2 + $0xb7] sm:$0xff]
        %v7635 = vld [vmem:[#allocation2 + $0xbf] sm:$0xff]
        %v7636 = vld [vmem:[#allocation2 + $0xc7] sm:$0xff]
        %v7637 = vld [vmem:[#allocation2 + $0xcf] sm:$0xff]
        %v7638 = vld [vmem:[#allocation2 + $0xd7] sm:$0xff]
        %v7639 = vld [vmem:[#allocation2 + $0xdf] sm:$0xff]
        %v7640 = vld [vmem:[#allocation2 + $0xe7] sm:$0xff]
        %v7641 = vld [vmem:[#allocation2 + $0xef] sm:$0xff]
        %v7642 = vld [vmem:[#allocation2 + $0xf7] sm:$0xff]
        %v7643 = vld [vmem:[#allocation2 + $0xff] sm:$0xff]
        %v7644 = vld [vmem:[#allocation2 + $0x107] sm:$0xff]
        %v7645 = vld [vmem:[#allocation2 + $0x10f] sm:$0xff]
        %v7646 = vld [vmem:[#allocation2 + $0x117] sm:$0xff]
        %v7647 = vld [vmem:[#allocation2 + $0x11f] sm:$0xff]
        %v7648 = vld [vmem:[#allocation2 + $0x127] sm:$0xff]
        %v7649 = vld [vmem:[#allocation2 + $0x12f] sm:$0xff]
        %v7650 = vld [vmem:[#allocation2 + $0x137] sm:$0xff]
        %v7651 = vld [vmem:[#allocation2 + $0x13f] sm:$0xff]
        %v7652 = vld [vmem:[#allocation2 + $0x147] sm:$0xff]
        %v7653 = vld [vmem:[#allocation2 + $0x14f] sm:$0xff]
        %v7654 = vld [vmem:[#allocation2 + $0x157] sm:$0xff]
        %v7655 = vld [vmem:[#allocation2 + $0x15f] sm:$0xff]
        %v7656 = vld [vmem:[#allocation2 + $0x167] sm:$0xff]
        %v7657 = vld [vmem:[#allocation2 + $0x16f] sm:$0xff]
        %v7658 = vld [vmem:[#allocation2 + $0x177] sm:$0xff]
        %v7659 = vld [vmem:[#allocation2 + $0x17f] sm:$0xff]
        %v7660 = vld [vmem:[#allocation2 + $0x187] sm:$0xff]
        %v7661 = vld [vmem:[#allocation2 + $0x18f] sm:$0xff]
        %v7662 = vld [vmem:[#allocation2 + $0x197] sm:$0xff]
        %v7663 = vld [vmem:[#allocation2 + $0x19f] sm:$0xff]
        %v7664 = vld [vmem:[#allocation2 + $0x1a7] sm:$0xff]
        %v7665 = vld [vmem:[#allocation2 + $0x1af] sm:$0xff]
        %v7666 = vpack.c.bf16 %v7619, %v7618
        %v7667 = vpack.c.bf16 %v7621, %v7620
        %v7668 = vpack.c.bf16 %v7623, %v7622
        %v7669 = vpack.c.bf16 %v7625, %v7624
        %v7670 = vpack.c.bf16 %v7627, %v7626
        %v7671 = vpack.c.bf16 %v7629, %v7628
        %v7672 = vpack.c.bf16 %v7631, %v7630
        %v7673 = vpack.c.bf16 %v7633, %v7632
        %v7674 = vpack.c.bf16 %v7635, %v7634
        %v7675 = vpack.c.bf16 %v7637, %v7636
        %v7676 = vpack.c.bf16 %v7639, %v7638
        %v7677 = vpack.c.bf16 %v7641, %v7640
        %v7678 = vpack.c.bf16 %v7643, %v7642
        %v7679 = vpack.c.bf16 %v7645, %v7644
        %v7680 = vpack.c.bf16 %v7647, %v7646
        %v7681 = vpack.c.bf16 %v7649, %v7648
        %v7682 = vpack.c.bf16 %v7651, %v7650
        %v7683 = vpack.c.bf16 %v7653, %v7652
        %v7684 = vpack.c.bf16 %v7655, %v7654
        %v7685 = vpack.c.bf16 %v7657, %v7656
        %v7686 = vpack.c.bf16 %v7659, %v7658
        %v7687 = vpack.c.bf16 %v7661, %v7660
        %v7688 = vpack.c.bf16 %v7663, %v7662
        %v7689 = vpack.c.bf16 %v7665, %v7664
        %7714 = vrot.lane.b32.xlu0 %v7666, 64
        %v7715 = vpop.permute.xlu0 %7714
        %7716 = vrot.lane.b32.xlu0 %v7667, 64
        %v7717 = vpop.permute.xlu0 %7716
        %7718 = vrot.lane.b32.xlu0 %v7668, 64
        %v7719 = vpop.permute.xlu0 %7718
        %7720 = vrot.lane.b32.xlu0 %v7669, 64
        %v7721 = vpop.permute.xlu0 %7720
        %7722 = vrot.lane.b32.xlu0 %v7670, 64
        %v7723 = vpop.permute.xlu0 %7722
        %7724 = vrot.lane.b32.xlu0 %v7671, 64
        %v7725 = vpop.permute.xlu0 %7724
        %7726 = vrot.lane.b32.xlu0 %v7672, 64
        %v7727 = vpop.permute.xlu0 %7726
        %7728 = vrot.lane.b32.xlu0 %v7673, 64
        %v7729 = vpop.permute.xlu0 %7728
        %7730 = vrot.lane.b32.xlu0 %v7674, 64
        %v7731 = vpop.permute.xlu0 %7730
        %7732 = vrot.lane.b32.xlu0 %v7675, 64
        %v7733 = vpop.permute.xlu0 %7732
        %7734 = vrot.lane.b32.xlu0 %v7676, 64
        %v7735 = vpop.permute.xlu0 %7734
        %7736 = vrot.lane.b32.xlu0 %v7677, 64
        %v7737 = vpop.permute.xlu0 %7736
        %7738 = vrot.lane.b32.xlu0 %v7678, 64
        %v7739 = vpop.permute.xlu0 %7738
        %7740 = vrot.lane.b32.xlu0 %v7679, 64
        %v7741 = vpop.permute.xlu0 %7740
        %7742 = vrot.lane.b32.xlu0 %v7680, 64
        %v7743 = vpop.permute.xlu0 %7742
        %7744 = vrot.lane.b32.xlu0 %v7681, 64
        %v7745 = vpop.permute.xlu0 %7744
        %7746 = vrot.lane.b32.xlu0 %v7682, 64
        %v7747 = vpop.permute.xlu0 %7746
        %7748 = vrot.lane.b32.xlu0 %v7683, 64
        %v7749 = vpop.permute.xlu0 %7748
        %7750 = vrot.lane.b32.xlu0 %v7684, 64
        %v7751 = vpop.permute.xlu0 %7750
        %7752 = vrot.lane.b32.xlu0 %v7685, 64
        %v7753 = vpop.permute.xlu0 %7752
        %7754 = vrot.lane.b32.xlu0 %v7686, 64
        %v7755 = vpop.permute.xlu0 %7754
        %7756 = vrot.lane.b32.xlu0 %v7687, 64
        %v7757 = vpop.permute.xlu0 %7756
        %7758 = vrot.lane.b32.xlu0 %v7688, 64
        %v7759 = vpop.permute.xlu0 %7758
        %7760 = vrot.lane.b32.xlu0 %v7689, 64
        %v7761 = vpop.permute.xlu0 %7760
        %7786 = vst.msk [vmem:[#allocation3 + $0x8] sm:$0xff] %vm1027, %v7715
        %7787 = vst.msk [vmem:[#allocation3 + $0x20] sm:$0xff] %vm1027, %v7717
        %7788 = vst.msk [vmem:[#allocation3 + $0x38] sm:$0xff] %vm1027, %v7719
        %7789 = vst.msk [vmem:[#allocation3 + $0x50] sm:$0xff] %vm1027, %v7721
        %7790 = vst.msk [vmem:[#allocation3 + $0x68] sm:$0xff] %vm1027, %v7723
        %7791 = vst.msk [vmem:[#allocation3 + $0x80] sm:$0xff] %vm1027, %v7725
        %7792 = vst.msk [vmem:[#allocation3 + $0x98] sm:$0xff] %vm1027, %v7727
        %7793 = vst.msk [vmem:[#allocation3 + $0xb0] sm:$0xff] %vm1027, %v7729
        %7794 = vst.msk [vmem:[#allocation3 + $0xc8] sm:$0xff] %vm1027, %v7731
        %7795 = vst.msk [vmem:[#allocation3 + $0xe0] sm:$0xff] %vm1027, %v7733
        %7796 = vst.msk [vmem:[#allocation3 + $0xf8] sm:$0xff] %vm1027, %v7735
        %7797 = vst.msk [vmem:[#allocation3 + $0x110] sm:$0xff] %vm1027, %v7737
        %7798 = vst.msk [vmem:[#allocation3 + $0x128] sm:$0xff] %vm1027, %v7739
        %7799 = vst.msk [vmem:[#allocation3 + $0x140] sm:$0xff] %vm1027, %v7741
        %7800 = vst.msk [vmem:[#allocation3 + $0x158] sm:$0xff] %vm1027, %v7743
        %7801 = vst.msk [vmem:[#allocation3 + $0x170] sm:$0xff] %vm1027, %v7745
        %7802 = vst.msk [vmem:[#allocation3 + $0x188] sm:$0xff] %vm1027, %v7747
        %7803 = vst.msk [vmem:[#allocation3 + $0x1a0] sm:$0xff] %vm1027, %v7749
        %7804 = vst.msk [vmem:[#allocation3 + $0x1b8] sm:$0xff] %vm1027, %v7751
        %7805 = vst.msk [vmem:[#allocation3 + $0x1d0] sm:$0xff] %vm1027, %v7753
        %7806 = vst.msk [vmem:[#allocation3 + $0x1e8] sm:$0xff] %vm1027, %v7755
        %7807 = vst.msk [vmem:[#allocation3 + $0x200] sm:$0xff] %vm1027, %v7757
        %7808 = vst.msk [vmem:[#allocation3 + $0x218] sm:$0xff] %vm1027, %v7759
        %7809 = vst.msk [vmem:[#allocation3 + $0x230] sm:$0xff] %vm1027, %v7761
        %v7810 = vld [vmem:[#allocation2 + $0x38] sm:$0xff]
        %v7811 = vld [vmem:[#allocation2 + $0x40] sm:$0xff]
        %v7812 = vld [vmem:[#allocation2 + $0x48] sm:$0xff]
        %v7813 = vld [vmem:[#allocation2 + $0x50] sm:$0xff]
        %v7814 = vld [vmem:[#allocation2 + $0x58] sm:$0xff]
        %v7815 = vld [vmem:[#allocation2 + $0x60] sm:$0xff]
        %v7816 = vld [vmem:[#allocation2 + $0x68] sm:$0xff]
        %v7817 = vld [vmem:[#allocation2 + $0x70] sm:$0xff]
        %v7818 = vld [vmem:[#allocation2 + $0x78] sm:$0xff]
        %v7819 = vld [vmem:[#allocation2 + $0x80] sm:$0xff]
        %v7820 = vld [vmem:[#allocation2 + $0x88] sm:$0xff]
        %v7821 = vld [vmem:[#allocation2 + $0x90] sm:$0xff]
        %v7822 = vld [vmem:[#allocation2 + $0x98] sm:$0xff]
        %v7823 = vld [vmem:[#allocation2 + $0xa0] sm:$0xff]
        %v7824 = vld [vmem:[#allocation2 + $0xa8] sm:$0xff]
        %v7825 = vld [vmem:[#allocation2 + $0xb0] sm:$0xff]
        %v7826 = vld [vmem:[#allocation2 + $0xb8] sm:$0xff]
        %v7827 = vld [vmem:[#allocation2 + $0xc0] sm:$0xff]
        %v7828 = vld [vmem:[#allocation2 + $0xc8] sm:$0xff]
        %v7829 = vld [vmem:[#allocation2 + $0xd0] sm:$0xff]
        %v7830 = vld [vmem:[#allocation2 + $0xd8] sm:$0xff]
        %v7831 = vld [vmem:[#allocation2 + $0xe0] sm:$0xff]
        %v7832 = vld [vmem:[#allocation2 + $0xe8] sm:$0xff]
        %v7833 = vld [vmem:[#allocation2 + $0xf0] sm:$0xff]
        %v7834 = vld [vmem:[#allocation2 + $0xf8] sm:$0xff]
        %v7835 = vld [vmem:[#allocation2 + $0x100] sm:$0xff]
        %v7836 = vld [vmem:[#allocation2 + $0x108] sm:$0xff]
        %v7837 = vld [vmem:[#allocation2 + $0x110] sm:$0xff]
        %v7838 = vld [vmem:[#allocation2 + $0x118] sm:$0xff]
        %v7839 = vld [vmem:[#allocation2 + $0x120] sm:$0xff]
        %v7840 = vld [vmem:[#allocation2 + $0x128] sm:$0xff]
        %v7841 = vld [vmem:[#allocation2 + $0x130] sm:$0xff]
        %v7842 = vld [vmem:[#allocation2 + $0x138] sm:$0xff]
        %v7843 = vld [vmem:[#allocation2 + $0x140] sm:$0xff]
        %v7844 = vld [vmem:[#allocation2 + $0x148] sm:$0xff]
        %v7845 = vld [vmem:[#allocation2 + $0x150] sm:$0xff]
        %v7846 = vld [vmem:[#allocation2 + $0x158] sm:$0xff]
        %v7847 = vld [vmem:[#allocation2 + $0x160] sm:$0xff]
        %v7848 = vld [vmem:[#allocation2 + $0x168] sm:$0xff]
        %v7849 = vld [vmem:[#allocation2 + $0x170] sm:$0xff]
        %v7850 = vld [vmem:[#allocation2 + $0x178] sm:$0xff]
        %v7851 = vld [vmem:[#allocation2 + $0x180] sm:$0xff]
        %v7852 = vld [vmem:[#allocation2 + $0x188] sm:$0xff]
        %v7853 = vld [vmem:[#allocation2 + $0x190] sm:$0xff]
        %v7854 = vld [vmem:[#allocation2 + $0x198] sm:$0xff]
        %v7855 = vld [vmem:[#allocation2 + $0x1a0] sm:$0xff]
        %v7856 = vld [vmem:[#allocation2 + $0x1a8] sm:$0xff]
        %v7857 = vld [vmem:[#allocation2 + $0x1b0] sm:$0xff]
        %v7858 = vpack.c.bf16 %v7811, %v7810
        %v7859 = vpack.c.bf16 %v7813, %v7812
        %v7860 = vpack.c.bf16 %v7815, %v7814
        %v7861 = vpack.c.bf16 %v7817, %v7816
        %v7862 = vpack.c.bf16 %v7819, %v7818
        %v7863 = vpack.c.bf16 %v7821, %v7820
        %v7864 = vpack.c.bf16 %v7823, %v7822
        %v7865 = vpack.c.bf16 %v7825, %v7824
        %v7866 = vpack.c.bf16 %v7827, %v7826
        %v7867 = vpack.c.bf16 %v7829, %v7828
        %v7868 = vpack.c.bf16 %v7831, %v7830
        %v7869 = vpack.c.bf16 %v7833, %v7832
        %v7870 = vpack.c.bf16 %v7835, %v7834
        %v7871 = vpack.c.bf16 %v7837, %v7836
        %v7872 = vpack.c.bf16 %v7839, %v7838
        %v7873 = vpack.c.bf16 %v7841, %v7840
        %v7874 = vpack.c.bf16 %v7843, %v7842
        %v7875 = vpack.c.bf16 %v7845, %v7844
        %v7876 = vpack.c.bf16 %v7847, %v7846
        %v7877 = vpack.c.bf16 %v7849, %v7848
        %v7878 = vpack.c.bf16 %v7851, %v7850
        %v7879 = vpack.c.bf16 %v7853, %v7852
        %v7880 = vpack.c.bf16 %v7855, %v7854
        %v7881 = vpack.c.bf16 %v7857, %v7856
        %7906 = vrot.lane.b32.xlu0 %v7858, 96
        %v7907 = vpop.permute.xlu0 %7906
        %7908 = vrot.lane.b32.xlu0 %v7859, 96
        %v7909 = vpop.permute.xlu0 %7908
        %7910 = vrot.lane.b32.xlu0 %v7860, 96
        %v7911 = vpop.permute.xlu0 %7910
        %7912 = vrot.lane.b32.xlu0 %v7861, 96
        %v7913 = vpop.permute.xlu0 %7912
        %7914 = vrot.lane.b32.xlu0 %v7862, 96
        %v7915 = vpop.permute.xlu0 %7914
        %7916 = vrot.lane.b32.xlu0 %v7863, 96
        %v7917 = vpop.permute.xlu0 %7916
        %7918 = vrot.lane.b32.xlu0 %v7864, 96
        %v7919 = vpop.permute.xlu0 %7918
        %7920 = vrot.lane.b32.xlu0 %v7865, 96
        %v7921 = vpop.permute.xlu0 %7920
        %7922 = vrot.lane.b32.xlu0 %v7866, 96
        %v7923 = vpop.permute.xlu0 %7922
        %7924 = vrot.lane.b32.xlu0 %v7867, 96
        %v7925 = vpop.permute.xlu0 %7924
        %7926 = vrot.lane.b32.xlu0 %v7868, 96
        %v7927 = vpop.permute.xlu0 %7926
        %7928 = vrot.lane.b32.xlu0 %v7869, 96
        %v7929 = vpop.permute.xlu0 %7928
        %7930 = vrot.lane.b32.xlu0 %v7870, 96
        %v7931 = vpop.permute.xlu0 %7930
        %7932 = vrot.lane.b32.xlu0 %v7871, 96
        %v7933 = vpop.permute.xlu0 %7932
        %7934 = vrot.lane.b32.xlu0 %v7872, 96
        %v7935 = vpop.permute.xlu0 %7934
        %7936 = vrot.lane.b32.xlu0 %v7873, 96
        %v7937 = vpop.permute.xlu0 %7936
        %7938 = vrot.lane.b32.xlu0 %v7874, 96
        %v7939 = vpop.permute.xlu0 %7938
        %7940 = vrot.lane.b32.xlu0 %v7875, 96
        %v7941 = vpop.permute.xlu0 %7940
        %7942 = vrot.lane.b32.xlu0 %v7876, 96
        %v7943 = vpop.permute.xlu0 %7942
        %7944 = vrot.lane.b32.xlu0 %v7877, 96
        %v7945 = vpop.permute.xlu0 %7944
        %7946 = vrot.lane.b32.xlu0 %v7878, 96
        %v7947 = vpop.permute.xlu0 %7946
        %7948 = vrot.lane.b32.xlu0 %v7879, 96
        %v7949 = vpop.permute.xlu0 %7948
        %7950 = vrot.lane.b32.xlu0 %v7880, 96
        %v7951 = vpop.permute.xlu0 %7950
        %7952 = vrot.lane.b32.xlu0 %v7881, 96
        %v7953 = vpop.permute.xlu0 %7952
        %7978 = vst.msk [vmem:[#allocation3 + $0x8] sm:$0xff] %vm1220, %v7907
        %7979 = vst.msk [vmem:[#allocation3 + $0x20] sm:$0xff] %vm1220, %v7909
        %7980 = vst.msk [vmem:[#allocation3 + $0x38] sm:$0xff] %vm1220, %v7911
        %7981 = vst.msk [vmem:[#allocation3 + $0x50] sm:$0xff] %vm1220, %v7913
        %7982 = vst.msk [vmem:[#allocation3 + $0x68] sm:$0xff] %vm1220, %v7915
        %7983 = vst.msk [vmem:[#allocation3 + $0x80] sm:$0xff] %vm1220, %v7917
        %7984 = vst.msk [vmem:[#allocation3 + $0x98] sm:$0xff] %vm1220, %v7919
        %7985 = vst.msk [vmem:[#allocation3 + $0xb0] sm:$0xff] %vm1220, %v7921
        %7986 = vst.msk [vmem:[#allocation3 + $0xc8] sm:$0xff] %vm1220, %v7923
        %7987 = vst.msk [vmem:[#allocation3 + $0xe0] sm:$0xff] %vm1220, %v7925
        %7988 = vst.msk [vmem:[#allocation3 + $0xf8] sm:$0xff] %vm1220, %v7927
        %7989 = vst.msk [vmem:[#allocation3 + $0x110] sm:$0xff] %vm1220, %v7929
        %7990 = vst.msk [vmem:[#allocation3 + $0x128] sm:$0xff] %vm1220, %v7931
        %7991 = vst.msk [vmem:[#allocation3 + $0x140] sm:$0xff] %vm1220, %v7933
        %7992 = vst.msk [vmem:[#allocation3 + $0x158] sm:$0xff] %vm1220, %v7935
        %7993 = vst.msk [vmem:[#allocation3 + $0x170] sm:$0xff] %vm1220, %v7937
        %7994 = vst.msk [vmem:[#allocation3 + $0x188] sm:$0xff] %vm1220, %v7939
        %7995 = vst.msk [vmem:[#allocation3 + $0x1a0] sm:$0xff] %vm1220, %v7941
        %7996 = vst.msk [vmem:[#allocation3 + $0x1b8] sm:$0xff] %vm1220, %v7943
        %7997 = vst.msk [vmem:[#allocation3 + $0x1d0] sm:$0xff] %vm1220, %v7945
        %7998 = vst.msk [vmem:[#allocation3 + $0x1e8] sm:$0xff] %vm1220, %v7947
        %7999 = vst.msk [vmem:[#allocation3 + $0x200] sm:$0xff] %vm1220, %v7949
        %8000 = vst.msk [vmem:[#allocation3 + $0x218] sm:$0xff] %vm1220, %v7951
        %8001 = vst.msk [vmem:[#allocation3 + $0x230] sm:$0xff] %vm1220, %v7953
        %v8002 = vld [vmem:[#allocation2 + $0x39] sm:$0xff]
        %v8003 = vld [vmem:[#allocation2 + $0x41] sm:$0xff]
        %v8004 = vld [vmem:[#allocation2 + $0x49] sm:$0xff]
        %v8005 = vld [vmem:[#allocation2 + $0x51] sm:$0xff]
        %v8006 = vld [vmem:[#allocation2 + $0x59] sm:$0xff]
        %v8007 = vld [vmem:[#allocation2 + $0x61] sm:$0xff]
        %v8008 = vld [vmem:[#allocation2 + $0x69] sm:$0xff]
        %v8009 = vld [vmem:[#allocation2 + $0x71] sm:$0xff]
        %v8010 = vld [vmem:[#allocation2 + $0x79] sm:$0xff]
        %v8011 = vld [vmem:[#allocation2 + $0x81] sm:$0xff]
        %v8012 = vld [vmem:[#allocation2 + $0x89] sm:$0xff]
        %v8013 = vld [vmem:[#allocation2 + $0x91] sm:$0xff]
        %v8014 = vld [vmem:[#allocation2 + $0x99] sm:$0xff]
        %v8015 = vld [vmem:[#allocation2 + $0xa1] sm:$0xff]
        %v8016 = vld [vmem:[#allocation2 + $0xa9] sm:$0xff]
        %v8017 = vld [vmem:[#allocation2 + $0xb1] sm:$0xff]
        %v8018 = vld [vmem:[#allocation2 + $0xb9] sm:$0xff]
        %v8019 = vld [vmem:[#allocation2 + $0xc1] sm:$0xff]
        %v8020 = vld [vmem:[#allocation2 + $0xc9] sm:$0xff]
        %v8021 = vld [vmem:[#allocation2 + $0xd1] sm:$0xff]
        %v8022 = vld [vmem:[#allocation2 + $0xd9] sm:$0xff]
        %v8023 = vld [vmem:[#allocation2 + $0xe1] sm:$0xff]
        %v8024 = vld [vmem:[#allocation2 + $0xe9] sm:$0xff]
        %v8025 = vld [vmem:[#allocation2 + $0xf1] sm:$0xff]
        %v8026 = vld [vmem:[#allocation2 + $0xf9] sm:$0xff]
        %v8027 = vld [vmem:[#allocation2 + $0x101] sm:$0xff]
        %v8028 = vld [vmem:[#allocation2 + $0x109] sm:$0xff]
        %v8029 = vld [vmem:[#allocation2 + $0x111] sm:$0xff]
        %v8030 = vld [vmem:[#allocation2 + $0x119] sm:$0xff]
        %v8031 = vld [vmem:[#allocation2 + $0x121] sm:$0xff]
        %v8032 = vld [vmem:[#allocation2 + $0x129] sm:$0xff]
        %v8033 = vld [vmem:[#allocation2 + $0x131] sm:$0xff]
        %v8034 = vld [vmem:[#allocation2 + $0x139] sm:$0xff]
        %v8035 = vld [vmem:[#allocation2 + $0x141] sm:$0xff]
        %v8036 = vld [vmem:[#allocation2 + $0x149] sm:$0xff]
        %v8037 = vld [vmem:[#allocation2 + $0x151] sm:$0xff]
        %v8038 = vld [vmem:[#allocation2 + $0x159] sm:$0xff]
        %v8039 = vld [vmem:[#allocation2 + $0x161] sm:$0xff]
        %v8040 = vld [vmem:[#allocation2 + $0x169] sm:$0xff]
        %v8041 = vld [vmem:[#allocation2 + $0x171] sm:$0xff]
        %v8042 = vld [vmem:[#allocation2 + $0x179] sm:$0xff]
        %v8043 = vld [vmem:[#allocation2 + $0x181] sm:$0xff]
        %v8044 = vld [vmem:[#allocation2 + $0x189] sm:$0xff]
        %v8045 = vld [vmem:[#allocation2 + $0x191] sm:$0xff]
        %v8046 = vld [vmem:[#allocation2 + $0x199] sm:$0xff]
        %v8047 = vld [vmem:[#allocation2 + $0x1a1] sm:$0xff]
        %v8048 = vld [vmem:[#allocation2 + $0x1a9] sm:$0xff]
        %v8049 = vld [vmem:[#allocation2 + $0x1b1] sm:$0xff]
        %v8050 = vpack.c.bf16 %v8003, %v8002
        %v8051 = vpack.c.bf16 %v8005, %v8004
        %v8052 = vpack.c.bf16 %v8007, %v8006
        %v8053 = vpack.c.bf16 %v8009, %v8008
        %v8054 = vpack.c.bf16 %v8011, %v8010
        %v8055 = vpack.c.bf16 %v8013, %v8012
        %v8056 = vpack.c.bf16 %v8015, %v8014
        %v8057 = vpack.c.bf16 %v8017, %v8016
        %v8058 = vpack.c.bf16 %v8019, %v8018
        %v8059 = vpack.c.bf16 %v8021, %v8020
        %v8060 = vpack.c.bf16 %v8023, %v8022
        %v8061 = vpack.c.bf16 %v8025, %v8024
        %v8062 = vpack.c.bf16 %v8027, %v8026
        %v8063 = vpack.c.bf16 %v8029, %v8028
        %v8064 = vpack.c.bf16 %v8031, %v8030
        %v8065 = vpack.c.bf16 %v8033, %v8032
        %v8066 = vpack.c.bf16 %v8035, %v8034
        %v8067 = vpack.c.bf16 %v8037, %v8036
        %v8068 = vpack.c.bf16 %v8039, %v8038
        %v8069 = vpack.c.bf16 %v8041, %v8040
        %v8070 = vpack.c.bf16 %v8043, %v8042
        %v8071 = vpack.c.bf16 %v8045, %v8044
        %v8072 = vpack.c.bf16 %v8047, %v8046
        %v8073 = vpack.c.bf16 %v8049, %v8048
        %8074 = vst.msk [vmem:[#allocation3 + $0x10] sm:$0xff] %vm386, %v8050
        %8075 = vst.msk [vmem:[#allocation3 + $0x28] sm:$0xff] %vm386, %v8051
        %8076 = vst.msk [vmem:[#allocation3 + $0x40] sm:$0xff] %vm386, %v8052
        %8077 = vst.msk [vmem:[#allocation3 + $0x58] sm:$0xff] %vm386, %v8053
        %8078 = vst.msk [vmem:[#allocation3 + $0x70] sm:$0xff] %vm386, %v8054
        %8079 = vst.msk [vmem:[#allocation3 + $0x88] sm:$0xff] %vm386, %v8055
        %8080 = vst.msk [vmem:[#allocation3 + $0xa0] sm:$0xff] %vm386, %v8056
        %8081 = vst.msk [vmem:[#allocation3 + $0xb8] sm:$0xff] %vm386, %v8057
        %8082 = vst.msk [vmem:[#allocation3 + $0xd0] sm:$0xff] %vm386, %v8058
        %8083 = vst.msk [vmem:[#allocation3 + $0xe8] sm:$0xff] %vm386, %v8059
        %8084 = vst.msk [vmem:[#allocation3 + $0x100] sm:$0xff] %vm386, %v8060
        %8085 = vst.msk [vmem:[#allocation3 + $0x118] sm:$0xff] %vm386, %v8061
        %8086 = vst.msk [vmem:[#allocation3 + $0x130] sm:$0xff] %vm386, %v8062
        %8087 = vst.msk [vmem:[#allocation3 + $0x148] sm:$0xff] %vm386, %v8063
        %8088 = vst.msk [vmem:[#allocation3 + $0x160] sm:$0xff] %vm386, %v8064
        %8089 = vst.msk [vmem:[#allocation3 + $0x178] sm:$0xff] %vm386, %v8065
        %8090 = vst.msk [vmem:[#allocation3 + $0x190] sm:$0xff] %vm386, %v8066
        %8091 = vst.msk [vmem:[#allocation3 + $0x1a8] sm:$0xff] %vm386, %v8067
        %8092 = vst.msk [vmem:[#allocation3 + $0x1c0] sm:$0xff] %vm386, %v8068
        %8093 = vst.msk [vmem:[#allocation3 + $0x1d8] sm:$0xff] %vm386, %v8069
        %8094 = vst.msk [vmem:[#allocation3 + $0x1f0] sm:$0xff] %vm386, %v8070
        %8095 = vst.msk [vmem:[#allocation3 + $0x208] sm:$0xff] %vm386, %v8071
        %8096 = vst.msk [vmem:[#allocation3 + $0x220] sm:$0xff] %vm386, %v8072
        %8097 = vst.msk [vmem:[#allocation3 + $0x238] sm:$0xff] %vm386, %v8073
        %v8098 = vld [vmem:[#allocation3] sm:$0xff]
        %v8099 = vld [vmem:[#allocation3 + $0x8] sm:$0xff]
        %v8100 = vld [vmem:[#allocation3 + $0x10] sm:$0xff]
        %v8101 = vld [vmem:[#allocation3 + $0x18] sm:$0xff]
        %v8102 = vld [vmem:[#allocation3 + $0x20] sm:$0xff]
        %v8103 = vld [vmem:[#allocation3 + $0x28] sm:$0xff]
        %v8104 = vld [vmem:[#allocation3 + $0x30] sm:$0xff]
        %v8105 = vld [vmem:[#allocation3 + $0x38] sm:$0xff]
        %v8106 = vld [vmem:[#allocation3 + $0x40] sm:$0xff]
        %v8107 = vld [vmem:[#allocation3 + $0x48] sm:$0xff]
        %v8108 = vld [vmem:[#allocation3 + $0x50] sm:$0xff]
        %v8109 = vld [vmem:[#allocation3 + $0x58] sm:$0xff]
        %v8110 = vld [vmem:[#allocation3 + $0x60] sm:$0xff]
        %v8111 = vld [vmem:[#allocation3 + $0x68] sm:$0xff]
        %v8112 = vld [vmem:[#allocation3 + $0x70] sm:$0xff]
        %v8113 = vld [vmem:[#allocation3 + $0x78] sm:$0xff]
        %v8114 = vld [vmem:[#allocation3 + $0x80] sm:$0xff]
        %v8115 = vld [vmem:[#allocation3 + $0x88] sm:$0xff]
        %v8116 = vld [vmem:[#allocation3 + $0x90] sm:$0xff]
        %v8117 = vld [vmem:[#allocation3 + $0x98] sm:$0xff]
        %v8118 = vld [vmem:[#allocation3 + $0xa0] sm:$0xff]
        %v8119 = vld [vmem:[#allocation3 + $0xa8] sm:$0xff]
        %v8120 = vld [vmem:[#allocation3 + $0xb0] sm:$0xff]
        %v8121 = vld [vmem:[#allocation3 + $0xb8] sm:$0xff]
        %v8122 = vld [vmem:[#allocation3 + $0xc0] sm:$0xff]
        %v8123 = vld [vmem:[#allocation3 + $0xc8] sm:$0xff]
        %v8124 = vld [vmem:[#allocation3 + $0xd0] sm:$0xff]
        %v8125 = vld [vmem:[#allocation3 + $0xd8] sm:$0xff]
        %v8126 = vld [vmem:[#allocation3 + $0xe0] sm:$0xff]
        %v8127 = vld [vmem:[#allocation3 + $0xe8] sm:$0xff]
        %v8128 = vld [vmem:[#allocation3 + $0xf0] sm:$0xff]
        %v8129 = vld [vmem:[#allocation3 + $0xf8] sm:$0xff]
        %v8130 = vld [vmem:[#allocation3 + $0x100] sm:$0xff]
        %v8131 = vld [vmem:[#allocation3 + $0x108] sm:$0xff]
        %v8132 = vld [vmem:[#allocation3 + $0x110] sm:$0xff]
        %v8133 = vld [vmem:[#allocation3 + $0x118] sm:$0xff]
        %v8134 = vld [vmem:[#allocation3 + $0x120] sm:$0xff]
        %v8135 = vld [vmem:[#allocation3 + $0x128] sm:$0xff]
        %v8136 = vld [vmem:[#allocation3 + $0x130] sm:$0xff]
        %v8137 = vld [vmem:[#allocation3 + $0x138] sm:$0xff]
        %v8138 = vld [vmem:[#allocation3 + $0x140] sm:$0xff]
        %v8139 = vld [vmem:[#allocation3 + $0x148] sm:$0xff]
        %v8140 = vld [vmem:[#allocation3 + $0x150] sm:$0xff]
        %v8141 = vld [vmem:[#allocation3 + $0x158] sm:$0xff]
        %v8142 = vld [vmem:[#allocation3 + $0x160] sm:$0xff]
        %v8143 = vld [vmem:[#allocation3 + $0x168] sm:$0xff]
        %v8144 = vld [vmem:[#allocation3 + $0x170] sm:$0xff]
        %v8145 = vld [vmem:[#allocation3 + $0x178] sm:$0xff]
        %v8146 = vld [vmem:[#allocation3 + $0x180] sm:$0xff]
        %v8147 = vld [vmem:[#allocation3 + $0x188] sm:$0xff]
        %v8148 = vld [vmem:[#allocation3 + $0x190] sm:$0xff]
        %v8149 = vld [vmem:[#allocation3 + $0x198] sm:$0xff]
        %v8150 = vld [vmem:[#allocation3 + $0x1a0] sm:$0xff]
        %v8151 = vld [vmem:[#allocation3 + $0x1a8] sm:$0xff]
        %v8152 = vld [vmem:[#allocation3 + $0x1b0] sm:$0xff]
        %v8153 = vld [vmem:[#allocation3 + $0x1b8] sm:$0xff]
        %v8154 = vld [vmem:[#allocation3 + $0x1c0] sm:$0xff]
        %v8155 = vld [vmem:[#allocation3 + $0x1c8] sm:$0xff]
        %v8156 = vld [vmem:[#allocation3 + $0x1d0] sm:$0xff]
        %v8157 = vld [vmem:[#allocation3 + $0x1d8] sm:$0xff]
        %v8158 = vld [vmem:[#allocation3 + $0x1e0] sm:$0xff]
        %v8159 = vld [vmem:[#allocation3 + $0x1e8] sm:$0xff]
        %v8160 = vld [vmem:[#allocation3 + $0x1f0] sm:$0xff]
        %v8161 = vld [vmem:[#allocation3 + $0x1f8] sm:$0xff]
        %v8162 = vld [vmem:[#allocation3 + $0x200] sm:$0xff]
        %v8163 = vld [vmem:[#allocation3 + $0x208] sm:$0xff]
        %v8164 = vld [vmem:[#allocation3 + $0x210] sm:$0xff]
        %v8165 = vld [vmem:[#allocation3 + $0x218] sm:$0xff]
        %v8166 = vld [vmem:[#allocation3 + $0x220] sm:$0xff]
        %v8167 = vld [vmem:[#allocation3 + $0x228] sm:$0xff]
        %v8168 = vld [vmem:[#allocation3 + $0x230] sm:$0xff]
        %v8169 = vld [vmem:[#allocation3 + $0x238] sm:$0xff]
        %v8170 = vld [vmem:[%s9] sm:$0xf]
        %v8171 = vld [vmem:[%s9 + $0x4] sm:$0xf]
        %v8172 = vld [vmem:[%s9 + $0x8] sm:$0xf]
        %v8173 = vld [vmem:[%s9 + $0xc] sm:$0xf]
        %v8174 = vld [vmem:[%s9 + $0x10] sm:$0xf]
        %v8175 = vld [vmem:[%s9 + $0x14] sm:$0xf]
        %v8176 = vld [vmem:[%s9 + $0x18] sm:$0xf]
        %v8177 = vld [vmem:[%s9 + $0x1c] sm:$0xf]
        %v8178 = vld [vmem:[%s9 + $0x20] sm:$0xf]
        %v8179 = vld [vmem:[%s9 + $0x24] sm:$0xf]
        %v8180 = vld [vmem:[%s9 + $0x28] sm:$0xf]
        %v8181 = vld [vmem:[%s9 + $0x2c] sm:$0xf]
        %v8182 = vld [vmem:[%s9 + $0x30] sm:$0xf]
        %v8183 = vld [vmem:[%s9 + $0x34] sm:$0xf]
        %v8184 = vld [vmem:[%s9 + $0x38] sm:$0xf]
        %v8185 = vld [vmem:[%s9 + $0x3c] sm:$0xf]
        %v8186 = vld [vmem:[%s9 + $0x40] sm:$0xf]
        %v8187 = vld [vmem:[%s9 + $0x44] sm:$0xf]
        %v8188 = vld [vmem:[%s9 + $0x48] sm:$0xf]
        %v8189 = vld [vmem:[%s9 + $0x4c] sm:$0xf]
        %v8190 = vld [vmem:[%s9 + $0x50] sm:$0xf]
        %v8191 = vld [vmem:[%s9 + $0x54] sm:$0xf]
        %v8192 = vld [vmem:[%s9 + $0x58] sm:$0xf]
        %v8193 = vld [vmem:[%s9 + $0x5c] sm:$0xf]
        %v8194 = vld [vmem:[%s9 + $0x60] sm:$0xf]
        %v8195 = vld [vmem:[%s9 + $0x64] sm:$0xf]
        %v8196 = vld [vmem:[%s9 + $0x68] sm:$0xf]
        %v8197 = vld [vmem:[%s9 + $0x6c] sm:$0xf]
        %v8198 = vld [vmem:[%s9 + $0x70] sm:$0xf]
        %v8199 = vld [vmem:[%s9 + $0x74] sm:$0xf]
        %v8200 = vld [vmem:[%s9 + $0x78] sm:$0xf]
        %v8201 = vld [vmem:[%s9 + $0x7c] sm:$0xf]
        %v8202 = vld [vmem:[%s9 + $0x80] sm:$0xf]
        %v8203 = vld [vmem:[%s9 + $0x84] sm:$0xf]
        %v8204 = vld [vmem:[%s9 + $0x88] sm:$0xf]
        %v8205 = vld [vmem:[%s9 + $0x8c] sm:$0xf]
        %v8206 = vld [vmem:[%s10] sm:$0x1]
        %v8208 = vlaneseq
        %v8209 = vshrl.u32 %v8208, 7
        %v8210 = vsub.s32 0, %v8209
        %v8211 = vrot.slane %v8206, %v8210
        %v8249 = vunpack.c.l.b16 %v8170
        %v8250 = vunpack.c.l.b16 %v8171
        %v8251 = vunpack.c.l.b16 %v8172
        %v8252 = vunpack.c.l.b16 %v8173
        %v8253 = vunpack.c.l.b16 %v8174
        %v8254 = vunpack.c.l.b16 %v8175
        %v8255 = vunpack.c.l.b16 %v8176
        %v8256 = vunpack.c.l.b16 %v8177
        %v8257 = vunpack.c.l.b16 %v8178
        %v8258 = vunpack.c.l.b16 %v8179
        %v8259 = vunpack.c.l.b16 %v8180
        %v8260 = vunpack.c.l.b16 %v8181
        %v8261 = vunpack.c.l.b16 %v8182
        %v8262 = vunpack.c.l.b16 %v8183
        %v8263 = vunpack.c.l.b16 %v8184
        %v8264 = vunpack.c.l.b16 %v8185
        %v8265 = vunpack.c.l.b16 %v8186
        %v8266 = vunpack.c.l.b16 %v8187
        %v8267 = vunpack.c.l.b16 %v8188
        %v8268 = vunpack.c.l.b16 %v8189
        %v8269 = vunpack.c.l.b16 %v8190
        %v8270 = vunpack.c.l.b16 %v8191
        %v8271 = vunpack.c.l.b16 %v8192
        %v8272 = vunpack.c.l.b16 %v8193
        %v8273 = vunpack.c.l.b16 %v8194
        %v8274 = vunpack.c.l.b16 %v8195
        %v8275 = vunpack.c.l.b16 %v8196
        %v8276 = vunpack.c.l.b16 %v8197
        %v8277 = vunpack.c.l.b16 %v8198
        %v8278 = vunpack.c.l.b16 %v8199
        %v8279 = vunpack.c.l.b16 %v8200
        %v8280 = vunpack.c.l.b16 %v8201
        %v8281 = vunpack.c.l.b16 %v8202
        %v8282 = vunpack.c.l.b16 %v8203
        %v8283 = vunpack.c.l.b16 %v8204
        %v8284 = vunpack.c.l.b16 %v8205
        %v8285 = vpack.c.b16 %v8250, %v8249
        %v8286 = vpack.c.b16 %v8252, %v8251
        %v8287 = vpack.c.b16 %v8254, %v8253
        %v8288 = vpack.c.b16 %v8256, %v8255
        %v8289 = vpack.c.b16 %v8258, %v8257
        %v8290 = vpack.c.b16 %v8260, %v8259
        %v8291 = vpack.c.b16 %v8262, %v8261
        %v8292 = vpack.c.b16 %v8264, %v8263
        %v8293 = vpack.c.b16 %v8266, %v8265
        %v8294 = vpack.c.b16 %v8268, %v8267
        %v8295 = vpack.c.b16 %v8270, %v8269
        %v8296 = vpack.c.b16 %v8272, %v8271
        %v8297 = vpack.c.b16 %v8274, %v8273
        %v8298 = vpack.c.b16 %v8276, %v8275
        %v8299 = vpack.c.b16 %v8278, %v8277
        %v8300 = vpack.c.b16 %v8280, %v8279
        %v8301 = vpack.c.b16 %v8282, %v8281
        %v8302 = vpack.c.b16 %v8284, %v8283
        %v8322 = vsel %vm386, %v8100, 0
        %v8325 = vsel %vm386, %v8103, 0
        %v8328 = vsel %vm386, %v8106, 0
        %v8331 = vsel %vm386, %v8109, 0
        %v8334 = vsel %vm386, %v8112, 0
        %v8337 = vsel %vm386, %v8115, 0
        %v8340 = vsel %vm386, %v8118, 0
        %v8343 = vsel %vm386, %v8121, 0
        %v8346 = vsel %vm386, %v8124, 0
        %v8349 = vsel %vm386, %v8127, 0
        %v8352 = vsel %vm386, %v8130, 0
        %v8355 = vsel %vm386, %v8133, 0
        %v8358 = vsel %vm386, %v8136, 0
        %v8361 = vsel %vm386, %v8139, 0
        %v8364 = vsel %vm386, %v8142, 0
        %v8367 = vsel %vm386, %v8145, 0
        %v8370 = vsel %vm386, %v8148, 0
        %v8373 = vsel %vm386, %v8151, 0
        %v8376 = vsel %vm386, %v8154, 0
        %v8379 = vsel %vm386, %v8157, 0
        %v8382 = vsel %vm386, %v8160, 0
        %v8385 = vsel %vm386, %v8163, 0
        %v8388 = vsel %vm386, %v8166, 0
        %v8391 = vsel %vm386, %v8169, 0
        %8393 = vmatprep.subr.bf16.mxu0 0
        %8394 = vmatpush1.bf16.msra.mxu0 %v8285
        %8395 = vmatprep.subr.bf16.mxu0 0
        %8396 = vmatpush1.bf16.msra.mxu0 %v8286
        %8397 = vmatprep.subr.bf16.mxu0 0
        %8398 = vmatpush1.bf16.msra.mxu0 %v8287
        %8399 = vmatprep.subr.bf16.mxu0 0
        %8400 = vmatpush1.bf16.msra.mxu0 %v8288
        %8401 = vmatprep.subr.bf16.mxu0 0
        %8402 = vmatpush1.bf16.msra.mxu0 %v8289
        %8403 = vmatprep.subr.bf16.mxu0 0
        %8404 = vmatpush1.bf16.msra.mxu0 %v8290
        %8405 = vmatprep.subr.bf16.mxu0 0
        %8406 = vmatpush1.bf16.msra.mxu0 %v8291
        %8407 = vmatprep.subr.bf16.mxu0 0
        %8408 = vmatpush1.bf16.msra.mxu0 %v8292
        %8409 = vmatprep.subr.bf16.mxu0 0
        %8410 = vmatpush1.bf16.msra.mxu0 %v8293
        %8411 = vmatprep.subr.bf16.mxu0 0
        %8412 = vmatpush1.bf16.msra.mxu0 %v8294
        %8413 = vmatprep.subr.bf16.mxu0 0
        %8414 = vmatpush1.bf16.msra.mxu0 %v8295
        %8415 = vmatprep.subr.bf16.mxu0 0
        %8416 = vmatpush1.bf16.msra.mxu0 %v8296
        %8417 = vmatprep.subr.bf16.mxu0 0
        %8418 = vmatpush1.bf16.msra.mxu0 %v8297
        %8419 = vmatprep.subr.bf16.mxu0 0
        %8420 = vmatpush1.bf16.msra.mxu0 %v8298
        %8421 = vmatprep.subr.bf16.mxu0 0
        %8422 = vmatpush1.bf16.msra.mxu0 %v8299
        %8423 = vmatprep.subr.bf16.mxu0 0
        %8424 = vmatpush1.bf16.msra.mxu0 %v8300
        %8425 = vmatprep.mubr.bf16.mxu0 %v8099
        %8426 = vmatmul.mubr.bf16.gmra.mrb[0].mxu0 %v8098
        %v8427 = vpop.f32.mrb[0].mxu0
        %v8428 = vadd.f32 %v8211, %v8427
        %v8429 = vpop.f32.mrb[0].mxu0
        %v8430 = vpop.f32.mrb[0].mxu0
        %v8431 = vadd.f32 %v8211, %v8430
        %v8432 = vpop.f32.mrb[0].mxu0
        %8433 = vmatprep.mubr.bf16.mxu0 %v8102
        %8434 = vmatmul.mubr.bf16.gmra.mrb[0].mxu0 %v8101
        %v8435 = vpop.f32.mrb[0].mxu0
        %v8436 = vpop.f32.mrb[0].mxu0
        %v8437 = vpop.f32.mrb[0].mxu0
        %v8438 = vadd.f32 %v8211, %v8437
        %v8439 = vpop.f32.mrb[0].mxu0
        %8440 = vmatprep.mubr.bf16.mxu0 %v8105
        %8441 = vmatmul.mubr.bf16.gmra.mrb[0].mxu0 %v8104
        %v8442 = vpop.f32.mrb[0].mxu0
        %v8443 = vadd.f32 %v8211, %v8442
        %v8444 = vpop.f32.mrb[0].mxu0
        %v8445 = vpop.f32.mrb[0].mxu0
        %v8446 = vpop.f32.mrb[0].mxu0
        %8447 = vmatprep.mubr.bf16.mxu0 %v8108
        %8448 = vmatmul.mubr.bf16.gmra.mrb[0].mxu0 %v8107
        %v8449 = vpop.f32.mrb[0].mxu0
        %v8450 = vadd.f32 %v8211, %v8449
        %v8451 = vpop.f32.mrb[0].mxu0
        %v8452 = vpop.f32.mrb[0].mxu0
        %v8453 = vadd.f32 %v8211, %v8452
        %v8454 = vpop.f32.mrb[0].mxu0
        %8455 = vmatprep.mubr.bf16.mxu0 %v8111
        %8456 = vmatmul.mubr.bf16.gmra.mrb[0].mxu0 %v8110
        %v8457 = vpop.f32.mrb[0].mxu0
        %v8458 = vpop.f32.mrb[0].mxu0
        %v8459 = vpop.f32.mrb[0].mxu0
        %v8460 = vadd.f32 %v8211, %v8459
        %v8461 = vpop.f32.mrb[0].mxu0
        %8462 = vmatprep.mubr.bf16.mxu0 %v8114
        %8463 = vmatmul.mubr.bf16.gmra.mrb[0].mxu0 %v8113
        %v8464 = vpop.f32.mrb[0].mxu0
        %v8465 = vadd.f32 %v8211, %v8464
        %v8466 = vpop.f32.mrb[0].mxu0
        %v8467 = vpop.f32.mrb[0].mxu0
        %v8468 = vpop.f32.mrb[0].mxu0
        %8469 = vmatprep.mubr.bf16.mxu0 %v8117
        %8470 = vmatmul.mubr.bf16.gmra.mrb[0].mxu0 %v8116
        %v8471 = vpop.f32.mrb[0].mxu0
        %v8472 = vadd.f32 %v8211, %v8471
        %v8473 = vpop.f32.mrb[0].mxu0
        %v8474 = vpop.f32.mrb[0].mxu0
        %v8475 = vadd.f32 %v8211, %v8474
        %v8476 = vpop.f32.mrb[0].mxu0
        %8477 = vmatprep.mubr.bf16.mxu0 %v8120
        %8478 = vmatmul.mubr.bf16.gmra.mrb[0].mxu0 %v8119
        %v8479 = vpop.f32.mrb[0].mxu0
        %v8480 = vpop.f32.mrb[0].mxu0
        %v8481 = vpop.f32.mrb[0].mxu0
        %v8482 = vadd.f32 %v8211, %v8481
        %v8483 = vpop.f32.mrb[0].mxu0
        %8484 = vmatprep.mubr.bf16.mxu0 %v8123
        %8485 = vmatmul.mubr.bf16.gmra.mrb[0].mxu0 %v8122
        %v8486 = vpop.f32.mrb[0].mxu0
        %v8487 = vadd.f32 %v8211, %v8486
        %v8488 = vpop.f32.mrb[0].mxu0
        %v8489 = vpop.f32.mrb[0].mxu0
        %v8490 = vpop.f32.mrb[0].mxu0
        %8491 = vmatprep.mubr.bf16.mxu0 %v8126
        %8492 = vmatmul.mubr.bf16.gmra.mrb[0].mxu0 %v8125
        %v8493 = vpop.f32.mrb[0].mxu0
        %v8494 = vadd.f32 %v8211, %v8493
        %v8495 = vpop.f32.mrb[0].mxu0
        %v8496 = vpop.f32.mrb[0].mxu0
        %v8497 = vadd.f32 %v8211, %v8496
        %v8498 = vpop.f32.mrb[0].mxu0
        %8499 = vmatprep.mubr.bf16.mxu0 %v8129
        %8500 = vmatmul.mubr.bf16.gmra.mrb[0].mxu0 %v8128
        %v8501 = vpop.f32.mrb[0].mxu0
        %v8502 = vpop.f32.mrb[0].mxu0
        %v8503 = vpop.f32.mrb[0].mxu0
        %v8504 = vadd.f32 %v8211, %v8503
        %v8505 = vpop.f32.mrb[0].mxu0
        %8506 = vmatprep.mubr.bf16.mxu0 %v8132
        %8507 = vmatmul.mubr.bf16.gmra.mrb[0].mxu0 %v8131
        %v8508 = vpop.f32.mrb[0].mxu0
        %v8509 = vadd.f32 %v8211, %v8508
        %v8510 = vpop.f32.mrb[0].mxu0
        %v8511 = vpop.f32.mrb[0].mxu0
        %v8512 = vpop.f32.mrb[0].mxu0
        %8513 = vmatprep.mubr.bf16.mxu0 %v8135
        %8514 = vmatmul.mubr.bf16.gmra.mrb[0].mxu0 %v8134
        %v8515 = vpop.f32.mrb[0].mxu0
        %v8516 = vadd.f32 %v8211, %v8515
        %v8517 = vpop.f32.mrb[0].mxu0
        %v8518 = vpop.f32.mrb[0].mxu0
        %v8519 = vadd.f32 %v8211, %v8518
        %v8520 = vpop.f32.mrb[0].mxu0
        %8521 = vmatprep.mubr.bf16.mxu0 %v8138
        %8522 = vmatmul.mubr.bf16.gmra.mrb[0].mxu0 %v8137
        %v8523 = vpop.f32.mrb[0].mxu0
        %v8524 = vpop.f32.mrb[0].mxu0
        %v8525 = vpop.f32.mrb[0].mxu0
        %v8526 = vadd.f32 %v8211, %v8525
        %v8527 = vpop.f32.mrb[0].mxu0
        %8528 = vmatprep.mubr.bf16.mxu0 %v8141
        %8529 = vmatmul.mubr.bf16.gmra.mrb[0].mxu0 %v8140
        %v8530 = vpop.f32.mrb[0].mxu0
        %v8531 = vadd.f32 %v8211, %v8530
        %v8532 = vpop.f32.mrb[0].mxu0
        %v8533 = vpop.f32.mrb[0].mxu0
        %v8534 = vpop.f32.mrb[0].mxu0
        %8535 = vmatprep.mubr.bf16.mxu0 %v8144
        %8536 = vmatmul.mubr.bf16.gmra.mrb[0].mxu0 %v8143
        %v8537 = vpop.f32.mrb[0].mxu0
        %v8538 = vadd.f32 %v8211, %v8537
        %v8539 = vpop.f32.mrb[0].mxu0
        %v8540 = vpop.f32.mrb[0].mxu0
        %v8541 = vadd.f32 %v8211, %v8540
        %v8542 = vpop.f32.mrb[0].mxu0
        %8543 = vmatprep.mubr.bf16.mxu0 %v8147
        %8544 = vmatmul.mubr.bf16.gmra.mrb[0].mxu0 %v8146
        %v8545 = vpop.f32.mrb[0].mxu0
        %v8546 = vpop.f32.mrb[0].mxu0
        %v8547 = vpop.f32.mrb[0].mxu0
        %v8548 = vadd.f32 %v8211, %v8547
        %v8549 = vpop.f32.mrb[0].mxu0
        %8550 = vmatprep.mubr.bf16.mxu0 %v8150
        %8551 = vmatmul.mubr.bf16.gmra.mrb[0].mxu0 %v8149
        %v8552 = vpop.f32.mrb[0].mxu0
        %v8553 = vadd.f32 %v8211, %v8552
        %v8554 = vpop.f32.mrb[0].mxu0
        %v8555 = vpop.f32.mrb[0].mxu0
        %v8556 = vpop.f32.mrb[0].mxu0
        %8557 = vmatprep.mubr.bf16.mxu0 %v8153
        %8558 = vmatmul.mubr.bf16.gmra.mrb[0].mxu0 %v8152
        %v8559 = vpop.f32.mrb[0].mxu0
        %v8560 = vadd.f32 %v8211, %v8559
        %v8561 = vpop.f32.mrb[0].mxu0
        %v8562 = vpop.f32.mrb[0].mxu0
        %v8563 = vadd.f32 %v8211, %v8562
        %v8564 = vpop.f32.mrb[0].mxu0
        %8565 = vmatprep.mubr.bf16.mxu0 %v8156
        %8566 = vmatmul.mubr.bf16.gmra.mrb[0].mxu0 %v8155
        %v8567 = vpop.f32.mrb[0].mxu0
        %v8568 = vpop.f32.mrb[0].mxu0
        %v8569 = vpop.f32.mrb[0].mxu0
        %v8570 = vadd.f32 %v8211, %v8569
        %v8571 = vpop.f32.mrb[0].mxu0
        %8572 = vmatprep.mubr.bf16.mxu0 %v8159
        %8573 = vmatmul.mubr.bf16.gmra.mrb[0].mxu0 %v8158
        %v8574 = vpop.f32.mrb[0].mxu0
        %v8575 = vadd.f32 %v8211, %v8574
        %v8576 = vpop.f32.mrb[0].mxu0
        %v8577 = vpop.f32.mrb[0].mxu0
        %v8578 = vpop.f32.mrb[0].mxu0
        %8579 = vmatprep.mubr.bf16.mxu0 %v8162
        %8580 = vmatmul.mubr.bf16.gmra.mrb[0].mxu0 %v8161
        %v8581 = vpop.f32.mrb[0].mxu0
        %v8582 = vadd.f32 %v8211, %v8581
        %v8583 = vpop.f32.mrb[0].mxu0
        %v8584 = vpop.f32.mrb[0].mxu0
        %v8585 = vadd.f32 %v8211, %v8584
        %v8586 = vpop.f32.mrb[0].mxu0
        %8587 = vmatprep.mubr.bf16.mxu0 %v8165
        %8588 = vmatmul.mubr.bf16.gmra.mrb[0].mxu0 %v8164
        %v8589 = vpop.f32.mrb[0].mxu0
        %v8590 = vpop.f32.mrb[0].mxu0
        %v8591 = vpop.f32.mrb[0].mxu0
        %v8592 = vadd.f32 %v8211, %v8591
        %v8593 = vpop.f32.mrb[0].mxu0
        %8594 = vmatprep.mubr.bf16.mxu0 %v8168
        %8595 = vmatmul.mubr.bf16.gmra.mrb[0].mxu0 %v8167
        %v8596 = vpop.f32.mrb[0].mxu0
        %v8597 = vadd.f32 %v8211, %v8596
        %v8598 = vpop.f32.mrb[0].mxu0
        %v8599 = vpop.f32.mrb[0].mxu0
        %v8600 = vpop.f32.mrb[0].mxu0
        %8601 = vdwg.mxu0
        %8602 = vmatprep.subr.bf16.mxu0 0
        %8603 = vmatpush1.bf16.msra.mxu0 %v8301
        %8604 = vmatprep.subr.bf16.mxu0 0
        %8605 = vmatpush1.bf16.msra.mxu0 %v8302
        %8606 = vmatprep.subr.bf16.mxu0 0
        %8607 = vmatpush1.bf16.msra.mxu0 0
        %8608 = vmatprep.subr.bf16.mxu0 0
        %8609 = vmatpush1.bf16.msra.mxu0 0
        %8610 = vmatprep.subr.bf16.mxu0 0
        %8611 = vmatpush1.bf16.msra.mxu0 0
        %8612 = vmatprep.subr.bf16.mxu0 0
        %8613 = vmatpush1.bf16.msra.mxu0 0
        %8614 = vmatprep.subr.bf16.mxu0 0
        %8615 = vmatpush1.bf16.msra.mxu0 0
        %8616 = vmatprep.subr.bf16.mxu0 0
        %8617 = vmatpush1.bf16.msra.mxu0 0
        %8618 = vmatprep.subr.bf16.mxu0 0
        %8619 = vmatpush1.bf16.msra.mxu0 0
        %8620 = vmatprep.subr.bf16.mxu0 0
        %8621 = vmatpush1.bf16.msra.mxu0 0
        %8622 = vmatprep.subr.bf16.mxu0 0
        %8623 = vmatpush1.bf16.msra.mxu0 0
        %8624 = vmatprep.subr.bf16.mxu0 0
        %8625 = vmatpush1.bf16.msra.mxu0 0
        %8626 = vmatprep.subr.bf16.mxu0 0
        %8627 = vmatpush1.bf16.msra.mxu0 0
        %8628 = vmatprep.subr.bf16.mxu0 0
        %8629 = vmatpush1.bf16.msra.mxu0 0
        %8630 = vmatprep.subr.bf16.mxu0 0
        %8631 = vmatpush1.bf16.msra.mxu0 0
        %8632 = vmatprep.subr.bf16.mxu0 0
        %8633 = vmatpush1.bf16.msra.mxu0 0
        %8634 = vmatprep.mubr.bf16.mxu0 0
        %8635 = vmatmul.mubr.bf16.gmra.mrb[0].mxu0 %v8322
        %v8636 = vpop.f32.mrb[0].mxu0
        %v8637 = vadd.f32 %v8428, %v8636
        %v8638 = vpop.f32.mrb[0].mxu0
        %v8639 = vpop.f32.mrb[0].mxu0
        %v8640 = vadd.f32 %v8431, %v8639
        %v8641 = vpop.f32.mrb[0].mxu0
        %8642 = vmatprep.mubr.bf16.mxu0 0
        %8643 = vmatmul.mubr.bf16.gmra.mrb[0].mxu0 %v8325
        %v8644 = vpop.f32.mrb[0].mxu0
        %v8645 = vpop.f32.mrb[0].mxu0
        %v8646 = vpop.f32.mrb[0].mxu0
        %v8647 = vadd.f32 %v8438, %v8646
        %v8648 = vpop.f32.mrb[0].mxu0
        %8649 = vmatprep.mubr.bf16.mxu0 0
        %8650 = vmatmul.mubr.bf16.gmra.mrb[0].mxu0 %v8328
        %v8651 = vpop.f32.mrb[0].mxu0
        %v8652 = vadd.f32 %v8443, %v8651
        %v8653 = vpop.f32.mrb[0].mxu0
        %v8654 = vpop.f32.mrb[0].mxu0
        %v8655 = vpop.f32.mrb[0].mxu0
        %8656 = vmatprep.mubr.bf16.mxu0 0
        %8657 = vmatmul.mubr.bf16.gmra.mrb[0].mxu0 %v8331
        %v8658 = vpop.f32.mrb[0].mxu0
        %v8659 = vadd.f32 %v8450, %v8658
        %v8660 = vpop.f32.mrb[0].mxu0
        %v8661 = vpop.f32.mrb[0].mxu0
        %v8662 = vadd.f32 %v8453, %v8661
        %v8663 = vpop.f32.mrb[0].mxu0
        %8664 = vmatprep.mubr.bf16.mxu0 0
        %8665 = vmatmul.mubr.bf16.gmra.mrb[0].mxu0 %v8334
        %v8666 = vpop.f32.mrb[0].mxu0
        %v8667 = vpop.f32.mrb[0].mxu0
        %v8668 = vpop.f32.mrb[0].mxu0
        %v8669 = vadd.f32 %v8460, %v8668
        %v8670 = vpop.f32.mrb[0].mxu0
        %8671 = vmatprep.mubr.bf16.mxu0 0
        %8672 = vmatmul.mubr.bf16.gmra.mrb[0].mxu0 %v8337
        %v8673 = vpop.f32.mrb[0].mxu0
        %v8674 = vadd.f32 %v8465, %v8673
        %v8675 = vpop.f32.mrb[0].mxu0
        %v8676 = vpop.f32.mrb[0].mxu0
        %v8677 = vpop.f32.mrb[0].mxu0
        %8678 = vmatprep.mubr.bf16.mxu0 0
        %8679 = vmatmul.mubr.bf16.gmra.mrb[0].mxu0 %v8340
        %v8680 = vpop.f32.mrb[0].mxu0
        %v8681 = vadd.f32 %v8472, %v8680
        %v8682 = vpop.f32.mrb[0].mxu0
        %v8683 = vpop.f32.mrb[0].mxu0
        %v8684 = vadd.f32 %v8475, %v8683
        %v8685 = vpop.f32.mrb[0].mxu0
        %8686 = vmatprep.mubr.bf16.mxu0 0
        %8687 = vmatmul.mubr.bf16.gmra.mrb[0].mxu0 %v8343
        %v8688 = vpop.f32.mrb[0].mxu0
        %v8689 = vpop.f32.mrb[0].mxu0
        %v8690 = vpop.f32.mrb[0].mxu0
        %v8691 = vadd.f32 %v8482, %v8690
        %v8692 = vpop.f32.mrb[0].mxu0
        %8693 = vmatprep.mubr.bf16.mxu0 0
        %8694 = vmatmul.mubr.bf16.gmra.mrb[0].mxu0 %v8346
        %v8695 = vpop.f32.mrb[0].mxu0
        %v8696 = vadd.f32 %v8487, %v8695
        %v8697 = vpop.f32.mrb[0].mxu0
        %v8698 = vpop.f32.mrb[0].mxu0
        %v8699 = vpop.f32.mrb[0].mxu0
        %8700 = vmatprep.mubr.bf16.mxu0 0
        %8701 = vmatmul.mubr.bf16.gmra.mrb[0].mxu0 %v8349
        %v8702 = vpop.f32.mrb[0].mxu0
        %v8703 = vadd.f32 %v8494, %v8702
        %v8704 = vpop.f32.mrb[0].mxu0
        %v8705 = vpop.f32.mrb[0].mxu0
        %v8706 = vadd.f32 %v8497, %v8705
        %v8707 = vpop.f32.mrb[0].mxu0
        %8708 = vmatprep.mubr.bf16.mxu0 0
        %8709 = vmatmul.mubr.bf16.gmra.mrb[0].mxu0 %v8352
        %v8710 = vpop.f32.mrb[0].mxu0
        %v8711 = vpop.f32.mrb[0].mxu0
        %v8712 = vpop.f32.mrb[0].mxu0
        %v8713 = vadd.f32 %v8504, %v8712
        %v8714 = vpop.f32.mrb[0].mxu0
        %8715 = vmatprep.mubr.bf16.mxu0 0
        %8716 = vmatmul.mubr.bf16.gmra.mrb[0].mxu0 %v8355
        %v8717 = vpop.f32.mrb[0].mxu0
        %v8718 = vadd.f32 %v8509, %v8717
        %v8719 = vpop.f32.mrb[0].mxu0
        %v8720 = vpop.f32.mrb[0].mxu0
        %v8721 = vpop.f32.mrb[0].mxu0
        %8722 = vmatprep.mubr.bf16.mxu0 0
        %8723 = vmatmul.mubr.bf16.gmra.mrb[0].mxu0 %v8358
        %v8724 = vpop.f32.mrb[0].mxu0
        %v8725 = vadd.f32 %v8516, %v8724
        %v8726 = vpop.f32.mrb[0].mxu0
        %v8727 = vpop.f32.mrb[0].mxu0
        %v8728 = vadd.f32 %v8519, %v8727
        %v8729 = vpop.f32.mrb[0].mxu0
        %8730 = vmatprep.mubr.bf16.mxu0 0
        %8731 = vmatmul.mubr.bf16.gmra.mrb[0].mxu0 %v8361
        %v8732 = vpop.f32.mrb[0].mxu0
        %v8733 = vpop.f32.mrb[0].mxu0
        %v8734 = vpop.f32.mrb[0].mxu0
        %v8735 = vadd.f32 %v8526, %v8734
        %v8736 = vpop.f32.mrb[0].mxu0
        %8737 = vmatprep.mubr.bf16.mxu0 0
        %8738 = vmatmul.mubr.bf16.gmra.mrb[0].mxu0 %v8364
        %v8739 = vpop.f32.mrb[0].mxu0
        %v8740 = vadd.f32 %v8531, %v8739
        %v8741 = vpop.f32.mrb[0].mxu0
        %v8742 = vpop.f32.mrb[0].mxu0
        %v8743 = vpop.f32.mrb[0].mxu0
        %8744 = vmatprep.mubr.bf16.mxu0 0
        %8745 = vmatmul.mubr.bf16.gmra.mrb[0].mxu0 %v8367
        %v8746 = vpop.f32.mrb[0].mxu0
        %v8747 = vadd.f32 %v8538, %v8746
        %v8748 = vpop.f32.mrb[0].mxu0
        %v8749 = vpop.f32.mrb[0].mxu0
        %v8750 = vadd.f32 %v8541, %v8749
        %v8751 = vpop.f32.mrb[0].mxu0
        %8752 = vmatprep.mubr.bf16.mxu0 0
        %8753 = vmatmul.mubr.bf16.gmra.mrb[0].mxu0 %v8370
        %v8754 = vpop.f32.mrb[0].mxu0
        %v8755 = vpop.f32.mrb[0].mxu0
        %v8756 = vpop.f32.mrb[0].mxu0
        %v8757 = vadd.f32 %v8548, %v8756
        %v8758 = vpop.f32.mrb[0].mxu0
        %8759 = vmatprep.mubr.bf16.mxu0 0
        %8760 = vmatmul.mubr.bf16.gmra.mrb[0].mxu0 %v8373
        %v8761 = vpop.f32.mrb[0].mxu0
        %v8762 = vadd.f32 %v8553, %v8761
        %v8763 = vpop.f32.mrb[0].mxu0
        %v8764 = vpop.f32.mrb[0].mxu0
        %v8765 = vpop.f32.mrb[0].mxu0
        %8766 = vmatprep.mubr.bf16.mxu0 0
        %8767 = vmatmul.mubr.bf16.gmra.mrb[0].mxu0 %v8376
        %v8768 = vpop.f32.mrb[0].mxu0
        %v8769 = vadd.f32 %v8560, %v8768
        %v8770 = vpop.f32.mrb[0].mxu0
        %v8771 = vpop.f32.mrb[0].mxu0
        %v8772 = vadd.f32 %v8563, %v8771
        %v8773 = vpop.f32.mrb[0].mxu0
        %8774 = vmatprep.mubr.bf16.mxu0 0
        %8775 = vmatmul.mubr.bf16.gmra.mrb[0].mxu0 %v8379
        %v8776 = vpop.f32.mrb[0].mxu0
        %v8777 = vpop.f32.mrb[0].mxu0
        %v8778 = vpop.f32.mrb[0].mxu0
        %v8779 = vadd.f32 %v8570, %v8778
        %v8780 = vpop.f32.mrb[0].mxu0
        %8781 = vmatprep.mubr.bf16.mxu0 0
        %8782 = vmatmul.mubr.bf16.gmra.mrb[0].mxu0 %v8382
        %v8783 = vpop.f32.mrb[0].mxu0
        %v8784 = vadd.f32 %v8575, %v8783
        %v8785 = vpop.f32.mrb[0].mxu0
        %v8786 = vpop.f32.mrb[0].mxu0
        %v8787 = vpop.f32.mrb[0].mxu0
        %8788 = vmatprep.mubr.bf16.mxu0 0
        %8789 = vmatmul.mubr.bf16.gmra.mrb[0].mxu0 %v8385
        %v8790 = vpop.f32.mrb[0].mxu0
        %v8791 = vadd.f32 %v8582, %v8790
        %v8792 = vpop.f32.mrb[0].mxu0
        %v8793 = vpop.f32.mrb[0].mxu0
        %v8794 = vadd.f32 %v8585, %v8793
        %v8795 = vpop.f32.mrb[0].mxu0
        %8796 = vmatprep.mubr.bf16.mxu0 0
        %8797 = vmatmul.mubr.bf16.gmra.mrb[0].mxu0 %v8388
        %v8798 = vpop.f32.mrb[0].mxu0
        %v8799 = vpop.f32.mrb[0].mxu0
        %v8800 = vpop.f32.mrb[0].mxu0
        %v8801 = vadd.f32 %v8592, %v8800
        %v8802 = vpop.f32.mrb[0].mxu0
        %8803 = vmatprep.mubr.bf16.mxu0 0
        %8804 = vmatmul.mubr.bf16.gmra.mrb[0].mxu0 %v8391
        %v8805 = vpop.f32.mrb[0].mxu0
        %v8806 = vadd.f32 %v8597, %v8805
        %v8807 = vpop.f32.mrb[0].mxu0
        %v8808 = vpop.f32.mrb[0].mxu0
        %v8809 = vpop.f32.mrb[0].mxu0
        %8810 = vdwg.mxu0
        %8811 = vst [vmem:[%s379] sm:$0xff] %v8637
        %8812 = vst [vmem:[%s379 + $0x8] sm:$0xff] %v8640
        %8813 = vst [vmem:[%s379 + $0x10] sm:$0xff] %v8647
        %8814 = vst [vmem:[%s379 + $0x18] sm:$0xff] %v8652
        %8815 = vst [vmem:[%s379 + $0x20] sm:$0xff] %v8659
        %8816 = vst [vmem:[%s379 + $0x28] sm:$0xff] %v8662
        %8817 = vst [vmem:[%s379 + $0x30] sm:$0xff] %v8669
        %8818 = vst [vmem:[%s379 + $0x38] sm:$0xff] %v8674
        %8819 = vst [vmem:[%s379 + $0x40] sm:$0xff] %v8681
        %8820 = vst [vmem:[%s379 + $0x48] sm:$0xff] %v8684
        %8821 = vst [vmem:[%s379 + $0x50] sm:$0xff] %v8691
        %8822 = vst [vmem:[%s379 + $0x58] sm:$0xff] %v8696
        %8823 = vst [vmem:[%s379 + $0x60] sm:$0xff] %v8703
        %8824 = vst [vmem:[%s379 + $0x68] sm:$0xff] %v8706
        %8825 = vst [vmem:[%s379 + $0x70] sm:$0xff] %v8713
        %8826 = vst [vmem:[%s379 + $0x78] sm:$0xff] %v8718
        %8827 = vst [vmem:[%s379 + $0x80] sm:$0xff] %v8725
        %8828 = vst [vmem:[%s379 + $0x88] sm:$0xff] %v8728
        %8829 = vst [vmem:[%s379 + $0x90] sm:$0xff] %v8735
        %8830 = vst [vmem:[%s379 + $0x98] sm:$0xff] %v8740
        %8831 = vst [vmem:[%s379 + $0xa0] sm:$0xff] %v8747
        %8832 = vst [vmem:[%s379 + $0xa8] sm:$0xff] %v8750
        %8833 = vst [vmem:[%s379 + $0xb0] sm:$0xff] %v8757
        %8834 = vst [vmem:[%s379 + $0xb8] sm:$0xff] %v8762
        %8835 = vst [vmem:[%s379 + $0xc0] sm:$0xff] %v8769
        %8836 = vst [vmem:[%s379 + $0xc8] sm:$0xff] %v8772
        %8837 = vst [vmem:[%s379 + $0xd0] sm:$0xff] %v8779
        %8838 = vst [vmem:[%s379 + $0xd8] sm:$0xff] %v8784
        %8839 = vst [vmem:[%s379 + $0xe0] sm:$0xff] %v8791
        %8840 = vst [vmem:[%s379 + $0xe8] sm:$0xff] %v8794
        %8841 = vst [vmem:[%s379 + $0xf0] sm:$0xff] %v8801
        %8842 = vst [vmem:[%s379 + $0xf8] sm:$0xff] %v8806
        %s8843 = sand.u32 %s269, 1
        %s8844 = scalar_lea.sflag [#allocation5], %s8843
        %s8845 = sand.u32 %s269, 1
        %s8846 = smul.addr %s8845, 256
        %s8847 = scalar_lea.vmem [#allocation4], %s8846
        // Predicated region
        $region65: #{tpu_custom_call.1} parent=63 // pred_check
          %p8848 = pneg %p279
        $region66: #{tpu_custom_call.1} parent=63 // pred_check_branch
          %8850 = sbr.rel (%p8848) target = $region68
        $region67: #{tpu_custom_call.1} parent=63 // pred_region
          %s8852 = ssub.s32 4096, 4096
          %8853 = vsyncadd %s8844, %s8852
          %s8854 = smul.addr %s25, 32
          %s8855 = smul.addr %s8854, 128
          %s8856 = scalar_lea.hbm %s11, %s8855
          %s8857 = sshll.u32 %s8847, 4
          %s8858 = int_to_ptr.vmem [resolvable:$true] %s8857
          %8863 = dma.vmem_to_hbm [thread:$0]  %s8858, 4096, %s8856, %s8844, 128, 128, 8
        $region68: #{tpu_custom_call.1} parent=63 // pred_fallthru
          _
      $region64: #{tpu_custom_call.1} parent=5 // pred_fallthru
        _
      %p8864 = scmp.le.s32.totalorder 2, %s20
      // Predicated region
      $region69: #{tpu_custom_call.1} parent=5 // pred_check
        %p8865 = pneg %p8864
      $region70: #{tpu_custom_call.1} parent=5 // pred_check_branch
        %8867 = sbr.rel (%p8865) target = $region72
      $region71: #{tpu_custom_call.1} parent=5 // pred_region
        %s8868 = ssub.s32 %s20, 2
        // Predicated region
        $region73: #{tpu_custom_call.1} parent=71 // pred_check
          %p8869 = pneg %p285
        $region74: #{tpu_custom_call.1} parent=71 // pred_check_branch
          %8871 = sbr.rel (%p8869) target = $region76
        $region75: #{tpu_custom_call.1} parent=71 // pred_region
          %s8872 = sand.u32 %s270, 1
          %s8873 = scalar_lea.sflag [#allocation5], %s8872
          %s8874 = sand.u32 %s270, 1
          %s8875 = smul.addr %s8874, 256
          %s8876 = scalar_lea.vmem [#allocation4], %s8875
          %8877 = dma.done %s8873, 4096
        $region76: #{tpu_custom_call.1} parent=71 // pred_fallthru
          _
      $region72: #{tpu_custom_call.1} parent=5 // pred_fallthru
        _
    $region6: #{tpu_custom_call.1} parent=1 // loop_footer
      %s24 = sadd.s32 1, %s20
    $region7: #{tpu_custom_call.1} parent=1 // loop_footer_branch
      %19 = sbr.rel target = $region3
    $region8: #{tpu_custom_call.1} parent=1 // loop_exit
      _
    %8878 = vsyncpa [#allocation5], 1
    %s8879 = scalar_lea.sflag [#allocation5], 1
    %8880 = vsyncpa %s8879, 1

</llo_original>
